<compile_context>
chip_gen: v6e
topology: v6e:2x2x1
jax: 0.10.0
libtpu: 0.0.40
codegen_flags: <defaults>
</compile_context>

<pallas_src>
import jax
import jax.numpy as jnp
from jax.experimental import pallas as pl
from jax.experimental.pallas import tpu as pltpu

HIDDEN = 200


def _round_up(x, m):
    return ((x + m - 1) // m) * m


def _pick_block_k(dim_in, max_block=4096):
    """Largest multiple of 128 that divides dim_in and is <= max_block."""
    best = None
    for cand in range(128, min(dim_in, max_block) + 1, 128):
        if dim_in % cand == 0:
            best = cand
    return best if best is not None else dim_in


def _tensorcores_per_chip():
    """2 TensorCores per chip on v7x, 1 on v5e/v6e (and on failure)."""
    try:
        kind = jax.devices()[0].device_kind.lower()
    except Exception:
        return 1
    return 2 if "v7" in kind else 1


def simplenet_kernel(x_ref, w1_ref, b1_ref, w2_ref, b2_ref, o_ref, acc_ref):
    k = pl.program_id(1)

    @pl.when(k == 0)
    def _seed():
        # Seed the accumulator with the fc1 bias (broadcast over rows); this
        # replaces both the zero-init and the "+ b1" in the epilogue.
        acc_ref[...] = jnp.zeros_like(acc_ref) + b1_ref[...]

    # fc1 partial product: cast x tile to bf16 in-kernel (VPU filler hidden
    # under the DMA stall); bf16 x bf16 -> f32 accumulation on the MXU.
    xb = x_ref[...].astype(jnp.bfloat16)
    acc_ref[...] += jnp.dot(xb, w1_ref[...], preferred_element_type=jnp.float32)

    @pl.when(k == pl.num_programs(1) - 1)
    def _finalize():
        v = acc_ref[...]
        # Exact sigmoid: exp on the EUP, exact divide (free under the DMA stall).
        h = 1.0 / (1.0 + jnp.exp(-v))
        # fc2 (tiny): f32 matmul + bias.
        z = jnp.dot(h, w2_ref[...], preferred_element_type=jnp.float32)
        z = z + b2_ref[...]
        # log_softmax along the last axis, numerically stable.
        m = jnp.max(z, axis=-1, keepdims=True)
        s = z - m
        lse = jnp.log(jnp.sum(jnp.exp(s), axis=-1, keepdims=True))
        o_ref[...] = (s - lse).astype(o_ref.dtype)


def prepare_params(w1, b1, w2, b2):
    """One-time pad/cast of the weights (hoisted out of the forward).

    Lane-pads hidden (200 -> 256) with zeros: padded lanes see sigmoid(0)=0.5
    but multiply zero w2 rows, so the result is exactly unchanged.
    """
    hidden = w1.shape[1]
    h_pad = _round_up(hidden, 128)
    pad_h = h_pad - hidden
    w1_p = jnp.pad(w1, ((0, 0), (0, pad_h))).astype(jnp.bfloat16)
    b1_p = jnp.pad(b1.reshape(1, -1), ((0, 0), (0, pad_h))).astype(jnp.float32)
    w2_p = jnp.pad(w2, ((0, pad_h), (0, 0))).astype(jnp.float32)
    b2_p = b2.reshape(1, -1).astype(jnp.float32)
    return w1_p, b1_p, w2_p, b2_p


@jax.jit
def simplenet_forward(x, w1_p, b1_p, w2_p, b2_p):
    B, dim_in = x.shape
    h_pad = w1_p.shape[1]
    dim_out = w2_p.shape[1]

    # Batch tile: one tile on single-TC chips (w1 streamed exactly once);
    # two tiles on v7x so the "parallel" axis shards across both TensorCores.
    # TODO(synk): verify in xprof that the parallel axis actually splits across
    # v7x TensorCores; if not, switch that axis to pltpu.CORE_PARALLEL.
    n_tc = _tensorcores_per_chip()
    block_b = 128 if (n_tc >= 2 and B > 128) else 256
    block_b = min(block_b, _round_up(B, 8))
    Bp = _round_up(B, block_b)
    x_p = x if Bp == B else jnp.pad(x, ((0, Bp - B), (0, 0)))

    # K tiled at 3456 (3 steps for dim_in=10368): keeps the w1 stream
    # pipelined behind the matmul and VMEM residency well under the default
    # scoped limit on every generation.
    block_k = _pick_block_k(dim_in)
    grid = (Bp // block_b, dim_in // block_k)

    out = pl.pallas_call(
        simplenet_kernel,
        out_shape=jax.ShapeDtypeStruct((Bp, dim_out), jnp.float32),
        grid_spec=pltpu.PrefetchScalarGridSpec(
            num_scalar_prefetch=0,
            grid=grid,
            in_specs=[
                pl.BlockSpec((block_b, block_k), lambda b, k: (b, k)),   # x   (f32, cast in-kernel)
                pl.BlockSpec((block_k, h_pad), lambda b, k: (k, 0)),     # w1  (bf16, pre-padded)
                pl.BlockSpec((1, h_pad), lambda b, k: (0, 0)),           # b1  (f32, pre-padded)
                pl.BlockSpec((h_pad, dim_out), lambda b, k: (0, 0)),     # w2  (f32, pre-padded)
                pl.BlockSpec((1, dim_out), lambda b, k: (0, 0)),         # b2  (f32)
            ],
            out_specs=pl.BlockSpec((block_b, dim_out), lambda b, k: (b, 0)),
            scratch_shapes=[pltpu.VMEM((block_b, h_pad), jnp.float32)],
        ),
        compiler_params=pltpu.CompilerParams(
            dimension_semantics=("parallel", "arbitrary"),
        ),
    )(x_p, w1_p, b1_p, w2_p, b2_p)

    return out[:B]


def init_params(key, dim_in, hidden, dim_out):
    """Deterministic init mimicking nn.Linear's U(-1/sqrt(fan_in), 1/sqrt(fan_in))."""
    k1, k2, k3, k4 = jax.random.split(key, 4)
    bound1 = 1.0 / jnp.sqrt(dim_in)
    bound2 = 1.0 / jnp.sqrt(hidden)
    # stored as (in, out) so the kernel does x @ W directly
    w1 = jax.random.uniform(k1, (dim_in, hidden), jnp.float32, -bound1, bound1)
    b1 = jax.random.uniform(k2, (1, hidden), jnp.float32, -bound1, bound1)
    w2 = jax.random.uniform(k3, (hidden, dim_out), jnp.float32, -bound2, bound2)
    b2 = jax.random.uniform(k4, (1, dim_out), jnp.float32, -bound2, bound2)
    return w1, b1, w2, b2


if __name__ == "__main__":
    # Module defaults: dimIn = 12*12*12*6 = 10368, hidden = 200, dimOut = 4.
    DIM_IN = 12 * 12 * 12 * 6
    DIM_OUT = 4
    BATCH = 256  # one 256-row tile on v5e/v6e, two 128-row tiles on v7x

    key = jax.random.PRNGKey(0)
    kx, kp = jax.random.split(key)
    x = jax.random.normal(kx, (BATCH, DIM_IN), dtype=jnp.float32)
    w1, b1, w2, b2 = init_params(kp, DIM_IN, HIDDEN, DIM_OUT)

    # One-time parameter preparation (pad + bf16 cast), outside the forward.
    w1_p, b1_p, w2_p, b2_p = prepare_params(w1, b1, w2, b2)
    w1_p, b1_p, w2_p, b2_p = jax.block_until_ready((w1_p, b1_p, w2_p, b2_p))

    out = simplenet_forward(x, w1_p, b1_p, w2_p, b2_p)
    out = jax.block_until_ready(out)

    # Reference (same bf16 rounding of x/w1 that the kernel's fc1 matmul sees).
    xb = x.astype(jnp.bfloat16).astype(jnp.float32)
    w1b = w1.astype(jnp.bfloat16).astype(jnp.float32)
    h_ref = jax.nn.sigmoid(xb @ w1b + b1)
    ref = jax.nn.log_softmax(h_ref @ w2 + b2, axis=-1)

    assert out.shape == (BATCH, DIM_OUT)
    # log_softmax rows must sum (in prob space) to 1
    assert jnp.allclose(jnp.sum(jnp.exp(out), axis=1), 1.0, atol=1e-4)
    assert jnp.allclose(out, ref, atol=5e-3, rtol=5e-3)

    print("KERNEL_OK")
</pallas_src>

<mosaic_0001>
module attributes {stable_mosaic.version = 11 : i64} {
  func.func @simplenet_kernel(%arg0: i32, %arg1: i32, %arg2: memref<256x3456xf32, #tpu.memory_space<vmem>>, %arg3: memref<3456x256xbf16, #tpu.memory_space<vmem>>, %arg4: memref<1x256xf32, #tpu.memory_space<vmem>>, %arg5: memref<256x4xf32, #tpu.memory_space<vmem>>, %arg6: memref<1x4xf32, #tpu.memory_space<vmem>>, %arg7: memref<256x4xf32, #tpu.memory_space<vmem>>, %arg8: memref<256x256xf32, #tpu.memory_space<vmem>>) attributes {dimension_semantics = [#tpu.dimension_semantics<parallel>, #tpu.dimension_semantics<arbitrary>], iteration_bounds = array<i64: 1, 3>, scalar_prefetch = 0 : i64, scratch_operands = 1 : i64, tpu.core_type = #tpu.core_type<tc>, window_params = [{transform_indices = @transform_0, window_bounds = array<i64: 256, 3456>}, {transform_indices = @transform_1, window_bounds = array<i64: 3456, 256>}, {pipeline_mode = #tpu.pipeline_mode<synchronous>, transform_indices = @transform_2, window_bounds = array<i64: 1, 256>}, {pipeline_mode = #tpu.pipeline_mode<synchronous>, transform_indices = @transform_3, window_bounds = array<i64: 256, 4>}, {pipeline_mode = #tpu.pipeline_mode<synchronous>, transform_indices = @transform_4, window_bounds = array<i64: 1, 4>}, {transform_indices = @transform_5, window_bounds = array<i64: 256, 4>}]} {
    %c0_i32 = arith.constant 0 : i32
    %0 = arith.cmpi eq, %arg1, %c0_i32 : i32
    %1 = arith.extui %0 : i1 to i32
    %c0_i32_0 = arith.constant 0 : i32
    %2 = arith.cmpi ne, %1, %c0_i32_0 : i32
    scf.if %2 {
      %cst_9 = arith.constant 0.000000e+00 : f32
      %13 = vector.broadcast %cst_9 : f32 to vector<256x256xf32>
      %c0_10 = arith.constant 0 : index
      %c0_11 = arith.constant 0 : index
      %14 = vector.load %arg4[%c0_10, %c0_11] : memref<1x256xf32, #tpu.memory_space<vmem>>, vector<1x256xf32>
      %15 = vector.broadcast %14 : vector<1x256xf32> to vector<256x256xf32>
      %16 = arith.addf %13, %15 : vector<256x256xf32>
      %c0_12 = arith.constant 0 : index
      %c0_13 = arith.constant 0 : index
      %17 = vector.load %arg8[%c0_12, %c0_13] : memref<256x256xf32, #tpu.memory_space<vmem>>, vector<256x256xf32>
      tpu.vector_store %arg8[%c0_12, %c0_13], %16 {strides = array<i32>} : memref<256x256xf32, #tpu.memory_space<vmem>>, vector<256x256xf32>,
    } else {
    }
    %c0 = arith.constant 0 : index
    %c0_1 = arith.constant 0 : index
    %3 = vector.load %arg2[%c0, %c0_1] : memref<256x3456xf32, #tpu.memory_space<vmem>>, vector<256x3456xf32>
    %4 = arith.truncf %3 : vector<256x3456xf32> to vector<256x3456xbf16>
    %c0_2 = arith.constant 0 : index
    %c0_3 = arith.constant 0 : index
    %5 = vector.load %arg8[%c0_2, %c0_3] : memref<256x256xf32, #tpu.memory_space<vmem>>, vector<256x256xf32>
    %c0_4 = arith.constant 0 : index
    %c0_5 = arith.constant 0 : index
    %6 = vector.load %arg3[%c0_4, %c0_5] : memref<3456x256xbf16, #tpu.memory_space<vmem>>, vector<3456x256xbf16>
    %cst = arith.constant dense<0.000000e+00> : vector<256x256xf32>
    %7 = tpu.matmul %4, %6, %cst {dimension_numbers = #tpu.dot_dimension_numbers<[1], [0], [0], [1], [0, 0, 1, 1], [], []>} : vector<256x3456xbf16>, vector<3456x256xbf16>, vector<256x256xf32> -> vector<256x256xf32>
    %8 = arith.addf %5, %7 : vector<256x256xf32>
    %c0_6 = arith.constant 0 : index
    %c0_7 = arith.constant 0 : index
    %9 = vector.load %arg8[%c0_6, %c0_7] : memref<256x256xf32, #tpu.memory_space<vmem>>, vector<256x256xf32>
    tpu.vector_store %arg8[%c0_6, %c0_7], %8 {strides = array<i32>} : memref<256x256xf32, #tpu.memory_space<vmem>>, vector<256x256xf32>,
    %c2_i32 = arith.constant 2 : i32
    %10 = arith.cmpi eq, %arg1, %c2_i32 : i32
    %11 = arith.extui %10 : i1 to i32
    %c0_i32_8 = arith.constant 0 : i32
    %12 = arith.cmpi ne, %11, %c0_i32_8 : i32
    scf.if %12 {
      %c0_9 = arith.constant 0 : index
      %c0_10 = arith.constant 0 : index
      %13 = vector.load %arg8[%c0_9, %c0_10] : memref<256x256xf32, #tpu.memory_space<vmem>>, vector<256x256xf32>
      %cst_11 = arith.constant 0.000000e+00 : f32
      %14 = vector.broadcast %cst_11 : f32 to vector<256x256xf32>
      %15 = arith.subf %14, %13 : vector<256x256xf32>
      %16 = math.exp %15 : vector<256x256xf32>
      %cst_12 = arith.constant 1.000000e+00 : f32
      %17 = vector.broadcast %cst_12 : f32 to vector<256x256xf32>
      %18 = arith.addf %17, %16 : vector<256x256xf32>
      %cst_13 = arith.constant 1.000000e+00 : f32
      %19 = vector.broadcast %cst_13 : f32 to vector<256x256xf32>
      %20 = arith.divf %19, %18 : vector<256x256xf32>
      %c0_14 = arith.constant 0 : index
      %c0_15 = arith.constant 0 : index
      %21 = vector.load %arg5[%c0_14, %c0_15] : memref<256x4xf32, #tpu.memory_space<vmem>>, vector<256x4xf32>
      %cst_16 = arith.constant dense<0.000000e+00> : vector<256x4xf32>
      %22 = tpu.matmul %20, %21, %cst_16 {dimension_numbers = #tpu.dot_dimension_numbers<[1], [0], [0], [1], [0, 0, 1, 1], [], []>} : vector<256x256xf32>, vector<256x4xf32>, vector<256x4xf32> -> vector<256x4xf32>
      %c0_17 = arith.constant 0 : index
      %c0_18 = arith.constant 0 : index
      %23 = vector.load %arg6[%c0_17, %c0_18] : memref<1x4xf32, #tpu.memory_space<vmem>>, vector<1x4xf32>
      %24 = vector.broadcast %23 : vector<1x4xf32> to vector<256x4xf32>
      %25 = arith.addf %22, %24 : vector<256x4xf32>
      %cst_19 = arith.constant dense<0xFF800000> : vector<256xf32>
      %26 = vector.multi_reduction <maximumf>, %25, %cst_19 [1] : vector<256x4xf32> to vector<256xf32>
      %27 = vector.shape_cast %26 : vector<256xf32> to vector<256x1xf32>
      %28 = vector.broadcast %27 : vector<256x1xf32> to vector<256x4xf32>
      %29 = arith.subf %25, %28 : vector<256x4xf32>
      %30 = math.exp %29 : vector<256x4xf32>
      %cst_20 = arith.constant dense<0.000000e+00> : vector<256xf32>
      %31 = vector.multi_reduction <add>, %30, %cst_20 [1] : vector<256x4xf32> to vector<256xf32>
      %32 = vector.shape_cast %31 : vector<256xf32> to vector<256x1xf32>
      %33 = math.log %32 : vector<256x1xf32>
      %34 = vector.broadcast %33 : vector<256x1xf32> to vector<256x4xf32>
      %35 = arith.subf %29, %34 : vector<256x4xf32>
      %c0_21 = arith.constant 0 : index
      %c0_22 = arith.constant 0 : index
      %36 = vector.load %arg7[%c0_21, %c0_22] : memref<256x4xf32, #tpu.memory_space<vmem>>, vector<256x4xf32>
      tpu.vector_store %arg7[%c0_21, %c0_22], %35 {strides = array<i32>} : memref<256x4xf32, #tpu.memory_space<vmem>>, vector<256x4xf32>,
    } else {
    }
    return
  }
  func.func @transform_0(%arg0: i32, %arg1: i32) -> (i32, i32) {
    %c0_i32 = arith.constant 0 : i32
    return %arg0, %arg1 : i32, i32
  }
  func.func @transform_1(%arg0: i32, %arg1: i32) -> (i32, i32) {
    %c0_i32 = arith.constant 0 : i32
    %c0_i32_0 = arith.constant 0 : i32
    return %arg1, %c0_i32 : i32, i32
  }
  func.func @transform_2(%arg0: i32, %arg1: i32) -> (i32, i32) {
    %c0_i32 = arith.constant 0 : i32
    %c0_i32_0 = arith.constant 0 : i32
    %c0_i32_1 = arith.constant 0 : i32
    return %c0_i32, %c0_i32_0 : i32, i32
  }
  func.func @transform_3(%arg0: i32, %arg1: i32) -> (i32, i32) {
    %c0_i32 = arith.constant 0 : i32
    %c0_i32_0 = arith.constant 0 : i32
    %c0_i32_1 = arith.constant 0 : i32
    return %c0_i32, %c0_i32_0 : i32, i32
  }
  func.func @transform_4(%arg0: i32, %arg1: i32) -> (i32, i32) {
    %c0_i32 = arith.constant 0 : i32
    %c0_i32_0 = arith.constant 0 : i32
    %c0_i32_1 = arith.constant 0 : i32
    return %c0_i32, %c0_i32_0 : i32, i32
  }
  func.func @transform_5(%arg0: i32, %arg1: i32) -> (i32, i32) {
    %c0_i32 = arith.constant 0 : i32
    %c0_i32_0 = arith.constant 0 : i32
    return %arg0, %c0_i32 : i32, i32
  }
}

</mosaic_0001>

<llo_original>
// kernel: simplenet_forward.1
$region0: #{simplenet_forward.1}
  #allocation0 [shape = 'u32[]', space=smem, size = 0x4, offset = 0x4, fixed_abs, tag = 'smem constant byte address 0x4 - core index']
  #allocation1 [shape = 'u32[144,128]{1,0:T(1,128)}', space=vmem, size = 0x12000, scoped, tag = 'internal scratch']
  #allocation2 [shape = 'f32[256,256]{1,0:T(8,128)}', space=vmem, size = 0x40000, scoped, tag = 'scratch operand']
  %s0 = inlined_call_operand.hbm [shape: f32[256,10368], index: 0, kind: input, shape index: {}]
  %s1 = inlined_call_operand.hbm [shape: bf16[10368,256], index: 1, kind: input, shape index: {}]
  %s2 = inlined_call_operand.hbm [shape: f32[1,256], index: 2, kind: input, shape index: {}]
  %s3 = inlined_call_operand.vmem [shape: f32[256,4], index: 3, kind: input, shape index: {}]
  %s4 = inlined_call_operand.hbm [shape: f32[1,4], index: 4, kind: input, shape index: {}]
  %s5 = inlined_call_operand.vmem [shape: f32[256,4], index: 5, kind: output, shape index: {}]
  %s6 = sld [smem:[#allocation0]]
  $region77: #{simplenet_forward.1} parent=0
    _
  %s8 = ssub.s32 1, %s6
  %s9 = scalar_select 0, %s8, %s6
  $region1: #{simplenet_forward.1} parent=0
    #allocation3 [shape = 'u8[7077888]{0}', space=vmem, size = 0x6c0000, scoped, tag = 'input window, operand 0']
    #allocation4 [shape = 's32[2]{0}', space=sflag, size = 0x8, scoped, tag = 'scoped memory for simplenet_forward.1']
    #allocation5 [shape = 'u8[3538944]{0}', space=vmem, size = 0x360000, scoped, tag = 'input window, operand 1']
    #allocation6 [shape = 's32[2]{0}', space=sflag, size = 0x8, scoped, tag = 'scoped memory for simplenet_forward.1']
    #allocation7 [shape = 'u8[1024]{0}', space=vmem, size = 0x400, scoped, tag = 'input window, operand 2, single buffered']
    #allocation8 [shape = 'u8[512]{0}', space=vmem, size = 0x400, scoped, tag = 'input window, operand 4, single buffered']
    #allocation9 [shape = 's32[1]{0}', space=sflag, size = 0x4, scoped, tag = 'scoped memory for simplenet_forward.1']
    %10 = vsyncpa [#allocation4], 0
    %s11 = scalar_lea.sflag [#allocation4], 1
    %12 = vsyncpa %s11, 0
    %13 = vsyncpa [#allocation6], 0
    %s14 = scalar_lea.sflag [#allocation6], 1
    %15 = vsyncpa %s14, 0
    %16 = vsyncpa [#allocation9], 0
    loop: start=0, step=1, limit=5
    $region2: #{simplenet_forward.1} parent=1 // loop_pre_header
      _
    $region3: #{simplenet_forward.1} parent=1 // loop_header
      %s18 = sphi 0, %s22
      %p19 = scmp.ge.s32.totalorder %s18, 5
      %s25 = sphi 0, %s37
      %s26 = sphi 0, %s33
      %s27 = sphi 0, %s25
      %s28 = sphi 0, %s26
      %s29 = sphi 0, %s27
      %s30 = sphi 0, %s28
      %s42 = sphi 0, %s44
      %s45 = sphi 0, %s42
      %s46 = sphi 0, %s45
      %s62 = sphi 0, %s46
      %s68 = sphi 0, %s70
      %s71 = sphi 0, %s68
      %s72 = sphi 0, %s71
      %s88 = sphi 0, %s72
      %s92 = sphi 0, %s92
      %s94 = sphi 0, %s92
      %s95 = sphi 0, %s94
      %s109 = sphi 0, %s95
      %s113 = sphi 0, %s113
      %s115 = sphi 0, %s113
      %s116 = sphi 0, %s115
      %s130 = sphi 0, %s116
      %s134 = sphi 0, %s134
      %s136 = sphi 0, %s134
      %s137 = sphi 0, %s136
      %s151 = sphi 0, %s137
      %s157 = sphi 0, %s159
      %s160 = sphi 0, %s157
      %s161 = sphi 0, %s160
      %s177 = sphi 0, %s161
    $region4: #{simplenet_forward.1} parent=1 // loop_header_branch
      %21 = sbr.rel (%p19) target = $region8
    $region5: #{simplenet_forward.1} parent=1 // loop_body
      %s23 = ssub.s32 %s18, 1
      %s24 = ssub.s32 %s18, 2
      %s31 = sadd.s32 1, %s26
      %p32 = scmp.ge.s32.totalorder %s31, 3
      %s33 = scalar_select %p32, 0, %s31
      %s34 = sadd.s32 1, %s25
      %s35 = scalar_select %p32, %s34, %s25
      %p36 = scmp.ge.s32.totalorder %s35, 1
      %s37 = scalar_select %p36, 0, %s35
      %s38 = ssub.s32 %s25, %s37
      %s39 = ssub.s32 %s26, %s33
      %s40 = sor.u32 %s38, %s39
      %p41 = scmp.eq.s32.totalorder %s40, 0
      %s43 = sadd.s32 %s42, 1
      %s44 = scalar_select %p41, %s42, %s43
      %p47 = pneg %p41
      %p48 = scmp.eq.s32.totalorder %s18, 2
      %p49 = por %p47, %p48
      %p50 = scmp.ne.s32.totalorder %s42, %s45
      %p51 = scmp.eq.s32.totalorder %s18, 0
      %p52 = por %p50, %p51
      %p53 = scmp.ne.s32.totalorder %s42, %s45
      %p54 = scmp.eq.s32.totalorder %s23, 2
      %p55 = por %p53, %p54
      %p56 = scmp.ne.s32.totalorder %s45, %s46
      %p57 = scmp.eq.s32.totalorder %s23, 0
      %p58 = por %p56, %p57
      %p59 = scmp.ne.s32.totalorder %s45, %s46
      %p60 = scmp.eq.s32.totalorder %s24, 2
      %p61 = por %p59, %p60
      %p63 = scmp.ne.s32.totalorder %s46, %s62
      %p64 = scmp.eq.s32.totalorder %s24, 0
      %p65 = por %p63, %p64
      %s66 = ssub.s32 %s26, %s33
      %p67 = scmp.eq.s32.totalorder %s66, 0
      %s69 = sadd.s32 %s68, 1
      %s70 = scalar_select %p67, %s68, %s69
      %p73 = pneg %p67
      %p74 = scmp.eq.s32.totalorder %s18, 2
      %p75 = por %p73, %p74
      %p76 = scmp.ne.s32.totalorder %s68, %s71
      %p77 = scmp.eq.s32.totalorder %s18, 0
      %p78 = por %p76, %p77
      %p79 = scmp.ne.s32.totalorder %s68, %s71
      %p80 = scmp.eq.s32.totalorder %s23, 2
      %p81 = por %p79, %p80
      %p82 = scmp.ne.s32.totalorder %s71, %s72
      %p83 = scmp.eq.s32.totalorder %s23, 0
      %p84 = por %p82, %p83
      %p85 = scmp.ne.s32.totalorder %s71, %s72
      %p86 = scmp.eq.s32.totalorder %s24, 2
      %p87 = por %p85, %p86
      %p89 = scmp.ne.s32.totalorder %s72, %s88
      %p90 = scmp.eq.s32.totalorder %s24, 0
      %p91 = por %p89, %p90
      %s93 = sadd.s32 %s92, 1
      %p96 = scmp.eq.s32.totalorder %s18, 2
      %p97 = scmp.ne.s32.totalorder %s92, %s94
      %p98 = scmp.eq.s32.totalorder %s18, 0
      %p99 = por %p97, %p98
      %p100 = scmp.ne.s32.totalorder %s92, %s94
      %p101 = scmp.eq.s32.totalorder %s23, 2
      %p102 = por %p100, %p101
      %p103 = scmp.ne.s32.totalorder %s94, %s95
      %p104 = scmp.eq.s32.totalorder %s23, 0
      %p105 = por %p103, %p104
      %p106 = scmp.ne.s32.totalorder %s94, %s95
      %p107 = scmp.eq.s32.totalorder %s24, 2
      %p108 = por %p106, %p107
      %p110 = scmp.ne.s32.totalorder %s95, %s109
      %p111 = scmp.eq.s32.totalorder %s24, 0
      %p112 = por %p110, %p111
      %s114 = sadd.s32 %s113, 1
      %p117 = scmp.eq.s32.totalorder %s18, 2
      %p118 = scmp.ne.s32.totalorder %s113, %s115
      %p119 = scmp.eq.s32.totalorder %s18, 0
      %p120 = por %p118, %p119
      %p121 = scmp.ne.s32.totalorder %s113, %s115
      %p122 = scmp.eq.s32.totalorder %s23, 2
      %p123 = por %p121, %p122
      %p124 = scmp.ne.s32.totalorder %s115, %s116
      %p125 = scmp.eq.s32.totalorder %s23, 0
      %p126 = por %p124, %p125
      %p127 = scmp.ne.s32.totalorder %s115, %s116
      %p128 = scmp.eq.s32.totalorder %s24, 2
      %p129 = por %p127, %p128
      %p131 = scmp.ne.s32.totalorder %s116, %s130
      %p132 = scmp.eq.s32.totalorder %s24, 0
      %p133 = por %p131, %p132
      %s135 = sadd.s32 %s134, 1
      %p138 = scmp.eq.s32.totalorder %s18, 2
      %p139 = scmp.ne.s32.totalorder %s134, %s136
      %p140 = scmp.eq.s32.totalorder %s18, 0
      %p141 = por %p139, %p140
      %p142 = scmp.ne.s32.totalorder %s134, %s136
      %p143 = scmp.eq.s32.totalorder %s23, 2
      %p144 = por %p142, %p143
      %p145 = scmp.ne.s32.totalorder %s136, %s137
      %p146 = scmp.eq.s32.totalorder %s23, 0
      %p147 = por %p145, %p146
      %p148 = scmp.ne.s32.totalorder %s136, %s137
      %p149 = scmp.eq.s32.totalorder %s24, 2
      %p150 = por %p148, %p149
      %p152 = scmp.ne.s32.totalorder %s137, %s151
      %p153 = scmp.eq.s32.totalorder %s24, 0
      %p154 = por %p152, %p153
      %s155 = ssub.s32 %s25, %s37
      %p156 = scmp.eq.s32.totalorder %s155, 0
      %s158 = sadd.s32 %s157, 1
      %s159 = scalar_select %p156, %s157, %s158
      %p162 = pneg %p156
      %p163 = scmp.eq.s32.totalorder %s18, 2
      %p164 = por %p162, %p163
      %p165 = scmp.ne.s32.totalorder %s157, %s160
      %p166 = scmp.eq.s32.totalorder %s18, 0
      %p167 = por %p165, %p166
      %p168 = scmp.ne.s32.totalorder %s157, %s160
      %p169 = scmp.eq.s32.totalorder %s23, 2
      %p170 = por %p168, %p169
      %p171 = scmp.ne.s32.totalorder %s160, %s161
      %p172 = scmp.eq.s32.totalorder %s23, 0
      %p173 = por %p171, %p172
      %p174 = scmp.ne.s32.totalorder %s160, %s161
      %p175 = scmp.eq.s32.totalorder %s24, 2
      %p176 = por %p174, %p175
      %p178 = scmp.ne.s32.totalorder %s161, %s177
      %p179 = scmp.eq.s32.totalorder %s24, 0
      %p180 = por %p178, %p179
      %p181 = scmp.le.s32.totalorder 1, %s18
      %p182 = scmp.lt.s32.totalorder %s18, 4
      %p183 = pnand %p181, %p182
      %p184 = pneg %p183
      // Predicated region
      $region9: #{simplenet_forward.1} parent=5 // pred_check
        _
      $region10: #{simplenet_forward.1} parent=5 // pred_check_branch
        %186 = sbr.rel (%p183) target = $region12
      $region11: #{simplenet_forward.1} parent=5 // pred_region
        %s187 = ssub.s32 %s18, 1
        // Predicated region
        $region13: #{simplenet_forward.1} parent=11 // pred_check
          %p188 = pneg %p105
        $region14: #{simplenet_forward.1} parent=11 // pred_check_branch
          %190 = sbr.rel (%p188) target = $region16
        $region15: #{simplenet_forward.1} parent=11 // pred_region
          %s192 = ssub.s32 32, 32
          %193 = vsyncadd [#allocation6], %s192
          %s195 = sshll.u32 [#allocation7], 4
          %s196 = int_to_ptr.vmem [resolvable:$true] %s195
          %198 = dma.hbm_to_vmem [thread:$0]  %s2, 32, %s196, [#allocation6]
        $region16: #{simplenet_forward.1} parent=11 // pred_fallthru
          _
        // Predicated region
        $region17: #{simplenet_forward.1} parent=11 // pred_check
          %p199 = pneg %p126
        $region18: #{simplenet_forward.1} parent=11 // pred_check_branch
          %201 = sbr.rel (%p199) target = $region20
        $region19: #{simplenet_forward.1} parent=11 // pred_region
          _
        $region20: #{simplenet_forward.1} parent=11 // pred_fallthru
          _
        // Predicated region
        $region21: #{simplenet_forward.1} parent=11 // pred_check
          %p202 = pneg %p147
        $region22: #{simplenet_forward.1} parent=11 // pred_check_branch
          %204 = sbr.rel (%p202) target = $region24
        $region23: #{simplenet_forward.1} parent=11 // pred_region
          %s206 = ssub.s32 16, 16
          %207 = vsyncadd [#allocation9], %s206
          %s209 = sshll.u32 [#allocation8], 4
          %s210 = int_to_ptr.vmem [resolvable:$true] %s209
          %212 = dma.hbm_to_vmem [thread:$0]  %s4, 16, %s210, [#allocation9]
        $region24: #{simplenet_forward.1} parent=11 // pred_fallthru
          _
      $region12: #{simplenet_forward.1} parent=5 // pred_fallthru
        _
      %p213 = scmp.lt.s32.totalorder %s18, 3
      // Predicated region
      $region25: #{simplenet_forward.1} parent=5 // pred_check
        %p214 = pneg %p213
      $region26: #{simplenet_forward.1} parent=5 // pred_check_branch
        %216 = sbr.rel (%p214) target = $region28
      $region27: #{simplenet_forward.1} parent=5 // pred_region
        // Predicated region
        $region29: #{simplenet_forward.1} parent=27 // pred_check
          %p217 = pneg %p52
        $region30: #{simplenet_forward.1} parent=27 // pred_check_branch
          %219 = sbr.rel (%p217) target = $region32
        $region31: #{simplenet_forward.1} parent=27 // pred_region
          %s220 = sand.u32 %s42, 1
          %s221 = scalar_lea.sflag [#allocation4], %s220
          %s222 = sand.u32 %s42, 1
          %s223 = smul.addr %s222, 6912
          %s224 = scalar_lea.vmem [#allocation3], %s223
          %s225 = smul.u32 32, %s25
          %s226 = smul.u32 27, %s26
          %s228 = ssub.s32 110592, 110592
          %229 = vsyncadd %s221, %s228
          %s230 = smul.addr %s225, 81
          %s231 = sadd.s32 %s226, %s230
          %s232 = smul.addr %s231, 128
          %s233 = scalar_lea.hbm %s0, %s232
          %s234 = sshll.u32 %s224, 4
          %s235 = int_to_ptr.vmem [resolvable:$true] %s234
          %240 = dma.hbm_to_vmem [thread:$0]  %s233, 110592, %s235, %s221, 10368, 3456, 216
        $region32: #{simplenet_forward.1} parent=27 // pred_fallthru
          _
        // Predicated region
        $region33: #{simplenet_forward.1} parent=27 // pred_check
          %p241 = pneg %p78
        $region34: #{simplenet_forward.1} parent=27 // pred_check_branch
          %243 = sbr.rel (%p241) target = $region36
        $region35: #{simplenet_forward.1} parent=27 // pred_region
          %s244 = sand.u32 %s18, 1
          %s245 = scalar_lea.sflag [#allocation6], %s244
          %s246 = sand.u32 %s68, 1
          %s247 = smul.addr %s246, 3456
          %s248 = scalar_lea.vmem [#allocation5], %s247
          %s249 = smul.u32 432, %s26
          %s251 = ssub.s32 55296, 55296
          %252 = vsyncadd %s245, %s251
          %s253 = smul.addr %s249, 2
          %s254 = smul.addr %s253, 64
          %s255 = scalar_lea.hbm %s1, %s254
          %s256 = sshll.u32 %s248, 4
          %s257 = int_to_ptr.vmem [resolvable:$true] %s256
          %262 = dma.hbm_to_vmem [thread:$0]  %s255, 55296, %s257, %s245, 128, 128, 8
        $region36: #{simplenet_forward.1} parent=27 // pred_fallthru
          _
      $region28: #{simplenet_forward.1} parent=5 // pred_fallthru
        _
      %p263 = scmp.le.s32.totalorder 1, %s18
      %p264 = scmp.lt.s32.totalorder %s18, 4
      %p265 = pnand %p263, %p264
      %p266 = pneg %p265
      // Predicated region
      $region37: #{simplenet_forward.1} parent=5 // pred_check
        _
      $region38: #{simplenet_forward.1} parent=5 // pred_check_branch
        %268 = sbr.rel (%p265) target = $region40
      $region39: #{simplenet_forward.1} parent=5 // pred_region
        %s269 = ssub.s32 %s18, 1
        %s270 = sand.u32 %s45, 1
        %s271 = scalar_lea.sflag [#allocation4], %s270
        %s272 = sand.u32 %s45, 1
        %s273 = smul.addr %s272, 6912
        %s274 = scalar_lea.vmem [#allocation3], %s273
        // Predicated region
        $region41: #{simplenet_forward.1} parent=39 // pred_check
          %p275 = pneg %p58
        $region42: #{simplenet_forward.1} parent=39 // pred_check_branch
          %277 = sbr.rel (%p275) target = $region44
        $region43: #{simplenet_forward.1} parent=39 // pred_region
          %278 = dma.done %s271, 110592
        $region44: #{simplenet_forward.1} parent=39 // pred_fallthru
          _
        %s279 = sand.u32 %s23, 1
        %s280 = scalar_lea.sflag [#allocation6], %s279
        %s281 = sand.u32 %s71, 1
        %s282 = smul.addr %s281, 3456
        %s283 = scalar_lea.vmem [#allocation5], %s282
        // Predicated region
        $region45: #{simplenet_forward.1} parent=39 // pred_check
          %p284 = pneg %p84
        $region46: #{simplenet_forward.1} parent=39 // pred_check_branch
          %286 = sbr.rel (%p284) target = $region48
        $region47: #{simplenet_forward.1} parent=39 // pred_region
          %287 = dma.done %s280, 55296
        $region48: #{simplenet_forward.1} parent=39 // pred_fallthru
          _
        // Predicated region
        $region49: #{simplenet_forward.1} parent=39 // pred_check
          %p288 = pneg %p105
        $region50: #{simplenet_forward.1} parent=39 // pred_check_branch
          %290 = sbr.rel (%p288) target = $region52
        $region51: #{simplenet_forward.1} parent=39 // pred_region
          %291 = dma.done [#allocation6], 32
        $region52: #{simplenet_forward.1} parent=39 // pred_fallthru
          _
        // Predicated region
        $region53: #{simplenet_forward.1} parent=39 // pred_check
          %p292 = pneg %p147
        $region54: #{simplenet_forward.1} parent=39 // pred_check_branch
          %294 = sbr.rel (%p292) target = $region56
        $region55: #{simplenet_forward.1} parent=39 // pred_region
          %295 = dma.done [#allocation9], 16
        $region56: #{simplenet_forward.1} parent=39 // pred_fallthru
          _
        %s296 = sand.u32 %s45, 1
        %s297 = scalar_lea.sflag [#allocation4], %s296
        %s298 = sand.u32 %s45, 1
        %s299 = smul.addr %s298, 6912
        %s300 = scalar_lea.vmem [#allocation3], %s299
        %p301 = pneg %p58
        %p302 = pneg %p55
        %s303 = sand.u32 %s23, 1
        %s304 = scalar_lea.sflag [#allocation6], %s303
        %s305 = sand.u32 %s71, 1
        %s306 = smul.addr %s305, 3456
        %s307 = scalar_lea.vmem [#allocation5], %s306
        %p308 = pneg %p84
        %p309 = pneg %p81
        %p310 = pneg %p105
        %p311 = pneg %p102
        %p312 = pneg %p126
        %p313 = pneg %p123
        %p314 = pneg %p147
        %p315 = pneg %p144
        %p316 = pneg %p173
        %p317 = pneg %p170
        %s318 = smul.u32 32, %s27
        %p319 = scmp.lt.s32.totalorder %s318, 31
        %s320 = scalar_select %p319, %s318, 31
        %s321 = smul.addr %s320, 8
        %s322 = scalar_lea.vmem %s5, %s321
        %s323 = smul.u32 32, %s27
        %s324 = smul.u32 27, %s28
        %s325 = smul.u32 432, %s28
        %s326 = smul.u32 32, %s27
        %p327 = scmp.lt.s32.totalorder %s326, 31
        %s328 = scalar_select %p327, %s326, 31
        %s329 = smul.addr %s328, 8
        %s330 = scalar_lea.vmem %s5, %s329
        %s331 = smul.u32 32, %s27
        %p333 = scmp.eq.s32.totalorder %s28, 0
        // Predicated region
        $region57: #{simplenet_forward.1} parent=39 // pred_check
          %p334 = pneg %p333
        $region58: #{simplenet_forward.1} parent=39 // pred_check_branch
          %336 = sbr.rel (%p334) target = $region60
        $region59: #{simplenet_forward.1} parent=39 // pred_region
          %v337 = vld [vmem:[#allocation7] sm:$0x3]
          %v339 = vlaneseq
          %v340 = vshrl.u32 %v339, 7
          %v341 = vsub.s32 0, %v340
          %v342 = vrot.slane %v337, %v341
          %v343 = vlaneseq
          %v344 = vshrl.u32 %v343, 7
          %v345 = vsub.s32 1, %v344
          %v346 = vrot.slane %v337, %v345
          %v349 = vadd.f32 %v342, 0.0
          %v350 = vadd.f32 %v346, 0.0
          %351 = vst [vmem:[#allocation2] sm:$0xff] %v349
          %352 = vst [vmem:[#allocation2 + $0x8] sm:$0xff] %v350
          %353 = vst [vmem:[#allocation2 + $0x10] sm:$0xff] %v349
          %354 = vst [vmem:[#allocation2 + $0x18] sm:$0xff] %v350
          %355 = vst [vmem:[#allocation2 + $0x20] sm:$0xff] %v349
          %356 = vst [vmem:[#allocation2 + $0x28] sm:$0xff] %v350
          %357 = vst [vmem:[#allocation2 + $0x30] sm:$0xff] %v349
          %358 = vst [vmem:[#allocation2 + $0x38] sm:$0xff] %v350
          %359 = vst [vmem:[#allocation2 + $0x40] sm:$0xff] %v349
          %360 = vst [vmem:[#allocation2 + $0x48] sm:$0xff] %v350
          %361 = vst [vmem:[#allocation2 + $0x50] sm:$0xff] %v349
          %362 = vst [vmem:[#allocation2 + $0x58] sm:$0xff] %v350
          %363 = vst [vmem:[#allocation2 + $0x60] sm:$0xff] %v349
          %364 = vst [vmem:[#allocation2 + $0x68] sm:$0xff] %v350
          %365 = vst [vmem:[#allocation2 + $0x70] sm:$0xff] %v349
          %366 = vst [vmem:[#allocation2 + $0x78] sm:$0xff] %v350
          %367 = vst [vmem:[#allocation2 + $0x80] sm:$0xff] %v349
          %368 = vst [vmem:[#allocation2 + $0x88] sm:$0xff] %v350
          %369 = vst [vmem:[#allocation2 + $0x90] sm:$0xff] %v349
          %370 = vst [vmem:[#allocation2 + $0x98] sm:$0xff] %v350
          %371 = vst [vmem:[#allocation2 + $0xa0] sm:$0xff] %v349
          %372 = vst [vmem:[#allocation2 + $0xa8] sm:$0xff] %v350
          %373 = vst [vmem:[#allocation2 + $0xb0] sm:$0xff] %v349
          %374 = vst [vmem:[#allocation2 + $0xb8] sm:$0xff] %v350
          %375 = vst [vmem:[#allocation2 + $0xc0] sm:$0xff] %v349
          %376 = vst [vmem:[#allocation2 + $0xc8] sm:$0xff] %v350
          %377 = vst [vmem:[#allocation2 + $0xd0] sm:$0xff] %v349
          %378 = vst [vmem:[#allocation2 + $0xd8] sm:$0xff] %v350
          %379 = vst [vmem:[#allocation2 + $0xe0] sm:$0xff] %v349
          %380 = vst [vmem:[#allocation2 + $0xe8] sm:$0xff] %v350
          %381 = vst [vmem:[#allocation2 + $0xf0] sm:$0xff] %v349
          %382 = vst [vmem:[#allocation2 + $0xf8] sm:$0xff] %v350
          %383 = vst [vmem:[#allocation2 + $0x100] sm:$0xff] %v349
          %384 = vst [vmem:[#allocation2 + $0x108] sm:$0xff] %v350
          %385 = vst [vmem:[#allocation2 + $0x110] sm:$0xff] %v349
          %386 = vst [vmem:[#allocation2 + $0x118] sm:$0xff] %v350
          %387 = vst [vmem:[#allocation2 + $0x120] sm:$0xff] %v349
          %388 = vst [vmem:[#allocation2 + $0x128] sm:$0xff] %v350
          %389 = vst [vmem:[#allocation2 + $0x130] sm:$0xff] %v349
          %390 = vst [vmem:[#allocation2 + $0x138] sm:$0xff] %v350
          %391 = vst [vmem:[#allocation2 + $0x140] sm:$0xff] %v349
          %392 = vst [vmem:[#allocation2 + $0x148] sm:$0xff] %v350
          %393 = vst [vmem:[#allocation2 + $0x150] sm:$0xff] %v349
          %394 = vst [vmem:[#allocation2 + $0x158] sm:$0xff] %v350
          %395 = vst [vmem:[#allocation2 + $0x160] sm:$0xff] %v349
          %396 = vst [vmem:[#allocation2 + $0x168] sm:$0xff] %v350
          %397 = vst [vmem:[#allocation2 + $0x170] sm:$0xff] %v349
          %398 = vst [vmem:[#allocation2 + $0x178] sm:$0xff] %v350
          %399 = vst [vmem:[#allocation2 + $0x180] sm:$0xff] %v349
          %400 = vst [vmem:[#allocation2 + $0x188] sm:$0xff] %v350
          %401 = vst [vmem:[#allocation2 + $0x190] sm:$0xff] %v349
          %402 = vst [vmem:[#allocation2 + $0x198] sm:$0xff] %v350
          %403 = vst [vmem:[#allocation2 + $0x1a0] sm:$0xff] %v349
          %404 = vst [vmem:[#allocation2 + $0x1a8] sm:$0xff] %v350
          %405 = vst [vmem:[#allocation2 + $0x1b0] sm:$0xff] %v349
          %406 = vst [vmem:[#allocation2 + $0x1b8] sm:$0xff] %v350
          %407 = vst [vmem:[#allocation2 + $0x1c0] sm:$0xff] %v349
          %408 = vst [vmem:[#allocation2 + $0x1c8] sm:$0xff] %v350
          %409 = vst [vmem:[#allocation2 + $0x1d0] sm:$0xff] %v349
          %410 = vst [vmem:[#allocation2 + $0x1d8] sm:$0xff] %v350
          %411 = vst [vmem:[#allocation2 + $0x1e0] sm:$0xff] %v349
          %412 = vst [vmem:[#allocation2 + $0x1e8] sm:$0xff] %v350
          %413 = vst [vmem:[#allocation2 + $0x1f0] sm:$0xff] %v349
          %414 = vst [vmem:[#allocation2 + $0x1f8] sm:$0xff] %v350
        $region60: #{simplenet_forward.1} parent=39 // pred_fallthru
          _
        %v415 = vld [vmem:[%s274] sm:$0xff]
        %v416 = vld [vmem:[%s274 + $0x8] sm:$0xff]
        %v417 = vld [vmem:[%s274 + $0x10] sm:$0xff]
        %v418 = vld [vmem:[%s274 + $0x18] sm:$0xff]
        %v419 = vld [vmem:[%s274 + $0x20] sm:$0xff]
        %v420 = vld [vmem:[%s274 + $0x28] sm:$0xff]
        %v421 = vld [vmem:[%s274 + $0x30] sm:$0xff]
        %v422 = vld [vmem:[%s274 + $0x38] sm:$0xff]
        %v423 = vld [vmem:[%s274 + $0x40] sm:$0xff]
        %v424 = vld [vmem:[%s274 + $0x48] sm:$0xff]
        %v425 = vld [vmem:[%s274 + $0x50] sm:$0xff]
        %v426 = vld [vmem:[%s274 + $0x58] sm:$0xff]
        %v427 = vld [vmem:[%s274 + $0x60] sm:$0xff]
        %v428 = vld [vmem:[%s274 + $0x68] sm:$0xff]
        %v429 = vld [vmem:[%s274 + $0x70] sm:$0xff]
        %v430 = vld [vmem:[%s274 + $0x78] sm:$0xff]
        %v431 = vld [vmem:[%s274 + $0x80] sm:$0xff]
        %v432 = vld [vmem:[%s274 + $0x88] sm:$0xff]
        %v433 = vld [vmem:[%s274 + $0x90] sm:$0xff]
        %v434 = vld [vmem:[%s274 + $0x98] sm:$0xff]
        %v435 = vld [vmem:[%s274 + $0xa0] sm:$0xff]
        %v436 = vld [vmem:[%s274 + $0xa8] sm:$0xff]
        %v437 = vld [vmem:[%s274 + $0xb0] sm:$0xff]
        %v438 = vld [vmem:[%s274 + $0xb8] sm:$0xff]
        %v439 = vld [vmem:[%s274 + $0xc0] sm:$0xff]
        %v440 = vld [vmem:[%s274 + $0xc8] sm:$0xff]
        %v441 = vld [vmem:[%s274 + $0xd0] sm:$0xff]
        %v442 = vld [vmem:[%s274 + $0xd8] sm:$0xff]
        %v443 = vld [vmem:[%s274 + $0xe0] sm:$0xff]
        %v444 = vld [vmem:[%s274 + $0xe8] sm:$0xff]
        %v445 = vld [vmem:[%s274 + $0xf0] sm:$0xff]
        %v446 = vld [vmem:[%s274 + $0xf8] sm:$0xff]
        %v447 = vld [vmem:[%s274 + $0x100] sm:$0xff]
        %v448 = vld [vmem:[%s274 + $0x108] sm:$0xff]
        %v449 = vld [vmem:[%s274 + $0x110] sm:$0xff]
        %v450 = vld [vmem:[%s274 + $0x118] sm:$0xff]
        %v451 = vld [vmem:[%s274 + $0x120] sm:$0xff]
        %v452 = vld [vmem:[%s274 + $0x128] sm:$0xff]
        %v453 = vld [vmem:[%s274 + $0x130] sm:$0xff]
        %v454 = vld [vmem:[%s274 + $0x138] sm:$0xff]
        %v455 = vld [vmem:[%s274 + $0x140] sm:$0xff]
        %v456 = vld [vmem:[%s274 + $0x148] sm:$0xff]
        %v457 = vld [vmem:[%s274 + $0x150] sm:$0xff]
        %v458 = vld [vmem:[%s274 + $0x158] sm:$0xff]
        %v459 = vld [vmem:[%s274 + $0x160] sm:$0xff]
        %v460 = vld [vmem:[%s274 + $0x168] sm:$0xff]
        %v461 = vld [vmem:[%s274 + $0x170] sm:$0xff]
        %v462 = vld [vmem:[%s274 + $0x178] sm:$0xff]
        %v463 = vld [vmem:[%s274 + $0x180] sm:$0xff]
        %v464 = vld [vmem:[%s274 + $0x188] sm:$0xff]
        %v465 = vld [vmem:[%s274 + $0x190] sm:$0xff]
        %v466 = vld [vmem:[%s274 + $0x198] sm:$0xff]
        %v467 = vld [vmem:[%s274 + $0x1a0] sm:$0xff]
        %v468 = vld [vmem:[%s274 + $0x1a8] sm:$0xff]
        %v469 = vld [vmem:[%s274 + $0x1b0] sm:$0xff]
        %v470 = vld [vmem:[%s274 + $0x1b8] sm:$0xff]
        %v471 = vld [vmem:[%s274 + $0x1c0] sm:$0xff]
        %v472 = vld [vmem:[%s274 + $0x1c8] sm:$0xff]
        %v473 = vld [vmem:[%s274 + $0x1d0] sm:$0xff]
        %v474 = vld [vmem:[%s274 + $0x1d8] sm:$0xff]
        %v475 = vld [vmem:[%s274 + $0x1e0] sm:$0xff]
        %v476 = vld [vmem:[%s274 + $0x1e8] sm:$0xff]
        %v477 = vld [vmem:[%s274 + $0x1f0] sm:$0xff]
        %v478 = vld [vmem:[%s274 + $0x1f8] sm:$0xff]
        %v479 = vld [vmem:[%s274 + $0x200] sm:$0xff]
        %v480 = vld [vmem:[%s274 + $0x208] sm:$0xff]
        %v481 = vld [vmem:[%s274 + $0x210] sm:$0xff]
        %v482 = vld [vmem:[%s274 + $0x218] sm:$0xff]
        %v483 = vld [vmem:[%s274 + $0x220] sm:$0xff]
        %v484 = vld [vmem:[%s274 + $0x228] sm:$0xff]
        %v485 = vld [vmem:[%s274 + $0x230] sm:$0xff]
        %v486 = vld [vmem:[%s274 + $0x238] sm:$0xff]
        %v487 = vld [vmem:[%s274 + $0x240] sm:$0xff]
        %v488 = vld [vmem:[%s274 + $0x248] sm:$0xff]
        %v489 = vld [vmem:[%s274 + $0x250] sm:$0xff]
        %v490 = vld [vmem:[%s274 + $0x258] sm:$0xff]
        %v491 = vld [vmem:[%s274 + $0x260] sm:$0xff]
        %v492 = vld [vmem:[%s274 + $0x268] sm:$0xff]
        %v493 = vld [vmem:[%s274 + $0x270] sm:$0xff]
        %v494 = vld [vmem:[%s274 + $0x278] sm:$0xff]
        %v495 = vld [vmem:[%s274 + $0x280] sm:$0xff]
        %v496 = vld [vmem:[%s274 + $0x288] sm:$0xff]
        %v497 = vld [vmem:[%s274 + $0x290] sm:$0xff]
        %v498 = vld [vmem:[%s274 + $0x298] sm:$0xff]
        %v499 = vld [vmem:[%s274 + $0x2a0] sm:$0xff]
        %v500 = vld [vmem:[%s274 + $0x2a8] sm:$0xff]
        %v501 = vld [vmem:[%s274 + $0x2b0] sm:$0xff]
        %v502 = vld [vmem:[%s274 + $0x2b8] sm:$0xff]
        %v503 = vld [vmem:[%s274 + $0x2c0] sm:$0xff]
        %v504 = vld [vmem:[%s274 + $0x2c8] sm:$0xff]
        %v505 = vld [vmem:[%s274 + $0x2d0] sm:$0xff]
        %v506 = vld [vmem:[%s274 + $0x2d8] sm:$0xff]
        %v507 = vld [vmem:[%s274 + $0x2e0] sm:$0xff]
        %v508 = vld [vmem:[%s274 + $0x2e8] sm:$0xff]
        %v509 = vld [vmem:[%s274 + $0x2f0] sm:$0xff]
        %v510 = vld [vmem:[%s274 + $0x2f8] sm:$0xff]
        %v511 = vld [vmem:[%s274 + $0x300] sm:$0xff]
        %v512 = vld [vmem:[%s274 + $0x308] sm:$0xff]
        %v513 = vld [vmem:[%s274 + $0x310] sm:$0xff]
        %v514 = vld [vmem:[%s274 + $0x318] sm:$0xff]
        %v515 = vld [vmem:[%s274 + $0x320] sm:$0xff]
        %v516 = vld [vmem:[%s274 + $0x328] sm:$0xff]
        %v517 = vld [vmem:[%s274 + $0x330] sm:$0xff]
        %v518 = vld [vmem:[%s274 + $0x338] sm:$0xff]
        %v519 = vld [vmem:[%s274 + $0x340] sm:$0xff]
        %v520 = vld [vmem:[%s274 + $0x348] sm:$0xff]
        %v521 = vld [vmem:[%s274 + $0x350] sm:$0xff]
        %v522 = vld [vmem:[%s274 + $0x358] sm:$0xff]
        %v523 = vld [vmem:[%s274 + $0x360] sm:$0xff]
        %v524 = vld [vmem:[%s274 + $0x368] sm:$0xff]
        %v525 = vld [vmem:[%s274 + $0x370] sm:$0xff]
        %v526 = vld [vmem:[%s274 + $0x378] sm:$0xff]
        %v527 = vld [vmem:[%s274 + $0x380] sm:$0xff]
        %v528 = vld [vmem:[%s274 + $0x388] sm:$0xff]
        %v529 = vld [vmem:[%s274 + $0x390] sm:$0xff]
        %v530 = vld [vmem:[%s274 + $0x398] sm:$0xff]
        %v531 = vld [vmem:[%s274 + $0x3a0] sm:$0xff]
        %v532 = vld [vmem:[%s274 + $0x3a8] sm:$0xff]
        %v533 = vld [vmem:[%s274 + $0x3b0] sm:$0xff]
        %v534 = vld [vmem:[%s274 + $0x3b8] sm:$0xff]
        %v535 = vld [vmem:[%s274 + $0x3c0] sm:$0xff]
        %v536 = vld [vmem:[%s274 + $0x3c8] sm:$0xff]
        %v537 = vld [vmem:[%s274 + $0x3d0] sm:$0xff]
        %v538 = vld [vmem:[%s274 + $0x3d8] sm:$0xff]
        %v539 = vld [vmem:[%s274 + $0x3e0] sm:$0xff]
        %v540 = vld [vmem:[%s274 + $0x3e8] sm:$0xff]
        %v541 = vld [vmem:[%s274 + $0x3f0] sm:$0xff]
        %v542 = vld [vmem:[%s274 + $0x3f8] sm:$0xff]
        %v543 = vld [vmem:[%s274 + $0x400] sm:$0xff]
        %v544 = vld [vmem:[%s274 + $0x408] sm:$0xff]
        %v545 = vld [vmem:[%s274 + $0x410] sm:$0xff]
        %v546 = vld [vmem:[%s274 + $0x418] sm:$0xff]
        %v547 = vld [vmem:[%s274 + $0x420] sm:$0xff]
        %v548 = vld [vmem:[%s274 + $0x428] sm:$0xff]
        %v549 = vld [vmem:[%s274 + $0x430] sm:$0xff]
        %v550 = vld [vmem:[%s274 + $0x438] sm:$0xff]
        %v551 = vld [vmem:[%s274 + $0x440] sm:$0xff]
        %v552 = vld [vmem:[%s274 + $0x448] sm:$0xff]
        %v553 = vld [vmem:[%s274 + $0x450] sm:$0xff]
        %v554 = vld [vmem:[%s274 + $0x458] sm:$0xff]
        %v555 = vld [vmem:[%s274 + $0x460] sm:$0xff]
        %v556 = vld [vmem:[%s274 + $0x468] sm:$0xff]
        %v557 = vld [vmem:[%s274 + $0x470] sm:$0xff]
        %v558 = vld [vmem:[%s274 + $0x478] sm:$0xff]
        %v559 = vld [vmem:[%s274 + $0x480] sm:$0xff]
        %v560 = vld [vmem:[%s274 + $0x488] sm:$0xff]
        %v561 = vld [vmem:[%s274 + $0x490] sm:$0xff]
        %v562 = vld [vmem:[%s274 + $0x498] sm:$0xff]
        %v563 = vld [vmem:[%s274 + $0x4a0] sm:$0xff]
        %v564 = vld [vmem:[%s274 + $0x4a8] sm:$0xff]
        %v565 = vld [vmem:[%s274 + $0x4b0] sm:$0xff]
        %v566 = vld [vmem:[%s274 + $0x4b8] sm:$0xff]
        %v567 = vld [vmem:[%s274 + $0x4c0] sm:$0xff]
        %v568 = vld [vmem:[%s274 + $0x4c8] sm:$0xff]
        %v569 = vld [vmem:[%s274 + $0x4d0] sm:$0xff]
        %v570 = vld [vmem:[%s274 + $0x4d8] sm:$0xff]
        %v571 = vld [vmem:[%s274 + $0x4e0] sm:$0xff]
        %v572 = vld [vmem:[%s274 + $0x4e8] sm:$0xff]
        %v573 = vld [vmem:[%s274 + $0x4f0] sm:$0xff]
        %v574 = vld [vmem:[%s274 + $0x4f8] sm:$0xff]
        %v575 = vld [vmem:[%s274 + $0x500] sm:$0xff]
        %v576 = vld [vmem:[%s274 + $0x508] sm:$0xff]
        %v577 = vld [vmem:[%s274 + $0x510] sm:$0xff]
        %v578 = vld [vmem:[%s274 + $0x518] sm:$0xff]
        %v579 = vld [vmem:[%s274 + $0x520] sm:$0xff]
        %v580 = vld [vmem:[%s274 + $0x528] sm:$0xff]
        %v581 = vld [vmem:[%s274 + $0x530] sm:$0xff]
        %v582 = vld [vmem:[%s274 + $0x538] sm:$0xff]
        %v583 = vld [vmem:[%s274 + $0x540] sm:$0xff]
        %v584 = vld [vmem:[%s274 + $0x548] sm:$0xff]
        %v585 = vld [vmem:[%s274 + $0x550] sm:$0xff]
        %v586 = vld [vmem:[%s274 + $0x558] sm:$0xff]
        %v587 = vld [vmem:[%s274 + $0x560] sm:$0xff]
        %v588 = vld [vmem:[%s274 + $0x568] sm:$0xff]
        %v589 = vld [vmem:[%s274 + $0x570] sm:$0xff]
        %v590 = vld [vmem:[%s274 + $0x578] sm:$0xff]
        %v591 = vld [vmem:[%s274 + $0x580] sm:$0xff]
        %v592 = vld [vmem:[%s274 + $0x588] sm:$0xff]
        %v593 = vld [vmem:[%s274 + $0x590] sm:$0xff]
        %v594 = vld [vmem:[%s274 + $0x598] sm:$0xff]
        %v595 = vld [vmem:[%s274 + $0x5a0] sm:$0xff]
        %v596 = vld [vmem:[%s274 + $0x5a8] sm:$0xff]
        %v597 = vld [vmem:[%s274 + $0x5b0] sm:$0xff]
        %v598 = vld [vmem:[%s274 + $0x5b8] sm:$0xff]
        %v599 = vld [vmem:[%s274 + $0x5c0] sm:$0xff]
        %v600 = vld [vmem:[%s274 + $0x5c8] sm:$0xff]
        %v601 = vld [vmem:[%s274 + $0x5d0] sm:$0xff]
        %v602 = vld [vmem:[%s274 + $0x5d8] sm:$0xff]
        %v603 = vld [vmem:[%s274 + $0x5e0] sm:$0xff]
        %v604 = vld [vmem:[%s274 + $0x5e8] sm:$0xff]
        %v605 = vld [vmem:[%s274 + $0x5f0] sm:$0xff]
        %v606 = vld [vmem:[%s274 + $0x5f8] sm:$0xff]
        %v607 = vld [vmem:[%s274 + $0x600] sm:$0xff]
        %v608 = vld [vmem:[%s274 + $0x608] sm:$0xff]
        %v609 = vld [vmem:[%s274 + $0x610] sm:$0xff]
        %v610 = vld [vmem:[%s274 + $0x618] sm:$0xff]
        %v611 = vld [vmem:[%s274 + $0x620] sm:$0xff]
        %v612 = vld [vmem:[%s274 + $0x628] sm:$0xff]
        %v613 = vld [vmem:[%s274 + $0x630] sm:$0xff]
        %v614 = vld [vmem:[%s274 + $0x638] sm:$0xff]
        %v615 = vld [vmem:[%s274 + $0x640] sm:$0xff]
        %v616 = vld [vmem:[%s274 + $0x648] sm:$0xff]
        %v617 = vld [vmem:[%s274 + $0x650] sm:$0xff]
        %v618 = vld [vmem:[%s274 + $0x658] sm:$0xff]
        %v619 = vld [vmem:[%s274 + $0x660] sm:$0xff]
        %v620 = vld [vmem:[%s274 + $0x668] sm:$0xff]
        %v621 = vld [vmem:[%s274 + $0x670] sm:$0xff]
        %v622 = vld [vmem:[%s274 + $0x678] sm:$0xff]
        %v623 = vld [vmem:[%s274 + $0x680] sm:$0xff]
        %v624 = vld [vmem:[%s274 + $0x688] sm:$0xff]
        %v625 = vld [vmem:[%s274 + $0x690] sm:$0xff]
        %v626 = vld [vmem:[%s274 + $0x698] sm:$0xff]
        %v627 = vld [vmem:[%s274 + $0x6a0] sm:$0xff]
        %v628 = vld [vmem:[%s274 + $0x6a8] sm:$0xff]
        %v629 = vld [vmem:[%s274 + $0x6b0] sm:$0xff]
        %v630 = vld [vmem:[%s274 + $0x6b8] sm:$0xff]
        %v631 = vld [vmem:[%s274 + $0x6c0] sm:$0xff]
        %v632 = vld [vmem:[%s274 + $0x6c8] sm:$0xff]
        %v633 = vld [vmem:[%s274 + $0x6d0] sm:$0xff]
        %v634 = vld [vmem:[%s274 + $0x6d8] sm:$0xff]
        %v635 = vld [vmem:[%s274 + $0x6e0] sm:$0xff]
        %v636 = vld [vmem:[%s274 + $0x6e8] sm:$0xff]
        %v637 = vld [vmem:[%s274 + $0x6f0] sm:$0xff]
        %v638 = vld [vmem:[%s274 + $0x6f8] sm:$0xff]
        %v639 = vld [vmem:[%s274 + $0x700] sm:$0xff]
        %v640 = vld [vmem:[%s274 + $0x708] sm:$0xff]
        %v641 = vld [vmem:[%s274 + $0x710] sm:$0xff]
        %v642 = vld [vmem:[%s274 + $0x718] sm:$0xff]
        %v643 = vld [vmem:[%s274 + $0x720] sm:$0xff]
        %v644 = vld [vmem:[%s274 + $0x728] sm:$0xff]
        %v645 = vld [vmem:[%s274 + $0x730] sm:$0xff]
        %v646 = vld [vmem:[%s274 + $0x738] sm:$0xff]
        %v647 = vld [vmem:[%s274 + $0x740] sm:$0xff]
        %v648 = vld [vmem:[%s274 + $0x748] sm:$0xff]
        %v649 = vld [vmem:[%s274 + $0x750] sm:$0xff]
        %v650 = vld [vmem:[%s274 + $0x758] sm:$0xff]
        %v651 = vld [vmem:[%s274 + $0x760] sm:$0xff]
        %v652 = vld [vmem:[%s274 + $0x768] sm:$0xff]
        %v653 = vld [vmem:[%s274 + $0x770] sm:$0xff]
        %v654 = vld [vmem:[%s274 + $0x778] sm:$0xff]
        %v655 = vld [vmem:[%s274 + $0x780] sm:$0xff]
        %v656 = vld [vmem:[%s274 + $0x788] sm:$0xff]
        %v657 = vld [vmem:[%s274 + $0x790] sm:$0xff]
        %v658 = vld [vmem:[%s274 + $0x798] sm:$0xff]
        %v659 = vld [vmem:[%s274 + $0x7a0] sm:$0xff]
        %v660 = vld [vmem:[%s274 + $0x7a8] sm:$0xff]
        %v661 = vld [vmem:[%s274 + $0x7b0] sm:$0xff]
        %v662 = vld [vmem:[%s274 + $0x7b8] sm:$0xff]
        %v663 = vld [vmem:[%s274 + $0x7c0] sm:$0xff]
        %v664 = vld [vmem:[%s274 + $0x7c8] sm:$0xff]
        %v665 = vld [vmem:[%s274 + $0x7d0] sm:$0xff]
        %v666 = vld [vmem:[%s274 + $0x7d8] sm:$0xff]
        %v667 = vld [vmem:[%s274 + $0x7e0] sm:$0xff]
        %v668 = vld [vmem:[%s274 + $0x7e8] sm:$0xff]
        %v669 = vld [vmem:[%s274 + $0x7f0] sm:$0xff]
        %v670 = vld [vmem:[%s274 + $0x7f8] sm:$0xff]
        %v671 = vld [vmem:[%s274 + $0x800] sm:$0xff]
        %v672 = vld [vmem:[%s274 + $0x808] sm:$0xff]
        %v673 = vld [vmem:[%s274 + $0x810] sm:$0xff]
        %v674 = vld [vmem:[%s274 + $0x818] sm:$0xff]
        %v675 = vld [vmem:[%s274 + $0x820] sm:$0xff]
        %v676 = vld [vmem:[%s274 + $0x828] sm:$0xff]
        %v677 = vld [vmem:[%s274 + $0x830] sm:$0xff]
        %v678 = vld [vmem:[%s274 + $0x838] sm:$0xff]
        %v679 = vld [vmem:[%s274 + $0x840] sm:$0xff]
        %v680 = vld [vmem:[%s274 + $0x848] sm:$0xff]
        %v681 = vld [vmem:[%s274 + $0x850] sm:$0xff]
        %v682 = vld [vmem:[%s274 + $0x858] sm:$0xff]
        %v683 = vld [vmem:[%s274 + $0x860] sm:$0xff]
        %v684 = vld [vmem:[%s274 + $0x868] sm:$0xff]
        %v685 = vld [vmem:[%s274 + $0x870] sm:$0xff]
        %v686 = vld [vmem:[%s274 + $0x878] sm:$0xff]
        %v687 = vld [vmem:[%s274 + $0x880] sm:$0xff]
        %v688 = vld [vmem:[%s274 + $0x888] sm:$0xff]
        %v689 = vld [vmem:[%s274 + $0x890] sm:$0xff]
        %v690 = vld [vmem:[%s274 + $0x898] sm:$0xff]
        %v691 = vld [vmem:[%s274 + $0x8a0] sm:$0xff]
        %v692 = vld [vmem:[%s274 + $0x8a8] sm:$0xff]
        %v693 = vld [vmem:[%s274 + $0x8b0] sm:$0xff]
        %v694 = vld [vmem:[%s274 + $0x8b8] sm:$0xff]
        %v695 = vld [vmem:[%s274 + $0x8c0] sm:$0xff]
        %v696 = vld [vmem:[%s274 + $0x8c8] sm:$0xff]
        %v697 = vld [vmem:[%s274 + $0x8d0] sm:$0xff]
        %v698 = vld [vmem:[%s274 + $0x8d8] sm:$0xff]
        %v699 = vld [vmem:[%s274 + $0x8e0] sm:$0xff]
        %v700 = vld [vmem:[%s274 + $0x8e8] sm:$0xff]
        %v701 = vld [vmem:[%s274 + $0x8f0] sm:$0xff]
        %v702 = vld [vmem:[%s274 + $0x8f8] sm:$0xff]
        %v703 = vld [vmem:[%s274 + $0x900] sm:$0xff]
        %v704 = vld [vmem:[%s274 + $0x908] sm:$0xff]
        %v705 = vld [vmem:[%s274 + $0x910] sm:$0xff]
        %v706 = vld [vmem:[%s274 + $0x918] sm:$0xff]
        %v707 = vld [vmem:[%s274 + $0x920] sm:$0xff]
        %v708 = vld [vmem:[%s274 + $0x928] sm:$0xff]
        %v709 = vld [vmem:[%s274 + $0x930] sm:$0xff]
        %v710 = vld [vmem:[%s274 + $0x938] sm:$0xff]
        %v711 = vld [vmem:[%s274 + $0x940] sm:$0xff]
        %v712 = vld [vmem:[%s274 + $0x948] sm:$0xff]
        %v713 = vld [vmem:[%s274 + $0x950] sm:$0xff]
        %v714 = vld [vmem:[%s274 + $0x958] sm:$0xff]
        %v715 = vld [vmem:[%s274 + $0x960] sm:$0xff]
        %v716 = vld [vmem:[%s274 + $0x968] sm:$0xff]
        %v717 = vld [vmem:[%s274 + $0x970] sm:$0xff]
        %v718 = vld [vmem:[%s274 + $0x978] sm:$0xff]
        %v719 = vld [vmem:[%s274 + $0x980] sm:$0xff]
        %v720 = vld [vmem:[%s274 + $0x988] sm:$0xff]
        %v721 = vld [vmem:[%s274 + $0x990] sm:$0xff]
        %v722 = vld [vmem:[%s274 + $0x998] sm:$0xff]
        %v723 = vld [vmem:[%s274 + $0x9a0] sm:$0xff]
        %v724 = vld [vmem:[%s274 + $0x9a8] sm:$0xff]
        %v725 = vld [vmem:[%s274 + $0x9b0] sm:$0xff]
        %v726 = vld [vmem:[%s274 + $0x9b8] sm:$0xff]
        %v727 = vld [vmem:[%s274 + $0x9c0] sm:$0xff]
        %v728 = vld [vmem:[%s274 + $0x9c8] sm:$0xff]
        %v729 = vld [vmem:[%s274 + $0x9d0] sm:$0xff]
        %v730 = vld [vmem:[%s274 + $0x9d8] sm:$0xff]
        %v731 = vld [vmem:[%s274 + $0x9e0] sm:$0xff]
        %v732 = vld [vmem:[%s274 + $0x9e8] sm:$0xff]
        %v733 = vld [vmem:[%s274 + $0x9f0] sm:$0xff]
        %v734 = vld [vmem:[%s274 + $0x9f8] sm:$0xff]
        %v735 = vld [vmem:[%s274 + $0xa00] sm:$0xff]
        %v736 = vld [vmem:[%s274 + $0xa08] sm:$0xff]
        %v737 = vld [vmem:[%s274 + $0xa10] sm:$0xff]
        %v738 = vld [vmem:[%s274 + $0xa18] sm:$0xff]
        %v739 = vld [vmem:[%s274 + $0xa20] sm:$0xff]
        %v740 = vld [vmem:[%s274 + $0xa28] sm:$0xff]
        %v741 = vld [vmem:[%s274 + $0xa30] sm:$0xff]
        %v742 = vld [vmem:[%s274 + $0xa38] sm:$0xff]
        %v743 = vld [vmem:[%s274 + $0xa40] sm:$0xff]
        %v744 = vld [vmem:[%s274 + $0xa48] sm:$0xff]
        %v745 = vld [vmem:[%s274 + $0xa50] sm:$0xff]
        %v746 = vld [vmem:[%s274 + $0xa58] sm:$0xff]
        %v747 = vld [vmem:[%s274 + $0xa60] sm:$0xff]
        %v748 = vld [vmem:[%s274 + $0xa68] sm:$0xff]
        %v749 = vld [vmem:[%s274 + $0xa70] sm:$0xff]
        %v750 = vld [vmem:[%s274 + $0xa78] sm:$0xff]
        %v751 = vld [vmem:[%s274 + $0xa80] sm:$0xff]
        %v752 = vld [vmem:[%s274 + $0xa88] sm:$0xff]
        %v753 = vld [vmem:[%s274 + $0xa90] sm:$0xff]
        %v754 = vld [vmem:[%s274 + $0xa98] sm:$0xff]
        %v755 = vld [vmem:[%s274 + $0xaa0] sm:$0xff]
        %v756 = vld [vmem:[%s274 + $0xaa8] sm:$0xff]
        %v757 = vld [vmem:[%s274 + $0xab0] sm:$0xff]
        %v758 = vld [vmem:[%s274 + $0xab8] sm:$0xff]
        %v759 = vld [vmem:[%s274 + $0xac0] sm:$0xff]
        %v760 = vld [vmem:[%s274 + $0xac8] sm:$0xff]
        %v761 = vld [vmem:[%s274 + $0xad0] sm:$0xff]
        %v762 = vld [vmem:[%s274 + $0xad8] sm:$0xff]
        %v763 = vld [vmem:[%s274 + $0xae0] sm:$0xff]
        %v764 = vld [vmem:[%s274 + $0xae8] sm:$0xff]
        %v765 = vld [vmem:[%s274 + $0xaf0] sm:$0xff]
        %v766 = vld [vmem:[%s274 + $0xaf8] sm:$0xff]
        %v767 = vld [vmem:[%s274 + $0xb00] sm:$0xff]
        %v768 = vld [vmem:[%s274 + $0xb08] sm:$0xff]
        %v769 = vld [vmem:[%s274 + $0xb10] sm:$0xff]
        %v770 = vld [vmem:[%s274 + $0xb18] sm:$0xff]
        %v771 = vld [vmem:[%s274 + $0xb20] sm:$0xff]
        %v772 = vld [vmem:[%s274 + $0xb28] sm:$0xff]
        %v773 = vld [vmem:[%s274 + $0xb30] sm:$0xff]
        %v774 = vld [vmem:[%s274 + $0xb38] sm:$0xff]
        %v775 = vld [vmem:[%s274 + $0xb40] sm:$0xff]
        %v776 = vld [vmem:[%s274 + $0xb48] sm:$0xff]
        %v777 = vld [vmem:[%s274 + $0xb50] sm:$0xff]
        %v778 = vld [vmem:[%s274 + $0xb58] sm:$0xff]
        %v779 = vld [vmem:[%s274 + $0xb60] sm:$0xff]
        %v780 = vld [vmem:[%s274 + $0xb68] sm:$0xff]
        %v781 = vld [vmem:[%s274 + $0xb70] sm:$0xff]
        %v782 = vld [vmem:[%s274 + $0xb78] sm:$0xff]
        %v783 = vld [vmem:[%s274 + $0xb80] sm:$0xff]
        %v784 = vld [vmem:[%s274 + $0xb88] sm:$0xff]
        %v785 = vld [vmem:[%s274 + $0xb90] sm:$0xff]
        %v786 = vld [vmem:[%s274 + $0xb98] sm:$0xff]
        %v787 = vld [vmem:[%s274 + $0xba0] sm:$0xff]
        %v788 = vld [vmem:[%s274 + $0xba8] sm:$0xff]
        %v789 = vld [vmem:[%s274 + $0xbb0] sm:$0xff]
        %v790 = vld [vmem:[%s274 + $0xbb8] sm:$0xff]
        %v791 = vld [vmem:[%s274 + $0xbc0] sm:$0xff]
        %v792 = vld [vmem:[%s274 + $0xbc8] sm:$0xff]
        %v793 = vld [vmem:[%s274 + $0xbd0] sm:$0xff]
        %v794 = vld [vmem:[%s274 + $0xbd8] sm:$0xff]
        %v795 = vld [vmem:[%s274 + $0xbe0] sm:$0xff]
        %v796 = vld [vmem:[%s274 + $0xbe8] sm:$0xff]
        %v797 = vld [vmem:[%s274 + $0xbf0] sm:$0xff]
        %v798 = vld [vmem:[%s274 + $0xbf8] sm:$0xff]
        %v799 = vld [vmem:[%s274 + $0xc00] sm:$0xff]
        %v800 = vld [vmem:[%s274 + $0xc08] sm:$0xff]
        %v801 = vld [vmem:[%s274 + $0xc10] sm:$0xff]
        %v802 = vld [vmem:[%s274 + $0xc18] sm:$0xff]
        %v803 = vld [vmem:[%s274 + $0xc20] sm:$0xff]
        %v804 = vld [vmem:[%s274 + $0xc28] sm:$0xff]
        %v805 = vld [vmem:[%s274 + $0xc30] sm:$0xff]
        %v806 = vld [vmem:[%s274 + $0xc38] sm:$0xff]
        %v807 = vld [vmem:[%s274 + $0xc40] sm:$0xff]
        %v808 = vld [vmem:[%s274 + $0xc48] sm:$0xff]
        %v809 = vld [vmem:[%s274 + $0xc50] sm:$0xff]
        %v810 = vld [vmem:[%s274 + $0xc58] sm:$0xff]
        %v811 = vld [vmem:[%s274 + $0xc60] sm:$0xff]
        %v812 = vld [vmem:[%s274 + $0xc68] sm:$0xff]
        %v813 = vld [vmem:[%s274 + $0xc70] sm:$0xff]
        %v814 = vld [vmem:[%s274 + $0xc78] sm:$0xff]
        %v815 = vld [vmem:[%s274 + $0xc80] sm:$0xff]
        %v816 = vld [vmem:[%s274 + $0xc88] sm:$0xff]
        %v817 = vld [vmem:[%s274 + $0xc90] sm:$0xff]
        %v818 = vld [vmem:[%s274 + $0xc98] sm:$0xff]
        %v819 = vld [vmem:[%s274 + $0xca0] sm:$0xff]
        %v820 = vld [vmem:[%s274 + $0xca8] sm:$0xff]
        %v821 = vld [vmem:[%s274 + $0xcb0] sm:$0xff]
        %v822 = vld [vmem:[%s274 + $0xcb8] sm:$0xff]
        %v823 = vld [vmem:[%s274 + $0xcc0] sm:$0xff]
        %v824 = vld [vmem:[%s274 + $0xcc8] sm:$0xff]
        %v825 = vld [vmem:[%s274 + $0xcd0] sm:$0xff]
        %v826 = vld [vmem:[%s274 + $0xcd8] sm:$0xff]
        %v827 = vld [vmem:[%s274 + $0xce0] sm:$0xff]
        %v828 = vld [vmem:[%s274 + $0xce8] sm:$0xff]
        %v829 = vld [vmem:[%s274 + $0xcf0] sm:$0xff]
        %v830 = vld [vmem:[%s274 + $0xcf8] sm:$0xff]
        %v831 = vld [vmem:[%s274 + $0xd00] sm:$0xff]
        %v832 = vld [vmem:[%s274 + $0xd08] sm:$0xff]
        %v833 = vld [vmem:[%s274 + $0xd10] sm:$0xff]
        %v834 = vld [vmem:[%s274 + $0xd18] sm:$0xff]
        %v835 = vld [vmem:[%s274 + $0xd20] sm:$0xff]
        %v836 = vld [vmem:[%s274 + $0xd28] sm:$0xff]
        %v837 = vld [vmem:[%s274 + $0xd30] sm:$0xff]
        %v838 = vld [vmem:[%s274 + $0xd38] sm:$0xff]
        %v839 = vld [vmem:[%s274 + $0xd40] sm:$0xff]
        %v840 = vld [vmem:[%s274 + $0xd48] sm:$0xff]
        %v841 = vld [vmem:[%s274 + $0xd50] sm:$0xff]
        %v842 = vld [vmem:[%s274 + $0xd58] sm:$0xff]
        %v843 = vld [vmem:[%s274 + $0xd60] sm:$0xff]
        %v844 = vld [vmem:[%s274 + $0xd68] sm:$0xff]
        %v845 = vld [vmem:[%s274 + $0xd70] sm:$0xff]
        %v846 = vld [vmem:[%s274 + $0xd78] sm:$0xff]
        %v847 = vld [vmem:[%s274 + $0xd80] sm:$0xff]
        %v848 = vld [vmem:[%s274 + $0xd88] sm:$0xff]
        %v849 = vld [vmem:[%s274 + $0xd90] sm:$0xff]
        %v850 = vld [vmem:[%s274 + $0xd98] sm:$0xff]
        %v851 = vld [vmem:[%s274 + $0xda0] sm:$0xff]
        %v852 = vld [vmem:[%s274 + $0xda8] sm:$0xff]
        %v853 = vld [vmem:[%s274 + $0xdb0] sm:$0xff]
        %v854 = vld [vmem:[%s274 + $0xdb8] sm:$0xff]
        %v855 = vld [vmem:[%s274 + $0xdc0] sm:$0xff]
        %v856 = vld [vmem:[%s274 + $0xdc8] sm:$0xff]
        %v857 = vld [vmem:[%s274 + $0xdd0] sm:$0xff]
        %v858 = vld [vmem:[%s274 + $0xdd8] sm:$0xff]
        %v859 = vld [vmem:[%s274 + $0xde0] sm:$0xff]
        %v860 = vld [vmem:[%s274 + $0xde8] sm:$0xff]
        %v861 = vld [vmem:[%s274 + $0xdf0] sm:$0xff]
        %v862 = vld [vmem:[%s274 + $0xdf8] sm:$0xff]
        %v863 = vld [vmem:[%s274 + $0xe00] sm:$0xff]
        %v864 = vld [vmem:[%s274 + $0xe08] sm:$0xff]
        %v865 = vld [vmem:[%s274 + $0xe10] sm:$0xff]
        %v866 = vld [vmem:[%s274 + $0xe18] sm:$0xff]
        %v867 = vld [vmem:[%s274 + $0xe20] sm:$0xff]
        %v868 = vld [vmem:[%s274 + $0xe28] sm:$0xff]
        %v869 = vld [vmem:[%s274 + $0xe30] sm:$0xff]
        %v870 = vld [vmem:[%s274 + $0xe38] sm:$0xff]
        %v871 = vld [vmem:[%s274 + $0xe40] sm:$0xff]
        %v872 = vld [vmem:[%s274 + $0xe48] sm:$0xff]
        %v873 = vld [vmem:[%s274 + $0xe50] sm:$0xff]
        %v874 = vld [vmem:[%s274 + $0xe58] sm:$0xff]
        %v875 = vld [vmem:[%s274 + $0xe60] sm:$0xff]
        %v876 = vld [vmem:[%s274 + $0xe68] sm:$0xff]
        %v877 = vld [vmem:[%s274 + $0xe70] sm:$0xff]
        %v878 = vld [vmem:[%s274 + $0xe78] sm:$0xff]
        %v879 = vld [vmem:[%s274 + $0xe80] sm:$0xff]
        %v880 = vld [vmem:[%s274 + $0xe88] sm:$0xff]
        %v881 = vld [vmem:[%s274 + $0xe90] sm:$0xff]
        %v882 = vld [vmem:[%s274 + $0xe98] sm:$0xff]
        %v883 = vld [vmem:[%s274 + $0xea0] sm:$0xff]
        %v884 = vld [vmem:[%s274 + $0xea8] sm:$0xff]
        %v885 = vld [vmem:[%s274 + $0xeb0] sm:$0xff]
        %v886 = vld [vmem:[%s274 + $0xeb8] sm:$0xff]
        %v887 = vld [vmem:[%s274 + $0xec0] sm:$0xff]
        %v888 = vld [vmem:[%s274 + $0xec8] sm:$0xff]
        %v889 = vld [vmem:[%s274 + $0xed0] sm:$0xff]
        %v890 = vld [vmem:[%s274 + $0xed8] sm:$0xff]
        %v891 = vld [vmem:[%s274 + $0xee0] sm:$0xff]
        %v892 = vld [vmem:[%s274 + $0xee8] sm:$0xff]
        %v893 = vld [vmem:[%s274 + $0xef0] sm:$0xff]
        %v894 = vld [vmem:[%s274 + $0xef8] sm:$0xff]
        %v895 = vld [vmem:[%s274 + $0xf00] sm:$0xff]
        %v896 = vld [vmem:[%s274 + $0xf08] sm:$0xff]
        %v897 = vld [vmem:[%s274 + $0xf10] sm:$0xff]
        %v898 = vld [vmem:[%s274 + $0xf18] sm:$0xff]
        %v899 = vld [vmem:[%s274 + $0xf20] sm:$0xff]
        %v900 = vld [vmem:[%s274 + $0xf28] sm:$0xff]
        %v901 = vld [vmem:[%s274 + $0xf30] sm:$0xff]
        %v902 = vld [vmem:[%s274 + $0xf38] sm:$0xff]
        %v903 = vld [vmem:[%s274 + $0xf40] sm:$0xff]
        %v904 = vld [vmem:[%s274 + $0xf48] sm:$0xff]
        %v905 = vld [vmem:[%s274 + $0xf50] sm:$0xff]
        %v906 = vld [vmem:[%s274 + $0xf58] sm:$0xff]
        %v907 = vld [vmem:[%s274 + $0xf60] sm:$0xff]
        %v908 = vld [vmem:[%s274 + $0xf68] sm:$0xff]
        %v909 = vld [vmem:[%s274 + $0xf70] sm:$0xff]
        %v910 = vld [vmem:[%s274 + $0xf78] sm:$0xff]
        %v911 = vld [vmem:[%s274 + $0xf80] sm:$0xff]
        %v912 = vld [vmem:[%s274 + $0xf88] sm:$0xff]
        %v913 = vld [vmem:[%s274 + $0xf90] sm:$0xff]
        %v914 = vld [vmem:[%s274 + $0xf98] sm:$0xff]
        %v915 = vld [vmem:[%s274 + $0xfa0] sm:$0xff]
        %v916 = vld [vmem:[%s274 + $0xfa8] sm:$0xff]
        %v917 = vld [vmem:[%s274 + $0xfb0] sm:$0xff]
        %v918 = vld [vmem:[%s274 + $0xfb8] sm:$0xff]
        %v919 = vld [vmem:[%s274 + $0xfc0] sm:$0xff]
        %v920 = vld [vmem:[%s274 + $0xfc8] sm:$0xff]
        %v921 = vld [vmem:[%s274 + $0xfd0] sm:$0xff]
        %v922 = vld [vmem:[%s274 + $0xfd8] sm:$0xff]
        %v923 = vld [vmem:[%s274 + $0xfe0] sm:$0xff]
        %v924 = vld [vmem:[%s274 + $0xfe8] sm:$0xff]
        %v925 = vld [vmem:[%s274 + $0xff0] sm:$0xff]
        %v926 = vld [vmem:[%s274 + $0xff8] sm:$0xff]
        %v927 = vld [vmem:[%s274 + $0x1000] sm:$0xff]
        %v928 = vld [vmem:[%s274 + $0x1008] sm:$0xff]
        %v929 = vld [vmem:[%s274 + $0x1010] sm:$0xff]
        %v930 = vld [vmem:[%s274 + $0x1018] sm:$0xff]
        %v931 = vld [vmem:[%s274 + $0x1020] sm:$0xff]
        %v932 = vld [vmem:[%s274 + $0x1028] sm:$0xff]
        %v933 = vld [vmem:[%s274 + $0x1030] sm:$0xff]
        %v934 = vld [vmem:[%s274 + $0x1038] sm:$0xff]
        %v935 = vld [vmem:[%s274 + $0x1040] sm:$0xff]
        %v936 = vld [vmem:[%s274 + $0x1048] sm:$0xff]
        %v937 = vld [vmem:[%s274 + $0x1050] sm:$0xff]
        %v938 = vld [vmem:[%s274 + $0x1058] sm:$0xff]
        %v939 = vld [vmem:[%s274 + $0x1060] sm:$0xff]
        %v940 = vld [vmem:[%s274 + $0x1068] sm:$0xff]
        %v941 = vld [vmem:[%s274 + $0x1070] sm:$0xff]
        %v942 = vld [vmem:[%s274 + $0x1078] sm:$0xff]
        %v943 = vld [vmem:[%s274 + $0x1080] sm:$0xff]
        %v944 = vld [vmem:[%s274 + $0x1088] sm:$0xff]
        %v945 = vld [vmem:[%s274 + $0x1090] sm:$0xff]
        %v946 = vld [vmem:[%s274 + $0x1098] sm:$0xff]
        %v947 = vld [vmem:[%s274 + $0x10a0] sm:$0xff]
        %v948 = vld [vmem:[%s274 + $0x10a8] sm:$0xff]
        %v949 = vld [vmem:[%s274 + $0x10b0] sm:$0xff]
        %v950 = vld [vmem:[%s274 + $0x10b8] sm:$0xff]
        %v951 = vld [vmem:[%s274 + $0x10c0] sm:$0xff]
        %v952 = vld [vmem:[%s274 + $0x10c8] sm:$0xff]
        %v953 = vld [vmem:[%s274 + $0x10d0] sm:$0xff]
        %v954 = vld [vmem:[%s274 + $0x10d8] sm:$0xff]
        %v955 = vld [vmem:[%s274 + $0x10e0] sm:$0xff]
        %v956 = vld [vmem:[%s274 + $0x10e8] sm:$0xff]
        %v957 = vld [vmem:[%s274 + $0x10f0] sm:$0xff]
        %v958 = vld [vmem:[%s274 + $0x10f8] sm:$0xff]
        %v959 = vld [vmem:[%s274 + $0x1100] sm:$0xff]
        %v960 = vld [vmem:[%s274 + $0x1108] sm:$0xff]
        %v961 = vld [vmem:[%s274 + $0x1110] sm:$0xff]
        %v962 = vld [vmem:[%s274 + $0x1118] sm:$0xff]
        %v963 = vld [vmem:[%s274 + $0x1120] sm:$0xff]
        %v964 = vld [vmem:[%s274 + $0x1128] sm:$0xff]
        %v965 = vld [vmem:[%s274 + $0x1130] sm:$0xff]
        %v966 = vld [vmem:[%s274 + $0x1138] sm:$0xff]
        %v967 = vld [vmem:[%s274 + $0x1140] sm:$0xff]
        %v968 = vld [vmem:[%s274 + $0x1148] sm:$0xff]
        %v969 = vld [vmem:[%s274 + $0x1150] sm:$0xff]
        %v970 = vld [vmem:[%s274 + $0x1158] sm:$0xff]
        %v971 = vld [vmem:[%s274 + $0x1160] sm:$0xff]
        %v972 = vld [vmem:[%s274 + $0x1168] sm:$0xff]
        %v973 = vld [vmem:[%s274 + $0x1170] sm:$0xff]
        %v974 = vld [vmem:[%s274 + $0x1178] sm:$0xff]
        %v975 = vld [vmem:[%s274 + $0x1180] sm:$0xff]
        %v976 = vld [vmem:[%s274 + $0x1188] sm:$0xff]
        %v977 = vld [vmem:[%s274 + $0x1190] sm:$0xff]
        %v978 = vld [vmem:[%s274 + $0x1198] sm:$0xff]
        %v979 = vld [vmem:[%s274 + $0x11a0] sm:$0xff]
        %v980 = vld [vmem:[%s274 + $0x11a8] sm:$0xff]
        %v981 = vld [vmem:[%s274 + $0x11b0] sm:$0xff]
        %v982 = vld [vmem:[%s274 + $0x11b8] sm:$0xff]
        %v983 = vld [vmem:[%s274 + $0x11c0] sm:$0xff]
        %v984 = vld [vmem:[%s274 + $0x11c8] sm:$0xff]
        %v985 = vld [vmem:[%s274 + $0x11d0] sm:$0xff]
        %v986 = vld [vmem:[%s274 + $0x11d8] sm:$0xff]
        %v987 = vld [vmem:[%s274 + $0x11e0] sm:$0xff]
        %v988 = vld [vmem:[%s274 + $0x11e8] sm:$0xff]
        %v989 = vld [vmem:[%s274 + $0x11f0] sm:$0xff]
        %v990 = vld [vmem:[%s274 + $0x11f8] sm:$0xff]
        %v991 = vld [vmem:[%s274 + $0x1200] sm:$0xff]
        %v992 = vld [vmem:[%s274 + $0x1208] sm:$0xff]
        %v993 = vld [vmem:[%s274 + $0x1210] sm:$0xff]
        %v994 = vld [vmem:[%s274 + $0x1218] sm:$0xff]
        %v995 = vld [vmem:[%s274 + $0x1220] sm:$0xff]
        %v996 = vld [vmem:[%s274 + $0x1228] sm:$0xff]
        %v997 = vld [vmem:[%s274 + $0x1230] sm:$0xff]
        %v998 = vld [vmem:[%s274 + $0x1238] sm:$0xff]
        %v999 = vld [vmem:[%s274 + $0x1240] sm:$0xff]
        %v1000 = vld [vmem:[%s274 + $0x1248] sm:$0xff]
        %v1001 = vld [vmem:[%s274 + $0x1250] sm:$0xff]
        %v1002 = vld [vmem:[%s274 + $0x1258] sm:$0xff]
        %v1003 = vld [vmem:[%s274 + $0x1260] sm:$0xff]
        %v1004 = vld [vmem:[%s274 + $0x1268] sm:$0xff]
        %v1005 = vld [vmem:[%s274 + $0x1270] sm:$0xff]
        %v1006 = vld [vmem:[%s274 + $0x1278] sm:$0xff]
        %v1007 = vld [vmem:[%s274 + $0x1280] sm:$0xff]
        %v1008 = vld [vmem:[%s274 + $0x1288] sm:$0xff]
        %v1009 = vld [vmem:[%s274 + $0x1290] sm:$0xff]
        %v1010 = vld [vmem:[%s274 + $0x1298] sm:$0xff]
        %v1011 = vld [vmem:[%s274 + $0x12a0] sm:$0xff]
        %v1012 = vld [vmem:[%s274 + $0x12a8] sm:$0xff]
        %v1013 = vld [vmem:[%s274 + $0x12b0] sm:$0xff]
        %v1014 = vld [vmem:[%s274 + $0x12b8] sm:$0xff]
        %v1015 = vld [vmem:[%s274 + $0x12c0] sm:$0xff]
        %v1016 = vld [vmem:[%s274 + $0x12c8] sm:$0xff]
        %v1017 = vld [vmem:[%s274 + $0x12d0] sm:$0xff]
        %v1018 = vld [vmem:[%s274 + $0x12d8] sm:$0xff]
        %v1019 = vld [vmem:[%s274 + $0x12e0] sm:$0xff]
        %v1020 = vld [vmem:[%s274 + $0x12e8] sm:$0xff]
        %v1021 = vld [vmem:[%s274 + $0x12f0] sm:$0xff]
        %v1022 = vld [vmem:[%s274 + $0x12f8] sm:$0xff]
        %v1023 = vld [vmem:[%s274 + $0x1300] sm:$0xff]
        %v1024 = vld [vmem:[%s274 + $0x1308] sm:$0xff]
        %v1025 = vld [vmem:[%s274 + $0x1310] sm:$0xff]
        %v1026 = vld [vmem:[%s274 + $0x1318] sm:$0xff]
        %v1027 = vld [vmem:[%s274 + $0x1320] sm:$0xff]
        %v1028 = vld [vmem:[%s274 + $0x1328] sm:$0xff]
        %v1029 = vld [vmem:[%s274 + $0x1330] sm:$0xff]
        %v1030 = vld [vmem:[%s274 + $0x1338] sm:$0xff]
        %v1031 = vld [vmem:[%s274 + $0x1340] sm:$0xff]
        %v1032 = vld [vmem:[%s274 + $0x1348] sm:$0xff]
        %v1033 = vld [vmem:[%s274 + $0x1350] sm:$0xff]
        %v1034 = vld [vmem:[%s274 + $0x1358] sm:$0xff]
        %v1035 = vld [vmem:[%s274 + $0x1360] sm:$0xff]
        %v1036 = vld [vmem:[%s274 + $0x1368] sm:$0xff]
        %v1037 = vld [vmem:[%s274 + $0x1370] sm:$0xff]
        %v1038 = vld [vmem:[%s274 + $0x1378] sm:$0xff]
        %v1039 = vld [vmem:[%s274 + $0x1380] sm:$0xff]
        %v1040 = vld [vmem:[%s274 + $0x1388] sm:$0xff]
        %v1041 = vld [vmem:[%s274 + $0x1390] sm:$0xff]
        %v1042 = vld [vmem:[%s274 + $0x1398] sm:$0xff]
        %v1043 = vld [vmem:[%s274 + $0x13a0] sm:$0xff]
        %v1044 = vld [vmem:[%s274 + $0x13a8] sm:$0xff]
        %v1045 = vld [vmem:[%s274 + $0x13b0] sm:$0xff]
        %v1046 = vld [vmem:[%s274 + $0x13b8] sm:$0xff]
        %v1047 = vld [vmem:[%s274 + $0x13c0] sm:$0xff]
        %v1048 = vld [vmem:[%s274 + $0x13c8] sm:$0xff]
        %v1049 = vld [vmem:[%s274 + $0x13d0] sm:$0xff]
        %v1050 = vld [vmem:[%s274 + $0x13d8] sm:$0xff]
        %v1051 = vld [vmem:[%s274 + $0x13e0] sm:$0xff]
        %v1052 = vld [vmem:[%s274 + $0x13e8] sm:$0xff]
        %v1053 = vld [vmem:[%s274 + $0x13f0] sm:$0xff]
        %v1054 = vld [vmem:[%s274 + $0x13f8] sm:$0xff]
        %v1055 = vld [vmem:[%s274 + $0x1400] sm:$0xff]
        %v1056 = vld [vmem:[%s274 + $0x1408] sm:$0xff]
        %v1057 = vld [vmem:[%s274 + $0x1410] sm:$0xff]
        %v1058 = vld [vmem:[%s274 + $0x1418] sm:$0xff]
        %v1059 = vld [vmem:[%s274 + $0x1420] sm:$0xff]
        %v1060 = vld [vmem:[%s274 + $0x1428] sm:$0xff]
        %v1061 = vld [vmem:[%s274 + $0x1430] sm:$0xff]
        %v1062 = vld [vmem:[%s274 + $0x1438] sm:$0xff]
        %v1063 = vld [vmem:[%s274 + $0x1440] sm:$0xff]
        %v1064 = vld [vmem:[%s274 + $0x1448] sm:$0xff]
        %v1065 = vld [vmem:[%s274 + $0x1450] sm:$0xff]
        %v1066 = vld [vmem:[%s274 + $0x1458] sm:$0xff]
        %v1067 = vld [vmem:[%s274 + $0x1460] sm:$0xff]
        %v1068 = vld [vmem:[%s274 + $0x1468] sm:$0xff]
        %v1069 = vld [vmem:[%s274 + $0x1470] sm:$0xff]
        %v1070 = vld [vmem:[%s274 + $0x1478] sm:$0xff]
        %v1071 = vld [vmem:[%s274 + $0x1480] sm:$0xff]
        %v1072 = vld [vmem:[%s274 + $0x1488] sm:$0xff]
        %v1073 = vld [vmem:[%s274 + $0x1490] sm:$0xff]
        %v1074 = vld [vmem:[%s274 + $0x1498] sm:$0xff]
        %v1075 = vld [vmem:[%s274 + $0x14a0] sm:$0xff]
        %v1076 = vld [vmem:[%s274 + $0x14a8] sm:$0xff]
        %v1077 = vld [vmem:[%s274 + $0x14b0] sm:$0xff]
        %v1078 = vld [vmem:[%s274 + $0x14b8] sm:$0xff]
        %v1079 = vld [vmem:[%s274 + $0x14c0] sm:$0xff]
        %v1080 = vld [vmem:[%s274 + $0x14c8] sm:$0xff]
        %v1081 = vld [vmem:[%s274 + $0x14d0] sm:$0xff]
        %v1082 = vld [vmem:[%s274 + $0x14d8] sm:$0xff]
        %v1083 = vld [vmem:[%s274 + $0x14e0] sm:$0xff]
        %v1084 = vld [vmem:[%s274 + $0x14e8] sm:$0xff]
        %v1085 = vld [vmem:[%s274 + $0x14f0] sm:$0xff]
        %v1086 = vld [vmem:[%s274 + $0x14f8] sm:$0xff]
        %v1087 = vld [vmem:[%s274 + $0x1500] sm:$0xff]
        %v1088 = vld [vmem:[%s274 + $0x1508] sm:$0xff]
        %v1089 = vld [vmem:[%s274 + $0x1510] sm:$0xff]
        %v1090 = vld [vmem:[%s274 + $0x1518] sm:$0xff]
        %v1091 = vld [vmem:[%s274 + $0x1520] sm:$0xff]
        %v1092 = vld [vmem:[%s274 + $0x1528] sm:$0xff]
        %v1093 = vld [vmem:[%s274 + $0x1530] sm:$0xff]
        %v1094 = vld [vmem:[%s274 + $0x1538] sm:$0xff]
        %v1095 = vld [vmem:[%s274 + $0x1540] sm:$0xff]
        %v1096 = vld [vmem:[%s274 + $0x1548] sm:$0xff]
        %v1097 = vld [vmem:[%s274 + $0x1550] sm:$0xff]
        %v1098 = vld [vmem:[%s274 + $0x1558] sm:$0xff]
        %v1099 = vld [vmem:[%s274 + $0x1560] sm:$0xff]
        %v1100 = vld [vmem:[%s274 + $0x1568] sm:$0xff]
        %v1101 = vld [vmem:[%s274 + $0x1570] sm:$0xff]
        %v1102 = vld [vmem:[%s274 + $0x1578] sm:$0xff]
        %v1103 = vld [vmem:[%s274 + $0x1580] sm:$0xff]
        %v1104 = vld [vmem:[%s274 + $0x1588] sm:$0xff]
        %v1105 = vld [vmem:[%s274 + $0x1590] sm:$0xff]
        %v1106 = vld [vmem:[%s274 + $0x1598] sm:$0xff]
        %v1107 = vld [vmem:[%s274 + $0x15a0] sm:$0xff]
        %v1108 = vld [vmem:[%s274 + $0x15a8] sm:$0xff]
        %v1109 = vld [vmem:[%s274 + $0x15b0] sm:$0xff]
        %v1110 = vld [vmem:[%s274 + $0x15b8] sm:$0xff]
        %v1111 = vld [vmem:[%s274 + $0x15c0] sm:$0xff]
        %v1112 = vld [vmem:[%s274 + $0x15c8] sm:$0xff]
        %v1113 = vld [vmem:[%s274 + $0x15d0] sm:$0xff]
        %v1114 = vld [vmem:[%s274 + $0x15d8] sm:$0xff]
        %v1115 = vld [vmem:[%s274 + $0x15e0] sm:$0xff]
        %v1116 = vld [vmem:[%s274 + $0x15e8] sm:$0xff]
        %v1117 = vld [vmem:[%s274 + $0x15f0] sm:$0xff]
        %v1118 = vld [vmem:[%s274 + $0x15f8] sm:$0xff]
        %v1119 = vld [vmem:[%s274 + $0x1600] sm:$0xff]
        %v1120 = vld [vmem:[%s274 + $0x1608] sm:$0xff]
        %v1121 = vld [vmem:[%s274 + $0x1610] sm:$0xff]
        %v1122 = vld [vmem:[%s274 + $0x1618] sm:$0xff]
        %v1123 = vld [vmem:[%s274 + $0x1620] sm:$0xff]
        %v1124 = vld [vmem:[%s274 + $0x1628] sm:$0xff]
        %v1125 = vld [vmem:[%s274 + $0x1630] sm:$0xff]
        %v1126 = vld [vmem:[%s274 + $0x1638] sm:$0xff]
        %v1127 = vld [vmem:[%s274 + $0x1640] sm:$0xff]
        %v1128 = vld [vmem:[%s274 + $0x1648] sm:$0xff]
        %v1129 = vld [vmem:[%s274 + $0x1650] sm:$0xff]
        %v1130 = vld [vmem:[%s274 + $0x1658] sm:$0xff]
        %v1131 = vld [vmem:[%s274 + $0x1660] sm:$0xff]
        %v1132 = vld [vmem:[%s274 + $0x1668] sm:$0xff]
        %v1133 = vld [vmem:[%s274 + $0x1670] sm:$0xff]
        %v1134 = vld [vmem:[%s274 + $0x1678] sm:$0xff]
        %v1135 = vld [vmem:[%s274 + $0x1680] sm:$0xff]
        %v1136 = vld [vmem:[%s274 + $0x1688] sm:$0xff]
        %v1137 = vld [vmem:[%s274 + $0x1690] sm:$0xff]
        %v1138 = vld [vmem:[%s274 + $0x1698] sm:$0xff]
        %v1139 = vld [vmem:[%s274 + $0x16a0] sm:$0xff]
        %v1140 = vld [vmem:[%s274 + $0x16a8] sm:$0xff]
        %v1141 = vld [vmem:[%s274 + $0x16b0] sm:$0xff]
        %v1142 = vld [vmem:[%s274 + $0x16b8] sm:$0xff]
        %v1143 = vld [vmem:[%s274 + $0x16c0] sm:$0xff]
        %v1144 = vld [vmem:[%s274 + $0x16c8] sm:$0xff]
        %v1145 = vld [vmem:[%s274 + $0x16d0] sm:$0xff]
        %v1146 = vld [vmem:[%s274 + $0x16d8] sm:$0xff]
        %v1147 = vld [vmem:[%s274 + $0x16e0] sm:$0xff]
        %v1148 = vld [vmem:[%s274 + $0x16e8] sm:$0xff]
        %v1149 = vld [vmem:[%s274 + $0x16f0] sm:$0xff]
        %v1150 = vld [vmem:[%s274 + $0x16f8] sm:$0xff]
        %v1151 = vld [vmem:[%s274 + $0x1700] sm:$0xff]
        %v1152 = vld [vmem:[%s274 + $0x1708] sm:$0xff]
        %v1153 = vld [vmem:[%s274 + $0x1710] sm:$0xff]
        %v1154 = vld [vmem:[%s274 + $0x1718] sm:$0xff]
        %v1155 = vld [vmem:[%s274 + $0x1720] sm:$0xff]
        %v1156 = vld [vmem:[%s274 + $0x1728] sm:$0xff]
        %v1157 = vld [vmem:[%s274 + $0x1730] sm:$0xff]
        %v1158 = vld [vmem:[%s274 + $0x1738] sm:$0xff]
        %v1159 = vld [vmem:[%s274 + $0x1740] sm:$0xff]
        %v1160 = vld [vmem:[%s274 + $0x1748] sm:$0xff]
        %v1161 = vld [vmem:[%s274 + $0x1750] sm:$0xff]
        %v1162 = vld [vmem:[%s274 + $0x1758] sm:$0xff]
        %v1163 = vld [vmem:[%s274 + $0x1760] sm:$0xff]
        %v1164 = vld [vmem:[%s274 + $0x1768] sm:$0xff]
        %v1165 = vld [vmem:[%s274 + $0x1770] sm:$0xff]
        %v1166 = vld [vmem:[%s274 + $0x1778] sm:$0xff]
        %v1167 = vld [vmem:[%s274 + $0x1780] sm:$0xff]
        %v1168 = vld [vmem:[%s274 + $0x1788] sm:$0xff]
        %v1169 = vld [vmem:[%s274 + $0x1790] sm:$0xff]
        %v1170 = vld [vmem:[%s274 + $0x1798] sm:$0xff]
        %v1171 = vld [vmem:[%s274 + $0x17a0] sm:$0xff]
        %v1172 = vld [vmem:[%s274 + $0x17a8] sm:$0xff]
        %v1173 = vld [vmem:[%s274 + $0x17b0] sm:$0xff]
        %v1174 = vld [vmem:[%s274 + $0x17b8] sm:$0xff]
        %v1175 = vld [vmem:[%s274 + $0x17c0] sm:$0xff]
        %v1176 = vld [vmem:[%s274 + $0x17c8] sm:$0xff]
        %v1177 = vld [vmem:[%s274 + $0x17d0] sm:$0xff]
        %v1178 = vld [vmem:[%s274 + $0x17d8] sm:$0xff]
        %v1179 = vld [vmem:[%s274 + $0x17e0] sm:$0xff]
        %v1180 = vld [vmem:[%s274 + $0x17e8] sm:$0xff]
        %v1181 = vld [vmem:[%s274 + $0x17f0] sm:$0xff]
        %v1182 = vld [vmem:[%s274 + $0x17f8] sm:$0xff]
        %v1183 = vld [vmem:[%s274 + $0x1800] sm:$0xff]
        %v1184 = vld [vmem:[%s274 + $0x1808] sm:$0xff]
        %v1185 = vld [vmem:[%s274 + $0x1810] sm:$0xff]
        %v1186 = vld [vmem:[%s274 + $0x1818] sm:$0xff]
        %v1187 = vld [vmem:[%s274 + $0x1820] sm:$0xff]
        %v1188 = vld [vmem:[%s274 + $0x1828] sm:$0xff]
        %v1189 = vld [vmem:[%s274 + $0x1830] sm:$0xff]
        %v1190 = vld [vmem:[%s274 + $0x1838] sm:$0xff]
        %v1191 = vld [vmem:[%s274 + $0x1840] sm:$0xff]
        %v1192 = vld [vmem:[%s274 + $0x1848] sm:$0xff]
        %v1193 = vld [vmem:[%s274 + $0x1850] sm:$0xff]
        %v1194 = vld [vmem:[%s274 + $0x1858] sm:$0xff]
        %v1195 = vld [vmem:[%s274 + $0x1860] sm:$0xff]
        %v1196 = vld [vmem:[%s274 + $0x1868] sm:$0xff]
        %v1197 = vld [vmem:[%s274 + $0x1870] sm:$0xff]
        %v1198 = vld [vmem:[%s274 + $0x1878] sm:$0xff]
        %v1199 = vld [vmem:[%s274 + $0x1880] sm:$0xff]
        %v1200 = vld [vmem:[%s274 + $0x1888] sm:$0xff]
        %v1201 = vld [vmem:[%s274 + $0x1890] sm:$0xff]
        %v1202 = vld [vmem:[%s274 + $0x1898] sm:$0xff]
        %v1203 = vld [vmem:[%s274 + $0x18a0] sm:$0xff]
        %v1204 = vld [vmem:[%s274 + $0x18a8] sm:$0xff]
        %v1205 = vld [vmem:[%s274 + $0x18b0] sm:$0xff]
        %v1206 = vld [vmem:[%s274 + $0x18b8] sm:$0xff]
        %v1207 = vld [vmem:[%s274 + $0x18c0] sm:$0xff]
        %v1208 = vld [vmem:[%s274 + $0x18c8] sm:$0xff]
        %v1209 = vld [vmem:[%s274 + $0x18d0] sm:$0xff]
        %v1210 = vld [vmem:[%s274 + $0x18d8] sm:$0xff]
        %v1211 = vld [vmem:[%s274 + $0x18e0] sm:$0xff]
        %v1212 = vld [vmem:[%s274 + $0x18e8] sm:$0xff]
        %v1213 = vld [vmem:[%s274 + $0x18f0] sm:$0xff]
        %v1214 = vld [vmem:[%s274 + $0x18f8] sm:$0xff]
        %v1215 = vld [vmem:[%s274 + $0x1900] sm:$0xff]
        %v1216 = vld [vmem:[%s274 + $0x1908] sm:$0xff]
        %v1217 = vld [vmem:[%s274 + $0x1910] sm:$0xff]
        %v1218 = vld [vmem:[%s274 + $0x1918] sm:$0xff]
        %v1219 = vld [vmem:[%s274 + $0x1920] sm:$0xff]
        %v1220 = vld [vmem:[%s274 + $0x1928] sm:$0xff]
        %v1221 = vld [vmem:[%s274 + $0x1930] sm:$0xff]
        %v1222 = vld [vmem:[%s274 + $0x1938] sm:$0xff]
        %v1223 = vld [vmem:[%s274 + $0x1940] sm:$0xff]
        %v1224 = vld [vmem:[%s274 + $0x1948] sm:$0xff]
        %v1225 = vld [vmem:[%s274 + $0x1950] sm:$0xff]
        %v1226 = vld [vmem:[%s274 + $0x1958] sm:$0xff]
        %v1227 = vld [vmem:[%s274 + $0x1960] sm:$0xff]
        %v1228 = vld [vmem:[%s274 + $0x1968] sm:$0xff]
        %v1229 = vld [vmem:[%s274 + $0x1970] sm:$0xff]
        %v1230 = vld [vmem:[%s274 + $0x1978] sm:$0xff]
        %v1231 = vld [vmem:[%s274 + $0x1980] sm:$0xff]
        %v1232 = vld [vmem:[%s274 + $0x1988] sm:$0xff]
        %v1233 = vld [vmem:[%s274 + $0x1990] sm:$0xff]
        %v1234 = vld [vmem:[%s274 + $0x1998] sm:$0xff]
        %v1235 = vld [vmem:[%s274 + $0x19a0] sm:$0xff]
        %v1236 = vld [vmem:[%s274 + $0x19a8] sm:$0xff]
        %v1237 = vld [vmem:[%s274 + $0x19b0] sm:$0xff]
        %v1238 = vld [vmem:[%s274 + $0x19b8] sm:$0xff]
        %v1239 = vld [vmem:[%s274 + $0x19c0] sm:$0xff]
        %v1240 = vld [vmem:[%s274 + $0x19c8] sm:$0xff]
        %v1241 = vld [vmem:[%s274 + $0x19d0] sm:$0xff]
        %v1242 = vld [vmem:[%s274 + $0x19d8] sm:$0xff]
        %v1243 = vld [vmem:[%s274 + $0x19e0] sm:$0xff]
        %v1244 = vld [vmem:[%s274 + $0x19e8] sm:$0xff]
        %v1245 = vld [vmem:[%s274 + $0x19f0] sm:$0xff]
        %v1246 = vld [vmem:[%s274 + $0x19f8] sm:$0xff]
        %v1247 = vld [vmem:[%s274 + $0x1a00] sm:$0xff]
        %v1248 = vld [vmem:[%s274 + $0x1a08] sm:$0xff]
        %v1249 = vld [vmem:[%s274 + $0x1a10] sm:$0xff]
        %v1250 = vld [vmem:[%s274 + $0x1a18] sm:$0xff]
        %v1251 = vld [vmem:[%s274 + $0x1a20] sm:$0xff]
        %v1252 = vld [vmem:[%s274 + $0x1a28] sm:$0xff]
        %v1253 = vld [vmem:[%s274 + $0x1a30] sm:$0xff]
        %v1254 = vld [vmem:[%s274 + $0x1a38] sm:$0xff]
        %v1255 = vld [vmem:[%s274 + $0x1a40] sm:$0xff]
        %v1256 = vld [vmem:[%s274 + $0x1a48] sm:$0xff]
        %v1257 = vld [vmem:[%s274 + $0x1a50] sm:$0xff]
        %v1258 = vld [vmem:[%s274 + $0x1a58] sm:$0xff]
        %v1259 = vld [vmem:[%s274 + $0x1a60] sm:$0xff]
        %v1260 = vld [vmem:[%s274 + $0x1a68] sm:$0xff]
        %v1261 = vld [vmem:[%s274 + $0x1a70] sm:$0xff]
        %v1262 = vld [vmem:[%s274 + $0x1a78] sm:$0xff]
        %v1263 = vld [vmem:[%s274 + $0x1a80] sm:$0xff]
        %v1264 = vld [vmem:[%s274 + $0x1a88] sm:$0xff]
        %v1265 = vld [vmem:[%s274 + $0x1a90] sm:$0xff]
        %v1266 = vld [vmem:[%s274 + $0x1a98] sm:$0xff]
        %v1267 = vld [vmem:[%s274 + $0x1aa0] sm:$0xff]
        %v1268 = vld [vmem:[%s274 + $0x1aa8] sm:$0xff]
        %v1269 = vld [vmem:[%s274 + $0x1ab0] sm:$0xff]
        %v1270 = vld [vmem:[%s274 + $0x1ab8] sm:$0xff]
        %v1271 = vld [vmem:[%s274 + $0x1ac0] sm:$0xff]
        %v1272 = vld [vmem:[%s274 + $0x1ac8] sm:$0xff]
        %v1273 = vld [vmem:[%s274 + $0x1ad0] sm:$0xff]
        %v1274 = vld [vmem:[%s274 + $0x1ad8] sm:$0xff]
        %v1275 = vld [vmem:[%s274 + $0x1ae0] sm:$0xff]
        %v1276 = vld [vmem:[%s274 + $0x1ae8] sm:$0xff]
        %v1277 = vld [vmem:[%s274 + $0x1af0] sm:$0xff]
        %v1278 = vld [vmem:[%s274 + $0x1af8] sm:$0xff]
        %v1279 = vpack.c.bf16 %v442, %v415
        %v1280 = vpack.c.bf16 %v443, %v416
        %v1281 = vpack.c.bf16 %v444, %v417
        %v1282 = vpack.c.bf16 %v445, %v418
        %v1283 = vpack.c.bf16 %v446, %v419
        %v1284 = vpack.c.bf16 %v447, %v420
        %v1285 = vpack.c.bf16 %v448, %v421
        %v1286 = vpack.c.bf16 %v449, %v422
        %v1287 = vpack.c.bf16 %v450, %v423
        %v1288 = vpack.c.bf16 %v451, %v424
        %v1289 = vpack.c.bf16 %v452, %v425
        %v1290 = vpack.c.bf16 %v453, %v426
        %v1291 = vpack.c.bf16 %v454, %v427
        %v1292 = vpack.c.bf16 %v455, %v428
        %v1293 = vpack.c.bf16 %v456, %v429
        %v1294 = vpack.c.bf16 %v457, %v430
        %v1295 = vpack.c.bf16 %v458, %v431
        %v1296 = vpack.c.bf16 %v459, %v432
        %v1297 = vpack.c.bf16 %v460, %v433
        %v1298 = vpack.c.bf16 %v461, %v434
        %v1299 = vpack.c.bf16 %v462, %v435
        %v1300 = vpack.c.bf16 %v463, %v436
        %v1301 = vpack.c.bf16 %v464, %v437
        %v1302 = vpack.c.bf16 %v465, %v438
        %v1303 = vpack.c.bf16 %v466, %v439
        %v1304 = vpack.c.bf16 %v467, %v440
        %v1305 = vpack.c.bf16 %v468, %v441
        %v1306 = vpack.c.bf16 %v496, %v469
        %v1307 = vpack.c.bf16 %v497, %v470
        %v1308 = vpack.c.bf16 %v498, %v471
        %v1309 = vpack.c.bf16 %v499, %v472
        %v1310 = vpack.c.bf16 %v500, %v473
        %v1311 = vpack.c.bf16 %v501, %v474
        %v1312 = vpack.c.bf16 %v502, %v475
        %v1313 = vpack.c.bf16 %v503, %v476
        %v1314 = vpack.c.bf16 %v504, %v477
        %v1315 = vpack.c.bf16 %v505, %v478
        %v1316 = vpack.c.bf16 %v506, %v479
        %v1317 = vpack.c.bf16 %v507, %v480
        %v1318 = vpack.c.bf16 %v508, %v481
        %v1319 = vpack.c.bf16 %v509, %v482
        %v1320 = vpack.c.bf16 %v510, %v483
        %v1321 = vpack.c.bf16 %v511, %v484
        %v1322 = vpack.c.bf16 %v512, %v485
        %v1323 = vpack.c.bf16 %v513, %v486
        %v1324 = vpack.c.bf16 %v514, %v487
        %v1325 = vpack.c.bf16 %v515, %v488
        %v1326 = vpack.c.bf16 %v516, %v489
        %v1327 = vpack.c.bf16 %v517, %v490
        %v1328 = vpack.c.bf16 %v518, %v491
        %v1329 = vpack.c.bf16 %v519, %v492
        %v1330 = vpack.c.bf16 %v520, %v493
        %v1331 = vpack.c.bf16 %v521, %v494
        %v1332 = vpack.c.bf16 %v522, %v495
        %v1333 = vpack.c.bf16 %v550, %v523
        %v1334 = vpack.c.bf16 %v551, %v524
        %v1335 = vpack.c.bf16 %v552, %v525
        %v1336 = vpack.c.bf16 %v553, %v526
        %v1337 = vpack.c.bf16 %v554, %v527
        %v1338 = vpack.c.bf16 %v555, %v528
        %v1339 = vpack.c.bf16 %v556, %v529
        %v1340 = vpack.c.bf16 %v557, %v530
        %v1341 = vpack.c.bf16 %v558, %v531
        %v1342 = vpack.c.bf16 %v559, %v532
        %v1343 = vpack.c.bf16 %v560, %v533
        %v1344 = vpack.c.bf16 %v561, %v534
        %v1345 = vpack.c.bf16 %v562, %v535
        %v1346 = vpack.c.bf16 %v563, %v536
        %v1347 = vpack.c.bf16 %v564, %v537
        %v1348 = vpack.c.bf16 %v565, %v538
        %v1349 = vpack.c.bf16 %v566, %v539
        %v1350 = vpack.c.bf16 %v567, %v540
        %v1351 = vpack.c.bf16 %v568, %v541
        %v1352 = vpack.c.bf16 %v569, %v542
        %v1353 = vpack.c.bf16 %v570, %v543
        %v1354 = vpack.c.bf16 %v571, %v544
        %v1355 = vpack.c.bf16 %v572, %v545
        %v1356 = vpack.c.bf16 %v573, %v546
        %v1357 = vpack.c.bf16 %v574, %v547
        %v1358 = vpack.c.bf16 %v575, %v548
        %v1359 = vpack.c.bf16 %v576, %v549
        %v1360 = vpack.c.bf16 %v604, %v577
        %v1361 = vpack.c.bf16 %v605, %v578
        %v1362 = vpack.c.bf16 %v606, %v579
        %v1363 = vpack.c.bf16 %v607, %v580
        %v1364 = vpack.c.bf16 %v608, %v581
        %v1365 = vpack.c.bf16 %v609, %v582
        %v1366 = vpack.c.bf16 %v610, %v583
        %v1367 = vpack.c.bf16 %v611, %v584
        %v1368 = vpack.c.bf16 %v612, %v585
        %v1369 = vpack.c.bf16 %v613, %v586
        %v1370 = vpack.c.bf16 %v614, %v587
        %v1371 = vpack.c.bf16 %v615, %v588
        %v1372 = vpack.c.bf16 %v616, %v589
        %v1373 = vpack.c.bf16 %v617, %v590
        %v1374 = vpack.c.bf16 %v618, %v591
        %v1375 = vpack.c.bf16 %v619, %v592
        %v1376 = vpack.c.bf16 %v620, %v593
        %v1377 = vpack.c.bf16 %v621, %v594
        %v1378 = vpack.c.bf16 %v622, %v595
        %v1379 = vpack.c.bf16 %v623, %v596
        %v1380 = vpack.c.bf16 %v624, %v597
        %v1381 = vpack.c.bf16 %v625, %v598
        %v1382 = vpack.c.bf16 %v626, %v599
        %v1383 = vpack.c.bf16 %v627, %v600
        %v1384 = vpack.c.bf16 %v628, %v601
        %v1385 = vpack.c.bf16 %v629, %v602
        %v1386 = vpack.c.bf16 %v630, %v603
        %v1387 = vpack.c.bf16 %v658, %v631
        %v1388 = vpack.c.bf16 %v659, %v632
        %v1389 = vpack.c.bf16 %v660, %v633
        %v1390 = vpack.c.bf16 %v661, %v634
        %v1391 = vpack.c.bf16 %v662, %v635
        %v1392 = vpack.c.bf16 %v663, %v636
        %v1393 = vpack.c.bf16 %v664, %v637
        %v1394 = vpack.c.bf16 %v665, %v638
        %v1395 = vpack.c.bf16 %v666, %v639
        %v1396 = vpack.c.bf16 %v667, %v640
        %v1397 = vpack.c.bf16 %v668, %v641
        %v1398 = vpack.c.bf16 %v669, %v642
        %v1399 = vpack.c.bf16 %v670, %v643
        %v1400 = vpack.c.bf16 %v671, %v644
        %v1401 = vpack.c.bf16 %v672, %v645
        %v1402 = vpack.c.bf16 %v673, %v646
        %v1403 = vpack.c.bf16 %v674, %v647
        %v1404 = vpack.c.bf16 %v675, %v648
        %v1405 = vpack.c.bf16 %v676, %v649
        %v1406 = vpack.c.bf16 %v677, %v650
        %v1407 = vpack.c.bf16 %v678, %v651
        %v1408 = vpack.c.bf16 %v679, %v652
        %v1409 = vpack.c.bf16 %v680, %v653
        %v1410 = vpack.c.bf16 %v681, %v654
        %v1411 = vpack.c.bf16 %v682, %v655
        %v1412 = vpack.c.bf16 %v683, %v656
        %v1413 = vpack.c.bf16 %v684, %v657
        %v1414 = vpack.c.bf16 %v712, %v685
        %v1415 = vpack.c.bf16 %v713, %v686
        %v1416 = vpack.c.bf16 %v714, %v687
        %v1417 = vpack.c.bf16 %v715, %v688
        %v1418 = vpack.c.bf16 %v716, %v689
        %v1419 = vpack.c.bf16 %v717, %v690
        %v1420 = vpack.c.bf16 %v718, %v691
        %v1421 = vpack.c.bf16 %v719, %v692
        %v1422 = vpack.c.bf16 %v720, %v693
        %v1423 = vpack.c.bf16 %v721, %v694
        %v1424 = vpack.c.bf16 %v722, %v695
        %v1425 = vpack.c.bf16 %v723, %v696
        %v1426 = vpack.c.bf16 %v724, %v697
        %v1427 = vpack.c.bf16 %v725, %v698
        %v1428 = vpack.c.bf16 %v726, %v699
        %v1429 = vpack.c.bf16 %v727, %v700
        %v1430 = vpack.c.bf16 %v728, %v701
        %v1431 = vpack.c.bf16 %v729, %v702
        %v1432 = vpack.c.bf16 %v730, %v703
        %v1433 = vpack.c.bf16 %v731, %v704
        %v1434 = vpack.c.bf16 %v732, %v705
        %v1435 = vpack.c.bf16 %v733, %v706
        %v1436 = vpack.c.bf16 %v734, %v707
        %v1437 = vpack.c.bf16 %v735, %v708
        %v1438 = vpack.c.bf16 %v736, %v709
        %v1439 = vpack.c.bf16 %v737, %v710
        %v1440 = vpack.c.bf16 %v738, %v711
        %v1441 = vpack.c.bf16 %v766, %v739
        %v1442 = vpack.c.bf16 %v767, %v740
        %v1443 = vpack.c.bf16 %v768, %v741
        %v1444 = vpack.c.bf16 %v769, %v742
        %v1445 = vpack.c.bf16 %v770, %v743
        %v1446 = vpack.c.bf16 %v771, %v744
        %v1447 = vpack.c.bf16 %v772, %v745
        %v1448 = vpack.c.bf16 %v773, %v746
        %v1449 = vpack.c.bf16 %v774, %v747
        %v1450 = vpack.c.bf16 %v775, %v748
        %v1451 = vpack.c.bf16 %v776, %v749
        %v1452 = vpack.c.bf16 %v777, %v750
        %v1453 = vpack.c.bf16 %v778, %v751
        %v1454 = vpack.c.bf16 %v779, %v752
        %v1455 = vpack.c.bf16 %v780, %v753
        %v1456 = vpack.c.bf16 %v781, %v754
        %v1457 = vpack.c.bf16 %v782, %v755
        %v1458 = vpack.c.bf16 %v783, %v756
        %v1459 = vpack.c.bf16 %v784, %v757
        %v1460 = vpack.c.bf16 %v785, %v758
        %v1461 = vpack.c.bf16 %v786, %v759
        %v1462 = vpack.c.bf16 %v787, %v760
        %v1463 = vpack.c.bf16 %v788, %v761
        %v1464 = vpack.c.bf16 %v789, %v762
        %v1465 = vpack.c.bf16 %v790, %v763
        %v1466 = vpack.c.bf16 %v791, %v764
        %v1467 = vpack.c.bf16 %v792, %v765
        %v1468 = vpack.c.bf16 %v820, %v793
        %v1469 = vpack.c.bf16 %v821, %v794
        %v1470 = vpack.c.bf16 %v822, %v795
        %v1471 = vpack.c.bf16 %v823, %v796
        %v1472 = vpack.c.bf16 %v824, %v797
        %v1473 = vpack.c.bf16 %v825, %v798
        %v1474 = vpack.c.bf16 %v826, %v799
        %v1475 = vpack.c.bf16 %v827, %v800
        %v1476 = vpack.c.bf16 %v828, %v801
        %v1477 = vpack.c.bf16 %v829, %v802
        %v1478 = vpack.c.bf16 %v830, %v803
        %v1479 = vpack.c.bf16 %v831, %v804
        %v1480 = vpack.c.bf16 %v832, %v805
        %v1481 = vpack.c.bf16 %v833, %v806
        %v1482 = vpack.c.bf16 %v834, %v807
        %v1483 = vpack.c.bf16 %v835, %v808
        %v1484 = vpack.c.bf16 %v836, %v809
        %v1485 = vpack.c.bf16 %v837, %v810
        %v1486 = vpack.c.bf16 %v838, %v811
        %v1487 = vpack.c.bf16 %v839, %v812
        %v1488 = vpack.c.bf16 %v840, %v813
        %v1489 = vpack.c.bf16 %v841, %v814
        %v1490 = vpack.c.bf16 %v842, %v815
        %v1491 = vpack.c.bf16 %v843, %v816
        %v1492 = vpack.c.bf16 %v844, %v817
        %v1493 = vpack.c.bf16 %v845, %v818
        %v1494 = vpack.c.bf16 %v846, %v819
        %v1495 = vpack.c.bf16 %v874, %v847
        %v1496 = vpack.c.bf16 %v875, %v848
        %v1497 = vpack.c.bf16 %v876, %v849
        %v1498 = vpack.c.bf16 %v877, %v850
        %v1499 = vpack.c.bf16 %v878, %v851
        %v1500 = vpack.c.bf16 %v879, %v852
        %v1501 = vpack.c.bf16 %v880, %v853
        %v1502 = vpack.c.bf16 %v881, %v854
        %v1503 = vpack.c.bf16 %v882, %v855
        %v1504 = vpack.c.bf16 %v883, %v856
        %v1505 = vpack.c.bf16 %v884, %v857
        %v1506 = vpack.c.bf16 %v885, %v858
        %v1507 = vpack.c.bf16 %v886, %v859
        %v1508 = vpack.c.bf16 %v887, %v860
        %v1509 = vpack.c.bf16 %v888, %v861
        %v1510 = vpack.c.bf16 %v889, %v862
        %v1511 = vpack.c.bf16 %v890, %v863
        %v1512 = vpack.c.bf16 %v891, %v864
        %v1513 = vpack.c.bf16 %v892, %v865
        %v1514 = vpack.c.bf16 %v893, %v866
        %v1515 = vpack.c.bf16 %v894, %v867
        %v1516 = vpack.c.bf16 %v895, %v868
        %v1517 = vpack.c.bf16 %v896, %v869
        %v1518 = vpack.c.bf16 %v897, %v870
        %v1519 = vpack.c.bf16 %v898, %v871
        %v1520 = vpack.c.bf16 %v899, %v872
        %v1521 = vpack.c.bf16 %v900, %v873
        %v1522 = vpack.c.bf16 %v928, %v901
        %v1523 = vpack.c.bf16 %v929, %v902
        %v1524 = vpack.c.bf16 %v930, %v903
        %v1525 = vpack.c.bf16 %v931, %v904
        %v1526 = vpack.c.bf16 %v932, %v905
        %v1527 = vpack.c.bf16 %v933, %v906
        %v1528 = vpack.c.bf16 %v934, %v907
        %v1529 = vpack.c.bf16 %v935, %v908
        %v1530 = vpack.c.bf16 %v936, %v909
        %v1531 = vpack.c.bf16 %v937, %v910
        %v1532 = vpack.c.bf16 %v938, %v911
        %v1533 = vpack.c.bf16 %v939, %v912
        %v1534 = vpack.c.bf16 %v940, %v913
        %v1535 = vpack.c.bf16 %v941, %v914
        %v1536 = vpack.c.bf16 %v942, %v915
        %v1537 = vpack.c.bf16 %v943, %v916
        %v1538 = vpack.c.bf16 %v944, %v917
        %v1539 = vpack.c.bf16 %v945, %v918
        %v1540 = vpack.c.bf16 %v946, %v919
        %v1541 = vpack.c.bf16 %v947, %v920
        %v1542 = vpack.c.bf16 %v948, %v921
        %v1543 = vpack.c.bf16 %v949, %v922
        %v1544 = vpack.c.bf16 %v950, %v923
        %v1545 = vpack.c.bf16 %v951, %v924
        %v1546 = vpack.c.bf16 %v952, %v925
        %v1547 = vpack.c.bf16 %v953, %v926
        %v1548 = vpack.c.bf16 %v954, %v927
        %v1549 = vpack.c.bf16 %v982, %v955
        %v1550 = vpack.c.bf16 %v983, %v956
        %v1551 = vpack.c.bf16 %v984, %v957
        %v1552 = vpack.c.bf16 %v985, %v958
        %v1553 = vpack.c.bf16 %v986, %v959
        %v1554 = vpack.c.bf16 %v987, %v960
        %v1555 = vpack.c.bf16 %v988, %v961
        %v1556 = vpack.c.bf16 %v989, %v962
        %v1557 = vpack.c.bf16 %v990, %v963
        %v1558 = vpack.c.bf16 %v991, %v964
        %v1559 = vpack.c.bf16 %v992, %v965
        %v1560 = vpack.c.bf16 %v993, %v966
        %v1561 = vpack.c.bf16 %v994, %v967
        %v1562 = vpack.c.bf16 %v995, %v968
        %v1563 = vpack.c.bf16 %v996, %v969
        %v1564 = vpack.c.bf16 %v997, %v970
        %v1565 = vpack.c.bf16 %v998, %v971
        %v1566 = vpack.c.bf16 %v999, %v972
        %v1567 = vpack.c.bf16 %v1000, %v973
        %v1568 = vpack.c.bf16 %v1001, %v974
        %v1569 = vpack.c.bf16 %v1002, %v975
        %v1570 = vpack.c.bf16 %v1003, %v976
        %v1571 = vpack.c.bf16 %v1004, %v977
        %v1572 = vpack.c.bf16 %v1005, %v978
        %v1573 = vpack.c.bf16 %v1006, %v979
        %v1574 = vpack.c.bf16 %v1007, %v980
        %v1575 = vpack.c.bf16 %v1008, %v981
        %v1576 = vpack.c.bf16 %v1036, %v1009
        %v1577 = vpack.c.bf16 %v1037, %v1010
        %v1578 = vpack.c.bf16 %v1038, %v1011
        %v1579 = vpack.c.bf16 %v1039, %v1012
        %v1580 = vpack.c.bf16 %v1040, %v1013
        %v1581 = vpack.c.bf16 %v1041, %v1014
        %v1582 = vpack.c.bf16 %v1042, %v1015
        %v1583 = vpack.c.bf16 %v1043, %v1016
        %v1584 = vpack.c.bf16 %v1044, %v1017
        %v1585 = vpack.c.bf16 %v1045, %v1018
        %v1586 = vpack.c.bf16 %v1046, %v1019
        %v1587 = vpack.c.bf16 %v1047, %v1020
        %v1588 = vpack.c.bf16 %v1048, %v1021
        %v1589 = vpack.c.bf16 %v1049, %v1022
        %v1590 = vpack.c.bf16 %v1050, %v1023
        %v1591 = vpack.c.bf16 %v1051, %v1024
        %v1592 = vpack.c.bf16 %v1052, %v1025
        %v1593 = vpack.c.bf16 %v1053, %v1026
        %v1594 = vpack.c.bf16 %v1054, %v1027
        %v1595 = vpack.c.bf16 %v1055, %v1028
        %v1596 = vpack.c.bf16 %v1056, %v1029
        %v1597 = vpack.c.bf16 %v1057, %v1030
        %v1598 = vpack.c.bf16 %v1058, %v1031
        %v1599 = vpack.c.bf16 %v1059, %v1032
        %v1600 = vpack.c.bf16 %v1060, %v1033
        %v1601 = vpack.c.bf16 %v1061, %v1034
        %v1602 = vpack.c.bf16 %v1062, %v1035
        %v1603 = vpack.c.bf16 %v1090, %v1063
        %v1604 = vpack.c.bf16 %v1091, %v1064
        %v1605 = vpack.c.bf16 %v1092, %v1065
        %v1606 = vpack.c.bf16 %v1093, %v1066
        %v1607 = vpack.c.bf16 %v1094, %v1067
        %v1608 = vpack.c.bf16 %v1095, %v1068
        %v1609 = vpack.c.bf16 %v1096, %v1069
        %v1610 = vpack.c.bf16 %v1097, %v1070
        %v1611 = vpack.c.bf16 %v1098, %v1071
        %v1612 = vpack.c.bf16 %v1099, %v1072
        %v1613 = vpack.c.bf16 %v1100, %v1073
        %v1614 = vpack.c.bf16 %v1101, %v1074
        %v1615 = vpack.c.bf16 %v1102, %v1075
        %v1616 = vpack.c.bf16 %v1103, %v1076
        %v1617 = vpack.c.bf16 %v1104, %v1077
        %v1618 = vpack.c.bf16 %v1105, %v1078
        %v1619 = vpack.c.bf16 %v1106, %v1079
        %v1620 = vpack.c.bf16 %v1107, %v1080
        %v1621 = vpack.c.bf16 %v1108, %v1081
        %v1622 = vpack.c.bf16 %v1109, %v1082
        %v1623 = vpack.c.bf16 %v1110, %v1083
        %v1624 = vpack.c.bf16 %v1111, %v1084
        %v1625 = vpack.c.bf16 %v1112, %v1085
        %v1626 = vpack.c.bf16 %v1113, %v1086
        %v1627 = vpack.c.bf16 %v1114, %v1087
        %v1628 = vpack.c.bf16 %v1115, %v1088
        %v1629 = vpack.c.bf16 %v1116, %v1089
        %v1630 = vpack.c.bf16 %v1144, %v1117
        %v1631 = vpack.c.bf16 %v1145, %v1118
        %v1632 = vpack.c.bf16 %v1146, %v1119
        %v1633 = vpack.c.bf16 %v1147, %v1120
        %v1634 = vpack.c.bf16 %v1148, %v1121
        %v1635 = vpack.c.bf16 %v1149, %v1122
        %v1636 = vpack.c.bf16 %v1150, %v1123
        %v1637 = vpack.c.bf16 %v1151, %v1124
        %v1638 = vpack.c.bf16 %v1152, %v1125
        %v1639 = vpack.c.bf16 %v1153, %v1126
        %v1640 = vpack.c.bf16 %v1154, %v1127
        %v1641 = vpack.c.bf16 %v1155, %v1128
        %v1642 = vpack.c.bf16 %v1156, %v1129
        %v1643 = vpack.c.bf16 %v1157, %v1130
        %v1644 = vpack.c.bf16 %v1158, %v1131
        %v1645 = vpack.c.bf16 %v1159, %v1132
        %v1646 = vpack.c.bf16 %v1160, %v1133
        %v1647 = vpack.c.bf16 %v1161, %v1134
        %v1648 = vpack.c.bf16 %v1162, %v1135
        %v1649 = vpack.c.bf16 %v1163, %v1136
        %v1650 = vpack.c.bf16 %v1164, %v1137
        %v1651 = vpack.c.bf16 %v1165, %v1138
        %v1652 = vpack.c.bf16 %v1166, %v1139
        %v1653 = vpack.c.bf16 %v1167, %v1140
        %v1654 = vpack.c.bf16 %v1168, %v1141
        %v1655 = vpack.c.bf16 %v1169, %v1142
        %v1656 = vpack.c.bf16 %v1170, %v1143
        %v1657 = vpack.c.bf16 %v1198, %v1171
        %v1658 = vpack.c.bf16 %v1199, %v1172
        %v1659 = vpack.c.bf16 %v1200, %v1173
        %v1660 = vpack.c.bf16 %v1201, %v1174
        %v1661 = vpack.c.bf16 %v1202, %v1175
        %v1662 = vpack.c.bf16 %v1203, %v1176
        %v1663 = vpack.c.bf16 %v1204, %v1177
        %v1664 = vpack.c.bf16 %v1205, %v1178
        %v1665 = vpack.c.bf16 %v1206, %v1179
        %v1666 = vpack.c.bf16 %v1207, %v1180
        %v1667 = vpack.c.bf16 %v1208, %v1181
        %v1668 = vpack.c.bf16 %v1209, %v1182
        %v1669 = vpack.c.bf16 %v1210, %v1183
        %v1670 = vpack.c.bf16 %v1211, %v1184
        %v1671 = vpack.c.bf16 %v1212, %v1185
        %v1672 = vpack.c.bf16 %v1213, %v1186
        %v1673 = vpack.c.bf16 %v1214, %v1187
        %v1674 = vpack.c.bf16 %v1215, %v1188
        %v1675 = vpack.c.bf16 %v1216, %v1189
        %v1676 = vpack.c.bf16 %v1217, %v1190
        %v1677 = vpack.c.bf16 %v1218, %v1191
        %v1678 = vpack.c.bf16 %v1219, %v1192
        %v1679 = vpack.c.bf16 %v1220, %v1193
        %v1680 = vpack.c.bf16 %v1221, %v1194
        %v1681 = vpack.c.bf16 %v1222, %v1195
        %v1682 = vpack.c.bf16 %v1223, %v1196
        %v1683 = vpack.c.bf16 %v1224, %v1197
        %v1684 = vpack.c.bf16 %v1252, %v1225
        %v1685 = vpack.c.bf16 %v1253, %v1226
        %v1686 = vpack.c.bf16 %v1254, %v1227
        %v1687 = vpack.c.bf16 %v1255, %v1228
        %v1688 = vpack.c.bf16 %v1256, %v1229
        %v1689 = vpack.c.bf16 %v1257, %v1230
        %v1690 = vpack.c.bf16 %v1258, %v1231
        %v1691 = vpack.c.bf16 %v1259, %v1232
        %v1692 = vpack.c.bf16 %v1260, %v1233
        %v1693 = vpack.c.bf16 %v1261, %v1234
        %v1694 = vpack.c.bf16 %v1262, %v1235
        %v1695 = vpack.c.bf16 %v1263, %v1236
        %v1696 = vpack.c.bf16 %v1264, %v1237
        %v1697 = vpack.c.bf16 %v1265, %v1238
        %v1698 = vpack.c.bf16 %v1266, %v1239
        %v1699 = vpack.c.bf16 %v1267, %v1240
        %v1700 = vpack.c.bf16 %v1268, %v1241
        %v1701 = vpack.c.bf16 %v1269, %v1242
        %v1702 = vpack.c.bf16 %v1270, %v1243
        %v1703 = vpack.c.bf16 %v1271, %v1244
        %v1704 = vpack.c.bf16 %v1272, %v1245
        %v1705 = vpack.c.bf16 %v1273, %v1246
        %v1706 = vpack.c.bf16 %v1274, %v1247
        %v1707 = vpack.c.bf16 %v1275, %v1248
        %v1708 = vpack.c.bf16 %v1276, %v1249
        %v1709 = vpack.c.bf16 %v1277, %v1250
        %v1710 = vpack.c.bf16 %v1278, %v1251
        %v1711 = vld [vmem:[#allocation2] sm:$0xff]
        %v1712 = vld [vmem:[#allocation2 + $0x8] sm:$0xff]
        %v1713 = vld [vmem:[#allocation2 + $0x10] sm:$0xff]
        %v1714 = vld [vmem:[#allocation2 + $0x18] sm:$0xff]
        %v1715 = vld [vmem:[#allocation2 + $0x20] sm:$0xff]
        %v1716 = vld [vmem:[#allocation2 + $0x28] sm:$0xff]
        %v1717 = vld [vmem:[#allocation2 + $0x30] sm:$0xff]
        %v1718 = vld [vmem:[#allocation2 + $0x38] sm:$0xff]
        %v1719 = vld [vmem:[#allocation2 + $0x40] sm:$0xff]
        %v1720 = vld [vmem:[#allocation2 + $0x48] sm:$0xff]
        %v1721 = vld [vmem:[#allocation2 + $0x50] sm:$0xff]
        %v1722 = vld [vmem:[#allocation2 + $0x58] sm:$0xff]
        %v1723 = vld [vmem:[#allocation2 + $0x60] sm:$0xff]
        %v1724 = vld [vmem:[#allocation2 + $0x68] sm:$0xff]
        %v1725 = vld [vmem:[#allocation2 + $0x70] sm:$0xff]
        %v1726 = vld [vmem:[#allocation2 + $0x78] sm:$0xff]
        %v1727 = vld [vmem:[#allocation2 + $0x80] sm:$0xff]
        %v1728 = vld [vmem:[#allocation2 + $0x88] sm:$0xff]
        %v1729 = vld [vmem:[#allocation2 + $0x90] sm:$0xff]
        %v1730 = vld [vmem:[#allocation2 + $0x98] sm:$0xff]
        %v1731 = vld [vmem:[#allocation2 + $0xa0] sm:$0xff]
        %v1732 = vld [vmem:[#allocation2 + $0xa8] sm:$0xff]
        %v1733 = vld [vmem:[#allocation2 + $0xb0] sm:$0xff]
        %v1734 = vld [vmem:[#allocation2 + $0xb8] sm:$0xff]
        %v1735 = vld [vmem:[#allocation2 + $0xc0] sm:$0xff]
        %v1736 = vld [vmem:[#allocation2 + $0xc8] sm:$0xff]
        %v1737 = vld [vmem:[#allocation2 + $0xd0] sm:$0xff]
        %v1738 = vld [vmem:[#allocation2 + $0xd8] sm:$0xff]
        %v1739 = vld [vmem:[#allocation2 + $0xe0] sm:$0xff]
        %v1740 = vld [vmem:[#allocation2 + $0xe8] sm:$0xff]
        %v1741 = vld [vmem:[#allocation2 + $0xf0] sm:$0xff]
        %v1742 = vld [vmem:[#allocation2 + $0xf8] sm:$0xff]
        %v1743 = vld [vmem:[#allocation2 + $0x100] sm:$0xff]
        %v1744 = vld [vmem:[#allocation2 + $0x108] sm:$0xff]
        %v1745 = vld [vmem:[#allocation2 + $0x110] sm:$0xff]
        %v1746 = vld [vmem:[#allocation2 + $0x118] sm:$0xff]
        %v1747 = vld [vmem:[#allocation2 + $0x120] sm:$0xff]
        %v1748 = vld [vmem:[#allocation2 + $0x128] sm:$0xff]
        %v1749 = vld [vmem:[#allocation2 + $0x130] sm:$0xff]
        %v1750 = vld [vmem:[#allocation2 + $0x138] sm:$0xff]
        %v1751 = vld [vmem:[#allocation2 + $0x140] sm:$0xff]
        %v1752 = vld [vmem:[#allocation2 + $0x148] sm:$0xff]
        %v1753 = vld [vmem:[#allocation2 + $0x150] sm:$0xff]
        %v1754 = vld [vmem:[#allocation2 + $0x158] sm:$0xff]
        %v1755 = vld [vmem:[#allocation2 + $0x160] sm:$0xff]
        %v1756 = vld [vmem:[#allocation2 + $0x168] sm:$0xff]
        %v1757 = vld [vmem:[#allocation2 + $0x170] sm:$0xff]
        %v1758 = vld [vmem:[#allocation2 + $0x178] sm:$0xff]
        %v1759 = vld [vmem:[#allocation2 + $0x180] sm:$0xff]
        %v1760 = vld [vmem:[#allocation2 + $0x188] sm:$0xff]
        %v1761 = vld [vmem:[#allocation2 + $0x190] sm:$0xff]
        %v1762 = vld [vmem:[#allocation2 + $0x198] sm:$0xff]
        %v1763 = vld [vmem:[#allocation2 + $0x1a0] sm:$0xff]
        %v1764 = vld [vmem:[#allocation2 + $0x1a8] sm:$0xff]
        %v1765 = vld [vmem:[#allocation2 + $0x1b0] sm:$0xff]
        %v1766 = vld [vmem:[#allocation2 + $0x1b8] sm:$0xff]
        %v1767 = vld [vmem:[#allocation2 + $0x1c0] sm:$0xff]
        %v1768 = vld [vmem:[#allocation2 + $0x1c8] sm:$0xff]
        %v1769 = vld [vmem:[#allocation2 + $0x1d0] sm:$0xff]
        %v1770 = vld [vmem:[#allocation2 + $0x1d8] sm:$0xff]
        %v1771 = vld [vmem:[#allocation2 + $0x1e0] sm:$0xff]
        %v1772 = vld [vmem:[#allocation2 + $0x1e8] sm:$0xff]
        %v1773 = vld [vmem:[#allocation2 + $0x1f0] sm:$0xff]
        %v1774 = vld [vmem:[#allocation2 + $0x1f8] sm:$0xff]
        %v1775 = vld [vmem:[%s283] sm:$0xff]
        %v1776 = vld [vmem:[%s283 + $0x8] sm:$0xff]
        %v1777 = vld [vmem:[%s283 + $0x10] sm:$0xff]
        %v1778 = vld [vmem:[%s283 + $0x18] sm:$0xff]
        %v1779 = vld [vmem:[%s283 + $0x20] sm:$0xff]
        %v1780 = vld [vmem:[%s283 + $0x28] sm:$0xff]
        %v1781 = vld [vmem:[%s283 + $0x30] sm:$0xff]
        %v1782 = vld [vmem:[%s283 + $0x38] sm:$0xff]
        %v1783 = vld [vmem:[%s283 + $0x40] sm:$0xff]
        %v1784 = vld [vmem:[%s283 + $0x48] sm:$0xff]
        %v1785 = vld [vmem:[%s283 + $0x50] sm:$0xff]
        %v1786 = vld [vmem:[%s283 + $0x58] sm:$0xff]
        %v1787 = vld [vmem:[%s283 + $0x60] sm:$0xff]
        %v1788 = vld [vmem:[%s283 + $0x68] sm:$0xff]
        %v1789 = vld [vmem:[%s283 + $0x70] sm:$0xff]
        %v1790 = vld [vmem:[%s283 + $0x78] sm:$0xff]
        %v1791 = vld [vmem:[%s283 + $0x80] sm:$0xff]
        %v1792 = vld [vmem:[%s283 + $0x88] sm:$0xff]
        %v1793 = vld [vmem:[%s283 + $0x90] sm:$0xff]
        %v1794 = vld [vmem:[%s283 + $0x98] sm:$0xff]
        %v1795 = vld [vmem:[%s283 + $0xa0] sm:$0xff]
        %v1796 = vld [vmem:[%s283 + $0xa8] sm:$0xff]
        %v1797 = vld [vmem:[%s283 + $0xb0] sm:$0xff]
        %v1798 = vld [vmem:[%s283 + $0xb8] sm:$0xff]
        %v1799 = vld [vmem:[%s283 + $0xc0] sm:$0xff]
        %v1800 = vld [vmem:[%s283 + $0xc8] sm:$0xff]
        %v1801 = vld [vmem:[%s283 + $0xd0] sm:$0xff]
        %v1802 = vld [vmem:[%s283 + $0xd8] sm:$0xff]
        %v1803 = vld [vmem:[%s283 + $0xe0] sm:$0xff]
        %v1804 = vld [vmem:[%s283 + $0xe8] sm:$0xff]
        %v1805 = vld [vmem:[%s283 + $0xf0] sm:$0xff]
        %v1806 = vld [vmem:[%s283 + $0xf8] sm:$0xff]
        %v1807 = vld [vmem:[%s283 + $0x100] sm:$0xff]
        %v1808 = vld [vmem:[%s283 + $0x108] sm:$0xff]
        %v1809 = vld [vmem:[%s283 + $0x110] sm:$0xff]
        %v1810 = vld [vmem:[%s283 + $0x118] sm:$0xff]
        %v1811 = vld [vmem:[%s283 + $0x120] sm:$0xff]
        %v1812 = vld [vmem:[%s283 + $0x128] sm:$0xff]
        %v1813 = vld [vmem:[%s283 + $0x130] sm:$0xff]
        %v1814 = vld [vmem:[%s283 + $0x138] sm:$0xff]
        %v1815 = vld [vmem:[%s283 + $0x140] sm:$0xff]
        %v1816 = vld [vmem:[%s283 + $0x148] sm:$0xff]
        %v1817 = vld [vmem:[%s283 + $0x150] sm:$0xff]
        %v1818 = vld [vmem:[%s283 + $0x158] sm:$0xff]
        %v1819 = vld [vmem:[%s283 + $0x160] sm:$0xff]
        %v1820 = vld [vmem:[%s283 + $0x168] sm:$0xff]
        %v1821 = vld [vmem:[%s283 + $0x170] sm:$0xff]
        %v1822 = vld [vmem:[%s283 + $0x178] sm:$0xff]
        %v1823 = vld [vmem:[%s283 + $0x180] sm:$0xff]
        %v1824 = vld [vmem:[%s283 + $0x188] sm:$0xff]
        %v1825 = vld [vmem:[%s283 + $0x190] sm:$0xff]
        %v1826 = vld [vmem:[%s283 + $0x198] sm:$0xff]
        %v1827 = vld [vmem:[%s283 + $0x1a0] sm:$0xff]
        %v1828 = vld [vmem:[%s283 + $0x1a8] sm:$0xff]
        %v1829 = vld [vmem:[%s283 + $0x1b0] sm:$0xff]
        %v1830 = vld [vmem:[%s283 + $0x1b8] sm:$0xff]
        %v1831 = vld [vmem:[%s283 + $0x1c0] sm:$0xff]
        %v1832 = vld [vmem:[%s283 + $0x1c8] sm:$0xff]
        %v1833 = vld [vmem:[%s283 + $0x1d0] sm:$0xff]
        %v1834 = vld [vmem:[%s283 + $0x1d8] sm:$0xff]
        %v1835 = vld [vmem:[%s283 + $0x1e0] sm:$0xff]
        %v1836 = vld [vmem:[%s283 + $0x1e8] sm:$0xff]
        %v1837 = vld [vmem:[%s283 + $0x1f0] sm:$0xff]
        %v1838 = vld [vmem:[%s283 + $0x1f8] sm:$0xff]
        %v1839 = vld [vmem:[%s283 + $0x200] sm:$0xff]
        %v1840 = vld [vmem:[%s283 + $0x208] sm:$0xff]
        %v1841 = vld [vmem:[%s283 + $0x210] sm:$0xff]
        %v1842 = vld [vmem:[%s283 + $0x218] sm:$0xff]
        %v1843 = vld [vmem:[%s283 + $0x220] sm:$0xff]
        %v1844 = vld [vmem:[%s283 + $0x228] sm:$0xff]
        %v1845 = vld [vmem:[%s283 + $0x230] sm:$0xff]
        %v1846 = vld [vmem:[%s283 + $0x238] sm:$0xff]
        %v1847 = vld [vmem:[%s283 + $0x240] sm:$0xff]
        %v1848 = vld [vmem:[%s283 + $0x248] sm:$0xff]
        %v1849 = vld [vmem:[%s283 + $0x250] sm:$0xff]
        %v1850 = vld [vmem:[%s283 + $0x258] sm:$0xff]
        %v1851 = vld [vmem:[%s283 + $0x260] sm:$0xff]
        %v1852 = vld [vmem:[%s283 + $0x268] sm:$0xff]
        %v1853 = vld [vmem:[%s283 + $0x270] sm:$0xff]
        %v1854 = vld [vmem:[%s283 + $0x278] sm:$0xff]
        %v1855 = vld [vmem:[%s283 + $0x280] sm:$0xff]
        %v1856 = vld [vmem:[%s283 + $0x288] sm:$0xff]
        %v1857 = vld [vmem:[%s283 + $0x290] sm:$0xff]
        %v1858 = vld [vmem:[%s283 + $0x298] sm:$0xff]
        %v1859 = vld [vmem:[%s283 + $0x2a0] sm:$0xff]
        %v1860 = vld [vmem:[%s283 + $0x2a8] sm:$0xff]
        %v1861 = vld [vmem:[%s283 + $0x2b0] sm:$0xff]
        %v1862 = vld [vmem:[%s283 + $0x2b8] sm:$0xff]
        %v1863 = vld [vmem:[%s283 + $0x2c0] sm:$0xff]
        %v1864 = vld [vmem:[%s283 + $0x2c8] sm:$0xff]
        %v1865 = vld [vmem:[%s283 + $0x2d0] sm:$0xff]
        %v1866 = vld [vmem:[%s283 + $0x2d8] sm:$0xff]
        %v1867 = vld [vmem:[%s283 + $0x2e0] sm:$0xff]
        %v1868 = vld [vmem:[%s283 + $0x2e8] sm:$0xff]
        %v1869 = vld [vmem:[%s283 + $0x2f0] sm:$0xff]
        %v1870 = vld [vmem:[%s283 + $0x2f8] sm:$0xff]
        %v1871 = vld [vmem:[%s283 + $0x300] sm:$0xff]
        %v1872 = vld [vmem:[%s283 + $0x308] sm:$0xff]
        %v1873 = vld [vmem:[%s283 + $0x310] sm:$0xff]
        %v1874 = vld [vmem:[%s283 + $0x318] sm:$0xff]
        %v1875 = vld [vmem:[%s283 + $0x320] sm:$0xff]
        %v1876 = vld [vmem:[%s283 + $0x328] sm:$0xff]
        %v1877 = vld [vmem:[%s283 + $0x330] sm:$0xff]
        %v1878 = vld [vmem:[%s283 + $0x338] sm:$0xff]
        %v1879 = vld [vmem:[%s283 + $0x340] sm:$0xff]
        %v1880 = vld [vmem:[%s283 + $0x348] sm:$0xff]
        %v1881 = vld [vmem:[%s283 + $0x350] sm:$0xff]
        %v1882 = vld [vmem:[%s283 + $0x358] sm:$0xff]
        %v1883 = vld [vmem:[%s283 + $0x360] sm:$0xff]
        %v1884 = vld [vmem:[%s283 + $0x368] sm:$0xff]
        %v1885 = vld [vmem:[%s283 + $0x370] sm:$0xff]
        %v1886 = vld [vmem:[%s283 + $0x378] sm:$0xff]
        %v1887 = vld [vmem:[%s283 + $0x380] sm:$0xff]
        %v1888 = vld [vmem:[%s283 + $0x388] sm:$0xff]
        %v1889 = vld [vmem:[%s283 + $0x390] sm:$0xff]
        %v1890 = vld [vmem:[%s283 + $0x398] sm:$0xff]
        %v1891 = vld [vmem:[%s283 + $0x3a0] sm:$0xff]
        %v1892 = vld [vmem:[%s283 + $0x3a8] sm:$0xff]
        %v1893 = vld [vmem:[%s283 + $0x3b0] sm:$0xff]
        %v1894 = vld [vmem:[%s283 + $0x3b8] sm:$0xff]
        %v1895 = vld [vmem:[%s283 + $0x3c0] sm:$0xff]
        %v1896 = vld [vmem:[%s283 + $0x3c8] sm:$0xff]
        %v1897 = vld [vmem:[%s283 + $0x3d0] sm:$0xff]
        %v1898 = vld [vmem:[%s283 + $0x3d8] sm:$0xff]
        %v1899 = vld [vmem:[%s283 + $0x3e0] sm:$0xff]
        %v1900 = vld [vmem:[%s283 + $0x3e8] sm:$0xff]
        %v1901 = vld [vmem:[%s283 + $0x3f0] sm:$0xff]
        %v1902 = vld [vmem:[%s283 + $0x3f8] sm:$0xff]
        %v1903 = vld [vmem:[%s283 + $0x400] sm:$0xff]
        %v1904 = vld [vmem:[%s283 + $0x408] sm:$0xff]
        %v1905 = vld [vmem:[%s283 + $0x410] sm:$0xff]
        %v1906 = vld [vmem:[%s283 + $0x418] sm:$0xff]
        %v1907 = vld [vmem:[%s283 + $0x420] sm:$0xff]
        %v1908 = vld [vmem:[%s283 + $0x428] sm:$0xff]
        %v1909 = vld [vmem:[%s283 + $0x430] sm:$0xff]
        %v1910 = vld [vmem:[%s283 + $0x438] sm:$0xff]
        %v1911 = vld [vmem:[%s283 + $0x440] sm:$0xff]
        %v1912 = vld [vmem:[%s283 + $0x448] sm:$0xff]
        %v1913 = vld [vmem:[%s283 + $0x450] sm:$0xff]
        %v1914 = vld [vmem:[%s283 + $0x458] sm:$0xff]
        %v1915 = vld [vmem:[%s283 + $0x460] sm:$0xff]
        %v1916 = vld [vmem:[%s283 + $0x468] sm:$0xff]
        %v1917 = vld [vmem:[%s283 + $0x470] sm:$0xff]
        %v1918 = vld [vmem:[%s283 + $0x478] sm:$0xff]
        %v1919 = vld [vmem:[%s283 + $0x480] sm:$0xff]
        %v1920 = vld [vmem:[%s283 + $0x488] sm:$0xff]
        %v1921 = vld [vmem:[%s283 + $0x490] sm:$0xff]
        %v1922 = vld [vmem:[%s283 + $0x498] sm:$0xff]
        %v1923 = vld [vmem:[%s283 + $0x4a0] sm:$0xff]
        %v1924 = vld [vmem:[%s283 + $0x4a8] sm:$0xff]
        %v1925 = vld [vmem:[%s283 + $0x4b0] sm:$0xff]
        %v1926 = vld [vmem:[%s283 + $0x4b8] sm:$0xff]
        %v1927 = vld [vmem:[%s283 + $0x4c0] sm:$0xff]
        %v1928 = vld [vmem:[%s283 + $0x4c8] sm:$0xff]
        %v1929 = vld [vmem:[%s283 + $0x4d0] sm:$0xff]
        %v1930 = vld [vmem:[%s283 + $0x4d8] sm:$0xff]
        %v1931 = vld [vmem:[%s283 + $0x4e0] sm:$0xff]
        %v1932 = vld [vmem:[%s283 + $0x4e8] sm:$0xff]
        %v1933 = vld [vmem:[%s283 + $0x4f0] sm:$0xff]
        %v1934 = vld [vmem:[%s283 + $0x4f8] sm:$0xff]
        %v1935 = vld [vmem:[%s283 + $0x500] sm:$0xff]
        %v1936 = vld [vmem:[%s283 + $0x508] sm:$0xff]
        %v1937 = vld [vmem:[%s283 + $0x510] sm:$0xff]
        %v1938 = vld [vmem:[%s283 + $0x518] sm:$0xff]
        %v1939 = vld [vmem:[%s283 + $0x520] sm:$0xff]
        %v1940 = vld [vmem:[%s283 + $0x528] sm:$0xff]
        %v1941 = vld [vmem:[%s283 + $0x530] sm:$0xff]
        %v1942 = vld [vmem:[%s283 + $0x538] sm:$0xff]
        %v1943 = vld [vmem:[%s283 + $0x540] sm:$0xff]
        %v1944 = vld [vmem:[%s283 + $0x548] sm:$0xff]
        %v1945 = vld [vmem:[%s283 + $0x550] sm:$0xff]
        %v1946 = vld [vmem:[%s283 + $0x558] sm:$0xff]
        %v1947 = vld [vmem:[%s283 + $0x560] sm:$0xff]
        %v1948 = vld [vmem:[%s283 + $0x568] sm:$0xff]
        %v1949 = vld [vmem:[%s283 + $0x570] sm:$0xff]
        %v1950 = vld [vmem:[%s283 + $0x578] sm:$0xff]
        %v1951 = vld [vmem:[%s283 + $0x580] sm:$0xff]
        %v1952 = vld [vmem:[%s283 + $0x588] sm:$0xff]
        %v1953 = vld [vmem:[%s283 + $0x590] sm:$0xff]
        %v1954 = vld [vmem:[%s283 + $0x598] sm:$0xff]
        %v1955 = vld [vmem:[%s283 + $0x5a0] sm:$0xff]
        %v1956 = vld [vmem:[%s283 + $0x5a8] sm:$0xff]
        %v1957 = vld [vmem:[%s283 + $0x5b0] sm:$0xff]
        %v1958 = vld [vmem:[%s283 + $0x5b8] sm:$0xff]
        %v1959 = vld [vmem:[%s283 + $0x5c0] sm:$0xff]
        %v1960 = vld [vmem:[%s283 + $0x5c8] sm:$0xff]
        %v1961 = vld [vmem:[%s283 + $0x5d0] sm:$0xff]
        %v1962 = vld [vmem:[%s283 + $0x5d8] sm:$0xff]
        %v1963 = vld [vmem:[%s283 + $0x5e0] sm:$0xff]
        %v1964 = vld [vmem:[%s283 + $0x5e8] sm:$0xff]
        %v1965 = vld [vmem:[%s283 + $0x5f0] sm:$0xff]
        %v1966 = vld [vmem:[%s283 + $0x5f8] sm:$0xff]
        %v1967 = vld [vmem:[%s283 + $0x600] sm:$0xff]
        %v1968 = vld [vmem:[%s283 + $0x608] sm:$0xff]
        %v1969 = vld [vmem:[%s283 + $0x610] sm:$0xff]
        %v1970 = vld [vmem:[%s283 + $0x618] sm:$0xff]
        %v1971 = vld [vmem:[%s283 + $0x620] sm:$0xff]
        %v1972 = vld [vmem:[%s283 + $0x628] sm:$0xff]
        %v1973 = vld [vmem:[%s283 + $0x630] sm:$0xff]
        %v1974 = vld [vmem:[%s283 + $0x638] sm:$0xff]
        %v1975 = vld [vmem:[%s283 + $0x640] sm:$0xff]
        %v1976 = vld [vmem:[%s283 + $0x648] sm:$0xff]
        %v1977 = vld [vmem:[%s283 + $0x650] sm:$0xff]
        %v1978 = vld [vmem:[%s283 + $0x658] sm:$0xff]
        %v1979 = vld [vmem:[%s283 + $0x660] sm:$0xff]
        %v1980 = vld [vmem:[%s283 + $0x668] sm:$0xff]
        %v1981 = vld [vmem:[%s283 + $0x670] sm:$0xff]
        %v1982 = vld [vmem:[%s283 + $0x678] sm:$0xff]
        %v1983 = vld [vmem:[%s283 + $0x680] sm:$0xff]
        %v1984 = vld [vmem:[%s283 + $0x688] sm:$0xff]
        %v1985 = vld [vmem:[%s283 + $0x690] sm:$0xff]
        %v1986 = vld [vmem:[%s283 + $0x698] sm:$0xff]
        %v1987 = vld [vmem:[%s283 + $0x6a0] sm:$0xff]
        %v1988 = vld [vmem:[%s283 + $0x6a8] sm:$0xff]
        %v1989 = vld [vmem:[%s283 + $0x6b0] sm:$0xff]
        %v1990 = vld [vmem:[%s283 + $0x6b8] sm:$0xff]
        %v1991 = vld [vmem:[%s283 + $0x6c0] sm:$0xff]
        %v1992 = vld [vmem:[%s283 + $0x6c8] sm:$0xff]
        %v1993 = vld [vmem:[%s283 + $0x6d0] sm:$0xff]
        %v1994 = vld [vmem:[%s283 + $0x6d8] sm:$0xff]
        %v1995 = vld [vmem:[%s283 + $0x6e0] sm:$0xff]
        %v1996 = vld [vmem:[%s283 + $0x6e8] sm:$0xff]
        %v1997 = vld [vmem:[%s283 + $0x6f0] sm:$0xff]
        %v1998 = vld [vmem:[%s283 + $0x6f8] sm:$0xff]
        %v1999 = vld [vmem:[%s283 + $0x700] sm:$0xff]
        %v2000 = vld [vmem:[%s283 + $0x708] sm:$0xff]
        %v2001 = vld [vmem:[%s283 + $0x710] sm:$0xff]
        %v2002 = vld [vmem:[%s283 + $0x718] sm:$0xff]
        %v2003 = vld [vmem:[%s283 + $0x720] sm:$0xff]
        %v2004 = vld [vmem:[%s283 + $0x728] sm:$0xff]
        %v2005 = vld [vmem:[%s283 + $0x730] sm:$0xff]
        %v2006 = vld [vmem:[%s283 + $0x738] sm:$0xff]
        %v2007 = vld [vmem:[%s283 + $0x740] sm:$0xff]
        %v2008 = vld [vmem:[%s283 + $0x748] sm:$0xff]
        %v2009 = vld [vmem:[%s283 + $0x750] sm:$0xff]
        %v2010 = vld [vmem:[%s283 + $0x758] sm:$0xff]
        %v2011 = vld [vmem:[%s283 + $0x760] sm:$0xff]
        %v2012 = vld [vmem:[%s283 + $0x768] sm:$0xff]
        %v2013 = vld [vmem:[%s283 + $0x770] sm:$0xff]
        %v2014 = vld [vmem:[%s283 + $0x778] sm:$0xff]
        %v2015 = vld [vmem:[%s283 + $0x780] sm:$0xff]
        %v2016 = vld [vmem:[%s283 + $0x788] sm:$0xff]
        %v2017 = vld [vmem:[%s283 + $0x790] sm:$0xff]
        %v2018 = vld [vmem:[%s283 + $0x798] sm:$0xff]
        %v2019 = vld [vmem:[%s283 + $0x7a0] sm:$0xff]
        %v2020 = vld [vmem:[%s283 + $0x7a8] sm:$0xff]
        %v2021 = vld [vmem:[%s283 + $0x7b0] sm:$0xff]
        %v2022 = vld [vmem:[%s283 + $0x7b8] sm:$0xff]
        %v2023 = vld [vmem:[%s283 + $0x7c0] sm:$0xff]
        %v2024 = vld [vmem:[%s283 + $0x7c8] sm:$0xff]
        %v2025 = vld [vmem:[%s283 + $0x7d0] sm:$0xff]
        %v2026 = vld [vmem:[%s283 + $0x7d8] sm:$0xff]
        %v2027 = vld [vmem:[%s283 + $0x7e0] sm:$0xff]
        %v2028 = vld [vmem:[%s283 + $0x7e8] sm:$0xff]
        %v2029 = vld [vmem:[%s283 + $0x7f0] sm:$0xff]
        %v2030 = vld [vmem:[%s283 + $0x7f8] sm:$0xff]
        %v2031 = vld [vmem:[%s283 + $0x800] sm:$0xff]
        %v2032 = vld [vmem:[%s283 + $0x808] sm:$0xff]
        %v2033 = vld [vmem:[%s283 + $0x810] sm:$0xff]
        %v2034 = vld [vmem:[%s283 + $0x818] sm:$0xff]
        %v2035 = vld [vmem:[%s283 + $0x820] sm:$0xff]
        %v2036 = vld [vmem:[%s283 + $0x828] sm:$0xff]
        %v2037 = vld [vmem:[%s283 + $0x830] sm:$0xff]
        %v2038 = vld [vmem:[%s283 + $0x838] sm:$0xff]
        %v2039 = vld [vmem:[%s283 + $0x840] sm:$0xff]
        %v2040 = vld [vmem:[%s283 + $0x848] sm:$0xff]
        %v2041 = vld [vmem:[%s283 + $0x850] sm:$0xff]
        %v2042 = vld [vmem:[%s283 + $0x858] sm:$0xff]
        %v2043 = vld [vmem:[%s283 + $0x860] sm:$0xff]
        %v2044 = vld [vmem:[%s283 + $0x868] sm:$0xff]
        %v2045 = vld [vmem:[%s283 + $0x870] sm:$0xff]
        %v2046 = vld [vmem:[%s283 + $0x878] sm:$0xff]
        %v2047 = vld [vmem:[%s283 + $0x880] sm:$0xff]
        %v2048 = vld [vmem:[%s283 + $0x888] sm:$0xff]
        %v2049 = vld [vmem:[%s283 + $0x890] sm:$0xff]
        %v2050 = vld [vmem:[%s283 + $0x898] sm:$0xff]
        %v2051 = vld [vmem:[%s283 + $0x8a0] sm:$0xff]
        %v2052 = vld [vmem:[%s283 + $0x8a8] sm:$0xff]
        %v2053 = vld [vmem:[%s283 + $0x8b0] sm:$0xff]
        %v2054 = vld [vmem:[%s283 + $0x8b8] sm:$0xff]
        %v2055 = vld [vmem:[%s283 + $0x8c0] sm:$0xff]
        %v2056 = vld [vmem:[%s283 + $0x8c8] sm:$0xff]
        %v2057 = vld [vmem:[%s283 + $0x8d0] sm:$0xff]
        %v2058 = vld [vmem:[%s283 + $0x8d8] sm:$0xff]
        %v2059 = vld [vmem:[%s283 + $0x8e0] sm:$0xff]
        %v2060 = vld [vmem:[%s283 + $0x8e8] sm:$0xff]
        %v2061 = vld [vmem:[%s283 + $0x8f0] sm:$0xff]
        %v2062 = vld [vmem:[%s283 + $0x8f8] sm:$0xff]
        %v2063 = vld [vmem:[%s283 + $0x900] sm:$0xff]
        %v2064 = vld [vmem:[%s283 + $0x908] sm:$0xff]
        %v2065 = vld [vmem:[%s283 + $0x910] sm:$0xff]
        %v2066 = vld [vmem:[%s283 + $0x918] sm:$0xff]
        %v2067 = vld [vmem:[%s283 + $0x920] sm:$0xff]
        %v2068 = vld [vmem:[%s283 + $0x928] sm:$0xff]
        %v2069 = vld [vmem:[%s283 + $0x930] sm:$0xff]
        %v2070 = vld [vmem:[%s283 + $0x938] sm:$0xff]
        %v2071 = vld [vmem:[%s283 + $0x940] sm:$0xff]
        %v2072 = vld [vmem:[%s283 + $0x948] sm:$0xff]
        %v2073 = vld [vmem:[%s283 + $0x950] sm:$0xff]
        %v2074 = vld [vmem:[%s283 + $0x958] sm:$0xff]
        %v2075 = vld [vmem:[%s283 + $0x960] sm:$0xff]
        %v2076 = vld [vmem:[%s283 + $0x968] sm:$0xff]
        %v2077 = vld [vmem:[%s283 + $0x970] sm:$0xff]
        %v2078 = vld [vmem:[%s283 + $0x978] sm:$0xff]
        %v2079 = vld [vmem:[%s283 + $0x980] sm:$0xff]
        %v2080 = vld [vmem:[%s283 + $0x988] sm:$0xff]
        %v2081 = vld [vmem:[%s283 + $0x990] sm:$0xff]
        %v2082 = vld [vmem:[%s283 + $0x998] sm:$0xff]
        %v2083 = vld [vmem:[%s283 + $0x9a0] sm:$0xff]
        %v2084 = vld [vmem:[%s283 + $0x9a8] sm:$0xff]
        %v2085 = vld [vmem:[%s283 + $0x9b0] sm:$0xff]
        %v2086 = vld [vmem:[%s283 + $0x9b8] sm:$0xff]
        %v2087 = vld [vmem:[%s283 + $0x9c0] sm:$0xff]
        %v2088 = vld [vmem:[%s283 + $0x9c8] sm:$0xff]
        %v2089 = vld [vmem:[%s283 + $0x9d0] sm:$0xff]
        %v2090 = vld [vmem:[%s283 + $0x9d8] sm:$0xff]
        %v2091 = vld [vmem:[%s283 + $0x9e0] sm:$0xff]
        %v2092 = vld [vmem:[%s283 + $0x9e8] sm:$0xff]
        %v2093 = vld [vmem:[%s283 + $0x9f0] sm:$0xff]
        %v2094 = vld [vmem:[%s283 + $0x9f8] sm:$0xff]
        %v2095 = vld [vmem:[%s283 + $0xa00] sm:$0xff]
        %v2096 = vld [vmem:[%s283 + $0xa08] sm:$0xff]
        %v2097 = vld [vmem:[%s283 + $0xa10] sm:$0xff]
        %v2098 = vld [vmem:[%s283 + $0xa18] sm:$0xff]
        %v2099 = vld [vmem:[%s283 + $0xa20] sm:$0xff]
        %v2100 = vld [vmem:[%s283 + $0xa28] sm:$0xff]
        %v2101 = vld [vmem:[%s283 + $0xa30] sm:$0xff]
        %v2102 = vld [vmem:[%s283 + $0xa38] sm:$0xff]
        %v2103 = vld [vmem:[%s283 + $0xa40] sm:$0xff]
        %v2104 = vld [vmem:[%s283 + $0xa48] sm:$0xff]
        %v2105 = vld [vmem:[%s283 + $0xa50] sm:$0xff]
        %v2106 = vld [vmem:[%s283 + $0xa58] sm:$0xff]
        %v2107 = vld [vmem:[%s283 + $0xa60] sm:$0xff]
        %v2108 = vld [vmem:[%s283 + $0xa68] sm:$0xff]
        %v2109 = vld [vmem:[%s283 + $0xa70] sm:$0xff]
        %v2110 = vld [vmem:[%s283 + $0xa78] sm:$0xff]
        %v2111 = vld [vmem:[%s283 + $0xa80] sm:$0xff]
        %v2112 = vld [vmem:[%s283 + $0xa88] sm:$0xff]
        %v2113 = vld [vmem:[%s283 + $0xa90] sm:$0xff]
        %v2114 = vld [vmem:[%s283 + $0xa98] sm:$0xff]
        %v2115 = vld [vmem:[%s283 + $0xaa0] sm:$0xff]
        %v2116 = vld [vmem:[%s283 + $0xaa8] sm:$0xff]
        %v2117 = vld [vmem:[%s283 + $0xab0] sm:$0xff]
        %v2118 = vld [vmem:[%s283 + $0xab8] sm:$0xff]
        %v2119 = vld [vmem:[%s283 + $0xac0] sm:$0xff]
        %v2120 = vld [vmem:[%s283 + $0xac8] sm:$0xff]
        %v2121 = vld [vmem:[%s283 + $0xad0] sm:$0xff]
        %v2122 = vld [vmem:[%s283 + $0xad8] sm:$0xff]
        %v2123 = vld [vmem:[%s283 + $0xae0] sm:$0xff]
        %v2124 = vld [vmem:[%s283 + $0xae8] sm:$0xff]
        %v2125 = vld [vmem:[%s283 + $0xaf0] sm:$0xff]
        %v2126 = vld [vmem:[%s283 + $0xaf8] sm:$0xff]
        %v2127 = vld [vmem:[%s283 + $0xb00] sm:$0xff]
        %v2128 = vld [vmem:[%s283 + $0xb08] sm:$0xff]
        %v2129 = vld [vmem:[%s283 + $0xb10] sm:$0xff]
        %v2130 = vld [vmem:[%s283 + $0xb18] sm:$0xff]
        %v2131 = vld [vmem:[%s283 + $0xb20] sm:$0xff]
        %v2132 = vld [vmem:[%s283 + $0xb28] sm:$0xff]
        %v2133 = vld [vmem:[%s283 + $0xb30] sm:$0xff]
        %v2134 = vld [vmem:[%s283 + $0xb38] sm:$0xff]
        %v2135 = vld [vmem:[%s283 + $0xb40] sm:$0xff]
        %v2136 = vld [vmem:[%s283 + $0xb48] sm:$0xff]
        %v2137 = vld [vmem:[%s283 + $0xb50] sm:$0xff]
        %v2138 = vld [vmem:[%s283 + $0xb58] sm:$0xff]
        %v2139 = vld [vmem:[%s283 + $0xb60] sm:$0xff]
        %v2140 = vld [vmem:[%s283 + $0xb68] sm:$0xff]
        %v2141 = vld [vmem:[%s283 + $0xb70] sm:$0xff]
        %v2142 = vld [vmem:[%s283 + $0xb78] sm:$0xff]
        %v2143 = vld [vmem:[%s283 + $0xb80] sm:$0xff]
        %v2144 = vld [vmem:[%s283 + $0xb88] sm:$0xff]
        %v2145 = vld [vmem:[%s283 + $0xb90] sm:$0xff]
        %v2146 = vld [vmem:[%s283 + $0xb98] sm:$0xff]
        %v2147 = vld [vmem:[%s283 + $0xba0] sm:$0xff]
        %v2148 = vld [vmem:[%s283 + $0xba8] sm:$0xff]
        %v2149 = vld [vmem:[%s283 + $0xbb0] sm:$0xff]
        %v2150 = vld [vmem:[%s283 + $0xbb8] sm:$0xff]
        %v2151 = vld [vmem:[%s283 + $0xbc0] sm:$0xff]
        %v2152 = vld [vmem:[%s283 + $0xbc8] sm:$0xff]
        %v2153 = vld [vmem:[%s283 + $0xbd0] sm:$0xff]
        %v2154 = vld [vmem:[%s283 + $0xbd8] sm:$0xff]
        %v2155 = vld [vmem:[%s283 + $0xbe0] sm:$0xff]
        %v2156 = vld [vmem:[%s283 + $0xbe8] sm:$0xff]
        %v2157 = vld [vmem:[%s283 + $0xbf0] sm:$0xff]
        %v2158 = vld [vmem:[%s283 + $0xbf8] sm:$0xff]
        %v2159 = vld [vmem:[%s283 + $0xc00] sm:$0xff]
        %v2160 = vld [vmem:[%s283 + $0xc08] sm:$0xff]
        %v2161 = vld [vmem:[%s283 + $0xc10] sm:$0xff]
        %v2162 = vld [vmem:[%s283 + $0xc18] sm:$0xff]
        %v2163 = vld [vmem:[%s283 + $0xc20] sm:$0xff]
        %v2164 = vld [vmem:[%s283 + $0xc28] sm:$0xff]
        %v2165 = vld [vmem:[%s283 + $0xc30] sm:$0xff]
        %v2166 = vld [vmem:[%s283 + $0xc38] sm:$0xff]
        %v2167 = vld [vmem:[%s283 + $0xc40] sm:$0xff]
        %v2168 = vld [vmem:[%s283 + $0xc48] sm:$0xff]
        %v2169 = vld [vmem:[%s283 + $0xc50] sm:$0xff]
        %v2170 = vld [vmem:[%s283 + $0xc58] sm:$0xff]
        %v2171 = vld [vmem:[%s283 + $0xc60] sm:$0xff]
        %v2172 = vld [vmem:[%s283 + $0xc68] sm:$0xff]
        %v2173 = vld [vmem:[%s283 + $0xc70] sm:$0xff]
        %v2174 = vld [vmem:[%s283 + $0xc78] sm:$0xff]
        %v2175 = vld [vmem:[%s283 + $0xc80] sm:$0xff]
        %v2176 = vld [vmem:[%s283 + $0xc88] sm:$0xff]
        %v2177 = vld [vmem:[%s283 + $0xc90] sm:$0xff]
        %v2178 = vld [vmem:[%s283 + $0xc98] sm:$0xff]
        %v2179 = vld [vmem:[%s283 + $0xca0] sm:$0xff]
        %v2180 = vld [vmem:[%s283 + $0xca8] sm:$0xff]
        %v2181 = vld [vmem:[%s283 + $0xcb0] sm:$0xff]
        %v2182 = vld [vmem:[%s283 + $0xcb8] sm:$0xff]
        %v2183 = vld [vmem:[%s283 + $0xcc0] sm:$0xff]
        %v2184 = vld [vmem:[%s283 + $0xcc8] sm:$0xff]
        %v2185 = vld [vmem:[%s283 + $0xcd0] sm:$0xff]
        %v2186 = vld [vmem:[%s283 + $0xcd8] sm:$0xff]
        %v2187 = vld [vmem:[%s283 + $0xce0] sm:$0xff]
        %v2188 = vld [vmem:[%s283 + $0xce8] sm:$0xff]
        %v2189 = vld [vmem:[%s283 + $0xcf0] sm:$0xff]
        %v2190 = vld [vmem:[%s283 + $0xcf8] sm:$0xff]
        %v2191 = vld [vmem:[%s283 + $0xd00] sm:$0xff]
        %v2192 = vld [vmem:[%s283 + $0xd08] sm:$0xff]
        %v2193 = vld [vmem:[%s283 + $0xd10] sm:$0xff]
        %v2194 = vld [vmem:[%s283 + $0xd18] sm:$0xff]
        %v2195 = vld [vmem:[%s283 + $0xd20] sm:$0xff]
        %v2196 = vld [vmem:[%s283 + $0xd28] sm:$0xff]
        %v2197 = vld [vmem:[%s283 + $0xd30] sm:$0xff]
        %v2198 = vld [vmem:[%s283 + $0xd38] sm:$0xff]
        %v2199 = vld [vmem:[%s283 + $0xd40] sm:$0xff]
        %v2200 = vld [vmem:[%s283 + $0xd48] sm:$0xff]
        %v2201 = vld [vmem:[%s283 + $0xd50] sm:$0xff]
        %v2202 = vld [vmem:[%s283 + $0xd58] sm:$0xff]
        %v2203 = vld [vmem:[%s283 + $0xd60] sm:$0xff]
        %v2204 = vld [vmem:[%s283 + $0xd68] sm:$0xff]
        %v2205 = vld [vmem:[%s283 + $0xd70] sm:$0xff]
        %v2206 = vld [vmem:[%s283 + $0xd78] sm:$0xff]
        %v2639 = vunpack.c.l.b16 %v1775
        %v2640 = vunpack.c.h.b16 %v1775
        %v2641 = vunpack.c.l.b16 %v1776
        %v2642 = vunpack.c.h.b16 %v1776
        %v2643 = vunpack.c.l.b16 %v1777
        %v2644 = vunpack.c.h.b16 %v1777
        %v2645 = vunpack.c.l.b16 %v1778
        %v2646 = vunpack.c.h.b16 %v1778
        %v2647 = vunpack.c.l.b16 %v1779
        %v2648 = vunpack.c.h.b16 %v1779
        %v2649 = vunpack.c.l.b16 %v1780
        %v2650 = vunpack.c.h.b16 %v1780
        %v2651 = vunpack.c.l.b16 %v1781
        %v2652 = vunpack.c.h.b16 %v1781
        %v2653 = vunpack.c.l.b16 %v1782
        %v2654 = vunpack.c.h.b16 %v1782
        %v2655 = vunpack.c.l.b16 %v1783
        %v2656 = vunpack.c.h.b16 %v1783
        %v2657 = vunpack.c.l.b16 %v1784
        %v2658 = vunpack.c.h.b16 %v1784
        %v2659 = vunpack.c.l.b16 %v1785
        %v2660 = vunpack.c.h.b16 %v1785
        %v2661 = vunpack.c.l.b16 %v1786
        %v2662 = vunpack.c.h.b16 %v1786
        %v2663 = vunpack.c.l.b16 %v1787
        %v2664 = vunpack.c.h.b16 %v1787
        %v2665 = vunpack.c.l.b16 %v1788
        %v2666 = vunpack.c.h.b16 %v1788
        %v2667 = vunpack.c.l.b16 %v1789
        %v2668 = vunpack.c.h.b16 %v1789
        %v2669 = vunpack.c.l.b16 %v1790
        %v2670 = vunpack.c.h.b16 %v1790
        %v2671 = vunpack.c.l.b16 %v1791
        %v2672 = vunpack.c.h.b16 %v1791
        %v2673 = vunpack.c.l.b16 %v1792
        %v2674 = vunpack.c.h.b16 %v1792
        %v2675 = vunpack.c.l.b16 %v1793
        %v2676 = vunpack.c.h.b16 %v1793
        %v2677 = vunpack.c.l.b16 %v1794
        %v2678 = vunpack.c.h.b16 %v1794
        %v2679 = vunpack.c.l.b16 %v1795
        %v2680 = vunpack.c.h.b16 %v1795
        %v2681 = vunpack.c.l.b16 %v1796
        %v2682 = vunpack.c.h.b16 %v1796
        %v2683 = vunpack.c.l.b16 %v1797
        %v2684 = vunpack.c.h.b16 %v1797
        %v2685 = vunpack.c.l.b16 %v1798
        %v2686 = vunpack.c.h.b16 %v1798
        %v2687 = vunpack.c.l.b16 %v1799
        %v2688 = vunpack.c.h.b16 %v1799
        %v2689 = vunpack.c.l.b16 %v1800
        %v2690 = vunpack.c.h.b16 %v1800
        %v2691 = vunpack.c.l.b16 %v1801
        %v2692 = vunpack.c.h.b16 %v1801
        %v2693 = vunpack.c.l.b16 %v1802
        %v2694 = vunpack.c.h.b16 %v1802
        %v2695 = vunpack.c.l.b16 %v1803
        %v2696 = vunpack.c.h.b16 %v1803
        %v2697 = vunpack.c.l.b16 %v1804
        %v2698 = vunpack.c.h.b16 %v1804
        %v2699 = vunpack.c.l.b16 %v1805
        %v2700 = vunpack.c.h.b16 %v1805
        %v2701 = vunpack.c.l.b16 %v1806
        %v2702 = vunpack.c.h.b16 %v1806
        %v2703 = vunpack.c.l.b16 %v1807
        %v2704 = vunpack.c.h.b16 %v1807
        %v2705 = vunpack.c.l.b16 %v1808
        %v2706 = vunpack.c.h.b16 %v1808
        %v2707 = vunpack.c.l.b16 %v1809
        %v2708 = vunpack.c.h.b16 %v1809
        %v2709 = vunpack.c.l.b16 %v1810
        %v2710 = vunpack.c.h.b16 %v1810
        %v2711 = vunpack.c.l.b16 %v1811
        %v2712 = vunpack.c.h.b16 %v1811
        %v2713 = vunpack.c.l.b16 %v1812
        %v2714 = vunpack.c.h.b16 %v1812
        %v2715 = vunpack.c.l.b16 %v1813
        %v2716 = vunpack.c.h.b16 %v1813
        %v2717 = vunpack.c.l.b16 %v1814
        %v2718 = vunpack.c.h.b16 %v1814
        %v2719 = vunpack.c.l.b16 %v1815
        %v2720 = vunpack.c.h.b16 %v1815
        %v2721 = vunpack.c.l.b16 %v1816
        %v2722 = vunpack.c.h.b16 %v1816
        %v2723 = vunpack.c.l.b16 %v1817
        %v2724 = vunpack.c.h.b16 %v1817
        %v2725 = vunpack.c.l.b16 %v1818
        %v2726 = vunpack.c.h.b16 %v1818
        %v2727 = vunpack.c.l.b16 %v1819
        %v2728 = vunpack.c.h.b16 %v1819
        %v2729 = vunpack.c.l.b16 %v1820
        %v2730 = vunpack.c.h.b16 %v1820
        %v2731 = vunpack.c.l.b16 %v1821
        %v2732 = vunpack.c.h.b16 %v1821
        %v2733 = vunpack.c.l.b16 %v1822
        %v2734 = vunpack.c.h.b16 %v1822
        %v2735 = vunpack.c.l.b16 %v1823
        %v2736 = vunpack.c.h.b16 %v1823
        %v2737 = vunpack.c.l.b16 %v1824
        %v2738 = vunpack.c.h.b16 %v1824
        %v2739 = vunpack.c.l.b16 %v1825
        %v2740 = vunpack.c.h.b16 %v1825
        %v2741 = vunpack.c.l.b16 %v1826
        %v2742 = vunpack.c.h.b16 %v1826
        %v2743 = vunpack.c.l.b16 %v1827
        %v2744 = vunpack.c.h.b16 %v1827
        %v2745 = vunpack.c.l.b16 %v1828
        %v2746 = vunpack.c.h.b16 %v1828
        %v2747 = vunpack.c.l.b16 %v1829
        %v2748 = vunpack.c.h.b16 %v1829
        %v2749 = vunpack.c.l.b16 %v1830
        %v2750 = vunpack.c.h.b16 %v1830
        %v2751 = vunpack.c.l.b16 %v1831
        %v2752 = vunpack.c.h.b16 %v1831
        %v2753 = vunpack.c.l.b16 %v1832
        %v2754 = vunpack.c.h.b16 %v1832
        %v2755 = vunpack.c.l.b16 %v1833
        %v2756 = vunpack.c.h.b16 %v1833
        %v2757 = vunpack.c.l.b16 %v1834
        %v2758 = vunpack.c.h.b16 %v1834
        %v2759 = vunpack.c.l.b16 %v1835
        %v2760 = vunpack.c.h.b16 %v1835
        %v2761 = vunpack.c.l.b16 %v1836
        %v2762 = vunpack.c.h.b16 %v1836
        %v2763 = vunpack.c.l.b16 %v1837
        %v2764 = vunpack.c.h.b16 %v1837
        %v2765 = vunpack.c.l.b16 %v1838
        %v2766 = vunpack.c.h.b16 %v1838
        %v2767 = vunpack.c.l.b16 %v1839
        %v2768 = vunpack.c.h.b16 %v1839
        %v2769 = vunpack.c.l.b16 %v1840
        %v2770 = vunpack.c.h.b16 %v1840
        %v2771 = vunpack.c.l.b16 %v1841
        %v2772 = vunpack.c.h.b16 %v1841
        %v2773 = vunpack.c.l.b16 %v1842
        %v2774 = vunpack.c.h.b16 %v1842
        %v2775 = vunpack.c.l.b16 %v1843
        %v2776 = vunpack.c.h.b16 %v1843
        %v2777 = vunpack.c.l.b16 %v1844
        %v2778 = vunpack.c.h.b16 %v1844
        %v2779 = vunpack.c.l.b16 %v1845
        %v2780 = vunpack.c.h.b16 %v1845
        %v2781 = vunpack.c.l.b16 %v1846
        %v2782 = vunpack.c.h.b16 %v1846
        %v2783 = vunpack.c.l.b16 %v1847
        %v2784 = vunpack.c.h.b16 %v1847
        %v2785 = vunpack.c.l.b16 %v1848
        %v2786 = vunpack.c.h.b16 %v1848
        %v2787 = vunpack.c.l.b16 %v1849
        %v2788 = vunpack.c.h.b16 %v1849
        %v2789 = vunpack.c.l.b16 %v1850
        %v2790 = vunpack.c.h.b16 %v1850
        %v2791 = vunpack.c.l.b16 %v1851
        %v2792 = vunpack.c.h.b16 %v1851
        %v2793 = vunpack.c.l.b16 %v1852
        %v2794 = vunpack.c.h.b16 %v1852
        %v2795 = vunpack.c.l.b16 %v1853
        %v2796 = vunpack.c.h.b16 %v1853
        %v2797 = vunpack.c.l.b16 %v1854
        %v2798 = vunpack.c.h.b16 %v1854
        %v2799 = vunpack.c.l.b16 %v1855
        %v2800 = vunpack.c.h.b16 %v1855
        %v2801 = vunpack.c.l.b16 %v1856
        %v2802 = vunpack.c.h.b16 %v1856
        %v2803 = vunpack.c.l.b16 %v1857
        %v2804 = vunpack.c.h.b16 %v1857
        %v2805 = vunpack.c.l.b16 %v1858
        %v2806 = vunpack.c.h.b16 %v1858
        %v2807 = vunpack.c.l.b16 %v1859
        %v2808 = vunpack.c.h.b16 %v1859
        %v2809 = vunpack.c.l.b16 %v1860
        %v2810 = vunpack.c.h.b16 %v1860
        %v2811 = vunpack.c.l.b16 %v1861
        %v2812 = vunpack.c.h.b16 %v1861
        %v2813 = vunpack.c.l.b16 %v1862
        %v2814 = vunpack.c.h.b16 %v1862
        %v2815 = vunpack.c.l.b16 %v1863
        %v2816 = vunpack.c.h.b16 %v1863
        %v2817 = vunpack.c.l.b16 %v1864
        %v2818 = vunpack.c.h.b16 %v1864
        %v2819 = vunpack.c.l.b16 %v1865
        %v2820 = vunpack.c.h.b16 %v1865
        %v2821 = vunpack.c.l.b16 %v1866
        %v2822 = vunpack.c.h.b16 %v1866
        %v2823 = vunpack.c.l.b16 %v1867
        %v2824 = vunpack.c.h.b16 %v1867
        %v2825 = vunpack.c.l.b16 %v1868
        %v2826 = vunpack.c.h.b16 %v1868
        %v2827 = vunpack.c.l.b16 %v1869
        %v2828 = vunpack.c.h.b16 %v1869
        %v2829 = vunpack.c.l.b16 %v1870
        %v2830 = vunpack.c.h.b16 %v1870
        %v2831 = vunpack.c.l.b16 %v1871
        %v2832 = vunpack.c.h.b16 %v1871
        %v2833 = vunpack.c.l.b16 %v1872
        %v2834 = vunpack.c.h.b16 %v1872
        %v2835 = vunpack.c.l.b16 %v1873
        %v2836 = vunpack.c.h.b16 %v1873
        %v2837 = vunpack.c.l.b16 %v1874
        %v2838 = vunpack.c.h.b16 %v1874
        %v2839 = vunpack.c.l.b16 %v1875
        %v2840 = vunpack.c.h.b16 %v1875
        %v2841 = vunpack.c.l.b16 %v1876
        %v2842 = vunpack.c.h.b16 %v1876
        %v2843 = vunpack.c.l.b16 %v1877
        %v2844 = vunpack.c.h.b16 %v1877
        %v2845 = vunpack.c.l.b16 %v1878
        %v2846 = vunpack.c.h.b16 %v1878
        %v2847 = vunpack.c.l.b16 %v1879
        %v2848 = vunpack.c.h.b16 %v1879
        %v2849 = vunpack.c.l.b16 %v1880
        %v2850 = vunpack.c.h.b16 %v1880
        %v2851 = vunpack.c.l.b16 %v1881
        %v2852 = vunpack.c.h.b16 %v1881
        %v2853 = vunpack.c.l.b16 %v1882
        %v2854 = vunpack.c.h.b16 %v1882
        %v2855 = vunpack.c.l.b16 %v1883
        %v2856 = vunpack.c.h.b16 %v1883
        %v2857 = vunpack.c.l.b16 %v1884
        %v2858 = vunpack.c.h.b16 %v1884
        %v2859 = vunpack.c.l.b16 %v1885
        %v2860 = vunpack.c.h.b16 %v1885
        %v2861 = vunpack.c.l.b16 %v1886
        %v2862 = vunpack.c.h.b16 %v1886
        %v2863 = vunpack.c.l.b16 %v1887
        %v2864 = vunpack.c.h.b16 %v1887
        %v2865 = vunpack.c.l.b16 %v1888
        %v2866 = vunpack.c.h.b16 %v1888
        %v2867 = vunpack.c.l.b16 %v1889
        %v2868 = vunpack.c.h.b16 %v1889
        %v2869 = vunpack.c.l.b16 %v1890
        %v2870 = vunpack.c.h.b16 %v1890
        %v2871 = vunpack.c.l.b16 %v1891
        %v2872 = vunpack.c.h.b16 %v1891
        %v2873 = vunpack.c.l.b16 %v1892
        %v2874 = vunpack.c.h.b16 %v1892
        %v2875 = vunpack.c.l.b16 %v1893
        %v2876 = vunpack.c.h.b16 %v1893
        %v2877 = vunpack.c.l.b16 %v1894
        %v2878 = vunpack.c.h.b16 %v1894
        %v2879 = vunpack.c.l.b16 %v1895
        %v2880 = vunpack.c.h.b16 %v1895
        %v2881 = vunpack.c.l.b16 %v1896
        %v2882 = vunpack.c.h.b16 %v1896
        %v2883 = vunpack.c.l.b16 %v1897
        %v2884 = vunpack.c.h.b16 %v1897
        %v2885 = vunpack.c.l.b16 %v1898
        %v2886 = vunpack.c.h.b16 %v1898
        %v2887 = vunpack.c.l.b16 %v1899
        %v2888 = vunpack.c.h.b16 %v1899
        %v2889 = vunpack.c.l.b16 %v1900
        %v2890 = vunpack.c.h.b16 %v1900
        %v2891 = vunpack.c.l.b16 %v1901
        %v2892 = vunpack.c.h.b16 %v1901
        %v2893 = vunpack.c.l.b16 %v1902
        %v2894 = vunpack.c.h.b16 %v1902
        %v2895 = vunpack.c.l.b16 %v1903
        %v2896 = vunpack.c.h.b16 %v1903
        %v2897 = vunpack.c.l.b16 %v1904
        %v2898 = vunpack.c.h.b16 %v1904
        %v2899 = vunpack.c.l.b16 %v1905
        %v2900 = vunpack.c.h.b16 %v1905
        %v2901 = vunpack.c.l.b16 %v1906
        %v2902 = vunpack.c.h.b16 %v1906
        %v2903 = vunpack.c.l.b16 %v1907
        %v2904 = vunpack.c.h.b16 %v1907
        %v2905 = vunpack.c.l.b16 %v1908
        %v2906 = vunpack.c.h.b16 %v1908
        %v2907 = vunpack.c.l.b16 %v1909
        %v2908 = vunpack.c.h.b16 %v1909
        %v2909 = vunpack.c.l.b16 %v1910
        %v2910 = vunpack.c.h.b16 %v1910
        %v2911 = vunpack.c.l.b16 %v1911
        %v2912 = vunpack.c.h.b16 %v1911
        %v2913 = vunpack.c.l.b16 %v1912
        %v2914 = vunpack.c.h.b16 %v1912
        %v2915 = vunpack.c.l.b16 %v1913
        %v2916 = vunpack.c.h.b16 %v1913
        %v2917 = vunpack.c.l.b16 %v1914
        %v2918 = vunpack.c.h.b16 %v1914
        %v2919 = vunpack.c.l.b16 %v1915
        %v2920 = vunpack.c.h.b16 %v1915
        %v2921 = vunpack.c.l.b16 %v1916
        %v2922 = vunpack.c.h.b16 %v1916
        %v2923 = vunpack.c.l.b16 %v1917
        %v2924 = vunpack.c.h.b16 %v1917
        %v2925 = vunpack.c.l.b16 %v1918
        %v2926 = vunpack.c.h.b16 %v1918
        %v2927 = vunpack.c.l.b16 %v1919
        %v2928 = vunpack.c.h.b16 %v1919
        %v2929 = vunpack.c.l.b16 %v1920
        %v2930 = vunpack.c.h.b16 %v1920
        %v2931 = vunpack.c.l.b16 %v1921
        %v2932 = vunpack.c.h.b16 %v1921
        %v2933 = vunpack.c.l.b16 %v1922
        %v2934 = vunpack.c.h.b16 %v1922
        %v2935 = vunpack.c.l.b16 %v1923
        %v2936 = vunpack.c.h.b16 %v1923
        %v2937 = vunpack.c.l.b16 %v1924
        %v2938 = vunpack.c.h.b16 %v1924
        %v2939 = vunpack.c.l.b16 %v1925
        %v2940 = vunpack.c.h.b16 %v1925
        %v2941 = vunpack.c.l.b16 %v1926
        %v2942 = vunpack.c.h.b16 %v1926
        %v2943 = vunpack.c.l.b16 %v1927
        %v2944 = vunpack.c.h.b16 %v1927
        %v2945 = vunpack.c.l.b16 %v1928
        %v2946 = vunpack.c.h.b16 %v1928
        %v2947 = vunpack.c.l.b16 %v1929
        %v2948 = vunpack.c.h.b16 %v1929
        %v2949 = vunpack.c.l.b16 %v1930
        %v2950 = vunpack.c.h.b16 %v1930
        %v2951 = vunpack.c.l.b16 %v1931
        %v2952 = vunpack.c.h.b16 %v1931
        %v2953 = vunpack.c.l.b16 %v1932
        %v2954 = vunpack.c.h.b16 %v1932
        %v2955 = vunpack.c.l.b16 %v1933
        %v2956 = vunpack.c.h.b16 %v1933
        %v2957 = vunpack.c.l.b16 %v1934
        %v2958 = vunpack.c.h.b16 %v1934
        %v2959 = vunpack.c.l.b16 %v1935
        %v2960 = vunpack.c.h.b16 %v1935
        %v2961 = vunpack.c.l.b16 %v1936
        %v2962 = vunpack.c.h.b16 %v1936
        %v2963 = vunpack.c.l.b16 %v1937
        %v2964 = vunpack.c.h.b16 %v1937
        %v2965 = vunpack.c.l.b16 %v1938
        %v2966 = vunpack.c.h.b16 %v1938
        %v2967 = vunpack.c.l.b16 %v1939
        %v2968 = vunpack.c.h.b16 %v1939
        %v2969 = vunpack.c.l.b16 %v1940
        %v2970 = vunpack.c.h.b16 %v1940
        %v2971 = vunpack.c.l.b16 %v1941
        %v2972 = vunpack.c.h.b16 %v1941
        %v2973 = vunpack.c.l.b16 %v1942
        %v2974 = vunpack.c.h.b16 %v1942
        %v2975 = vunpack.c.l.b16 %v1943
        %v2976 = vunpack.c.h.b16 %v1943
        %v2977 = vunpack.c.l.b16 %v1944
        %v2978 = vunpack.c.h.b16 %v1944
        %v2979 = vunpack.c.l.b16 %v1945
        %v2980 = vunpack.c.h.b16 %v1945
        %v2981 = vunpack.c.l.b16 %v1946
        %v2982 = vunpack.c.h.b16 %v1946
        %v2983 = vunpack.c.l.b16 %v1947
        %v2984 = vunpack.c.h.b16 %v1947
        %v2985 = vunpack.c.l.b16 %v1948
        %v2986 = vunpack.c.h.b16 %v1948
        %v2987 = vunpack.c.l.b16 %v1949
        %v2988 = vunpack.c.h.b16 %v1949
        %v2989 = vunpack.c.l.b16 %v1950
        %v2990 = vunpack.c.h.b16 %v1950
        %v2991 = vunpack.c.l.b16 %v1951
        %v2992 = vunpack.c.h.b16 %v1951
        %v2993 = vunpack.c.l.b16 %v1952
        %v2994 = vunpack.c.h.b16 %v1952
        %v2995 = vunpack.c.l.b16 %v1953
        %v2996 = vunpack.c.h.b16 %v1953
        %v2997 = vunpack.c.l.b16 %v1954
        %v2998 = vunpack.c.h.b16 %v1954
        %v2999 = vunpack.c.l.b16 %v1955
        %v3000 = vunpack.c.h.b16 %v1955
        %v3001 = vunpack.c.l.b16 %v1956
        %v3002 = vunpack.c.h.b16 %v1956
        %v3003 = vunpack.c.l.b16 %v1957
        %v3004 = vunpack.c.h.b16 %v1957
        %v3005 = vunpack.c.l.b16 %v1958
        %v3006 = vunpack.c.h.b16 %v1958
        %v3007 = vunpack.c.l.b16 %v1959
        %v3008 = vunpack.c.h.b16 %v1959
        %v3009 = vunpack.c.l.b16 %v1960
        %v3010 = vunpack.c.h.b16 %v1960
        %v3011 = vunpack.c.l.b16 %v1961
        %v3012 = vunpack.c.h.b16 %v1961
        %v3013 = vunpack.c.l.b16 %v1962
        %v3014 = vunpack.c.h.b16 %v1962
        %v3015 = vunpack.c.l.b16 %v1963
        %v3016 = vunpack.c.h.b16 %v1963
        %v3017 = vunpack.c.l.b16 %v1964
        %v3018 = vunpack.c.h.b16 %v1964
        %v3019 = vunpack.c.l.b16 %v1965
        %v3020 = vunpack.c.h.b16 %v1965
        %v3021 = vunpack.c.l.b16 %v1966
        %v3022 = vunpack.c.h.b16 %v1966
        %v3023 = vunpack.c.l.b16 %v1967
        %v3024 = vunpack.c.h.b16 %v1967
        %v3025 = vunpack.c.l.b16 %v1968
        %v3026 = vunpack.c.h.b16 %v1968
        %v3027 = vunpack.c.l.b16 %v1969
        %v3028 = vunpack.c.h.b16 %v1969
        %v3029 = vunpack.c.l.b16 %v1970
        %v3030 = vunpack.c.h.b16 %v1970
        %v3031 = vunpack.c.l.b16 %v1971
        %v3032 = vunpack.c.h.b16 %v1971
        %v3033 = vunpack.c.l.b16 %v1972
        %v3034 = vunpack.c.h.b16 %v1972
        %v3035 = vunpack.c.l.b16 %v1973
        %v3036 = vunpack.c.h.b16 %v1973
        %v3037 = vunpack.c.l.b16 %v1974
        %v3038 = vunpack.c.h.b16 %v1974
        %v3039 = vunpack.c.l.b16 %v1975
        %v3040 = vunpack.c.h.b16 %v1975
        %v3041 = vunpack.c.l.b16 %v1976
        %v3042 = vunpack.c.h.b16 %v1976
        %v3043 = vunpack.c.l.b16 %v1977
        %v3044 = vunpack.c.h.b16 %v1977
        %v3045 = vunpack.c.l.b16 %v1978
        %v3046 = vunpack.c.h.b16 %v1978
        %v3047 = vunpack.c.l.b16 %v1979
        %v3048 = vunpack.c.h.b16 %v1979
        %v3049 = vunpack.c.l.b16 %v1980
        %v3050 = vunpack.c.h.b16 %v1980
        %v3051 = vunpack.c.l.b16 %v1981
        %v3052 = vunpack.c.h.b16 %v1981
        %v3053 = vunpack.c.l.b16 %v1982
        %v3054 = vunpack.c.h.b16 %v1982
        %v3055 = vunpack.c.l.b16 %v1983
        %v3056 = vunpack.c.h.b16 %v1983
        %v3057 = vunpack.c.l.b16 %v1984
        %v3058 = vunpack.c.h.b16 %v1984
        %v3059 = vunpack.c.l.b16 %v1985
        %v3060 = vunpack.c.h.b16 %v1985
        %v3061 = vunpack.c.l.b16 %v1986
        %v3062 = vunpack.c.h.b16 %v1986
        %v3063 = vunpack.c.l.b16 %v1987
        %v3064 = vunpack.c.h.b16 %v1987
        %v3065 = vunpack.c.l.b16 %v1988
        %v3066 = vunpack.c.h.b16 %v1988
        %v3067 = vunpack.c.l.b16 %v1989
        %v3068 = vunpack.c.h.b16 %v1989
        %v3069 = vunpack.c.l.b16 %v1990
        %v3070 = vunpack.c.h.b16 %v1990
        %v3071 = vunpack.c.l.b16 %v1991
        %v3072 = vunpack.c.h.b16 %v1991
        %v3073 = vunpack.c.l.b16 %v1992
        %v3074 = vunpack.c.h.b16 %v1992
        %v3075 = vunpack.c.l.b16 %v1993
        %v3076 = vunpack.c.h.b16 %v1993
        %v3077 = vunpack.c.l.b16 %v1994
        %v3078 = vunpack.c.h.b16 %v1994
        %v3079 = vunpack.c.l.b16 %v1995
        %v3080 = vunpack.c.h.b16 %v1995
        %v3081 = vunpack.c.l.b16 %v1996
        %v3082 = vunpack.c.h.b16 %v1996
        %v3083 = vunpack.c.l.b16 %v1997
        %v3084 = vunpack.c.h.b16 %v1997
        %v3085 = vunpack.c.l.b16 %v1998
        %v3086 = vunpack.c.h.b16 %v1998
        %v3087 = vunpack.c.l.b16 %v1999
        %v3088 = vunpack.c.h.b16 %v1999
        %v3089 = vunpack.c.l.b16 %v2000
        %v3090 = vunpack.c.h.b16 %v2000
        %v3091 = vunpack.c.l.b16 %v2001
        %v3092 = vunpack.c.h.b16 %v2001
        %v3093 = vunpack.c.l.b16 %v2002
        %v3094 = vunpack.c.h.b16 %v2002
        %v3095 = vunpack.c.l.b16 %v2003
        %v3096 = vunpack.c.h.b16 %v2003
        %v3097 = vunpack.c.l.b16 %v2004
        %v3098 = vunpack.c.h.b16 %v2004
        %v3099 = vunpack.c.l.b16 %v2005
        %v3100 = vunpack.c.h.b16 %v2005
        %v3101 = vunpack.c.l.b16 %v2006
        %v3102 = vunpack.c.h.b16 %v2006
        %v3103 = vunpack.c.l.b16 %v2007
        %v3104 = vunpack.c.h.b16 %v2007
        %v3105 = vunpack.c.l.b16 %v2008
        %v3106 = vunpack.c.h.b16 %v2008
        %v3107 = vunpack.c.l.b16 %v2009
        %v3108 = vunpack.c.h.b16 %v2009
        %v3109 = vunpack.c.l.b16 %v2010
        %v3110 = vunpack.c.h.b16 %v2010
        %v3111 = vunpack.c.l.b16 %v2011
        %v3112 = vunpack.c.h.b16 %v2011
        %v3113 = vunpack.c.l.b16 %v2012
        %v3114 = vunpack.c.h.b16 %v2012
        %v3115 = vunpack.c.l.b16 %v2013
        %v3116 = vunpack.c.h.b16 %v2013
        %v3117 = vunpack.c.l.b16 %v2014
        %v3118 = vunpack.c.h.b16 %v2014
        %v3119 = vunpack.c.l.b16 %v2015
        %v3120 = vunpack.c.h.b16 %v2015
        %v3121 = vunpack.c.l.b16 %v2016
        %v3122 = vunpack.c.h.b16 %v2016
        %v3123 = vunpack.c.l.b16 %v2017
        %v3124 = vunpack.c.h.b16 %v2017
        %v3125 = vunpack.c.l.b16 %v2018
        %v3126 = vunpack.c.h.b16 %v2018
        %v3127 = vunpack.c.l.b16 %v2019
        %v3128 = vunpack.c.h.b16 %v2019
        %v3129 = vunpack.c.l.b16 %v2020
        %v3130 = vunpack.c.h.b16 %v2020
        %v3131 = vunpack.c.l.b16 %v2021
        %v3132 = vunpack.c.h.b16 %v2021
        %v3133 = vunpack.c.l.b16 %v2022
        %v3134 = vunpack.c.h.b16 %v2022
        %v3135 = vunpack.c.l.b16 %v2023
        %v3136 = vunpack.c.h.b16 %v2023
        %v3137 = vunpack.c.l.b16 %v2024
        %v3138 = vunpack.c.h.b16 %v2024
        %v3139 = vunpack.c.l.b16 %v2025
        %v3140 = vunpack.c.h.b16 %v2025
        %v3141 = vunpack.c.l.b16 %v2026
        %v3142 = vunpack.c.h.b16 %v2026
        %v3143 = vunpack.c.l.b16 %v2027
        %v3144 = vunpack.c.h.b16 %v2027
        %v3145 = vunpack.c.l.b16 %v2028
        %v3146 = vunpack.c.h.b16 %v2028
        %v3147 = vunpack.c.l.b16 %v2029
        %v3148 = vunpack.c.h.b16 %v2029
        %v3149 = vunpack.c.l.b16 %v2030
        %v3150 = vunpack.c.h.b16 %v2030
        %v3151 = vunpack.c.l.b16 %v2031
        %v3152 = vunpack.c.h.b16 %v2031
        %v3153 = vunpack.c.l.b16 %v2032
        %v3154 = vunpack.c.h.b16 %v2032
        %v3155 = vunpack.c.l.b16 %v2033
        %v3156 = vunpack.c.h.b16 %v2033
        %v3157 = vunpack.c.l.b16 %v2034
        %v3158 = vunpack.c.h.b16 %v2034
        %v3159 = vunpack.c.l.b16 %v2035
        %v3160 = vunpack.c.h.b16 %v2035
        %v3161 = vunpack.c.l.b16 %v2036
        %v3162 = vunpack.c.h.b16 %v2036
        %v3163 = vunpack.c.l.b16 %v2037
        %v3164 = vunpack.c.h.b16 %v2037
        %v3165 = vunpack.c.l.b16 %v2038
        %v3166 = vunpack.c.h.b16 %v2038
        %v3167 = vunpack.c.l.b16 %v2039
        %v3168 = vunpack.c.h.b16 %v2039
        %v3169 = vunpack.c.l.b16 %v2040
        %v3170 = vunpack.c.h.b16 %v2040
        %v3171 = vunpack.c.l.b16 %v2041
        %v3172 = vunpack.c.h.b16 %v2041
        %v3173 = vunpack.c.l.b16 %v2042
        %v3174 = vunpack.c.h.b16 %v2042
        %v3175 = vunpack.c.l.b16 %v2043
        %v3176 = vunpack.c.h.b16 %v2043
        %v3177 = vunpack.c.l.b16 %v2044
        %v3178 = vunpack.c.h.b16 %v2044
        %v3179 = vunpack.c.l.b16 %v2045
        %v3180 = vunpack.c.h.b16 %v2045
        %v3181 = vunpack.c.l.b16 %v2046
        %v3182 = vunpack.c.h.b16 %v2046
        %v3183 = vunpack.c.l.b16 %v2047
        %v3184 = vunpack.c.h.b16 %v2047
        %v3185 = vunpack.c.l.b16 %v2048
        %v3186 = vunpack.c.h.b16 %v2048
        %v3187 = vunpack.c.l.b16 %v2049
        %v3188 = vunpack.c.h.b16 %v2049
        %v3189 = vunpack.c.l.b16 %v2050
        %v3190 = vunpack.c.h.b16 %v2050
        %v3191 = vunpack.c.l.b16 %v2051
        %v3192 = vunpack.c.h.b16 %v2051
        %v3193 = vunpack.c.l.b16 %v2052
        %v3194 = vunpack.c.h.b16 %v2052
        %v3195 = vunpack.c.l.b16 %v2053
        %v3196 = vunpack.c.h.b16 %v2053
        %v3197 = vunpack.c.l.b16 %v2054
        %v3198 = vunpack.c.h.b16 %v2054
        %v3199 = vunpack.c.l.b16 %v2055
        %v3200 = vunpack.c.h.b16 %v2055
        %v3201 = vunpack.c.l.b16 %v2056
        %v3202 = vunpack.c.h.b16 %v2056
        %v3203 = vunpack.c.l.b16 %v2057
        %v3204 = vunpack.c.h.b16 %v2057
        %v3205 = vunpack.c.l.b16 %v2058
        %v3206 = vunpack.c.h.b16 %v2058
        %v3207 = vunpack.c.l.b16 %v2059
        %v3208 = vunpack.c.h.b16 %v2059
        %v3209 = vunpack.c.l.b16 %v2060
        %v3210 = vunpack.c.h.b16 %v2060
        %v3211 = vunpack.c.l.b16 %v2061
        %v3212 = vunpack.c.h.b16 %v2061
        %v3213 = vunpack.c.l.b16 %v2062
        %v3214 = vunpack.c.h.b16 %v2062
        %v3215 = vunpack.c.l.b16 %v2063
        %v3216 = vunpack.c.h.b16 %v2063
        %v3217 = vunpack.c.l.b16 %v2064
        %v3218 = vunpack.c.h.b16 %v2064
        %v3219 = vunpack.c.l.b16 %v2065
        %v3220 = vunpack.c.h.b16 %v2065
        %v3221 = vunpack.c.l.b16 %v2066
        %v3222 = vunpack.c.h.b16 %v2066
        %v3223 = vunpack.c.l.b16 %v2067
        %v3224 = vunpack.c.h.b16 %v2067
        %v3225 = vunpack.c.l.b16 %v2068
        %v3226 = vunpack.c.h.b16 %v2068
        %v3227 = vunpack.c.l.b16 %v2069
        %v3228 = vunpack.c.h.b16 %v2069
        %v3229 = vunpack.c.l.b16 %v2070
        %v3230 = vunpack.c.h.b16 %v2070
        %v3231 = vunpack.c.l.b16 %v2071
        %v3232 = vunpack.c.h.b16 %v2071
        %v3233 = vunpack.c.l.b16 %v2072
        %v3234 = vunpack.c.h.b16 %v2072
        %v3235 = vunpack.c.l.b16 %v2073
        %v3236 = vunpack.c.h.b16 %v2073
        %v3237 = vunpack.c.l.b16 %v2074
        %v3238 = vunpack.c.h.b16 %v2074
        %v3239 = vunpack.c.l.b16 %v2075
        %v3240 = vunpack.c.h.b16 %v2075
        %v3241 = vunpack.c.l.b16 %v2076
        %v3242 = vunpack.c.h.b16 %v2076
        %v3243 = vunpack.c.l.b16 %v2077
        %v3244 = vunpack.c.h.b16 %v2077
        %v3245 = vunpack.c.l.b16 %v2078
        %v3246 = vunpack.c.h.b16 %v2078
        %v3247 = vunpack.c.l.b16 %v2079
        %v3248 = vunpack.c.h.b16 %v2079
        %v3249 = vunpack.c.l.b16 %v2080
        %v3250 = vunpack.c.h.b16 %v2080
        %v3251 = vunpack.c.l.b16 %v2081
        %v3252 = vunpack.c.h.b16 %v2081
        %v3253 = vunpack.c.l.b16 %v2082
        %v3254 = vunpack.c.h.b16 %v2082
        %v3255 = vunpack.c.l.b16 %v2083
        %v3256 = vunpack.c.h.b16 %v2083
        %v3257 = vunpack.c.l.b16 %v2084
        %v3258 = vunpack.c.h.b16 %v2084
        %v3259 = vunpack.c.l.b16 %v2085
        %v3260 = vunpack.c.h.b16 %v2085
        %v3261 = vunpack.c.l.b16 %v2086
        %v3262 = vunpack.c.h.b16 %v2086
        %v3263 = vunpack.c.l.b16 %v2087
        %v3264 = vunpack.c.h.b16 %v2087
        %v3265 = vunpack.c.l.b16 %v2088
        %v3266 = vunpack.c.h.b16 %v2088
        %v3267 = vunpack.c.l.b16 %v2089
        %v3268 = vunpack.c.h.b16 %v2089
        %v3269 = vunpack.c.l.b16 %v2090
        %v3270 = vunpack.c.h.b16 %v2090
        %v3271 = vunpack.c.l.b16 %v2091
        %v3272 = vunpack.c.h.b16 %v2091
        %v3273 = vunpack.c.l.b16 %v2092
        %v3274 = vunpack.c.h.b16 %v2092
        %v3275 = vunpack.c.l.b16 %v2093
        %v3276 = vunpack.c.h.b16 %v2093
        %v3277 = vunpack.c.l.b16 %v2094
        %v3278 = vunpack.c.h.b16 %v2094
        %v3279 = vunpack.c.l.b16 %v2095
        %v3280 = vunpack.c.h.b16 %v2095
        %v3281 = vunpack.c.l.b16 %v2096
        %v3282 = vunpack.c.h.b16 %v2096
        %v3283 = vunpack.c.l.b16 %v2097
        %v3284 = vunpack.c.h.b16 %v2097
        %v3285 = vunpack.c.l.b16 %v2098
        %v3286 = vunpack.c.h.b16 %v2098
        %v3287 = vunpack.c.l.b16 %v2099
        %v3288 = vunpack.c.h.b16 %v2099
        %v3289 = vunpack.c.l.b16 %v2100
        %v3290 = vunpack.c.h.b16 %v2100
        %v3291 = vunpack.c.l.b16 %v2101
        %v3292 = vunpack.c.h.b16 %v2101
        %v3293 = vunpack.c.l.b16 %v2102
        %v3294 = vunpack.c.h.b16 %v2102
        %v3295 = vunpack.c.l.b16 %v2103
        %v3296 = vunpack.c.h.b16 %v2103
        %v3297 = vunpack.c.l.b16 %v2104
        %v3298 = vunpack.c.h.b16 %v2104
        %v3299 = vunpack.c.l.b16 %v2105
        %v3300 = vunpack.c.h.b16 %v2105
        %v3301 = vunpack.c.l.b16 %v2106
        %v3302 = vunpack.c.h.b16 %v2106
        %v3303 = vunpack.c.l.b16 %v2107
        %v3304 = vunpack.c.h.b16 %v2107
        %v3305 = vunpack.c.l.b16 %v2108
        %v3306 = vunpack.c.h.b16 %v2108
        %v3307 = vunpack.c.l.b16 %v2109
        %v3308 = vunpack.c.h.b16 %v2109
        %v3309 = vunpack.c.l.b16 %v2110
        %v3310 = vunpack.c.h.b16 %v2110
        %v3311 = vunpack.c.l.b16 %v2111
        %v3312 = vunpack.c.h.b16 %v2111
        %v3313 = vunpack.c.l.b16 %v2112
        %v3314 = vunpack.c.h.b16 %v2112
        %v3315 = vunpack.c.l.b16 %v2113
        %v3316 = vunpack.c.h.b16 %v2113
        %v3317 = vunpack.c.l.b16 %v2114
        %v3318 = vunpack.c.h.b16 %v2114
        %v3319 = vunpack.c.l.b16 %v2115
        %v3320 = vunpack.c.h.b16 %v2115
        %v3321 = vunpack.c.l.b16 %v2116
        %v3322 = vunpack.c.h.b16 %v2116
        %v3323 = vunpack.c.l.b16 %v2117
        %v3324 = vunpack.c.h.b16 %v2117
        %v3325 = vunpack.c.l.b16 %v2118
        %v3326 = vunpack.c.h.b16 %v2118
        %v3327 = vunpack.c.l.b16 %v2119
        %v3328 = vunpack.c.h.b16 %v2119
        %v3329 = vunpack.c.l.b16 %v2120
        %v3330 = vunpack.c.h.b16 %v2120
        %v3331 = vunpack.c.l.b16 %v2121
        %v3332 = vunpack.c.h.b16 %v2121
        %v3333 = vunpack.c.l.b16 %v2122
        %v3334 = vunpack.c.h.b16 %v2122
        %v3335 = vunpack.c.l.b16 %v2123
        %v3336 = vunpack.c.h.b16 %v2123
        %v3337 = vunpack.c.l.b16 %v2124
        %v3338 = vunpack.c.h.b16 %v2124
        %v3339 = vunpack.c.l.b16 %v2125
        %v3340 = vunpack.c.h.b16 %v2125
        %v3341 = vunpack.c.l.b16 %v2126
        %v3342 = vunpack.c.h.b16 %v2126
        %v3343 = vunpack.c.l.b16 %v2127
        %v3344 = vunpack.c.h.b16 %v2127
        %v3345 = vunpack.c.l.b16 %v2128
        %v3346 = vunpack.c.h.b16 %v2128
        %v3347 = vunpack.c.l.b16 %v2129
        %v3348 = vunpack.c.h.b16 %v2129
        %v3349 = vunpack.c.l.b16 %v2130
        %v3350 = vunpack.c.h.b16 %v2130
        %v3351 = vunpack.c.l.b16 %v2131
        %v3352 = vunpack.c.h.b16 %v2131
        %v3353 = vunpack.c.l.b16 %v2132
        %v3354 = vunpack.c.h.b16 %v2132
        %v3355 = vunpack.c.l.b16 %v2133
        %v3356 = vunpack.c.h.b16 %v2133
        %v3357 = vunpack.c.l.b16 %v2134
        %v3358 = vunpack.c.h.b16 %v2134
        %v3359 = vunpack.c.l.b16 %v2135
        %v3360 = vunpack.c.h.b16 %v2135
        %v3361 = vunpack.c.l.b16 %v2136
        %v3362 = vunpack.c.h.b16 %v2136
        %v3363 = vunpack.c.l.b16 %v2137
        %v3364 = vunpack.c.h.b16 %v2137
        %v3365 = vunpack.c.l.b16 %v2138
        %v3366 = vunpack.c.h.b16 %v2138
        %v3367 = vunpack.c.l.b16 %v2139
        %v3368 = vunpack.c.h.b16 %v2139
        %v3369 = vunpack.c.l.b16 %v2140
        %v3370 = vunpack.c.h.b16 %v2140
        %v3371 = vunpack.c.l.b16 %v2141
        %v3372 = vunpack.c.h.b16 %v2141
        %v3373 = vunpack.c.l.b16 %v2142
        %v3374 = vunpack.c.h.b16 %v2142
        %v3375 = vunpack.c.l.b16 %v2143
        %v3376 = vunpack.c.h.b16 %v2143
        %v3377 = vunpack.c.l.b16 %v2144
        %v3378 = vunpack.c.h.b16 %v2144
        %v3379 = vunpack.c.l.b16 %v2145
        %v3380 = vunpack.c.h.b16 %v2145
        %v3381 = vunpack.c.l.b16 %v2146
        %v3382 = vunpack.c.h.b16 %v2146
        %v3383 = vunpack.c.l.b16 %v2147
        %v3384 = vunpack.c.h.b16 %v2147
        %v3385 = vunpack.c.l.b16 %v2148
        %v3386 = vunpack.c.h.b16 %v2148
        %v3387 = vunpack.c.l.b16 %v2149
        %v3388 = vunpack.c.h.b16 %v2149
        %v3389 = vunpack.c.l.b16 %v2150
        %v3390 = vunpack.c.h.b16 %v2150
        %v3391 = vunpack.c.l.b16 %v2151
        %v3392 = vunpack.c.h.b16 %v2151
        %v3393 = vunpack.c.l.b16 %v2152
        %v3394 = vunpack.c.h.b16 %v2152
        %v3395 = vunpack.c.l.b16 %v2153
        %v3396 = vunpack.c.h.b16 %v2153
        %v3397 = vunpack.c.l.b16 %v2154
        %v3398 = vunpack.c.h.b16 %v2154
        %v3399 = vunpack.c.l.b16 %v2155
        %v3400 = vunpack.c.h.b16 %v2155
        %v3401 = vunpack.c.l.b16 %v2156
        %v3402 = vunpack.c.h.b16 %v2156
        %v3403 = vunpack.c.l.b16 %v2157
        %v3404 = vunpack.c.h.b16 %v2157
        %v3405 = vunpack.c.l.b16 %v2158
        %v3406 = vunpack.c.h.b16 %v2158
        %v3407 = vunpack.c.l.b16 %v2159
        %v3408 = vunpack.c.h.b16 %v2159
        %v3409 = vunpack.c.l.b16 %v2160
        %v3410 = vunpack.c.h.b16 %v2160
        %v3411 = vunpack.c.l.b16 %v2161
        %v3412 = vunpack.c.h.b16 %v2161
        %v3413 = vunpack.c.l.b16 %v2162
        %v3414 = vunpack.c.h.b16 %v2162
        %v3415 = vunpack.c.l.b16 %v2163
        %v3416 = vunpack.c.h.b16 %v2163
        %v3417 = vunpack.c.l.b16 %v2164
        %v3418 = vunpack.c.h.b16 %v2164
        %v3419 = vunpack.c.l.b16 %v2165
        %v3420 = vunpack.c.h.b16 %v2165
        %v3421 = vunpack.c.l.b16 %v2166
        %v3422 = vunpack.c.h.b16 %v2166
        %v3423 = vunpack.c.l.b16 %v2167
        %v3424 = vunpack.c.h.b16 %v2167
        %v3425 = vunpack.c.l.b16 %v2168
        %v3426 = vunpack.c.h.b16 %v2168
        %v3427 = vunpack.c.l.b16 %v2169
        %v3428 = vunpack.c.h.b16 %v2169
        %v3429 = vunpack.c.l.b16 %v2170
        %v3430 = vunpack.c.h.b16 %v2170
        %v3431 = vunpack.c.l.b16 %v2171
        %v3432 = vunpack.c.h.b16 %v2171
        %v3433 = vunpack.c.l.b16 %v2172
        %v3434 = vunpack.c.h.b16 %v2172
        %v3435 = vunpack.c.l.b16 %v2173
        %v3436 = vunpack.c.h.b16 %v2173
        %v3437 = vunpack.c.l.b16 %v2174
        %v3438 = vunpack.c.h.b16 %v2174
        %v3439 = vunpack.c.l.b16 %v2175
        %v3440 = vunpack.c.h.b16 %v2175
        %v3441 = vunpack.c.l.b16 %v2176
        %v3442 = vunpack.c.h.b16 %v2176
        %v3443 = vunpack.c.l.b16 %v2177
        %v3444 = vunpack.c.h.b16 %v2177
        %v3445 = vunpack.c.l.b16 %v2178
        %v3446 = vunpack.c.h.b16 %v2178
        %v3447 = vunpack.c.l.b16 %v2179
        %v3448 = vunpack.c.h.b16 %v2179
        %v3449 = vunpack.c.l.b16 %v2180
        %v3450 = vunpack.c.h.b16 %v2180
        %v3451 = vunpack.c.l.b16 %v2181
        %v3452 = vunpack.c.h.b16 %v2181
        %v3453 = vunpack.c.l.b16 %v2182
        %v3454 = vunpack.c.h.b16 %v2182
        %v3455 = vunpack.c.l.b16 %v2183
        %v3456 = vunpack.c.h.b16 %v2183
        %v3457 = vunpack.c.l.b16 %v2184
        %v3458 = vunpack.c.h.b16 %v2184
        %v3459 = vunpack.c.l.b16 %v2185
        %v3460 = vunpack.c.h.b16 %v2185
        %v3461 = vunpack.c.l.b16 %v2186
        %v3462 = vunpack.c.h.b16 %v2186
        %v3463 = vunpack.c.l.b16 %v2187
        %v3464 = vunpack.c.h.b16 %v2187
        %v3465 = vunpack.c.l.b16 %v2188
        %v3466 = vunpack.c.h.b16 %v2188
        %v3467 = vunpack.c.l.b16 %v2189
        %v3468 = vunpack.c.h.b16 %v2189
        %v3469 = vunpack.c.l.b16 %v2190
        %v3470 = vunpack.c.h.b16 %v2190
        %v3471 = vunpack.c.l.b16 %v2191
        %v3472 = vunpack.c.h.b16 %v2191
        %v3473 = vunpack.c.l.b16 %v2192
        %v3474 = vunpack.c.h.b16 %v2192
        %v3475 = vunpack.c.l.b16 %v2193
        %v3476 = vunpack.c.h.b16 %v2193
        %v3477 = vunpack.c.l.b16 %v2194
        %v3478 = vunpack.c.h.b16 %v2194
        %v3479 = vunpack.c.l.b16 %v2195
        %v3480 = vunpack.c.h.b16 %v2195
        %v3481 = vunpack.c.l.b16 %v2196
        %v3482 = vunpack.c.h.b16 %v2196
        %v3483 = vunpack.c.l.b16 %v2197
        %v3484 = vunpack.c.h.b16 %v2197
        %v3485 = vunpack.c.l.b16 %v2198
        %v3486 = vunpack.c.h.b16 %v2198
        %v3487 = vunpack.c.l.b16 %v2199
        %v3488 = vunpack.c.h.b16 %v2199
        %v3489 = vunpack.c.l.b16 %v2200
        %v3490 = vunpack.c.h.b16 %v2200
        %v3491 = vunpack.c.l.b16 %v2201
        %v3492 = vunpack.c.h.b16 %v2201
        %v3493 = vunpack.c.l.b16 %v2202
        %v3494 = vunpack.c.h.b16 %v2202
        %v3495 = vunpack.c.l.b16 %v2203
        %v3496 = vunpack.c.h.b16 %v2203
        %v3497 = vunpack.c.l.b16 %v2204
        %v3498 = vunpack.c.h.b16 %v2204
        %v3499 = vunpack.c.l.b16 %v2205
        %v3500 = vunpack.c.h.b16 %v2205
        %v3501 = vunpack.c.l.b16 %v2206
        %v3502 = vunpack.c.h.b16 %v2206
        %v3503 = vpack.c.b16 %v2641, %v2639
        %v3504 = vpack.c.b16 %v2642, %v2640
        %v3505 = vpack.c.b16 %v2645, %v2643
        %v3506 = vpack.c.b16 %v2646, %v2644
        %v3507 = vpack.c.b16 %v2649, %v2647
        %v3508 = vpack.c.b16 %v2650, %v2648
        %v3509 = vpack.c.b16 %v2653, %v2651
        %v3510 = vpack.c.b16 %v2654, %v2652
        %v3511 = vpack.c.b16 %v2657, %v2655
        %v3512 = vpack.c.b16 %v2658, %v2656
        %v3513 = vpack.c.b16 %v2661, %v2659
        %v3514 = vpack.c.b16 %v2662, %v2660
        %v3515 = vpack.c.b16 %v2665, %v2663
        %v3516 = vpack.c.b16 %v2666, %v2664
        %v3517 = vpack.c.b16 %v2669, %v2667
        %v3518 = vpack.c.b16 %v2670, %v2668
        %v3519 = vpack.c.b16 %v2673, %v2671
        %v3520 = vpack.c.b16 %v2674, %v2672
        %v3521 = vpack.c.b16 %v2677, %v2675
        %v3522 = vpack.c.b16 %v2678, %v2676
        %v3523 = vpack.c.b16 %v2681, %v2679
        %v3524 = vpack.c.b16 %v2682, %v2680
        %v3525 = vpack.c.b16 %v2685, %v2683
        %v3526 = vpack.c.b16 %v2686, %v2684
        %v3527 = vpack.c.b16 %v2689, %v2687
        %v3528 = vpack.c.b16 %v2690, %v2688
        %v3529 = vpack.c.b16 %v2693, %v2691
        %v3530 = vpack.c.b16 %v2694, %v2692
        %v3531 = vpack.c.b16 %v2697, %v2695
        %v3532 = vpack.c.b16 %v2698, %v2696
        %v3533 = vpack.c.b16 %v2701, %v2699
        %v3534 = vpack.c.b16 %v2702, %v2700
        %v3535 = vpack.c.b16 %v2705, %v2703
        %v3536 = vpack.c.b16 %v2706, %v2704
        %v3537 = vpack.c.b16 %v2709, %v2707
        %v3538 = vpack.c.b16 %v2710, %v2708
        %v3539 = vpack.c.b16 %v2713, %v2711
        %v3540 = vpack.c.b16 %v2714, %v2712
        %v3541 = vpack.c.b16 %v2717, %v2715
        %v3542 = vpack.c.b16 %v2718, %v2716
        %v3543 = vpack.c.b16 %v2721, %v2719
        %v3544 = vpack.c.b16 %v2722, %v2720
        %v3545 = vpack.c.b16 %v2725, %v2723
        %v3546 = vpack.c.b16 %v2726, %v2724
        %v3547 = vpack.c.b16 %v2729, %v2727
        %v3548 = vpack.c.b16 %v2730, %v2728
        %v3549 = vpack.c.b16 %v2733, %v2731
        %v3550 = vpack.c.b16 %v2734, %v2732
        %v3551 = vpack.c.b16 %v2737, %v2735
        %v3552 = vpack.c.b16 %v2738, %v2736
        %v3553 = vpack.c.b16 %v2741, %v2739
        %v3554 = vpack.c.b16 %v2742, %v2740
        %v3555 = vpack.c.b16 %v2745, %v2743
        %v3556 = vpack.c.b16 %v2746, %v2744
        %v3557 = vpack.c.b16 %v2749, %v2747
        %v3558 = vpack.c.b16 %v2750, %v2748
        %v3559 = vpack.c.b16 %v2753, %v2751
        %v3560 = vpack.c.b16 %v2754, %v2752
        %v3561 = vpack.c.b16 %v2757, %v2755
        %v3562 = vpack.c.b16 %v2758, %v2756
        %v3563 = vpack.c.b16 %v2761, %v2759
        %v3564 = vpack.c.b16 %v2762, %v2760
        %v3565 = vpack.c.b16 %v2765, %v2763
        %v3566 = vpack.c.b16 %v2766, %v2764
        %v3567 = vpack.c.b16 %v2769, %v2767
        %v3568 = vpack.c.b16 %v2770, %v2768
        %v3569 = vpack.c.b16 %v2773, %v2771
        %v3570 = vpack.c.b16 %v2774, %v2772
        %v3571 = vpack.c.b16 %v2777, %v2775
        %v3572 = vpack.c.b16 %v2778, %v2776
        %v3573 = vpack.c.b16 %v2781, %v2779
        %v3574 = vpack.c.b16 %v2782, %v2780
        %v3575 = vpack.c.b16 %v2785, %v2783
        %v3576 = vpack.c.b16 %v2786, %v2784
        %v3577 = vpack.c.b16 %v2789, %v2787
        %v3578 = vpack.c.b16 %v2790, %v2788
        %v3579 = vpack.c.b16 %v2793, %v2791
        %v3580 = vpack.c.b16 %v2794, %v2792
        %v3581 = vpack.c.b16 %v2797, %v2795
        %v3582 = vpack.c.b16 %v2798, %v2796
        %v3583 = vpack.c.b16 %v2801, %v2799
        %v3584 = vpack.c.b16 %v2802, %v2800
        %v3585 = vpack.c.b16 %v2805, %v2803
        %v3586 = vpack.c.b16 %v2806, %v2804
        %v3587 = vpack.c.b16 %v2809, %v2807
        %v3588 = vpack.c.b16 %v2810, %v2808
        %v3589 = vpack.c.b16 %v2813, %v2811
        %v3590 = vpack.c.b16 %v2814, %v2812
        %v3591 = vpack.c.b16 %v2817, %v2815
        %v3592 = vpack.c.b16 %v2818, %v2816
        %v3593 = vpack.c.b16 %v2821, %v2819
        %v3594 = vpack.c.b16 %v2822, %v2820
        %v3595 = vpack.c.b16 %v2825, %v2823
        %v3596 = vpack.c.b16 %v2826, %v2824
        %v3597 = vpack.c.b16 %v2829, %v2827
        %v3598 = vpack.c.b16 %v2830, %v2828
        %v3599 = vpack.c.b16 %v2833, %v2831
        %v3600 = vpack.c.b16 %v2834, %v2832
        %v3601 = vpack.c.b16 %v2837, %v2835
        %v3602 = vpack.c.b16 %v2838, %v2836
        %v3603 = vpack.c.b16 %v2841, %v2839
        %v3604 = vpack.c.b16 %v2842, %v2840
        %v3605 = vpack.c.b16 %v2845, %v2843
        %v3606 = vpack.c.b16 %v2846, %v2844
        %v3607 = vpack.c.b16 %v2849, %v2847
        %v3608 = vpack.c.b16 %v2850, %v2848
        %v3609 = vpack.c.b16 %v2853, %v2851
        %v3610 = vpack.c.b16 %v2854, %v2852
        %v3611 = vpack.c.b16 %v2857, %v2855
        %v3612 = vpack.c.b16 %v2858, %v2856
        %v3613 = vpack.c.b16 %v2861, %v2859
        %v3614 = vpack.c.b16 %v2862, %v2860
        %v3615 = vpack.c.b16 %v2865, %v2863
        %v3616 = vpack.c.b16 %v2866, %v2864
        %v3617 = vpack.c.b16 %v2869, %v2867
        %v3618 = vpack.c.b16 %v2870, %v2868
        %v3619 = vpack.c.b16 %v2873, %v2871
        %v3620 = vpack.c.b16 %v2874, %v2872
        %v3621 = vpack.c.b16 %v2877, %v2875
        %v3622 = vpack.c.b16 %v2878, %v2876
        %v3623 = vpack.c.b16 %v2881, %v2879
        %v3624 = vpack.c.b16 %v2882, %v2880
        %v3625 = vpack.c.b16 %v2885, %v2883
        %v3626 = vpack.c.b16 %v2886, %v2884
        %v3627 = vpack.c.b16 %v2889, %v2887
        %v3628 = vpack.c.b16 %v2890, %v2888
        %v3629 = vpack.c.b16 %v2893, %v2891
        %v3630 = vpack.c.b16 %v2894, %v2892
        %v3631 = vpack.c.b16 %v2897, %v2895
        %v3632 = vpack.c.b16 %v2898, %v2896
        %v3633 = vpack.c.b16 %v2901, %v2899
        %v3634 = vpack.c.b16 %v2902, %v2900
        %v3635 = vpack.c.b16 %v2905, %v2903
        %v3636 = vpack.c.b16 %v2906, %v2904
        %v3637 = vpack.c.b16 %v2909, %v2907
        %v3638 = vpack.c.b16 %v2910, %v2908
        %v3639 = vpack.c.b16 %v2913, %v2911
        %v3640 = vpack.c.b16 %v2914, %v2912
        %v3641 = vpack.c.b16 %v2917, %v2915
        %v3642 = vpack.c.b16 %v2918, %v2916
        %v3643 = vpack.c.b16 %v2921, %v2919
        %v3644 = vpack.c.b16 %v2922, %v2920
        %v3645 = vpack.c.b16 %v2925, %v2923
        %v3646 = vpack.c.b16 %v2926, %v2924
        %v3647 = vpack.c.b16 %v2929, %v2927
        %v3648 = vpack.c.b16 %v2930, %v2928
        %v3649 = vpack.c.b16 %v2933, %v2931
        %v3650 = vpack.c.b16 %v2934, %v2932
        %v3651 = vpack.c.b16 %v2937, %v2935
        %v3652 = vpack.c.b16 %v2938, %v2936
        %v3653 = vpack.c.b16 %v2941, %v2939
        %v3654 = vpack.c.b16 %v2942, %v2940
        %v3655 = vpack.c.b16 %v2945, %v2943
        %v3656 = vpack.c.b16 %v2946, %v2944
        %v3657 = vpack.c.b16 %v2949, %v2947
        %v3658 = vpack.c.b16 %v2950, %v2948
        %v3659 = vpack.c.b16 %v2953, %v2951
        %v3660 = vpack.c.b16 %v2954, %v2952
        %v3661 = vpack.c.b16 %v2957, %v2955
        %v3662 = vpack.c.b16 %v2958, %v2956
        %v3663 = vpack.c.b16 %v2961, %v2959
        %v3664 = vpack.c.b16 %v2962, %v2960
        %v3665 = vpack.c.b16 %v2965, %v2963
        %v3666 = vpack.c.b16 %v2966, %v2964
        %v3667 = vpack.c.b16 %v2969, %v2967
        %v3668 = vpack.c.b16 %v2970, %v2968
        %v3669 = vpack.c.b16 %v2973, %v2971
        %v3670 = vpack.c.b16 %v2974, %v2972
        %v3671 = vpack.c.b16 %v2977, %v2975
        %v3672 = vpack.c.b16 %v2978, %v2976
        %v3673 = vpack.c.b16 %v2981, %v2979
        %v3674 = vpack.c.b16 %v2982, %v2980
        %v3675 = vpack.c.b16 %v2985, %v2983
        %v3676 = vpack.c.b16 %v2986, %v2984
        %v3677 = vpack.c.b16 %v2989, %v2987
        %v3678 = vpack.c.b16 %v2990, %v2988
        %v3679 = vpack.c.b16 %v2993, %v2991
        %v3680 = vpack.c.b16 %v2994, %v2992
        %v3681 = vpack.c.b16 %v2997, %v2995
        %v3682 = vpack.c.b16 %v2998, %v2996
        %v3683 = vpack.c.b16 %v3001, %v2999
        %v3684 = vpack.c.b16 %v3002, %v3000
        %v3685 = vpack.c.b16 %v3005, %v3003
        %v3686 = vpack.c.b16 %v3006, %v3004
        %v3687 = vpack.c.b16 %v3009, %v3007
        %v3688 = vpack.c.b16 %v3010, %v3008
        %v3689 = vpack.c.b16 %v3013, %v3011
        %v3690 = vpack.c.b16 %v3014, %v3012
        %v3691 = vpack.c.b16 %v3017, %v3015
        %v3692 = vpack.c.b16 %v3018, %v3016
        %v3693 = vpack.c.b16 %v3021, %v3019
        %v3694 = vpack.c.b16 %v3022, %v3020
        %v3695 = vpack.c.b16 %v3025, %v3023
        %v3696 = vpack.c.b16 %v3026, %v3024
        %v3697 = vpack.c.b16 %v3029, %v3027
        %v3698 = vpack.c.b16 %v3030, %v3028
        %v3699 = vpack.c.b16 %v3033, %v3031
        %v3700 = vpack.c.b16 %v3034, %v3032
        %v3701 = vpack.c.b16 %v3037, %v3035
        %v3702 = vpack.c.b16 %v3038, %v3036
        %v3703 = vpack.c.b16 %v3041, %v3039
        %v3704 = vpack.c.b16 %v3042, %v3040
        %v3705 = vpack.c.b16 %v3045, %v3043
        %v3706 = vpack.c.b16 %v3046, %v3044
        %v3707 = vpack.c.b16 %v3049, %v3047
        %v3708 = vpack.c.b16 %v3050, %v3048
        %v3709 = vpack.c.b16 %v3053, %v3051
        %v3710 = vpack.c.b16 %v3054, %v3052
        %v3711 = vpack.c.b16 %v3057, %v3055
        %v3712 = vpack.c.b16 %v3058, %v3056
        %v3713 = vpack.c.b16 %v3061, %v3059
        %v3714 = vpack.c.b16 %v3062, %v3060
        %v3715 = vpack.c.b16 %v3065, %v3063
        %v3716 = vpack.c.b16 %v3066, %v3064
        %v3717 = vpack.c.b16 %v3069, %v3067
        %v3718 = vpack.c.b16 %v3070, %v3068
        %v3719 = vpack.c.b16 %v3073, %v3071
        %v3720 = vpack.c.b16 %v3074, %v3072
        %v3721 = vpack.c.b16 %v3077, %v3075
        %v3722 = vpack.c.b16 %v3078, %v3076
        %v3723 = vpack.c.b16 %v3081, %v3079
        %v3724 = vpack.c.b16 %v3082, %v3080
        %v3725 = vpack.c.b16 %v3085, %v3083
        %v3726 = vpack.c.b16 %v3086, %v3084
        %v3727 = vpack.c.b16 %v3089, %v3087
        %v3728 = vpack.c.b16 %v3090, %v3088
        %v3729 = vpack.c.b16 %v3093, %v3091
        %v3730 = vpack.c.b16 %v3094, %v3092
        %v3731 = vpack.c.b16 %v3097, %v3095
        %v3732 = vpack.c.b16 %v3098, %v3096
        %v3733 = vpack.c.b16 %v3101, %v3099
        %v3734 = vpack.c.b16 %v3102, %v3100
        %v3735 = vpack.c.b16 %v3105, %v3103
        %v3736 = vpack.c.b16 %v3106, %v3104
        %v3737 = vpack.c.b16 %v3109, %v3107
        %v3738 = vpack.c.b16 %v3110, %v3108
        %v3739 = vpack.c.b16 %v3113, %v3111
        %v3740 = vpack.c.b16 %v3114, %v3112
        %v3741 = vpack.c.b16 %v3117, %v3115
        %v3742 = vpack.c.b16 %v3118, %v3116
        %v3743 = vpack.c.b16 %v3121, %v3119
        %v3744 = vpack.c.b16 %v3122, %v3120
        %v3745 = vpack.c.b16 %v3125, %v3123
        %v3746 = vpack.c.b16 %v3126, %v3124
        %v3747 = vpack.c.b16 %v3129, %v3127
        %v3748 = vpack.c.b16 %v3130, %v3128
        %v3749 = vpack.c.b16 %v3133, %v3131
        %v3750 = vpack.c.b16 %v3134, %v3132
        %v3751 = vpack.c.b16 %v3137, %v3135
        %v3752 = vpack.c.b16 %v3138, %v3136
        %v3753 = vpack.c.b16 %v3141, %v3139
        %v3754 = vpack.c.b16 %v3142, %v3140
        %v3755 = vpack.c.b16 %v3145, %v3143
        %v3756 = vpack.c.b16 %v3146, %v3144
        %v3757 = vpack.c.b16 %v3149, %v3147
        %v3758 = vpack.c.b16 %v3150, %v3148
        %v3759 = vpack.c.b16 %v3153, %v3151
        %v3760 = vpack.c.b16 %v3154, %v3152
        %v3761 = vpack.c.b16 %v3157, %v3155
        %v3762 = vpack.c.b16 %v3158, %v3156
        %v3763 = vpack.c.b16 %v3161, %v3159
        %v3764 = vpack.c.b16 %v3162, %v3160
        %v3765 = vpack.c.b16 %v3165, %v3163
        %v3766 = vpack.c.b16 %v3166, %v3164
        %v3767 = vpack.c.b16 %v3169, %v3167
        %v3768 = vpack.c.b16 %v3170, %v3168
        %v3769 = vpack.c.b16 %v3173, %v3171
        %v3770 = vpack.c.b16 %v3174, %v3172
        %v3771 = vpack.c.b16 %v3177, %v3175
        %v3772 = vpack.c.b16 %v3178, %v3176
        %v3773 = vpack.c.b16 %v3181, %v3179
        %v3774 = vpack.c.b16 %v3182, %v3180
        %v3775 = vpack.c.b16 %v3185, %v3183
        %v3776 = vpack.c.b16 %v3186, %v3184
        %v3777 = vpack.c.b16 %v3189, %v3187
        %v3778 = vpack.c.b16 %v3190, %v3188
        %v3779 = vpack.c.b16 %v3193, %v3191
        %v3780 = vpack.c.b16 %v3194, %v3192
        %v3781 = vpack.c.b16 %v3197, %v3195
        %v3782 = vpack.c.b16 %v3198, %v3196
        %v3783 = vpack.c.b16 %v3201, %v3199
        %v3784 = vpack.c.b16 %v3202, %v3200
        %v3785 = vpack.c.b16 %v3205, %v3203
        %v3786 = vpack.c.b16 %v3206, %v3204
        %v3787 = vpack.c.b16 %v3209, %v3207
        %v3788 = vpack.c.b16 %v3210, %v3208
        %v3789 = vpack.c.b16 %v3213, %v3211
        %v3790 = vpack.c.b16 %v3214, %v3212
        %v3791 = vpack.c.b16 %v3217, %v3215
        %v3792 = vpack.c.b16 %v3218, %v3216
        %v3793 = vpack.c.b16 %v3221, %v3219
        %v3794 = vpack.c.b16 %v3222, %v3220
        %v3795 = vpack.c.b16 %v3225, %v3223
        %v3796 = vpack.c.b16 %v3226, %v3224
        %v3797 = vpack.c.b16 %v3229, %v3227
        %v3798 = vpack.c.b16 %v3230, %v3228
        %v3799 = vpack.c.b16 %v3233, %v3231
        %v3800 = vpack.c.b16 %v3234, %v3232
        %v3801 = vpack.c.b16 %v3237, %v3235
        %v3802 = vpack.c.b16 %v3238, %v3236
        %v3803 = vpack.c.b16 %v3241, %v3239
        %v3804 = vpack.c.b16 %v3242, %v3240
        %v3805 = vpack.c.b16 %v3245, %v3243
        %v3806 = vpack.c.b16 %v3246, %v3244
        %v3807 = vpack.c.b16 %v3249, %v3247
        %v3808 = vpack.c.b16 %v3250, %v3248
        %v3809 = vpack.c.b16 %v3253, %v3251
        %v3810 = vpack.c.b16 %v3254, %v3252
        %v3811 = vpack.c.b16 %v3257, %v3255
        %v3812 = vpack.c.b16 %v3258, %v3256
        %v3813 = vpack.c.b16 %v3261, %v3259
        %v3814 = vpack.c.b16 %v3262, %v3260
        %v3815 = vpack.c.b16 %v3265, %v3263
        %v3816 = vpack.c.b16 %v3266, %v3264
        %v3817 = vpack.c.b16 %v3269, %v3267
        %v3818 = vpack.c.b16 %v3270, %v3268
        %v3819 = vpack.c.b16 %v3273, %v3271
        %v3820 = vpack.c.b16 %v3274, %v3272
        %v3821 = vpack.c.b16 %v3277, %v3275
        %v3822 = vpack.c.b16 %v3278, %v3276
        %v3823 = vpack.c.b16 %v3281, %v3279
        %v3824 = vpack.c.b16 %v3282, %v3280
        %v3825 = vpack.c.b16 %v3285, %v3283
        %v3826 = vpack.c.b16 %v3286, %v3284
        %v3827 = vpack.c.b16 %v3289, %v3287
        %v3828 = vpack.c.b16 %v3290, %v3288
        %v3829 = vpack.c.b16 %v3293, %v3291
        %v3830 = vpack.c.b16 %v3294, %v3292
        %v3831 = vpack.c.b16 %v3297, %v3295
        %v3832 = vpack.c.b16 %v3298, %v3296
        %v3833 = vpack.c.b16 %v3301, %v3299
        %v3834 = vpack.c.b16 %v3302, %v3300
        %v3835 = vpack.c.b16 %v3305, %v3303
        %v3836 = vpack.c.b16 %v3306, %v3304
        %v3837 = vpack.c.b16 %v3309, %v3307
        %v3838 = vpack.c.b16 %v3310, %v3308
        %v3839 = vpack.c.b16 %v3313, %v3311
        %v3840 = vpack.c.b16 %v3314, %v3312
        %v3841 = vpack.c.b16 %v3317, %v3315
        %v3842 = vpack.c.b16 %v3318, %v3316
        %v3843 = vpack.c.b16 %v3321, %v3319
        %v3844 = vpack.c.b16 %v3322, %v3320
        %v3845 = vpack.c.b16 %v3325, %v3323
        %v3846 = vpack.c.b16 %v3326, %v3324
        %v3847 = vpack.c.b16 %v3329, %v3327
        %v3848 = vpack.c.b16 %v3330, %v3328
        %v3849 = vpack.c.b16 %v3333, %v3331
        %v3850 = vpack.c.b16 %v3334, %v3332
        %v3851 = vpack.c.b16 %v3337, %v3335
        %v3852 = vpack.c.b16 %v3338, %v3336
        %v3853 = vpack.c.b16 %v3341, %v3339
        %v3854 = vpack.c.b16 %v3342, %v3340
        %v3855 = vpack.c.b16 %v3345, %v3343
        %v3856 = vpack.c.b16 %v3346, %v3344
        %v3857 = vpack.c.b16 %v3349, %v3347
        %v3858 = vpack.c.b16 %v3350, %v3348
        %v3859 = vpack.c.b16 %v3353, %v3351
        %v3860 = vpack.c.b16 %v3354, %v3352
        %v3861 = vpack.c.b16 %v3357, %v3355
        %v3862 = vpack.c.b16 %v3358, %v3356
        %v3863 = vpack.c.b16 %v3361, %v3359
        %v3864 = vpack.c.b16 %v3362, %v3360
        %v3865 = vpack.c.b16 %v3365, %v3363
        %v3866 = vpack.c.b16 %v3366, %v3364
        %v3867 = vpack.c.b16 %v3369, %v3367
        %v3868 = vpack.c.b16 %v3370, %v3368
        %v3869 = vpack.c.b16 %v3373, %v3371
        %v3870 = vpack.c.b16 %v3374, %v3372
        %v3871 = vpack.c.b16 %v3377, %v3375
        %v3872 = vpack.c.b16 %v3378, %v3376
        %v3873 = vpack.c.b16 %v3381, %v3379
        %v3874 = vpack.c.b16 %v3382, %v3380
        %v3875 = vpack.c.b16 %v3385, %v3383
        %v3876 = vpack.c.b16 %v3386, %v3384
        %v3877 = vpack.c.b16 %v3389, %v3387
        %v3878 = vpack.c.b16 %v3390, %v3388
        %v3879 = vpack.c.b16 %v3393, %v3391
        %v3880 = vpack.c.b16 %v3394, %v3392
        %v3881 = vpack.c.b16 %v3397, %v3395
        %v3882 = vpack.c.b16 %v3398, %v3396
        %v3883 = vpack.c.b16 %v3401, %v3399
        %v3884 = vpack.c.b16 %v3402, %v3400
        %v3885 = vpack.c.b16 %v3405, %v3403
        %v3886 = vpack.c.b16 %v3406, %v3404
        %v3887 = vpack.c.b16 %v3409, %v3407
        %v3888 = vpack.c.b16 %v3410, %v3408
        %v3889 = vpack.c.b16 %v3413, %v3411
        %v3890 = vpack.c.b16 %v3414, %v3412
        %v3891 = vpack.c.b16 %v3417, %v3415
        %v3892 = vpack.c.b16 %v3418, %v3416
        %v3893 = vpack.c.b16 %v3421, %v3419
        %v3894 = vpack.c.b16 %v3422, %v3420
        %v3895 = vpack.c.b16 %v3425, %v3423
        %v3896 = vpack.c.b16 %v3426, %v3424
        %v3897 = vpack.c.b16 %v3429, %v3427
        %v3898 = vpack.c.b16 %v3430, %v3428
        %v3899 = vpack.c.b16 %v3433, %v3431
        %v3900 = vpack.c.b16 %v3434, %v3432
        %v3901 = vpack.c.b16 %v3437, %v3435
        %v3902 = vpack.c.b16 %v3438, %v3436
        %v3903 = vpack.c.b16 %v3441, %v3439
        %v3904 = vpack.c.b16 %v3442, %v3440
        %v3905 = vpack.c.b16 %v3445, %v3443
        %v3906 = vpack.c.b16 %v3446, %v3444
        %v3907 = vpack.c.b16 %v3449, %v3447
        %v3908 = vpack.c.b16 %v3450, %v3448
        %v3909 = vpack.c.b16 %v3453, %v3451
        %v3910 = vpack.c.b16 %v3454, %v3452
        %v3911 = vpack.c.b16 %v3457, %v3455
        %v3912 = vpack.c.b16 %v3458, %v3456
        %v3913 = vpack.c.b16 %v3461, %v3459
        %v3914 = vpack.c.b16 %v3462, %v3460
        %v3915 = vpack.c.b16 %v3465, %v3463
        %v3916 = vpack.c.b16 %v3466, %v3464
        %v3917 = vpack.c.b16 %v3469, %v3467
        %v3918 = vpack.c.b16 %v3470, %v3468
        %v3919 = vpack.c.b16 %v3473, %v3471
        %v3920 = vpack.c.b16 %v3474, %v3472
        %v3921 = vpack.c.b16 %v3477, %v3475
        %v3922 = vpack.c.b16 %v3478, %v3476
        %v3923 = vpack.c.b16 %v3481, %v3479
        %v3924 = vpack.c.b16 %v3482, %v3480
        %v3925 = vpack.c.b16 %v3485, %v3483
        %v3926 = vpack.c.b16 %v3486, %v3484
        %v3927 = vpack.c.b16 %v3489, %v3487
        %v3928 = vpack.c.b16 %v3490, %v3488
        %v3929 = vpack.c.b16 %v3493, %v3491
        %v3930 = vpack.c.b16 %v3494, %v3492
        %v3931 = vpack.c.b16 %v3497, %v3495
        %v3932 = vpack.c.b16 %v3498, %v3496
        %v3933 = vpack.c.b16 %v3501, %v3499
        %v3934 = vpack.c.b16 %v3502, %v3500
        %4367 = vmatprep.subr.bf16.mxu0 %v3518
        %4368 = vmatpush1.bf16.msra.mxu0 %v3517
        %4369 = vmatprep.subr.bf16.mxu0 %v3516
        %4370 = vmatpush1.bf16.msra.mxu0 %v3515
        %4371 = vmatprep.subr.bf16.mxu0 %v3514
        %4372 = vmatpush1.bf16.msra.mxu0 %v3513
        %4373 = vmatprep.subr.bf16.mxu0 %v3512
        %4374 = vmatpush1.bf16.msra.mxu0 %v3511
        %4375 = vmatprep.subr.bf16.mxu0 %v3510
        %4376 = vmatpush1.bf16.msra.mxu0 %v3509
        %4377 = vmatprep.subr.bf16.mxu0 %v3508
        %4378 = vmatpush1.bf16.msra.mxu0 %v3507
        %4379 = vmatprep.subr.bf16.mxu0 %v3506
        %4380 = vmatpush1.bf16.msra.mxu0 %v3505
        %4381 = vmatprep.subr.bf16.mxu0 %v3504
        %4382 = vmatpush1.bf16.msra.mxu0 %v3503
        %4383 = vmatprep.subr.bf16.mxu0 %v3534
        %4384 = vmatpush2.bf16.msra.mxu0 %v3533
        %4385 = vmatprep.subr.bf16.mxu0 %v3532
        %4386 = vmatpush2.bf16.msra.mxu0 %v3531
        %4387 = vmatprep.subr.bf16.mxu0 %v3530
        %4388 = vmatpush2.bf16.msra.mxu0 %v3529
        %4389 = vmatprep.subr.bf16.mxu0 %v3528
        %4390 = vmatpush2.bf16.msra.mxu0 %v3527
        %4391 = vmatprep.subr.bf16.mxu0 %v3526
        %4392 = vmatpush2.bf16.msra.mxu0 %v3525
        %4393 = vmatprep.subr.bf16.mxu0 %v3524
        %4394 = vmatpush2.bf16.msra.mxu0 %v3523
        %4395 = vmatprep.subr.bf16.mxu0 %v3522
        %4396 = vmatpush2.bf16.msra.mxu0 %v3521
        %4397 = vmatprep.subr.bf16.mxu0 %v3520
        %4398 = vmatpush2.bf16.msra.mxu0 %v3519
        %4399 = vmatprep.mubr.bf16.mxu0 %v1280
        %4400 = vmatmul.mubr.bf16.gmra.mxu0 %v1279
        %v4401 = vpop.f32.mrf.mxu0
        %v4402 = vadd.f32 0.0, %v4401
        %v4403 = vpop.f32.mrf.mxu0
        %v4404 = vadd.f32 0.0, %v4403
        %v4405 = vpop.f32.mrf.mxu0
        %v4406 = vadd.f32 0.0, %v4405
        %v4407 = vpop.f32.mrf.mxu0
        %v4408 = vadd.f32 0.0, %v4407
        %4409 = vmatprep.mubr.bf16.mxu0 %v1307
        %4410 = vmatmul.mubr.bf16.gmra.mxu0 %v1306
        %v4411 = vpop.f32.mrf.mxu0
        %v4412 = vadd.f32 0.0, %v4411
        %v4413 = vpop.f32.mrf.mxu0
        %v4414 = vadd.f32 0.0, %v4413
        %v4415 = vpop.f32.mrf.mxu0
        %v4416 = vadd.f32 0.0, %v4415
        %v4417 = vpop.f32.mrf.mxu0
        %v4418 = vadd.f32 0.0, %v4417
        %4419 = vmatprep.mubr.bf16.mxu0 %v1334
        %4420 = vmatmul.mubr.bf16.gmra.mxu0 %v1333
        %v4421 = vpop.f32.mrf.mxu0
        %v4422 = vadd.f32 0.0, %v4421
        %v4423 = vpop.f32.mrf.mxu0
        %v4424 = vadd.f32 0.0, %v4423
        %v4425 = vpop.f32.mrf.mxu0
        %v4426 = vadd.f32 0.0, %v4425
        %v4427 = vpop.f32.mrf.mxu0
        %v4428 = vadd.f32 0.0, %v4427
        %4429 = vmatprep.mubr.bf16.mxu0 %v1361
        %4430 = vmatmul.mubr.bf16.gmra.mxu0 %v1360
        %v4431 = vpop.f32.mrf.mxu0
        %v4432 = vadd.f32 0.0, %v4431
        %v4433 = vpop.f32.mrf.mxu0
        %v4434 = vadd.f32 0.0, %v4433
        %v4435 = vpop.f32.mrf.mxu0
        %v4436 = vadd.f32 0.0, %v4435
        %v4437 = vpop.f32.mrf.mxu0
        %v4438 = vadd.f32 0.0, %v4437
        %4439 = vmatprep.mubr.bf16.mxu0 %v1388
        %4440 = vmatmul.mubr.bf16.gmra.mxu0 %v1387
        %v4441 = vpop.f32.mrf.mxu0
        %v4442 = vadd.f32 0.0, %v4441
        %v4443 = vpop.f32.mrf.mxu0
        %v4444 = vadd.f32 0.0, %v4443
        %v4445 = vpop.f32.mrf.mxu0
        %v4446 = vadd.f32 0.0, %v4445
        %v4447 = vpop.f32.mrf.mxu0
        %v4448 = vadd.f32 0.0, %v4447
        %4449 = vmatprep.mubr.bf16.mxu0 %v1415
        %4450 = vmatmul.mubr.bf16.gmra.mxu0 %v1414
        %v4451 = vpop.f32.mrf.mxu0
        %v4452 = vadd.f32 0.0, %v4451
        %v4453 = vpop.f32.mrf.mxu0
        %v4454 = vadd.f32 0.0, %v4453
        %v4455 = vpop.f32.mrf.mxu0
        %v4456 = vadd.f32 0.0, %v4455
        %v4457 = vpop.f32.mrf.mxu0
        %v4458 = vadd.f32 0.0, %v4457
        %4459 = vmatprep.mubr.bf16.mxu0 %v1442
        %4460 = vmatmul.mubr.bf16.gmra.mxu0 %v1441
        %v4461 = vpop.f32.mrf.mxu0
        %v4462 = vadd.f32 0.0, %v4461
        %v4463 = vpop.f32.mrf.mxu0
        %v4464 = vadd.f32 0.0, %v4463
        %v4465 = vpop.f32.mrf.mxu0
        %v4466 = vadd.f32 0.0, %v4465
        %v4467 = vpop.f32.mrf.mxu0
        %v4468 = vadd.f32 0.0, %v4467
        %4469 = vmatprep.mubr.bf16.mxu0 %v1469
        %4470 = vmatmul.mubr.bf16.gmra.mxu0 %v1468
        %v4471 = vpop.f32.mrf.mxu0
        %v4472 = vadd.f32 0.0, %v4471
        %v4473 = vpop.f32.mrf.mxu0
        %v4474 = vadd.f32 0.0, %v4473
        %v4475 = vpop.f32.mrf.mxu0
        %v4476 = vadd.f32 0.0, %v4475
        %v4477 = vpop.f32.mrf.mxu0
        %v4478 = vadd.f32 0.0, %v4477
        %4479 = vmatprep.mubr.bf16.mxu0 %v1496
        %4480 = vmatmul.mubr.bf16.gmra.mxu0 %v1495
        %v4481 = vpop.f32.mrf.mxu0
        %v4482 = vadd.f32 0.0, %v4481
        %v4483 = vpop.f32.mrf.mxu0
        %v4484 = vadd.f32 0.0, %v4483
        %v4485 = vpop.f32.mrf.mxu0
        %v4486 = vadd.f32 0.0, %v4485
        %v4487 = vpop.f32.mrf.mxu0
        %v4488 = vadd.f32 0.0, %v4487
        %4489 = vmatprep.mubr.bf16.mxu0 %v1523
        %4490 = vmatmul.mubr.bf16.gmra.mxu0 %v1522
        %v4491 = vpop.f32.mrf.mxu0
        %v4492 = vadd.f32 0.0, %v4491
        %v4493 = vpop.f32.mrf.mxu0
        %v4494 = vadd.f32 0.0, %v4493
        %v4495 = vpop.f32.mrf.mxu0
        %v4496 = vadd.f32 0.0, %v4495
        %v4497 = vpop.f32.mrf.mxu0
        %v4498 = vadd.f32 0.0, %v4497
        %4499 = vmatprep.mubr.bf16.mxu0 %v1550
        %4500 = vmatmul.mubr.bf16.gmra.mxu0 %v1549
        %v4501 = vpop.f32.mrf.mxu0
        %v4502 = vadd.f32 0.0, %v4501
        %v4503 = vpop.f32.mrf.mxu0
        %v4504 = vadd.f32 0.0, %v4503
        %v4505 = vpop.f32.mrf.mxu0
        %v4506 = vadd.f32 0.0, %v4505
        %v4507 = vpop.f32.mrf.mxu0
        %v4508 = vadd.f32 0.0, %v4507
        %4509 = vmatprep.mubr.bf16.mxu0 %v1577
        %4510 = vmatmul.mubr.bf16.gmra.mxu0 %v1576
        %v4511 = vpop.f32.mrf.mxu0
        %v4512 = vadd.f32 0.0, %v4511
        %v4513 = vpop.f32.mrf.mxu0
        %v4514 = vadd.f32 0.0, %v4513
        %v4515 = vpop.f32.mrf.mxu0
        %v4516 = vadd.f32 0.0, %v4515
        %v4517 = vpop.f32.mrf.mxu0
        %v4518 = vadd.f32 0.0, %v4517
        %4519 = vmatprep.mubr.bf16.mxu0 %v1604
        %4520 = vmatmul.mubr.bf16.gmra.mxu0 %v1603
        %v4521 = vpop.f32.mrf.mxu0
        %v4522 = vadd.f32 0.0, %v4521
        %v4523 = vpop.f32.mrf.mxu0
        %v4524 = vadd.f32 0.0, %v4523
        %v4525 = vpop.f32.mrf.mxu0
        %v4526 = vadd.f32 0.0, %v4525
        %v4527 = vpop.f32.mrf.mxu0
        %v4528 = vadd.f32 0.0, %v4527
        %4529 = vmatprep.mubr.bf16.mxu0 %v1631
        %4530 = vmatmul.mubr.bf16.gmra.mxu0 %v1630
        %v4531 = vpop.f32.mrf.mxu0
        %v4532 = vadd.f32 0.0, %v4531
        %v4533 = vpop.f32.mrf.mxu0
        %v4534 = vadd.f32 0.0, %v4533
        %v4535 = vpop.f32.mrf.mxu0
        %v4536 = vadd.f32 0.0, %v4535
        %v4537 = vpop.f32.mrf.mxu0
        %v4538 = vadd.f32 0.0, %v4537
        %4539 = vmatprep.mubr.bf16.mxu0 %v1658
        %4540 = vmatmul.mubr.bf16.gmra.mxu0 %v1657
        %v4541 = vpop.f32.mrf.mxu0
        %v4542 = vadd.f32 0.0, %v4541
        %v4543 = vpop.f32.mrf.mxu0
        %v4544 = vadd.f32 0.0, %v4543
        %v4545 = vpop.f32.mrf.mxu0
        %v4546 = vadd.f32 0.0, %v4545
        %v4547 = vpop.f32.mrf.mxu0
        %v4548 = vadd.f32 0.0, %v4547
        %4549 = vmatprep.mubr.bf16.mxu0 %v1685
        %4550 = vmatmul.mubr.bf16.gmra.mxu0 %v1684
        %v4551 = vpop.f32.mrf.mxu0
        %v4552 = vadd.f32 0.0, %v4551
        %v4553 = vpop.f32.mrf.mxu0
        %v4554 = vadd.f32 0.0, %v4553
        %v4555 = vpop.f32.mrf.mxu0
        %v4556 = vadd.f32 0.0, %v4555
        %v4557 = vpop.f32.mrf.mxu0
        %v4558 = vadd.f32 0.0, %v4557
        %4559 = vdwg.mxu0
        %4560 = vmatprep.subr.bf16.mxu0 %v3550
        %4561 = vmatpush1.bf16.msra.mxu0 %v3549
        %4562 = vmatprep.subr.bf16.mxu0 %v3548
        %4563 = vmatpush1.bf16.msra.mxu0 %v3547
        %4564 = vmatprep.subr.bf16.mxu0 %v3546
        %4565 = vmatpush1.bf16.msra.mxu0 %v3545
        %4566 = vmatprep.subr.bf16.mxu0 %v3544
        %4567 = vmatpush1.bf16.msra.mxu0 %v3543
        %4568 = vmatprep.subr.bf16.mxu0 %v3542
        %4569 = vmatpush1.bf16.msra.mxu0 %v3541
        %4570 = vmatprep.subr.bf16.mxu0 %v3540
        %4571 = vmatpush1.bf16.msra.mxu0 %v3539
        %4572 = vmatprep.subr.bf16.mxu0 %v3538
        %4573 = vmatpush1.bf16.msra.mxu0 %v3537
        %4574 = vmatprep.subr.bf16.mxu0 %v3536
        %4575 = vmatpush1.bf16.msra.mxu0 %v3535
        %4576 = vmatprep.subr.bf16.mxu0 %v3566
        %4577 = vmatpush2.bf16.msra.mxu0 %v3565
        %4578 = vmatprep.subr.bf16.mxu0 %v3564
        %4579 = vmatpush2.bf16.msra.mxu0 %v3563
        %4580 = vmatprep.subr.bf16.mxu0 %v3562
        %4581 = vmatpush2.bf16.msra.mxu0 %v3561
        %4582 = vmatprep.subr.bf16.mxu0 %v3560
        %4583 = vmatpush2.bf16.msra.mxu0 %v3559
        %4584 = vmatprep.subr.bf16.mxu0 %v3558
        %4585 = vmatpush2.bf16.msra.mxu0 %v3557
        %4586 = vmatprep.subr.bf16.mxu0 %v3556
        %4587 = vmatpush2.bf16.msra.mxu0 %v3555
        %4588 = vmatprep.subr.bf16.mxu0 %v3554
        %4589 = vmatpush2.bf16.msra.mxu0 %v3553
        %4590 = vmatprep.subr.bf16.mxu0 %v3552
        %4591 = vmatpush2.bf16.msra.mxu0 %v3551
        %4592 = vmatprep.mubr.bf16.mxu0 %v1282
        %4593 = vmatmul.mubr.bf16.gmra.mxu0 %v1281
        %v4594 = vpop.f32.mrf.mxu0
        %v4595 = vadd.f32 %v4402, %v4594
        %v4596 = vpop.f32.mrf.mxu0
        %v4597 = vadd.f32 %v4404, %v4596
        %v4598 = vpop.f32.mrf.mxu0
        %v4599 = vadd.f32 %v4406, %v4598
        %v4600 = vpop.f32.mrf.mxu0
        %v4601 = vadd.f32 %v4408, %v4600
        %4602 = vmatprep.mubr.bf16.mxu0 %v1309
        %4603 = vmatmul.mubr.bf16.gmra.mxu0 %v1308
        %v4604 = vpop.f32.mrf.mxu0
        %v4605 = vadd.f32 %v4412, %v4604
        %v4606 = vpop.f32.mrf.mxu0
        %v4607 = vadd.f32 %v4414, %v4606
        %v4608 = vpop.f32.mrf.mxu0
        %v4609 = vadd.f32 %v4416, %v4608
        %v4610 = vpop.f32.mrf.mxu0
        %v4611 = vadd.f32 %v4418, %v4610
        %4612 = vmatprep.mubr.bf16.mxu0 %v1336
        %4613 = vmatmul.mubr.bf16.gmra.mxu0 %v1335
        %v4614 = vpop.f32.mrf.mxu0
        %v4615 = vadd.f32 %v4422, %v4614
        %v4616 = vpop.f32.mrf.mxu0
        %v4617 = vadd.f32 %v4424, %v4616
        %v4618 = vpop.f32.mrf.mxu0
        %v4619 = vadd.f32 %v4426, %v4618
        %v4620 = vpop.f32.mrf.mxu0
        %v4621 = vadd.f32 %v4428, %v4620
        %4622 = vmatprep.mubr.bf16.mxu0 %v1363
        %4623 = vmatmul.mubr.bf16.gmra.mxu0 %v1362
        %v4624 = vpop.f32.mrf.mxu0
        %v4625 = vadd.f32 %v4432, %v4624
        %v4626 = vpop.f32.mrf.mxu0
        %v4627 = vadd.f32 %v4434, %v4626
        %v4628 = vpop.f32.mrf.mxu0
        %v4629 = vadd.f32 %v4436, %v4628
        %v4630 = vpop.f32.mrf.mxu0
        %v4631 = vadd.f32 %v4438, %v4630
        %4632 = vmatprep.mubr.bf16.mxu0 %v1390
        %4633 = vmatmul.mubr.bf16.gmra.mxu0 %v1389
        %v4634 = vpop.f32.mrf.mxu0
        %v4635 = vadd.f32 %v4442, %v4634
        %v4636 = vpop.f32.mrf.mxu0
        %v4637 = vadd.f32 %v4444, %v4636
        %v4638 = vpop.f32.mrf.mxu0
        %v4639 = vadd.f32 %v4446, %v4638
        %v4640 = vpop.f32.mrf.mxu0
        %v4641 = vadd.f32 %v4448, %v4640
        %4642 = vmatprep.mubr.bf16.mxu0 %v1417
        %4643 = vmatmul.mubr.bf16.gmra.mxu0 %v1416
        %v4644 = vpop.f32.mrf.mxu0
        %v4645 = vadd.f32 %v4452, %v4644
        %v4646 = vpop.f32.mrf.mxu0
        %v4647 = vadd.f32 %v4454, %v4646
        %v4648 = vpop.f32.mrf.mxu0
        %v4649 = vadd.f32 %v4456, %v4648
        %v4650 = vpop.f32.mrf.mxu0
        %v4651 = vadd.f32 %v4458, %v4650
        %4652 = vmatprep.mubr.bf16.mxu0 %v1444
        %4653 = vmatmul.mubr.bf16.gmra.mxu0 %v1443
        %v4654 = vpop.f32.mrf.mxu0
        %v4655 = vadd.f32 %v4462, %v4654
        %v4656 = vpop.f32.mrf.mxu0
        %v4657 = vadd.f32 %v4464, %v4656
        %v4658 = vpop.f32.mrf.mxu0
        %v4659 = vadd.f32 %v4466, %v4658
        %v4660 = vpop.f32.mrf.mxu0
        %v4661 = vadd.f32 %v4468, %v4660
        %4662 = vmatprep.mubr.bf16.mxu0 %v1471
        %4663 = vmatmul.mubr.bf16.gmra.mxu0 %v1470
        %v4664 = vpop.f32.mrf.mxu0
        %v4665 = vadd.f32 %v4472, %v4664
        %v4666 = vpop.f32.mrf.mxu0
        %v4667 = vadd.f32 %v4474, %v4666
        %v4668 = vpop.f32.mrf.mxu0
        %v4669 = vadd.f32 %v4476, %v4668
        %v4670 = vpop.f32.mrf.mxu0
        %v4671 = vadd.f32 %v4478, %v4670
        %4672 = vmatprep.mubr.bf16.mxu0 %v1498
        %4673 = vmatmul.mubr.bf16.gmra.mxu0 %v1497
        %v4674 = vpop.f32.mrf.mxu0
        %v4675 = vadd.f32 %v4482, %v4674
        %v4676 = vpop.f32.mrf.mxu0
        %v4677 = vadd.f32 %v4484, %v4676
        %v4678 = vpop.f32.mrf.mxu0
        %v4679 = vadd.f32 %v4486, %v4678
        %v4680 = vpop.f32.mrf.mxu0
        %v4681 = vadd.f32 %v4488, %v4680
        %4682 = vmatprep.mubr.bf16.mxu0 %v1525
        %4683 = vmatmul.mubr.bf16.gmra.mxu0 %v1524
        %v4684 = vpop.f32.mrf.mxu0
        %v4685 = vadd.f32 %v4492, %v4684
        %v4686 = vpop.f32.mrf.mxu0
        %v4687 = vadd.f32 %v4494, %v4686
        %v4688 = vpop.f32.mrf.mxu0
        %v4689 = vadd.f32 %v4496, %v4688
        %v4690 = vpop.f32.mrf.mxu0
        %v4691 = vadd.f32 %v4498, %v4690
        %4692 = vmatprep.mubr.bf16.mxu0 %v1552
        %4693 = vmatmul.mubr.bf16.gmra.mxu0 %v1551
        %v4694 = vpop.f32.mrf.mxu0
        %v4695 = vadd.f32 %v4502, %v4694
        %v4696 = vpop.f32.mrf.mxu0
        %v4697 = vadd.f32 %v4504, %v4696
        %v4698 = vpop.f32.mrf.mxu0
        %v4699 = vadd.f32 %v4506, %v4698
        %v4700 = vpop.f32.mrf.mxu0
        %v4701 = vadd.f32 %v4508, %v4700
        %4702 = vmatprep.mubr.bf16.mxu0 %v1579
        %4703 = vmatmul.mubr.bf16.gmra.mxu0 %v1578
        %v4704 = vpop.f32.mrf.mxu0
        %v4705 = vadd.f32 %v4512, %v4704
        %v4706 = vpop.f32.mrf.mxu0
        %v4707 = vadd.f32 %v4514, %v4706
        %v4708 = vpop.f32.mrf.mxu0
        %v4709 = vadd.f32 %v4516, %v4708
        %v4710 = vpop.f32.mrf.mxu0
        %v4711 = vadd.f32 %v4518, %v4710
        %4712 = vmatprep.mubr.bf16.mxu0 %v1606
        %4713 = vmatmul.mubr.bf16.gmra.mxu0 %v1605
        %v4714 = vpop.f32.mrf.mxu0
        %v4715 = vadd.f32 %v4522, %v4714
        %v4716 = vpop.f32.mrf.mxu0
        %v4717 = vadd.f32 %v4524, %v4716
        %v4718 = vpop.f32.mrf.mxu0
        %v4719 = vadd.f32 %v4526, %v4718
        %v4720 = vpop.f32.mrf.mxu0
        %v4721 = vadd.f32 %v4528, %v4720
        %4722 = vmatprep.mubr.bf16.mxu0 %v1633
        %4723 = vmatmul.mubr.bf16.gmra.mxu0 %v1632
        %v4724 = vpop.f32.mrf.mxu0
        %v4725 = vadd.f32 %v4532, %v4724
        %v4726 = vpop.f32.mrf.mxu0
        %v4727 = vadd.f32 %v4534, %v4726
        %v4728 = vpop.f32.mrf.mxu0
        %v4729 = vadd.f32 %v4536, %v4728
        %v4730 = vpop.f32.mrf.mxu0
        %v4731 = vadd.f32 %v4538, %v4730
        %4732 = vmatprep.mubr.bf16.mxu0 %v1660
        %4733 = vmatmul.mubr.bf16.gmra.mxu0 %v1659
        %v4734 = vpop.f32.mrf.mxu0
        %v4735 = vadd.f32 %v4542, %v4734
        %v4736 = vpop.f32.mrf.mxu0
        %v4737 = vadd.f32 %v4544, %v4736
        %v4738 = vpop.f32.mrf.mxu0
        %v4739 = vadd.f32 %v4546, %v4738
        %v4740 = vpop.f32.mrf.mxu0
        %v4741 = vadd.f32 %v4548, %v4740
        %4742 = vmatprep.mubr.bf16.mxu0 %v1687
        %4743 = vmatmul.mubr.bf16.gmra.mxu0 %v1686
        %v4744 = vpop.f32.mrf.mxu0
        %v4745 = vadd.f32 %v4552, %v4744
        %v4746 = vpop.f32.mrf.mxu0
        %v4747 = vadd.f32 %v4554, %v4746
        %v4748 = vpop.f32.mrf.mxu0
        %v4749 = vadd.f32 %v4556, %v4748
        %v4750 = vpop.f32.mrf.mxu0
        %v4751 = vadd.f32 %v4558, %v4750
        %4752 = vdwg.mxu0
        %4753 = vmatprep.subr.bf16.mxu0 %v3582
        %4754 = vmatpush1.bf16.msra.mxu0 %v3581
        %4755 = vmatprep.subr.bf16.mxu0 %v3580
        %4756 = vmatpush1.bf16.msra.mxu0 %v3579
        %4757 = vmatprep.subr.bf16.mxu0 %v3578
        %4758 = vmatpush1.bf16.msra.mxu0 %v3577
        %4759 = vmatprep.subr.bf16.mxu0 %v3576
        %4760 = vmatpush1.bf16.msra.mxu0 %v3575
        %4761 = vmatprep.subr.bf16.mxu0 %v3574
        %4762 = vmatpush1.bf16.msra.mxu0 %v3573
        %4763 = vmatprep.subr.bf16.mxu0 %v3572
        %4764 = vmatpush1.bf16.msra.mxu0 %v3571
        %4765 = vmatprep.subr.bf16.mxu0 %v3570
        %4766 = vmatpush1.bf16.msra.mxu0 %v3569
        %4767 = vmatprep.subr.bf16.mxu0 %v3568
        %4768 = vmatpush1.bf16.msra.mxu0 %v3567
        %4769 = vmatprep.subr.bf16.mxu0 %v3598
        %4770 = vmatpush2.bf16.msra.mxu0 %v3597
        %4771 = vmatprep.subr.bf16.mxu0 %v3596
        %4772 = vmatpush2.bf16.msra.mxu0 %v3595
        %4773 = vmatprep.subr.bf16.mxu0 %v3594
        %4774 = vmatpush2.bf16.msra.mxu0 %v3593
        %4775 = vmatprep.subr.bf16.mxu0 %v3592
        %4776 = vmatpush2.bf16.msra.mxu0 %v3591
        %4777 = vmatprep.subr.bf16.mxu0 %v3590
        %4778 = vmatpush2.bf16.msra.mxu0 %v3589
        %4779 = vmatprep.subr.bf16.mxu0 %v3588
        %4780 = vmatpush2.bf16.msra.mxu0 %v3587
        %4781 = vmatprep.subr.bf16.mxu0 %v3586
        %4782 = vmatpush2.bf16.msra.mxu0 %v3585
        %4783 = vmatprep.subr.bf16.mxu0 %v3584
        %4784 = vmatpush2.bf16.msra.mxu0 %v3583
        %4785 = vmatprep.mubr.bf16.mxu0 %v1284
        %4786 = vmatmul.mubr.bf16.gmra.mxu0 %v1283
        %v4787 = vpop.f32.mrf.mxu0
        %v4788 = vadd.f32 %v4595, %v4787
        %v4789 = vpop.f32.mrf.mxu0
        %v4790 = vadd.f32 %v4597, %v4789
        %v4791 = vpop.f32.mrf.mxu0
        %v4792 = vadd.f32 %v4599, %v4791
        %v4793 = vpop.f32.mrf.mxu0
        %v4794 = vadd.f32 %v4601, %v4793
        %4795 = vmatprep.mubr.bf16.mxu0 %v1311
        %4796 = vmatmul.mubr.bf16.gmra.mxu0 %v1310
        %v4797 = vpop.f32.mrf.mxu0
        %v4798 = vadd.f32 %v4605, %v4797
        %v4799 = vpop.f32.mrf.mxu0
        %v4800 = vadd.f32 %v4607, %v4799
        %v4801 = vpop.f32.mrf.mxu0
        %v4802 = vadd.f32 %v4609, %v4801
        %v4803 = vpop.f32.mrf.mxu0
        %v4804 = vadd.f32 %v4611, %v4803
        %4805 = vmatprep.mubr.bf16.mxu0 %v1338
        %4806 = vmatmul.mubr.bf16.gmra.mxu0 %v1337
        %v4807 = vpop.f32.mrf.mxu0
        %v4808 = vadd.f32 %v4615, %v4807
        %v4809 = vpop.f32.mrf.mxu0
        %v4810 = vadd.f32 %v4617, %v4809
        %v4811 = vpop.f32.mrf.mxu0
        %v4812 = vadd.f32 %v4619, %v4811
        %v4813 = vpop.f32.mrf.mxu0
        %v4814 = vadd.f32 %v4621, %v4813
        %4815 = vmatprep.mubr.bf16.mxu0 %v1365
        %4816 = vmatmul.mubr.bf16.gmra.mxu0 %v1364
        %v4817 = vpop.f32.mrf.mxu0
        %v4818 = vadd.f32 %v4625, %v4817
        %v4819 = vpop.f32.mrf.mxu0
        %v4820 = vadd.f32 %v4627, %v4819
        %v4821 = vpop.f32.mrf.mxu0
        %v4822 = vadd.f32 %v4629, %v4821
        %v4823 = vpop.f32.mrf.mxu0
        %v4824 = vadd.f32 %v4631, %v4823
        %4825 = vmatprep.mubr.bf16.mxu0 %v1392
        %4826 = vmatmul.mubr.bf16.gmra.mxu0 %v1391
        %v4827 = vpop.f32.mrf.mxu0
        %v4828 = vadd.f32 %v4635, %v4827
        %v4829 = vpop.f32.mrf.mxu0
        %v4830 = vadd.f32 %v4637, %v4829
        %v4831 = vpop.f32.mrf.mxu0
        %v4832 = vadd.f32 %v4639, %v4831
        %v4833 = vpop.f32.mrf.mxu0
        %v4834 = vadd.f32 %v4641, %v4833
        %4835 = vmatprep.mubr.bf16.mxu0 %v1419
        %4836 = vmatmul.mubr.bf16.gmra.mxu0 %v1418
        %v4837 = vpop.f32.mrf.mxu0
        %v4838 = vadd.f32 %v4645, %v4837
        %v4839 = vpop.f32.mrf.mxu0
        %v4840 = vadd.f32 %v4647, %v4839
        %v4841 = vpop.f32.mrf.mxu0
        %v4842 = vadd.f32 %v4649, %v4841
        %v4843 = vpop.f32.mrf.mxu0
        %v4844 = vadd.f32 %v4651, %v4843
        %4845 = vmatprep.mubr.bf16.mxu0 %v1446
        %4846 = vmatmul.mubr.bf16.gmra.mxu0 %v1445
        %v4847 = vpop.f32.mrf.mxu0
        %v4848 = vadd.f32 %v4655, %v4847
        %v4849 = vpop.f32.mrf.mxu0
        %v4850 = vadd.f32 %v4657, %v4849
        %v4851 = vpop.f32.mrf.mxu0
        %v4852 = vadd.f32 %v4659, %v4851
        %v4853 = vpop.f32.mrf.mxu0
        %v4854 = vadd.f32 %v4661, %v4853
        %4855 = vmatprep.mubr.bf16.mxu0 %v1473
        %4856 = vmatmul.mubr.bf16.gmra.mxu0 %v1472
        %v4857 = vpop.f32.mrf.mxu0
        %v4858 = vadd.f32 %v4665, %v4857
        %v4859 = vpop.f32.mrf.mxu0
        %v4860 = vadd.f32 %v4667, %v4859
        %v4861 = vpop.f32.mrf.mxu0
        %v4862 = vadd.f32 %v4669, %v4861
        %v4863 = vpop.f32.mrf.mxu0
        %v4864 = vadd.f32 %v4671, %v4863
        %4865 = vmatprep.mubr.bf16.mxu0 %v1500
        %4866 = vmatmul.mubr.bf16.gmra.mxu0 %v1499
        %v4867 = vpop.f32.mrf.mxu0
        %v4868 = vadd.f32 %v4675, %v4867
        %v4869 = vpop.f32.mrf.mxu0
        %v4870 = vadd.f32 %v4677, %v4869
        %v4871 = vpop.f32.mrf.mxu0
        %v4872 = vadd.f32 %v4679, %v4871
        %v4873 = vpop.f32.mrf.mxu0
        %v4874 = vadd.f32 %v4681, %v4873
        %4875 = vmatprep.mubr.bf16.mxu0 %v1527
        %4876 = vmatmul.mubr.bf16.gmra.mxu0 %v1526
        %v4877 = vpop.f32.mrf.mxu0
        %v4878 = vadd.f32 %v4685, %v4877
        %v4879 = vpop.f32.mrf.mxu0
        %v4880 = vadd.f32 %v4687, %v4879
        %v4881 = vpop.f32.mrf.mxu0
        %v4882 = vadd.f32 %v4689, %v4881
        %v4883 = vpop.f32.mrf.mxu0
        %v4884 = vadd.f32 %v4691, %v4883
        %4885 = vmatprep.mubr.bf16.mxu0 %v1554
        %4886 = vmatmul.mubr.bf16.gmra.mxu0 %v1553
        %v4887 = vpop.f32.mrf.mxu0
        %v4888 = vadd.f32 %v4695, %v4887
        %v4889 = vpop.f32.mrf.mxu0
        %v4890 = vadd.f32 %v4697, %v4889
        %v4891 = vpop.f32.mrf.mxu0
        %v4892 = vadd.f32 %v4699, %v4891
        %v4893 = vpop.f32.mrf.mxu0
        %v4894 = vadd.f32 %v4701, %v4893
        %4895 = vmatprep.mubr.bf16.mxu0 %v1581
        %4896 = vmatmul.mubr.bf16.gmra.mxu0 %v1580
        %v4897 = vpop.f32.mrf.mxu0
        %v4898 = vadd.f32 %v4705, %v4897
        %v4899 = vpop.f32.mrf.mxu0
        %v4900 = vadd.f32 %v4707, %v4899
        %v4901 = vpop.f32.mrf.mxu0
        %v4902 = vadd.f32 %v4709, %v4901
        %v4903 = vpop.f32.mrf.mxu0
        %v4904 = vadd.f32 %v4711, %v4903
        %4905 = vmatprep.mubr.bf16.mxu0 %v1608
        %4906 = vmatmul.mubr.bf16.gmra.mxu0 %v1607
        %v4907 = vpop.f32.mrf.mxu0
        %v4908 = vadd.f32 %v4715, %v4907
        %v4909 = vpop.f32.mrf.mxu0
        %v4910 = vadd.f32 %v4717, %v4909
        %v4911 = vpop.f32.mrf.mxu0
        %v4912 = vadd.f32 %v4719, %v4911
        %v4913 = vpop.f32.mrf.mxu0
        %v4914 = vadd.f32 %v4721, %v4913
        %4915 = vmatprep.mubr.bf16.mxu0 %v1635
        %4916 = vmatmul.mubr.bf16.gmra.mxu0 %v1634
        %v4917 = vpop.f32.mrf.mxu0
        %v4918 = vadd.f32 %v4725, %v4917
        %v4919 = vpop.f32.mrf.mxu0
        %v4920 = vadd.f32 %v4727, %v4919
        %v4921 = vpop.f32.mrf.mxu0
        %v4922 = vadd.f32 %v4729, %v4921
        %v4923 = vpop.f32.mrf.mxu0
        %v4924 = vadd.f32 %v4731, %v4923
        %4925 = vmatprep.mubr.bf16.mxu0 %v1662
        %4926 = vmatmul.mubr.bf16.gmra.mxu0 %v1661
        %v4927 = vpop.f32.mrf.mxu0
        %v4928 = vadd.f32 %v4735, %v4927
        %v4929 = vpop.f32.mrf.mxu0
        %v4930 = vadd.f32 %v4737, %v4929
        %v4931 = vpop.f32.mrf.mxu0
        %v4932 = vadd.f32 %v4739, %v4931
        %v4933 = vpop.f32.mrf.mxu0
        %v4934 = vadd.f32 %v4741, %v4933
        %4935 = vmatprep.mubr.bf16.mxu0 %v1689
        %4936 = vmatmul.mubr.bf16.gmra.mxu0 %v1688
        %v4937 = vpop.f32.mrf.mxu0
        %v4938 = vadd.f32 %v4745, %v4937
        %v4939 = vpop.f32.mrf.mxu0
        %v4940 = vadd.f32 %v4747, %v4939
        %v4941 = vpop.f32.mrf.mxu0
        %v4942 = vadd.f32 %v4749, %v4941
        %v4943 = vpop.f32.mrf.mxu0
        %v4944 = vadd.f32 %v4751, %v4943
        %4945 = vdwg.mxu0
        %4946 = vmatprep.subr.bf16.mxu0 %v3614
        %4947 = vmatpush1.bf16.msra.mxu0 %v3613
        %4948 = vmatprep.subr.bf16.mxu0 %v3612
        %4949 = vmatpush1.bf16.msra.mxu0 %v3611
        %4950 = vmatprep.subr.bf16.mxu0 %v3610
        %4951 = vmatpush1.bf16.msra.mxu0 %v3609
        %4952 = vmatprep.subr.bf16.mxu0 %v3608
        %4953 = vmatpush1.bf16.msra.mxu0 %v3607
        %4954 = vmatprep.subr.bf16.mxu0 %v3606
        %4955 = vmatpush1.bf16.msra.mxu0 %v3605
        %4956 = vmatprep.subr.bf16.mxu0 %v3604
        %4957 = vmatpush1.bf16.msra.mxu0 %v3603
        %4958 = vmatprep.subr.bf16.mxu0 %v3602
        %4959 = vmatpush1.bf16.msra.mxu0 %v3601
        %4960 = vmatprep.subr.bf16.mxu0 %v3600
        %4961 = vmatpush1.bf16.msra.mxu0 %v3599
        %4962 = vmatprep.subr.bf16.mxu0 %v3630
        %4963 = vmatpush2.bf16.msra.mxu0 %v3629
        %4964 = vmatprep.subr.bf16.mxu0 %v3628
        %4965 = vmatpush2.bf16.msra.mxu0 %v3627
        %4966 = vmatprep.subr.bf16.mxu0 %v3626
        %4967 = vmatpush2.bf16.msra.mxu0 %v3625
        %4968 = vmatprep.subr.bf16.mxu0 %v3624
        %4969 = vmatpush2.bf16.msra.mxu0 %v3623
        %4970 = vmatprep.subr.bf16.mxu0 %v3622
        %4971 = vmatpush2.bf16.msra.mxu0 %v3621
        %4972 = vmatprep.subr.bf16.mxu0 %v3620
        %4973 = vmatpush2.bf16.msra.mxu0 %v3619
        %4974 = vmatprep.subr.bf16.mxu0 %v3618
        %4975 = vmatpush2.bf16.msra.mxu0 %v3617
        %4976 = vmatprep.subr.bf16.mxu0 %v3616
        %4977 = vmatpush2.bf16.msra.mxu0 %v3615
        %4978 = vmatprep.mubr.bf16.mxu0 %v1286
        %4979 = vmatmul.mubr.bf16.gmra.mxu0 %v1285
        %v4980 = vpop.f32.mrf.mxu0
        %v4981 = vadd.f32 %v4788, %v4980
        %v4982 = vpop.f32.mrf.mxu0
        %v4983 = vadd.f32 %v4790, %v4982
        %v4984 = vpop.f32.mrf.mxu0
        %v4985 = vadd.f32 %v4792, %v4984
        %v4986 = vpop.f32.mrf.mxu0
        %v4987 = vadd.f32 %v4794, %v4986
        %4988 = vmatprep.mubr.bf16.mxu0 %v1313
        %4989 = vmatmul.mubr.bf16.gmra.mxu0 %v1312
        %v4990 = vpop.f32.mrf.mxu0
        %v4991 = vadd.f32 %v4798, %v4990
        %v4992 = vpop.f32.mrf.mxu0
        %v4993 = vadd.f32 %v4800, %v4992
        %v4994 = vpop.f32.mrf.mxu0
        %v4995 = vadd.f32 %v4802, %v4994
        %v4996 = vpop.f32.mrf.mxu0
        %v4997 = vadd.f32 %v4804, %v4996
        %4998 = vmatprep.mubr.bf16.mxu0 %v1340
        %4999 = vmatmul.mubr.bf16.gmra.mxu0 %v1339
        %v5000 = vpop.f32.mrf.mxu0
        %v5001 = vadd.f32 %v4808, %v5000
        %v5002 = vpop.f32.mrf.mxu0
        %v5003 = vadd.f32 %v4810, %v5002
        %v5004 = vpop.f32.mrf.mxu0
        %v5005 = vadd.f32 %v4812, %v5004
        %v5006 = vpop.f32.mrf.mxu0
        %v5007 = vadd.f32 %v4814, %v5006
        %5008 = vmatprep.mubr.bf16.mxu0 %v1367
        %5009 = vmatmul.mubr.bf16.gmra.mxu0 %v1366
        %v5010 = vpop.f32.mrf.mxu0
        %v5011 = vadd.f32 %v4818, %v5010
        %v5012 = vpop.f32.mrf.mxu0
        %v5013 = vadd.f32 %v4820, %v5012
        %v5014 = vpop.f32.mrf.mxu0
        %v5015 = vadd.f32 %v4822, %v5014
        %v5016 = vpop.f32.mrf.mxu0
        %v5017 = vadd.f32 %v4824, %v5016
        %5018 = vmatprep.mubr.bf16.mxu0 %v1394
        %5019 = vmatmul.mubr.bf16.gmra.mxu0 %v1393
        %v5020 = vpop.f32.mrf.mxu0
        %v5021 = vadd.f32 %v4828, %v5020
        %v5022 = vpop.f32.mrf.mxu0
        %v5023 = vadd.f32 %v4830, %v5022
        %v5024 = vpop.f32.mrf.mxu0
        %v5025 = vadd.f32 %v4832, %v5024
        %v5026 = vpop.f32.mrf.mxu0
        %v5027 = vadd.f32 %v4834, %v5026
        %5028 = vmatprep.mubr.bf16.mxu0 %v1421
        %5029 = vmatmul.mubr.bf16.gmra.mxu0 %v1420
        %v5030 = vpop.f32.mrf.mxu0
        %v5031 = vadd.f32 %v4838, %v5030
        %v5032 = vpop.f32.mrf.mxu0
        %v5033 = vadd.f32 %v4840, %v5032
        %v5034 = vpop.f32.mrf.mxu0
        %v5035 = vadd.f32 %v4842, %v5034
        %v5036 = vpop.f32.mrf.mxu0
        %v5037 = vadd.f32 %v4844, %v5036
        %5038 = vmatprep.mubr.bf16.mxu0 %v1448
        %5039 = vmatmul.mubr.bf16.gmra.mxu0 %v1447
        %v5040 = vpop.f32.mrf.mxu0
        %v5041 = vadd.f32 %v4848, %v5040
        %v5042 = vpop.f32.mrf.mxu0
        %v5043 = vadd.f32 %v4850, %v5042
        %v5044 = vpop.f32.mrf.mxu0
        %v5045 = vadd.f32 %v4852, %v5044
        %v5046 = vpop.f32.mrf.mxu0
        %v5047 = vadd.f32 %v4854, %v5046
        %5048 = vmatprep.mubr.bf16.mxu0 %v1475
        %5049 = vmatmul.mubr.bf16.gmra.mxu0 %v1474
        %v5050 = vpop.f32.mrf.mxu0
        %v5051 = vadd.f32 %v4858, %v5050
        %v5052 = vpop.f32.mrf.mxu0
        %v5053 = vadd.f32 %v4860, %v5052
        %v5054 = vpop.f32.mrf.mxu0
        %v5055 = vadd.f32 %v4862, %v5054
        %v5056 = vpop.f32.mrf.mxu0
        %v5057 = vadd.f32 %v4864, %v5056
        %5058 = vmatprep.mubr.bf16.mxu0 %v1502
        %5059 = vmatmul.mubr.bf16.gmra.mxu0 %v1501
        %v5060 = vpop.f32.mrf.mxu0
        %v5061 = vadd.f32 %v4868, %v5060
        %v5062 = vpop.f32.mrf.mxu0
        %v5063 = vadd.f32 %v4870, %v5062
        %v5064 = vpop.f32.mrf.mxu0
        %v5065 = vadd.f32 %v4872, %v5064
        %v5066 = vpop.f32.mrf.mxu0
        %v5067 = vadd.f32 %v4874, %v5066
        %5068 = vmatprep.mubr.bf16.mxu0 %v1529
        %5069 = vmatmul.mubr.bf16.gmra.mxu0 %v1528
        %v5070 = vpop.f32.mrf.mxu0
        %v5071 = vadd.f32 %v4878, %v5070
        %v5072 = vpop.f32.mrf.mxu0
        %v5073 = vadd.f32 %v4880, %v5072
        %v5074 = vpop.f32.mrf.mxu0
        %v5075 = vadd.f32 %v4882, %v5074
        %v5076 = vpop.f32.mrf.mxu0
        %v5077 = vadd.f32 %v4884, %v5076
        %5078 = vmatprep.mubr.bf16.mxu0 %v1556
        %5079 = vmatmul.mubr.bf16.gmra.mxu0 %v1555
        %v5080 = vpop.f32.mrf.mxu0
        %v5081 = vadd.f32 %v4888, %v5080
        %v5082 = vpop.f32.mrf.mxu0
        %v5083 = vadd.f32 %v4890, %v5082
        %v5084 = vpop.f32.mrf.mxu0
        %v5085 = vadd.f32 %v4892, %v5084
        %v5086 = vpop.f32.mrf.mxu0
        %v5087 = vadd.f32 %v4894, %v5086
        %5088 = vmatprep.mubr.bf16.mxu0 %v1583
        %5089 = vmatmul.mubr.bf16.gmra.mxu0 %v1582
        %v5090 = vpop.f32.mrf.mxu0
        %v5091 = vadd.f32 %v4898, %v5090
        %v5092 = vpop.f32.mrf.mxu0
        %v5093 = vadd.f32 %v4900, %v5092
        %v5094 = vpop.f32.mrf.mxu0
        %v5095 = vadd.f32 %v4902, %v5094
        %v5096 = vpop.f32.mrf.mxu0
        %v5097 = vadd.f32 %v4904, %v5096
        %5098 = vmatprep.mubr.bf16.mxu0 %v1610
        %5099 = vmatmul.mubr.bf16.gmra.mxu0 %v1609
        %v5100 = vpop.f32.mrf.mxu0
        %v5101 = vadd.f32 %v4908, %v5100
        %v5102 = vpop.f32.mrf.mxu0
        %v5103 = vadd.f32 %v4910, %v5102
        %v5104 = vpop.f32.mrf.mxu0
        %v5105 = vadd.f32 %v4912, %v5104
        %v5106 = vpop.f32.mrf.mxu0
        %v5107 = vadd.f32 %v4914, %v5106
        %5108 = vmatprep.mubr.bf16.mxu0 %v1637
        %5109 = vmatmul.mubr.bf16.gmra.mxu0 %v1636
        %v5110 = vpop.f32.mrf.mxu0
        %v5111 = vadd.f32 %v4918, %v5110
        %v5112 = vpop.f32.mrf.mxu0
        %v5113 = vadd.f32 %v4920, %v5112
        %v5114 = vpop.f32.mrf.mxu0
        %v5115 = vadd.f32 %v4922, %v5114
        %v5116 = vpop.f32.mrf.mxu0
        %v5117 = vadd.f32 %v4924, %v5116
        %5118 = vmatprep.mubr.bf16.mxu0 %v1664
        %5119 = vmatmul.mubr.bf16.gmra.mxu0 %v1663
        %v5120 = vpop.f32.mrf.mxu0
        %v5121 = vadd.f32 %v4928, %v5120
        %v5122 = vpop.f32.mrf.mxu0
        %v5123 = vadd.f32 %v4930, %v5122
        %v5124 = vpop.f32.mrf.mxu0
        %v5125 = vadd.f32 %v4932, %v5124
        %v5126 = vpop.f32.mrf.mxu0
        %v5127 = vadd.f32 %v4934, %v5126
        %5128 = vmatprep.mubr.bf16.mxu0 %v1691
        %5129 = vmatmul.mubr.bf16.gmra.mxu0 %v1690
        %v5130 = vpop.f32.mrf.mxu0
        %v5131 = vadd.f32 %v4938, %v5130
        %v5132 = vpop.f32.mrf.mxu0
        %v5133 = vadd.f32 %v4940, %v5132
        %v5134 = vpop.f32.mrf.mxu0
        %v5135 = vadd.f32 %v4942, %v5134
        %v5136 = vpop.f32.mrf.mxu0
        %v5137 = vadd.f32 %v4944, %v5136
        %5138 = vdwg.mxu0
        %5139 = vmatprep.subr.bf16.mxu0 %v3646
        %5140 = vmatpush1.bf16.msra.mxu0 %v3645
        %5141 = vmatprep.subr.bf16.mxu0 %v3644
        %5142 = vmatpush1.bf16.msra.mxu0 %v3643
        %5143 = vmatprep.subr.bf16.mxu0 %v3642
        %5144 = vmatpush1.bf16.msra.mxu0 %v3641
        %5145 = vmatprep.subr.bf16.mxu0 %v3640
        %5146 = vmatpush1.bf16.msra.mxu0 %v3639
        %5147 = vmatprep.subr.bf16.mxu0 %v3638
        %5148 = vmatpush1.bf16.msra.mxu0 %v3637
        %5149 = vmatprep.subr.bf16.mxu0 %v3636
        %5150 = vmatpush1.bf16.msra.mxu0 %v3635
        %5151 = vmatprep.subr.bf16.mxu0 %v3634
        %5152 = vmatpush1.bf16.msra.mxu0 %v3633
        %5153 = vmatprep.subr.bf16.mxu0 %v3632
        %5154 = vmatpush1.bf16.msra.mxu0 %v3631
        %5155 = vmatprep.subr.bf16.mxu0 %v3662
        %5156 = vmatpush2.bf16.msra.mxu0 %v3661
        %5157 = vmatprep.subr.bf16.mxu0 %v3660
        %5158 = vmatpush2.bf16.msra.mxu0 %v3659
        %5159 = vmatprep.subr.bf16.mxu0 %v3658
        %5160 = vmatpush2.bf16.msra.mxu0 %v3657
        %5161 = vmatprep.subr.bf16.mxu0 %v3656
        %5162 = vmatpush2.bf16.msra.mxu0 %v3655
        %5163 = vmatprep.subr.bf16.mxu0 %v3654
        %5164 = vmatpush2.bf16.msra.mxu0 %v3653
        %5165 = vmatprep.subr.bf16.mxu0 %v3652
        %5166 = vmatpush2.bf16.msra.mxu0 %v3651
        %5167 = vmatprep.subr.bf16.mxu0 %v3650
        %5168 = vmatpush2.bf16.msra.mxu0 %v3649
        %5169 = vmatprep.subr.bf16.mxu0 %v3648
        %5170 = vmatpush2.bf16.msra.mxu0 %v3647
        %5171 = vmatprep.mubr.bf16.mxu0 %v1288
        %5172 = vmatmul.mubr.bf16.gmra.mxu0 %v1287
        %v5173 = vpop.f32.mrf.mxu0
        %v5174 = vadd.f32 %v4981, %v5173
        %v5175 = vpop.f32.mrf.mxu0
        %v5176 = vadd.f32 %v4983, %v5175
        %v5177 = vpop.f32.mrf.mxu0
        %v5178 = vadd.f32 %v4985, %v5177
        %v5179 = vpop.f32.mrf.mxu0
        %v5180 = vadd.f32 %v4987, %v5179
        %5181 = vmatprep.mubr.bf16.mxu0 %v1315
        %5182 = vmatmul.mubr.bf16.gmra.mxu0 %v1314
        %v5183 = vpop.f32.mrf.mxu0
        %v5184 = vadd.f32 %v4991, %v5183
        %v5185 = vpop.f32.mrf.mxu0
        %v5186 = vadd.f32 %v4993, %v5185
        %v5187 = vpop.f32.mrf.mxu0
        %v5188 = vadd.f32 %v4995, %v5187
        %v5189 = vpop.f32.mrf.mxu0
        %v5190 = vadd.f32 %v4997, %v5189
        %5191 = vmatprep.mubr.bf16.mxu0 %v1342
        %5192 = vmatmul.mubr.bf16.gmra.mxu0 %v1341
        %v5193 = vpop.f32.mrf.mxu0
        %v5194 = vadd.f32 %v5001, %v5193
        %v5195 = vpop.f32.mrf.mxu0
        %v5196 = vadd.f32 %v5003, %v5195
        %v5197 = vpop.f32.mrf.mxu0
        %v5198 = vadd.f32 %v5005, %v5197
        %v5199 = vpop.f32.mrf.mxu0
        %v5200 = vadd.f32 %v5007, %v5199
        %5201 = vmatprep.mubr.bf16.mxu0 %v1369
        %5202 = vmatmul.mubr.bf16.gmra.mxu0 %v1368
        %v5203 = vpop.f32.mrf.mxu0
        %v5204 = vadd.f32 %v5011, %v5203
        %v5205 = vpop.f32.mrf.mxu0
        %v5206 = vadd.f32 %v5013, %v5205
        %v5207 = vpop.f32.mrf.mxu0
        %v5208 = vadd.f32 %v5015, %v5207
        %v5209 = vpop.f32.mrf.mxu0
        %v5210 = vadd.f32 %v5017, %v5209
        %5211 = vmatprep.mubr.bf16.mxu0 %v1396
        %5212 = vmatmul.mubr.bf16.gmra.mxu0 %v1395
        %v5213 = vpop.f32.mrf.mxu0
        %v5214 = vadd.f32 %v5021, %v5213
        %v5215 = vpop.f32.mrf.mxu0
        %v5216 = vadd.f32 %v5023, %v5215
        %v5217 = vpop.f32.mrf.mxu0
        %v5218 = vadd.f32 %v5025, %v5217
        %v5219 = vpop.f32.mrf.mxu0
        %v5220 = vadd.f32 %v5027, %v5219
        %5221 = vmatprep.mubr.bf16.mxu0 %v1423
        %5222 = vmatmul.mubr.bf16.gmra.mxu0 %v1422
        %v5223 = vpop.f32.mrf.mxu0
        %v5224 = vadd.f32 %v5031, %v5223
        %v5225 = vpop.f32.mrf.mxu0
        %v5226 = vadd.f32 %v5033, %v5225
        %v5227 = vpop.f32.mrf.mxu0
        %v5228 = vadd.f32 %v5035, %v5227
        %v5229 = vpop.f32.mrf.mxu0
        %v5230 = vadd.f32 %v5037, %v5229
        %5231 = vmatprep.mubr.bf16.mxu0 %v1450
        %5232 = vmatmul.mubr.bf16.gmra.mxu0 %v1449
        %v5233 = vpop.f32.mrf.mxu0
        %v5234 = vadd.f32 %v5041, %v5233
        %v5235 = vpop.f32.mrf.mxu0
        %v5236 = vadd.f32 %v5043, %v5235
        %v5237 = vpop.f32.mrf.mxu0
        %v5238 = vadd.f32 %v5045, %v5237
        %v5239 = vpop.f32.mrf.mxu0
        %v5240 = vadd.f32 %v5047, %v5239
        %5241 = vmatprep.mubr.bf16.mxu0 %v1477
        %5242 = vmatmul.mubr.bf16.gmra.mxu0 %v1476
        %v5243 = vpop.f32.mrf.mxu0
        %v5244 = vadd.f32 %v5051, %v5243
        %v5245 = vpop.f32.mrf.mxu0
        %v5246 = vadd.f32 %v5053, %v5245
        %v5247 = vpop.f32.mrf.mxu0
        %v5248 = vadd.f32 %v5055, %v5247
        %v5249 = vpop.f32.mrf.mxu0
        %v5250 = vadd.f32 %v5057, %v5249
        %5251 = vmatprep.mubr.bf16.mxu0 %v1504
        %5252 = vmatmul.mubr.bf16.gmra.mxu0 %v1503
        %v5253 = vpop.f32.mrf.mxu0
        %v5254 = vadd.f32 %v5061, %v5253
        %v5255 = vpop.f32.mrf.mxu0
        %v5256 = vadd.f32 %v5063, %v5255
        %v5257 = vpop.f32.mrf.mxu0
        %v5258 = vadd.f32 %v5065, %v5257
        %v5259 = vpop.f32.mrf.mxu0
        %v5260 = vadd.f32 %v5067, %v5259
        %5261 = vmatprep.mubr.bf16.mxu0 %v1531
        %5262 = vmatmul.mubr.bf16.gmra.mxu0 %v1530
        %v5263 = vpop.f32.mrf.mxu0
        %v5264 = vadd.f32 %v5071, %v5263
        %v5265 = vpop.f32.mrf.mxu0
        %v5266 = vadd.f32 %v5073, %v5265
        %v5267 = vpop.f32.mrf.mxu0
        %v5268 = vadd.f32 %v5075, %v5267
        %v5269 = vpop.f32.mrf.mxu0
        %v5270 = vadd.f32 %v5077, %v5269
        %5271 = vmatprep.mubr.bf16.mxu0 %v1558
        %5272 = vmatmul.mubr.bf16.gmra.mxu0 %v1557
        %v5273 = vpop.f32.mrf.mxu0
        %v5274 = vadd.f32 %v5081, %v5273
        %v5275 = vpop.f32.mrf.mxu0
        %v5276 = vadd.f32 %v5083, %v5275
        %v5277 = vpop.f32.mrf.mxu0
        %v5278 = vadd.f32 %v5085, %v5277
        %v5279 = vpop.f32.mrf.mxu0
        %v5280 = vadd.f32 %v5087, %v5279
        %5281 = vmatprep.mubr.bf16.mxu0 %v1585
        %5282 = vmatmul.mubr.bf16.gmra.mxu0 %v1584
        %v5283 = vpop.f32.mrf.mxu0
        %v5284 = vadd.f32 %v5091, %v5283
        %v5285 = vpop.f32.mrf.mxu0
        %v5286 = vadd.f32 %v5093, %v5285
        %v5287 = vpop.f32.mrf.mxu0
        %v5288 = vadd.f32 %v5095, %v5287
        %v5289 = vpop.f32.mrf.mxu0
        %v5290 = vadd.f32 %v5097, %v5289
        %5291 = vmatprep.mubr.bf16.mxu0 %v1612
        %5292 = vmatmul.mubr.bf16.gmra.mxu0 %v1611
        %v5293 = vpop.f32.mrf.mxu0
        %v5294 = vadd.f32 %v5101, %v5293
        %v5295 = vpop.f32.mrf.mxu0
        %v5296 = vadd.f32 %v5103, %v5295
        %v5297 = vpop.f32.mrf.mxu0
        %v5298 = vadd.f32 %v5105, %v5297
        %v5299 = vpop.f32.mrf.mxu0
        %v5300 = vadd.f32 %v5107, %v5299
        %5301 = vmatprep.mubr.bf16.mxu0 %v1639
        %5302 = vmatmul.mubr.bf16.gmra.mxu0 %v1638
        %v5303 = vpop.f32.mrf.mxu0
        %v5304 = vadd.f32 %v5111, %v5303
        %v5305 = vpop.f32.mrf.mxu0
        %v5306 = vadd.f32 %v5113, %v5305
        %v5307 = vpop.f32.mrf.mxu0
        %v5308 = vadd.f32 %v5115, %v5307
        %v5309 = vpop.f32.mrf.mxu0
        %v5310 = vadd.f32 %v5117, %v5309
        %5311 = vmatprep.mubr.bf16.mxu0 %v1666
        %5312 = vmatmul.mubr.bf16.gmra.mxu0 %v1665
        %v5313 = vpop.f32.mrf.mxu0
        %v5314 = vadd.f32 %v5121, %v5313
        %v5315 = vpop.f32.mrf.mxu0
        %v5316 = vadd.f32 %v5123, %v5315
        %v5317 = vpop.f32.mrf.mxu0
        %v5318 = vadd.f32 %v5125, %v5317
        %v5319 = vpop.f32.mrf.mxu0
        %v5320 = vadd.f32 %v5127, %v5319
        %5321 = vmatprep.mubr.bf16.mxu0 %v1693
        %5322 = vmatmul.mubr.bf16.gmra.mxu0 %v1692
        %v5323 = vpop.f32.mrf.mxu0
        %v5324 = vadd.f32 %v5131, %v5323
        %v5325 = vpop.f32.mrf.mxu0
        %v5326 = vadd.f32 %v5133, %v5325
        %v5327 = vpop.f32.mrf.mxu0
        %v5328 = vadd.f32 %v5135, %v5327
        %v5329 = vpop.f32.mrf.mxu0
        %v5330 = vadd.f32 %v5137, %v5329
        %5331 = vdwg.mxu0
        %5332 = vmatprep.subr.bf16.mxu0 %v3678
        %5333 = vmatpush1.bf16.msra.mxu0 %v3677
        %5334 = vmatprep.subr.bf16.mxu0 %v3676
        %5335 = vmatpush1.bf16.msra.mxu0 %v3675
        %5336 = vmatprep.subr.bf16.mxu0 %v3674
        %5337 = vmatpush1.bf16.msra.mxu0 %v3673
        %5338 = vmatprep.subr.bf16.mxu0 %v3672
        %5339 = vmatpush1.bf16.msra.mxu0 %v3671
        %5340 = vmatprep.subr.bf16.mxu0 %v3670
        %5341 = vmatpush1.bf16.msra.mxu0 %v3669
        %5342 = vmatprep.subr.bf16.mxu0 %v3668
        %5343 = vmatpush1.bf16.msra.mxu0 %v3667
        %5344 = vmatprep.subr.bf16.mxu0 %v3666
        %5345 = vmatpush1.bf16.msra.mxu0 %v3665
        %5346 = vmatprep.subr.bf16.mxu0 %v3664
        %5347 = vmatpush1.bf16.msra.mxu0 %v3663
        %5348 = vmatprep.subr.bf16.mxu0 %v3694
        %5349 = vmatpush2.bf16.msra.mxu0 %v3693
        %5350 = vmatprep.subr.bf16.mxu0 %v3692
        %5351 = vmatpush2.bf16.msra.mxu0 %v3691
        %5352 = vmatprep.subr.bf16.mxu0 %v3690
        %5353 = vmatpush2.bf16.msra.mxu0 %v3689
        %5354 = vmatprep.subr.bf16.mxu0 %v3688
        %5355 = vmatpush2.bf16.msra.mxu0 %v3687
        %5356 = vmatprep.subr.bf16.mxu0 %v3686
        %5357 = vmatpush2.bf16.msra.mxu0 %v3685
        %5358 = vmatprep.subr.bf16.mxu0 %v3684
        %5359 = vmatpush2.bf16.msra.mxu0 %v3683
        %5360 = vmatprep.subr.bf16.mxu0 %v3682
        %5361 = vmatpush2.bf16.msra.mxu0 %v3681
        %5362 = vmatprep.subr.bf16.mxu0 %v3680
        %5363 = vmatpush2.bf16.msra.mxu0 %v3679
        %5364 = vmatprep.mubr.bf16.mxu0 %v1290
        %5365 = vmatmul.mubr.bf16.gmra.mxu0 %v1289
        %v5366 = vpop.f32.mrf.mxu0
        %v5367 = vadd.f32 %v5174, %v5366
        %v5368 = vpop.f32.mrf.mxu0
        %v5369 = vadd.f32 %v5176, %v5368
        %v5370 = vpop.f32.mrf.mxu0
        %v5371 = vadd.f32 %v5178, %v5370
        %v5372 = vpop.f32.mrf.mxu0
        %v5373 = vadd.f32 %v5180, %v5372
        %5374 = vmatprep.mubr.bf16.mxu0 %v1317
        %5375 = vmatmul.mubr.bf16.gmra.mxu0 %v1316
        %v5376 = vpop.f32.mrf.mxu0
        %v5377 = vadd.f32 %v5184, %v5376
        %v5378 = vpop.f32.mrf.mxu0
        %v5379 = vadd.f32 %v5186, %v5378
        %v5380 = vpop.f32.mrf.mxu0
        %v5381 = vadd.f32 %v5188, %v5380
        %v5382 = vpop.f32.mrf.mxu0
        %v5383 = vadd.f32 %v5190, %v5382
        %5384 = vmatprep.mubr.bf16.mxu0 %v1344
        %5385 = vmatmul.mubr.bf16.gmra.mxu0 %v1343
        %v5386 = vpop.f32.mrf.mxu0
        %v5387 = vadd.f32 %v5194, %v5386
        %v5388 = vpop.f32.mrf.mxu0
        %v5389 = vadd.f32 %v5196, %v5388
        %v5390 = vpop.f32.mrf.mxu0
        %v5391 = vadd.f32 %v5198, %v5390
        %v5392 = vpop.f32.mrf.mxu0
        %v5393 = vadd.f32 %v5200, %v5392
        %5394 = vmatprep.mubr.bf16.mxu0 %v1371
        %5395 = vmatmul.mubr.bf16.gmra.mxu0 %v1370
        %v5396 = vpop.f32.mrf.mxu0
        %v5397 = vadd.f32 %v5204, %v5396
        %v5398 = vpop.f32.mrf.mxu0
        %v5399 = vadd.f32 %v5206, %v5398
        %v5400 = vpop.f32.mrf.mxu0
        %v5401 = vadd.f32 %v5208, %v5400
        %v5402 = vpop.f32.mrf.mxu0
        %v5403 = vadd.f32 %v5210, %v5402
        %5404 = vmatprep.mubr.bf16.mxu0 %v1398
        %5405 = vmatmul.mubr.bf16.gmra.mxu0 %v1397
        %v5406 = vpop.f32.mrf.mxu0
        %v5407 = vadd.f32 %v5214, %v5406
        %v5408 = vpop.f32.mrf.mxu0
        %v5409 = vadd.f32 %v5216, %v5408
        %v5410 = vpop.f32.mrf.mxu0
        %v5411 = vadd.f32 %v5218, %v5410
        %v5412 = vpop.f32.mrf.mxu0
        %v5413 = vadd.f32 %v5220, %v5412
        %5414 = vmatprep.mubr.bf16.mxu0 %v1425
        %5415 = vmatmul.mubr.bf16.gmra.mxu0 %v1424
        %v5416 = vpop.f32.mrf.mxu0
        %v5417 = vadd.f32 %v5224, %v5416
        %v5418 = vpop.f32.mrf.mxu0
        %v5419 = vadd.f32 %v5226, %v5418
        %v5420 = vpop.f32.mrf.mxu0
        %v5421 = vadd.f32 %v5228, %v5420
        %v5422 = vpop.f32.mrf.mxu0
        %v5423 = vadd.f32 %v5230, %v5422
        %5424 = vmatprep.mubr.bf16.mxu0 %v1452
        %5425 = vmatmul.mubr.bf16.gmra.mxu0 %v1451
        %v5426 = vpop.f32.mrf.mxu0
        %v5427 = vadd.f32 %v5234, %v5426
        %v5428 = vpop.f32.mrf.mxu0
        %v5429 = vadd.f32 %v5236, %v5428
        %v5430 = vpop.f32.mrf.mxu0
        %v5431 = vadd.f32 %v5238, %v5430
        %v5432 = vpop.f32.mrf.mxu0
        %v5433 = vadd.f32 %v5240, %v5432
        %5434 = vmatprep.mubr.bf16.mxu0 %v1479
        %5435 = vmatmul.mubr.bf16.gmra.mxu0 %v1478
        %v5436 = vpop.f32.mrf.mxu0
        %v5437 = vadd.f32 %v5244, %v5436
        %v5438 = vpop.f32.mrf.mxu0
        %v5439 = vadd.f32 %v5246, %v5438
        %v5440 = vpop.f32.mrf.mxu0
        %v5441 = vadd.f32 %v5248, %v5440
        %v5442 = vpop.f32.mrf.mxu0
        %v5443 = vadd.f32 %v5250, %v5442
        %5444 = vmatprep.mubr.bf16.mxu0 %v1506
        %5445 = vmatmul.mubr.bf16.gmra.mxu0 %v1505
        %v5446 = vpop.f32.mrf.mxu0
        %v5447 = vadd.f32 %v5254, %v5446
        %v5448 = vpop.f32.mrf.mxu0
        %v5449 = vadd.f32 %v5256, %v5448
        %v5450 = vpop.f32.mrf.mxu0
        %v5451 = vadd.f32 %v5258, %v5450
        %v5452 = vpop.f32.mrf.mxu0
        %v5453 = vadd.f32 %v5260, %v5452
        %5454 = vmatprep.mubr.bf16.mxu0 %v1533
        %5455 = vmatmul.mubr.bf16.gmra.mxu0 %v1532
        %v5456 = vpop.f32.mrf.mxu0
        %v5457 = vadd.f32 %v5264, %v5456
        %v5458 = vpop.f32.mrf.mxu0
        %v5459 = vadd.f32 %v5266, %v5458
        %v5460 = vpop.f32.mrf.mxu0
        %v5461 = vadd.f32 %v5268, %v5460
        %v5462 = vpop.f32.mrf.mxu0
        %v5463 = vadd.f32 %v5270, %v5462
        %5464 = vmatprep.mubr.bf16.mxu0 %v1560
        %5465 = vmatmul.mubr.bf16.gmra.mxu0 %v1559
        %v5466 = vpop.f32.mrf.mxu0
        %v5467 = vadd.f32 %v5274, %v5466
        %v5468 = vpop.f32.mrf.mxu0
        %v5469 = vadd.f32 %v5276, %v5468
        %v5470 = vpop.f32.mrf.mxu0
        %v5471 = vadd.f32 %v5278, %v5470
        %v5472 = vpop.f32.mrf.mxu0
        %v5473 = vadd.f32 %v5280, %v5472
        %5474 = vmatprep.mubr.bf16.mxu0 %v1587
        %5475 = vmatmul.mubr.bf16.gmra.mxu0 %v1586
        %v5476 = vpop.f32.mrf.mxu0
        %v5477 = vadd.f32 %v5284, %v5476
        %v5478 = vpop.f32.mrf.mxu0
        %v5479 = vadd.f32 %v5286, %v5478
        %v5480 = vpop.f32.mrf.mxu0
        %v5481 = vadd.f32 %v5288, %v5480
        %v5482 = vpop.f32.mrf.mxu0
        %v5483 = vadd.f32 %v5290, %v5482
        %5484 = vmatprep.mubr.bf16.mxu0 %v1614
        %5485 = vmatmul.mubr.bf16.gmra.mxu0 %v1613
        %v5486 = vpop.f32.mrf.mxu0
        %v5487 = vadd.f32 %v5294, %v5486
        %v5488 = vpop.f32.mrf.mxu0
        %v5489 = vadd.f32 %v5296, %v5488
        %v5490 = vpop.f32.mrf.mxu0
        %v5491 = vadd.f32 %v5298, %v5490
        %v5492 = vpop.f32.mrf.mxu0
        %v5493 = vadd.f32 %v5300, %v5492
        %5494 = vmatprep.mubr.bf16.mxu0 %v1641
        %5495 = vmatmul.mubr.bf16.gmra.mxu0 %v1640
        %v5496 = vpop.f32.mrf.mxu0
        %v5497 = vadd.f32 %v5304, %v5496
        %v5498 = vpop.f32.mrf.mxu0
        %v5499 = vadd.f32 %v5306, %v5498
        %v5500 = vpop.f32.mrf.mxu0
        %v5501 = vadd.f32 %v5308, %v5500
        %v5502 = vpop.f32.mrf.mxu0
        %v5503 = vadd.f32 %v5310, %v5502
        %5504 = vmatprep.mubr.bf16.mxu0 %v1668
        %5505 = vmatmul.mubr.bf16.gmra.mxu0 %v1667
        %v5506 = vpop.f32.mrf.mxu0
        %v5507 = vadd.f32 %v5314, %v5506
        %v5508 = vpop.f32.mrf.mxu0
        %v5509 = vadd.f32 %v5316, %v5508
        %v5510 = vpop.f32.mrf.mxu0
        %v5511 = vadd.f32 %v5318, %v5510
        %v5512 = vpop.f32.mrf.mxu0
        %v5513 = vadd.f32 %v5320, %v5512
        %5514 = vmatprep.mubr.bf16.mxu0 %v1695
        %5515 = vmatmul.mubr.bf16.gmra.mxu0 %v1694
        %v5516 = vpop.f32.mrf.mxu0
        %v5517 = vadd.f32 %v5324, %v5516
        %v5518 = vpop.f32.mrf.mxu0
        %v5519 = vadd.f32 %v5326, %v5518
        %v5520 = vpop.f32.mrf.mxu0
        %v5521 = vadd.f32 %v5328, %v5520
        %v5522 = vpop.f32.mrf.mxu0
        %v5523 = vadd.f32 %v5330, %v5522
        %5524 = vdwg.mxu0
        %5525 = vmatprep.subr.bf16.mxu0 %v3710
        %5526 = vmatpush1.bf16.msra.mxu0 %v3709
        %5527 = vmatprep.subr.bf16.mxu0 %v3708
        %5528 = vmatpush1.bf16.msra.mxu0 %v3707
        %5529 = vmatprep.subr.bf16.mxu0 %v3706
        %5530 = vmatpush1.bf16.msra.mxu0 %v3705
        %5531 = vmatprep.subr.bf16.mxu0 %v3704
        %5532 = vmatpush1.bf16.msra.mxu0 %v3703
        %5533 = vmatprep.subr.bf16.mxu0 %v3702
        %5534 = vmatpush1.bf16.msra.mxu0 %v3701
        %5535 = vmatprep.subr.bf16.mxu0 %v3700
        %5536 = vmatpush1.bf16.msra.mxu0 %v3699
        %5537 = vmatprep.subr.bf16.mxu0 %v3698
        %5538 = vmatpush1.bf16.msra.mxu0 %v3697
        %5539 = vmatprep.subr.bf16.mxu0 %v3696
        %5540 = vmatpush1.bf16.msra.mxu0 %v3695
        %5541 = vmatprep.subr.bf16.mxu0 %v3726
        %5542 = vmatpush2.bf16.msra.mxu0 %v3725
        %5543 = vmatprep.subr.bf16.mxu0 %v3724
        %5544 = vmatpush2.bf16.msra.mxu0 %v3723
        %5545 = vmatprep.subr.bf16.mxu0 %v3722
        %5546 = vmatpush2.bf16.msra.mxu0 %v3721
        %5547 = vmatprep.subr.bf16.mxu0 %v3720
        %5548 = vmatpush2.bf16.msra.mxu0 %v3719
        %5549 = vmatprep.subr.bf16.mxu0 %v3718
        %5550 = vmatpush2.bf16.msra.mxu0 %v3717
        %5551 = vmatprep.subr.bf16.mxu0 %v3716
        %5552 = vmatpush2.bf16.msra.mxu0 %v3715
        %5553 = vmatprep.subr.bf16.mxu0 %v3714
        %5554 = vmatpush2.bf16.msra.mxu0 %v3713
        %5555 = vmatprep.subr.bf16.mxu0 %v3712
        %5556 = vmatpush2.bf16.msra.mxu0 %v3711
        %5557 = vmatprep.mubr.bf16.mxu0 %v1292
        %5558 = vmatmul.mubr.bf16.gmra.mxu0 %v1291
        %v5559 = vpop.f32.mrf.mxu0
        %v5560 = vadd.f32 %v5367, %v5559
        %v5561 = vpop.f32.mrf.mxu0
        %v5562 = vadd.f32 %v5369, %v5561
        %v5563 = vpop.f32.mrf.mxu0
        %v5564 = vadd.f32 %v5371, %v5563
        %v5565 = vpop.f32.mrf.mxu0
        %v5566 = vadd.f32 %v5373, %v5565
        %5567 = vmatprep.mubr.bf16.mxu0 %v1319
        %5568 = vmatmul.mubr.bf16.gmra.mxu0 %v1318
        %v5569 = vpop.f32.mrf.mxu0
        %v5570 = vadd.f32 %v5377, %v5569
        %v5571 = vpop.f32.mrf.mxu0
        %v5572 = vadd.f32 %v5379, %v5571
        %v5573 = vpop.f32.mrf.mxu0
        %v5574 = vadd.f32 %v5381, %v5573
        %v5575 = vpop.f32.mrf.mxu0
        %v5576 = vadd.f32 %v5383, %v5575
        %5577 = vmatprep.mubr.bf16.mxu0 %v1346
        %5578 = vmatmul.mubr.bf16.gmra.mxu0 %v1345
        %v5579 = vpop.f32.mrf.mxu0
        %v5580 = vadd.f32 %v5387, %v5579
        %v5581 = vpop.f32.mrf.mxu0
        %v5582 = vadd.f32 %v5389, %v5581
        %v5583 = vpop.f32.mrf.mxu0
        %v5584 = vadd.f32 %v5391, %v5583
        %v5585 = vpop.f32.mrf.mxu0
        %v5586 = vadd.f32 %v5393, %v5585
        %5587 = vmatprep.mubr.bf16.mxu0 %v1373
        %5588 = vmatmul.mubr.bf16.gmra.mxu0 %v1372
        %v5589 = vpop.f32.mrf.mxu0
        %v5590 = vadd.f32 %v5397, %v5589
        %v5591 = vpop.f32.mrf.mxu0
        %v5592 = vadd.f32 %v5399, %v5591
        %v5593 = vpop.f32.mrf.mxu0
        %v5594 = vadd.f32 %v5401, %v5593
        %v5595 = vpop.f32.mrf.mxu0
        %v5596 = vadd.f32 %v5403, %v5595
        %5597 = vmatprep.mubr.bf16.mxu0 %v1400
        %5598 = vmatmul.mubr.bf16.gmra.mxu0 %v1399
        %v5599 = vpop.f32.mrf.mxu0
        %v5600 = vadd.f32 %v5407, %v5599
        %v5601 = vpop.f32.mrf.mxu0
        %v5602 = vadd.f32 %v5409, %v5601
        %v5603 = vpop.f32.mrf.mxu0
        %v5604 = vadd.f32 %v5411, %v5603
        %v5605 = vpop.f32.mrf.mxu0
        %v5606 = vadd.f32 %v5413, %v5605
        %5607 = vmatprep.mubr.bf16.mxu0 %v1427
        %5608 = vmatmul.mubr.bf16.gmra.mxu0 %v1426
        %v5609 = vpop.f32.mrf.mxu0
        %v5610 = vadd.f32 %v5417, %v5609
        %v5611 = vpop.f32.mrf.mxu0
        %v5612 = vadd.f32 %v5419, %v5611
        %v5613 = vpop.f32.mrf.mxu0
        %v5614 = vadd.f32 %v5421, %v5613
        %v5615 = vpop.f32.mrf.mxu0
        %v5616 = vadd.f32 %v5423, %v5615
        %5617 = vmatprep.mubr.bf16.mxu0 %v1454
        %5618 = vmatmul.mubr.bf16.gmra.mxu0 %v1453
        %v5619 = vpop.f32.mrf.mxu0
        %v5620 = vadd.f32 %v5427, %v5619
        %v5621 = vpop.f32.mrf.mxu0
        %v5622 = vadd.f32 %v5429, %v5621
        %v5623 = vpop.f32.mrf.mxu0
        %v5624 = vadd.f32 %v5431, %v5623
        %v5625 = vpop.f32.mrf.mxu0
        %v5626 = vadd.f32 %v5433, %v5625
        %5627 = vmatprep.mubr.bf16.mxu0 %v1481
        %5628 = vmatmul.mubr.bf16.gmra.mxu0 %v1480
        %v5629 = vpop.f32.mrf.mxu0
        %v5630 = vadd.f32 %v5437, %v5629
        %v5631 = vpop.f32.mrf.mxu0
        %v5632 = vadd.f32 %v5439, %v5631
        %v5633 = vpop.f32.mrf.mxu0
        %v5634 = vadd.f32 %v5441, %v5633
        %v5635 = vpop.f32.mrf.mxu0
        %v5636 = vadd.f32 %v5443, %v5635
        %5637 = vmatprep.mubr.bf16.mxu0 %v1508
        %5638 = vmatmul.mubr.bf16.gmra.mxu0 %v1507
        %v5639 = vpop.f32.mrf.mxu0
        %v5640 = vadd.f32 %v5447, %v5639
        %v5641 = vpop.f32.mrf.mxu0
        %v5642 = vadd.f32 %v5449, %v5641
        %v5643 = vpop.f32.mrf.mxu0
        %v5644 = vadd.f32 %v5451, %v5643
        %v5645 = vpop.f32.mrf.mxu0
        %v5646 = vadd.f32 %v5453, %v5645
        %5647 = vmatprep.mubr.bf16.mxu0 %v1535
        %5648 = vmatmul.mubr.bf16.gmra.mxu0 %v1534
        %v5649 = vpop.f32.mrf.mxu0
        %v5650 = vadd.f32 %v5457, %v5649
        %v5651 = vpop.f32.mrf.mxu0
        %v5652 = vadd.f32 %v5459, %v5651
        %v5653 = vpop.f32.mrf.mxu0
        %v5654 = vadd.f32 %v5461, %v5653
        %v5655 = vpop.f32.mrf.mxu0
        %v5656 = vadd.f32 %v5463, %v5655
        %5657 = vmatprep.mubr.bf16.mxu0 %v1562
        %5658 = vmatmul.mubr.bf16.gmra.mxu0 %v1561
        %v5659 = vpop.f32.mrf.mxu0
        %v5660 = vadd.f32 %v5467, %v5659
        %v5661 = vpop.f32.mrf.mxu0
        %v5662 = vadd.f32 %v5469, %v5661
        %v5663 = vpop.f32.mrf.mxu0
        %v5664 = vadd.f32 %v5471, %v5663
        %v5665 = vpop.f32.mrf.mxu0
        %v5666 = vadd.f32 %v5473, %v5665
        %5667 = vmatprep.mubr.bf16.mxu0 %v1589
        %5668 = vmatmul.mubr.bf16.gmra.mxu0 %v1588
        %v5669 = vpop.f32.mrf.mxu0
        %v5670 = vadd.f32 %v5477, %v5669
        %v5671 = vpop.f32.mrf.mxu0
        %v5672 = vadd.f32 %v5479, %v5671
        %v5673 = vpop.f32.mrf.mxu0
        %v5674 = vadd.f32 %v5481, %v5673
        %v5675 = vpop.f32.mrf.mxu0
        %v5676 = vadd.f32 %v5483, %v5675
        %5677 = vmatprep.mubr.bf16.mxu0 %v1616
        %5678 = vmatmul.mubr.bf16.gmra.mxu0 %v1615
        %v5679 = vpop.f32.mrf.mxu0
        %v5680 = vadd.f32 %v5487, %v5679
        %v5681 = vpop.f32.mrf.mxu0
        %v5682 = vadd.f32 %v5489, %v5681
        %v5683 = vpop.f32.mrf.mxu0
        %v5684 = vadd.f32 %v5491, %v5683
        %v5685 = vpop.f32.mrf.mxu0
        %v5686 = vadd.f32 %v5493, %v5685
        %5687 = vmatprep.mubr.bf16.mxu0 %v1643
        %5688 = vmatmul.mubr.bf16.gmra.mxu0 %v1642
        %v5689 = vpop.f32.mrf.mxu0
        %v5690 = vadd.f32 %v5497, %v5689
        %v5691 = vpop.f32.mrf.mxu0
        %v5692 = vadd.f32 %v5499, %v5691
        %v5693 = vpop.f32.mrf.mxu0
        %v5694 = vadd.f32 %v5501, %v5693
        %v5695 = vpop.f32.mrf.mxu0
        %v5696 = vadd.f32 %v5503, %v5695
        %5697 = vmatprep.mubr.bf16.mxu0 %v1670
        %5698 = vmatmul.mubr.bf16.gmra.mxu0 %v1669
        %v5699 = vpop.f32.mrf.mxu0
        %v5700 = vadd.f32 %v5507, %v5699
        %v5701 = vpop.f32.mrf.mxu0
        %v5702 = vadd.f32 %v5509, %v5701
        %v5703 = vpop.f32.mrf.mxu0
        %v5704 = vadd.f32 %v5511, %v5703
        %v5705 = vpop.f32.mrf.mxu0
        %v5706 = vadd.f32 %v5513, %v5705
        %5707 = vmatprep.mubr.bf16.mxu0 %v1697
        %5708 = vmatmul.mubr.bf16.gmra.mxu0 %v1696
        %v5709 = vpop.f32.mrf.mxu0
        %v5710 = vadd.f32 %v5517, %v5709
        %v5711 = vpop.f32.mrf.mxu0
        %v5712 = vadd.f32 %v5519, %v5711
        %v5713 = vpop.f32.mrf.mxu0
        %v5714 = vadd.f32 %v5521, %v5713
        %v5715 = vpop.f32.mrf.mxu0
        %v5716 = vadd.f32 %v5523, %v5715
        %5717 = vdwg.mxu0
        %5718 = vmatprep.subr.bf16.mxu0 %v3742
        %5719 = vmatpush1.bf16.msra.mxu0 %v3741
        %5720 = vmatprep.subr.bf16.mxu0 %v3740
        %5721 = vmatpush1.bf16.msra.mxu0 %v3739
        %5722 = vmatprep.subr.bf16.mxu0 %v3738
        %5723 = vmatpush1.bf16.msra.mxu0 %v3737
        %5724 = vmatprep.subr.bf16.mxu0 %v3736
        %5725 = vmatpush1.bf16.msra.mxu0 %v3735
        %5726 = vmatprep.subr.bf16.mxu0 %v3734
        %5727 = vmatpush1.bf16.msra.mxu0 %v3733
        %5728 = vmatprep.subr.bf16.mxu0 %v3732
        %5729 = vmatpush1.bf16.msra.mxu0 %v3731
        %5730 = vmatprep.subr.bf16.mxu0 %v3730
        %5731 = vmatpush1.bf16.msra.mxu0 %v3729
        %5732 = vmatprep.subr.bf16.mxu0 %v3728
        %5733 = vmatpush1.bf16.msra.mxu0 %v3727
        %5734 = vmatprep.subr.bf16.mxu0 %v3758
        %5735 = vmatpush2.bf16.msra.mxu0 %v3757
        %5736 = vmatprep.subr.bf16.mxu0 %v3756
        %5737 = vmatpush2.bf16.msra.mxu0 %v3755
        %5738 = vmatprep.subr.bf16.mxu0 %v3754
        %5739 = vmatpush2.bf16.msra.mxu0 %v3753
        %5740 = vmatprep.subr.bf16.mxu0 %v3752
        %5741 = vmatpush2.bf16.msra.mxu0 %v3751
        %5742 = vmatprep.subr.bf16.mxu0 %v3750
        %5743 = vmatpush2.bf16.msra.mxu0 %v3749
        %5744 = vmatprep.subr.bf16.mxu0 %v3748
        %5745 = vmatpush2.bf16.msra.mxu0 %v3747
        %5746 = vmatprep.subr.bf16.mxu0 %v3746
        %5747 = vmatpush2.bf16.msra.mxu0 %v3745
        %5748 = vmatprep.subr.bf16.mxu0 %v3744
        %5749 = vmatpush2.bf16.msra.mxu0 %v3743
        %5750 = vmatprep.mubr.bf16.mxu0 %v1294
        %5751 = vmatmul.mubr.bf16.gmra.mxu0 %v1293
        %v5752 = vpop.f32.mrf.mxu0
        %v5753 = vadd.f32 %v5560, %v5752
        %v5754 = vpop.f32.mrf.mxu0
        %v5755 = vadd.f32 %v5562, %v5754
        %v5756 = vpop.f32.mrf.mxu0
        %v5757 = vadd.f32 %v5564, %v5756
        %v5758 = vpop.f32.mrf.mxu0
        %v5759 = vadd.f32 %v5566, %v5758
        %5760 = vmatprep.mubr.bf16.mxu0 %v1321
        %5761 = vmatmul.mubr.bf16.gmra.mxu0 %v1320
        %v5762 = vpop.f32.mrf.mxu0
        %v5763 = vadd.f32 %v5570, %v5762
        %v5764 = vpop.f32.mrf.mxu0
        %v5765 = vadd.f32 %v5572, %v5764
        %v5766 = vpop.f32.mrf.mxu0
        %v5767 = vadd.f32 %v5574, %v5766
        %v5768 = vpop.f32.mrf.mxu0
        %v5769 = vadd.f32 %v5576, %v5768
        %5770 = vmatprep.mubr.bf16.mxu0 %v1348
        %5771 = vmatmul.mubr.bf16.gmra.mxu0 %v1347
        %v5772 = vpop.f32.mrf.mxu0
        %v5773 = vadd.f32 %v5580, %v5772
        %v5774 = vpop.f32.mrf.mxu0
        %v5775 = vadd.f32 %v5582, %v5774
        %v5776 = vpop.f32.mrf.mxu0
        %v5777 = vadd.f32 %v5584, %v5776
        %v5778 = vpop.f32.mrf.mxu0
        %v5779 = vadd.f32 %v5586, %v5778
        %5780 = vmatprep.mubr.bf16.mxu0 %v1375
        %5781 = vmatmul.mubr.bf16.gmra.mxu0 %v1374
        %v5782 = vpop.f32.mrf.mxu0
        %v5783 = vadd.f32 %v5590, %v5782
        %v5784 = vpop.f32.mrf.mxu0
        %v5785 = vadd.f32 %v5592, %v5784
        %v5786 = vpop.f32.mrf.mxu0
        %v5787 = vadd.f32 %v5594, %v5786
        %v5788 = vpop.f32.mrf.mxu0
        %v5789 = vadd.f32 %v5596, %v5788
        %5790 = vmatprep.mubr.bf16.mxu0 %v1402
        %5791 = vmatmul.mubr.bf16.gmra.mxu0 %v1401
        %v5792 = vpop.f32.mrf.mxu0
        %v5793 = vadd.f32 %v5600, %v5792
        %v5794 = vpop.f32.mrf.mxu0
        %v5795 = vadd.f32 %v5602, %v5794
        %v5796 = vpop.f32.mrf.mxu0
        %v5797 = vadd.f32 %v5604, %v5796
        %v5798 = vpop.f32.mrf.mxu0
        %v5799 = vadd.f32 %v5606, %v5798
        %5800 = vmatprep.mubr.bf16.mxu0 %v1429
        %5801 = vmatmul.mubr.bf16.gmra.mxu0 %v1428
        %v5802 = vpop.f32.mrf.mxu0
        %v5803 = vadd.f32 %v5610, %v5802
        %v5804 = vpop.f32.mrf.mxu0
        %v5805 = vadd.f32 %v5612, %v5804
        %v5806 = vpop.f32.mrf.mxu0
        %v5807 = vadd.f32 %v5614, %v5806
        %v5808 = vpop.f32.mrf.mxu0
        %v5809 = vadd.f32 %v5616, %v5808
        %5810 = vmatprep.mubr.bf16.mxu0 %v1456
        %5811 = vmatmul.mubr.bf16.gmra.mxu0 %v1455
        %v5812 = vpop.f32.mrf.mxu0
        %v5813 = vadd.f32 %v5620, %v5812
        %v5814 = vpop.f32.mrf.mxu0
        %v5815 = vadd.f32 %v5622, %v5814
        %v5816 = vpop.f32.mrf.mxu0
        %v5817 = vadd.f32 %v5624, %v5816
        %v5818 = vpop.f32.mrf.mxu0
        %v5819 = vadd.f32 %v5626, %v5818
        %5820 = vmatprep.mubr.bf16.mxu0 %v1483
        %5821 = vmatmul.mubr.bf16.gmra.mxu0 %v1482
        %v5822 = vpop.f32.mrf.mxu0
        %v5823 = vadd.f32 %v5630, %v5822
        %v5824 = vpop.f32.mrf.mxu0
        %v5825 = vadd.f32 %v5632, %v5824
        %v5826 = vpop.f32.mrf.mxu0
        %v5827 = vadd.f32 %v5634, %v5826
        %v5828 = vpop.f32.mrf.mxu0
        %v5829 = vadd.f32 %v5636, %v5828
        %5830 = vmatprep.mubr.bf16.mxu0 %v1510
        %5831 = vmatmul.mubr.bf16.gmra.mxu0 %v1509
        %v5832 = vpop.f32.mrf.mxu0
        %v5833 = vadd.f32 %v5640, %v5832
        %v5834 = vpop.f32.mrf.mxu0
        %v5835 = vadd.f32 %v5642, %v5834
        %v5836 = vpop.f32.mrf.mxu0
        %v5837 = vadd.f32 %v5644, %v5836
        %v5838 = vpop.f32.mrf.mxu0
        %v5839 = vadd.f32 %v5646, %v5838
        %5840 = vmatprep.mubr.bf16.mxu0 %v1537
        %5841 = vmatmul.mubr.bf16.gmra.mxu0 %v1536
        %v5842 = vpop.f32.mrf.mxu0
        %v5843 = vadd.f32 %v5650, %v5842
        %v5844 = vpop.f32.mrf.mxu0
        %v5845 = vadd.f32 %v5652, %v5844
        %v5846 = vpop.f32.mrf.mxu0
        %v5847 = vadd.f32 %v5654, %v5846
        %v5848 = vpop.f32.mrf.mxu0
        %v5849 = vadd.f32 %v5656, %v5848
        %5850 = vmatprep.mubr.bf16.mxu0 %v1564
        %5851 = vmatmul.mubr.bf16.gmra.mxu0 %v1563
        %v5852 = vpop.f32.mrf.mxu0
        %v5853 = vadd.f32 %v5660, %v5852
        %v5854 = vpop.f32.mrf.mxu0
        %v5855 = vadd.f32 %v5662, %v5854
        %v5856 = vpop.f32.mrf.mxu0
        %v5857 = vadd.f32 %v5664, %v5856
        %v5858 = vpop.f32.mrf.mxu0
        %v5859 = vadd.f32 %v5666, %v5858
        %5860 = vmatprep.mubr.bf16.mxu0 %v1591
        %5861 = vmatmul.mubr.bf16.gmra.mxu0 %v1590
        %v5862 = vpop.f32.mrf.mxu0
        %v5863 = vadd.f32 %v5670, %v5862
        %v5864 = vpop.f32.mrf.mxu0
        %v5865 = vadd.f32 %v5672, %v5864
        %v5866 = vpop.f32.mrf.mxu0
        %v5867 = vadd.f32 %v5674, %v5866
        %v5868 = vpop.f32.mrf.mxu0
        %v5869 = vadd.f32 %v5676, %v5868
        %5870 = vmatprep.mubr.bf16.mxu0 %v1618
        %5871 = vmatmul.mubr.bf16.gmra.mxu0 %v1617
        %v5872 = vpop.f32.mrf.mxu0
        %v5873 = vadd.f32 %v5680, %v5872
        %v5874 = vpop.f32.mrf.mxu0
        %v5875 = vadd.f32 %v5682, %v5874
        %v5876 = vpop.f32.mrf.mxu0
        %v5877 = vadd.f32 %v5684, %v5876
        %v5878 = vpop.f32.mrf.mxu0
        %v5879 = vadd.f32 %v5686, %v5878
        %5880 = vmatprep.mubr.bf16.mxu0 %v1645
        %5881 = vmatmul.mubr.bf16.gmra.mxu0 %v1644
        %v5882 = vpop.f32.mrf.mxu0
        %v5883 = vadd.f32 %v5690, %v5882
        %v5884 = vpop.f32.mrf.mxu0
        %v5885 = vadd.f32 %v5692, %v5884
        %v5886 = vpop.f32.mrf.mxu0
        %v5887 = vadd.f32 %v5694, %v5886
        %v5888 = vpop.f32.mrf.mxu0
        %v5889 = vadd.f32 %v5696, %v5888
        %5890 = vmatprep.mubr.bf16.mxu0 %v1672
        %5891 = vmatmul.mubr.bf16.gmra.mxu0 %v1671
        %v5892 = vpop.f32.mrf.mxu0
        %v5893 = vadd.f32 %v5700, %v5892
        %v5894 = vpop.f32.mrf.mxu0
        %v5895 = vadd.f32 %v5702, %v5894
        %v5896 = vpop.f32.mrf.mxu0
        %v5897 = vadd.f32 %v5704, %v5896
        %v5898 = vpop.f32.mrf.mxu0
        %v5899 = vadd.f32 %v5706, %v5898
        %5900 = vmatprep.mubr.bf16.mxu0 %v1699
        %5901 = vmatmul.mubr.bf16.gmra.mxu0 %v1698
        %v5902 = vpop.f32.mrf.mxu0
        %v5903 = vadd.f32 %v5710, %v5902
        %v5904 = vpop.f32.mrf.mxu0
        %v5905 = vadd.f32 %v5712, %v5904
        %v5906 = vpop.f32.mrf.mxu0
        %v5907 = vadd.f32 %v5714, %v5906
        %v5908 = vpop.f32.mrf.mxu0
        %v5909 = vadd.f32 %v5716, %v5908
        %5910 = vdwg.mxu0
        %5911 = vmatprep.subr.bf16.mxu0 %v3774
        %5912 = vmatpush1.bf16.msra.mxu0 %v3773
        %5913 = vmatprep.subr.bf16.mxu0 %v3772
        %5914 = vmatpush1.bf16.msra.mxu0 %v3771
        %5915 = vmatprep.subr.bf16.mxu0 %v3770
        %5916 = vmatpush1.bf16.msra.mxu0 %v3769
        %5917 = vmatprep.subr.bf16.mxu0 %v3768
        %5918 = vmatpush1.bf16.msra.mxu0 %v3767
        %5919 = vmatprep.subr.bf16.mxu0 %v3766
        %5920 = vmatpush1.bf16.msra.mxu0 %v3765
        %5921 = vmatprep.subr.bf16.mxu0 %v3764
        %5922 = vmatpush1.bf16.msra.mxu0 %v3763
        %5923 = vmatprep.subr.bf16.mxu0 %v3762
        %5924 = vmatpush1.bf16.msra.mxu0 %v3761
        %5925 = vmatprep.subr.bf16.mxu0 %v3760
        %5926 = vmatpush1.bf16.msra.mxu0 %v3759
        %5927 = vmatprep.subr.bf16.mxu0 %v3790
        %5928 = vmatpush2.bf16.msra.mxu0 %v3789
        %5929 = vmatprep.subr.bf16.mxu0 %v3788
        %5930 = vmatpush2.bf16.msra.mxu0 %v3787
        %5931 = vmatprep.subr.bf16.mxu0 %v3786
        %5932 = vmatpush2.bf16.msra.mxu0 %v3785
        %5933 = vmatprep.subr.bf16.mxu0 %v3784
        %5934 = vmatpush2.bf16.msra.mxu0 %v3783
        %5935 = vmatprep.subr.bf16.mxu0 %v3782
        %5936 = vmatpush2.bf16.msra.mxu0 %v3781
        %5937 = vmatprep.subr.bf16.mxu0 %v3780
        %5938 = vmatpush2.bf16.msra.mxu0 %v3779
        %5939 = vmatprep.subr.bf16.mxu0 %v3778
        %5940 = vmatpush2.bf16.msra.mxu0 %v3777
        %5941 = vmatprep.subr.bf16.mxu0 %v3776
        %5942 = vmatpush2.bf16.msra.mxu0 %v3775
        %5943 = vmatprep.mubr.bf16.mxu0 %v1296
        %5944 = vmatmul.mubr.bf16.gmra.mxu0 %v1295
        %v5945 = vpop.f32.mrf.mxu0
        %v5946 = vadd.f32 %v5753, %v5945
        %v5947 = vpop.f32.mrf.mxu0
        %v5948 = vadd.f32 %v5755, %v5947
        %v5949 = vpop.f32.mrf.mxu0
        %v5950 = vadd.f32 %v5757, %v5949
        %v5951 = vpop.f32.mrf.mxu0
        %v5952 = vadd.f32 %v5759, %v5951
        %5953 = vmatprep.mubr.bf16.mxu0 %v1323
        %5954 = vmatmul.mubr.bf16.gmra.mxu0 %v1322
        %v5955 = vpop.f32.mrf.mxu0
        %v5956 = vadd.f32 %v5763, %v5955
        %v5957 = vpop.f32.mrf.mxu0
        %v5958 = vadd.f32 %v5765, %v5957
        %v5959 = vpop.f32.mrf.mxu0
        %v5960 = vadd.f32 %v5767, %v5959
        %v5961 = vpop.f32.mrf.mxu0
        %v5962 = vadd.f32 %v5769, %v5961
        %5963 = vmatprep.mubr.bf16.mxu0 %v1350
        %5964 = vmatmul.mubr.bf16.gmra.mxu0 %v1349
        %v5965 = vpop.f32.mrf.mxu0
        %v5966 = vadd.f32 %v5773, %v5965
        %v5967 = vpop.f32.mrf.mxu0
        %v5968 = vadd.f32 %v5775, %v5967
        %v5969 = vpop.f32.mrf.mxu0
        %v5970 = vadd.f32 %v5777, %v5969
        %v5971 = vpop.f32.mrf.mxu0
        %v5972 = vadd.f32 %v5779, %v5971
        %5973 = vmatprep.mubr.bf16.mxu0 %v1377
        %5974 = vmatmul.mubr.bf16.gmra.mxu0 %v1376
        %v5975 = vpop.f32.mrf.mxu0
        %v5976 = vadd.f32 %v5783, %v5975
        %v5977 = vpop.f32.mrf.mxu0
        %v5978 = vadd.f32 %v5785, %v5977
        %v5979 = vpop.f32.mrf.mxu0
        %v5980 = vadd.f32 %v5787, %v5979
        %v5981 = vpop.f32.mrf.mxu0
        %v5982 = vadd.f32 %v5789, %v5981
        %5983 = vmatprep.mubr.bf16.mxu0 %v1404
        %5984 = vmatmul.mubr.bf16.gmra.mxu0 %v1403
        %v5985 = vpop.f32.mrf.mxu0
        %v5986 = vadd.f32 %v5793, %v5985
        %v5987 = vpop.f32.mrf.mxu0
        %v5988 = vadd.f32 %v5795, %v5987
        %v5989 = vpop.f32.mrf.mxu0
        %v5990 = vadd.f32 %v5797, %v5989
        %v5991 = vpop.f32.mrf.mxu0
        %v5992 = vadd.f32 %v5799, %v5991
        %5993 = vmatprep.mubr.bf16.mxu0 %v1431
        %5994 = vmatmul.mubr.bf16.gmra.mxu0 %v1430
        %v5995 = vpop.f32.mrf.mxu0
        %v5996 = vadd.f32 %v5803, %v5995
        %v5997 = vpop.f32.mrf.mxu0
        %v5998 = vadd.f32 %v5805, %v5997
        %v5999 = vpop.f32.mrf.mxu0
        %v6000 = vadd.f32 %v5807, %v5999
        %v6001 = vpop.f32.mrf.mxu0
        %v6002 = vadd.f32 %v5809, %v6001
        %6003 = vmatprep.mubr.bf16.mxu0 %v1458
        %6004 = vmatmul.mubr.bf16.gmra.mxu0 %v1457
        %v6005 = vpop.f32.mrf.mxu0
        %v6006 = vadd.f32 %v5813, %v6005
        %v6007 = vpop.f32.mrf.mxu0
        %v6008 = vadd.f32 %v5815, %v6007
        %v6009 = vpop.f32.mrf.mxu0
        %v6010 = vadd.f32 %v5817, %v6009
        %v6011 = vpop.f32.mrf.mxu0
        %v6012 = vadd.f32 %v5819, %v6011
        %6013 = vmatprep.mubr.bf16.mxu0 %v1485
        %6014 = vmatmul.mubr.bf16.gmra.mxu0 %v1484
        %v6015 = vpop.f32.mrf.mxu0
        %v6016 = vadd.f32 %v5823, %v6015
        %v6017 = vpop.f32.mrf.mxu0
        %v6018 = vadd.f32 %v5825, %v6017
        %v6019 = vpop.f32.mrf.mxu0
        %v6020 = vadd.f32 %v5827, %v6019
        %v6021 = vpop.f32.mrf.mxu0
        %v6022 = vadd.f32 %v5829, %v6021
        %6023 = vmatprep.mubr.bf16.mxu0 %v1512
        %6024 = vmatmul.mubr.bf16.gmra.mxu0 %v1511
        %v6025 = vpop.f32.mrf.mxu0
        %v6026 = vadd.f32 %v5833, %v6025
        %v6027 = vpop.f32.mrf.mxu0
        %v6028 = vadd.f32 %v5835, %v6027
        %v6029 = vpop.f32.mrf.mxu0
        %v6030 = vadd.f32 %v5837, %v6029
        %v6031 = vpop.f32.mrf.mxu0
        %v6032 = vadd.f32 %v5839, %v6031
        %6033 = vmatprep.mubr.bf16.mxu0 %v1539
        %6034 = vmatmul.mubr.bf16.gmra.mxu0 %v1538
        %v6035 = vpop.f32.mrf.mxu0
        %v6036 = vadd.f32 %v5843, %v6035
        %v6037 = vpop.f32.mrf.mxu0
        %v6038 = vadd.f32 %v5845, %v6037
        %v6039 = vpop.f32.mrf.mxu0
        %v6040 = vadd.f32 %v5847, %v6039
        %v6041 = vpop.f32.mrf.mxu0
        %v6042 = vadd.f32 %v5849, %v6041
        %6043 = vmatprep.mubr.bf16.mxu0 %v1566
        %6044 = vmatmul.mubr.bf16.gmra.mxu0 %v1565
        %v6045 = vpop.f32.mrf.mxu0
        %v6046 = vadd.f32 %v5853, %v6045
        %v6047 = vpop.f32.mrf.mxu0
        %v6048 = vadd.f32 %v5855, %v6047
        %v6049 = vpop.f32.mrf.mxu0
        %v6050 = vadd.f32 %v5857, %v6049
        %v6051 = vpop.f32.mrf.mxu0
        %v6052 = vadd.f32 %v5859, %v6051
        %6053 = vmatprep.mubr.bf16.mxu0 %v1593
        %6054 = vmatmul.mubr.bf16.gmra.mxu0 %v1592
        %v6055 = vpop.f32.mrf.mxu0
        %v6056 = vadd.f32 %v5863, %v6055
        %v6057 = vpop.f32.mrf.mxu0
        %v6058 = vadd.f32 %v5865, %v6057
        %v6059 = vpop.f32.mrf.mxu0
        %v6060 = vadd.f32 %v5867, %v6059
        %v6061 = vpop.f32.mrf.mxu0
        %v6062 = vadd.f32 %v5869, %v6061
        %6063 = vmatprep.mubr.bf16.mxu0 %v1620
        %6064 = vmatmul.mubr.bf16.gmra.mxu0 %v1619
        %v6065 = vpop.f32.mrf.mxu0
        %v6066 = vadd.f32 %v5873, %v6065
        %v6067 = vpop.f32.mrf.mxu0
        %v6068 = vadd.f32 %v5875, %v6067
        %v6069 = vpop.f32.mrf.mxu0
        %v6070 = vadd.f32 %v5877, %v6069
        %v6071 = vpop.f32.mrf.mxu0
        %v6072 = vadd.f32 %v5879, %v6071
        %6073 = vmatprep.mubr.bf16.mxu0 %v1647
        %6074 = vmatmul.mubr.bf16.gmra.mxu0 %v1646
        %v6075 = vpop.f32.mrf.mxu0
        %v6076 = vadd.f32 %v5883, %v6075
        %v6077 = vpop.f32.mrf.mxu0
        %v6078 = vadd.f32 %v5885, %v6077
        %v6079 = vpop.f32.mrf.mxu0
        %v6080 = vadd.f32 %v5887, %v6079
        %v6081 = vpop.f32.mrf.mxu0
        %v6082 = vadd.f32 %v5889, %v6081
        %6083 = vmatprep.mubr.bf16.mxu0 %v1674
        %6084 = vmatmul.mubr.bf16.gmra.mxu0 %v1673
        %v6085 = vpop.f32.mrf.mxu0
        %v6086 = vadd.f32 %v5893, %v6085
        %v6087 = vpop.f32.mrf.mxu0
        %v6088 = vadd.f32 %v5895, %v6087
        %v6089 = vpop.f32.mrf.mxu0
        %v6090 = vadd.f32 %v5897, %v6089
        %v6091 = vpop.f32.mrf.mxu0
        %v6092 = vadd.f32 %v5899, %v6091
        %6093 = vmatprep.mubr.bf16.mxu0 %v1701
        %6094 = vmatmul.mubr.bf16.gmra.mxu0 %v1700
        %v6095 = vpop.f32.mrf.mxu0
        %v6096 = vadd.f32 %v5903, %v6095
        %v6097 = vpop.f32.mrf.mxu0
        %v6098 = vadd.f32 %v5905, %v6097
        %v6099 = vpop.f32.mrf.mxu0
        %v6100 = vadd.f32 %v5907, %v6099
        %v6101 = vpop.f32.mrf.mxu0
        %v6102 = vadd.f32 %v5909, %v6101
        %6103 = vdwg.mxu0
        %6104 = vmatprep.subr.bf16.mxu0 %v3806
        %6105 = vmatpush1.bf16.msra.mxu0 %v3805
        %6106 = vmatprep.subr.bf16.mxu0 %v3804
        %6107 = vmatpush1.bf16.msra.mxu0 %v3803
        %6108 = vmatprep.subr.bf16.mxu0 %v3802
        %6109 = vmatpush1.bf16.msra.mxu0 %v3801
        %6110 = vmatprep.subr.bf16.mxu0 %v3800
        %6111 = vmatpush1.bf16.msra.mxu0 %v3799
        %6112 = vmatprep.subr.bf16.mxu0 %v3798
        %6113 = vmatpush1.bf16.msra.mxu0 %v3797
        %6114 = vmatprep.subr.bf16.mxu0 %v3796
        %6115 = vmatpush1.bf16.msra.mxu0 %v3795
        %6116 = vmatprep.subr.bf16.mxu0 %v3794
        %6117 = vmatpush1.bf16.msra.mxu0 %v3793
        %6118 = vmatprep.subr.bf16.mxu0 %v3792
        %6119 = vmatpush1.bf16.msra.mxu0 %v3791
        %6120 = vmatprep.subr.bf16.mxu0 %v3822
        %6121 = vmatpush2.bf16.msra.mxu0 %v3821
        %6122 = vmatprep.subr.bf16.mxu0 %v3820
        %6123 = vmatpush2.bf16.msra.mxu0 %v3819
        %6124 = vmatprep.subr.bf16.mxu0 %v3818
        %6125 = vmatpush2.bf16.msra.mxu0 %v3817
        %6126 = vmatprep.subr.bf16.mxu0 %v3816
        %6127 = vmatpush2.bf16.msra.mxu0 %v3815
        %6128 = vmatprep.subr.bf16.mxu0 %v3814
        %6129 = vmatpush2.bf16.msra.mxu0 %v3813
        %6130 = vmatprep.subr.bf16.mxu0 %v3812
        %6131 = vmatpush2.bf16.msra.mxu0 %v3811
        %6132 = vmatprep.subr.bf16.mxu0 %v3810
        %6133 = vmatpush2.bf16.msra.mxu0 %v3809
        %6134 = vmatprep.subr.bf16.mxu0 %v3808
        %6135 = vmatpush2.bf16.msra.mxu0 %v3807
        %6136 = vmatprep.mubr.bf16.mxu0 %v1298
        %6137 = vmatmul.mubr.bf16.gmra.mxu0 %v1297
        %v6138 = vpop.f32.mrf.mxu0
        %v6139 = vadd.f32 %v5946, %v6138
        %v6140 = vpop.f32.mrf.mxu0
        %v6141 = vadd.f32 %v5948, %v6140
        %v6142 = vpop.f32.mrf.mxu0
        %v6143 = vadd.f32 %v5950, %v6142
        %v6144 = vpop.f32.mrf.mxu0
        %v6145 = vadd.f32 %v5952, %v6144
        %6146 = vmatprep.mubr.bf16.mxu0 %v1325
        %6147 = vmatmul.mubr.bf16.gmra.mxu0 %v1324
        %v6148 = vpop.f32.mrf.mxu0
        %v6149 = vadd.f32 %v5956, %v6148
        %v6150 = vpop.f32.mrf.mxu0
        %v6151 = vadd.f32 %v5958, %v6150
        %v6152 = vpop.f32.mrf.mxu0
        %v6153 = vadd.f32 %v5960, %v6152
        %v6154 = vpop.f32.mrf.mxu0
        %v6155 = vadd.f32 %v5962, %v6154
        %6156 = vmatprep.mubr.bf16.mxu0 %v1352
        %6157 = vmatmul.mubr.bf16.gmra.mxu0 %v1351
        %v6158 = vpop.f32.mrf.mxu0
        %v6159 = vadd.f32 %v5966, %v6158
        %v6160 = vpop.f32.mrf.mxu0
        %v6161 = vadd.f32 %v5968, %v6160
        %v6162 = vpop.f32.mrf.mxu0
        %v6163 = vadd.f32 %v5970, %v6162
        %v6164 = vpop.f32.mrf.mxu0
        %v6165 = vadd.f32 %v5972, %v6164
        %6166 = vmatprep.mubr.bf16.mxu0 %v1379
        %6167 = vmatmul.mubr.bf16.gmra.mxu0 %v1378
        %v6168 = vpop.f32.mrf.mxu0
        %v6169 = vadd.f32 %v5976, %v6168
        %v6170 = vpop.f32.mrf.mxu0
        %v6171 = vadd.f32 %v5978, %v6170
        %v6172 = vpop.f32.mrf.mxu0
        %v6173 = vadd.f32 %v5980, %v6172
        %v6174 = vpop.f32.mrf.mxu0
        %v6175 = vadd.f32 %v5982, %v6174
        %6176 = vmatprep.mubr.bf16.mxu0 %v1406
        %6177 = vmatmul.mubr.bf16.gmra.mxu0 %v1405
        %v6178 = vpop.f32.mrf.mxu0
        %v6179 = vadd.f32 %v5986, %v6178
        %v6180 = vpop.f32.mrf.mxu0
        %v6181 = vadd.f32 %v5988, %v6180
        %v6182 = vpop.f32.mrf.mxu0
        %v6183 = vadd.f32 %v5990, %v6182
        %v6184 = vpop.f32.mrf.mxu0
        %v6185 = vadd.f32 %v5992, %v6184
        %6186 = vmatprep.mubr.bf16.mxu0 %v1433
        %6187 = vmatmul.mubr.bf16.gmra.mxu0 %v1432
        %v6188 = vpop.f32.mrf.mxu0
        %v6189 = vadd.f32 %v5996, %v6188
        %v6190 = vpop.f32.mrf.mxu0
        %v6191 = vadd.f32 %v5998, %v6190
        %v6192 = vpop.f32.mrf.mxu0
        %v6193 = vadd.f32 %v6000, %v6192
        %v6194 = vpop.f32.mrf.mxu0
        %v6195 = vadd.f32 %v6002, %v6194
        %6196 = vmatprep.mubr.bf16.mxu0 %v1460
        %6197 = vmatmul.mubr.bf16.gmra.mxu0 %v1459
        %v6198 = vpop.f32.mrf.mxu0
        %v6199 = vadd.f32 %v6006, %v6198
        %v6200 = vpop.f32.mrf.mxu0
        %v6201 = vadd.f32 %v6008, %v6200
        %v6202 = vpop.f32.mrf.mxu0
        %v6203 = vadd.f32 %v6010, %v6202
        %v6204 = vpop.f32.mrf.mxu0
        %v6205 = vadd.f32 %v6012, %v6204
        %6206 = vmatprep.mubr.bf16.mxu0 %v1487
        %6207 = vmatmul.mubr.bf16.gmra.mxu0 %v1486
        %v6208 = vpop.f32.mrf.mxu0
        %v6209 = vadd.f32 %v6016, %v6208
        %v6210 = vpop.f32.mrf.mxu0
        %v6211 = vadd.f32 %v6018, %v6210
        %v6212 = vpop.f32.mrf.mxu0
        %v6213 = vadd.f32 %v6020, %v6212
        %v6214 = vpop.f32.mrf.mxu0
        %v6215 = vadd.f32 %v6022, %v6214
        %6216 = vmatprep.mubr.bf16.mxu0 %v1514
        %6217 = vmatmul.mubr.bf16.gmra.mxu0 %v1513
        %v6218 = vpop.f32.mrf.mxu0
        %v6219 = vadd.f32 %v6026, %v6218
        %v6220 = vpop.f32.mrf.mxu0
        %v6221 = vadd.f32 %v6028, %v6220
        %v6222 = vpop.f32.mrf.mxu0
        %v6223 = vadd.f32 %v6030, %v6222
        %v6224 = vpop.f32.mrf.mxu0
        %v6225 = vadd.f32 %v6032, %v6224
        %6226 = vmatprep.mubr.bf16.mxu0 %v1541
        %6227 = vmatmul.mubr.bf16.gmra.mxu0 %v1540
        %v6228 = vpop.f32.mrf.mxu0
        %v6229 = vadd.f32 %v6036, %v6228
        %v6230 = vpop.f32.mrf.mxu0
        %v6231 = vadd.f32 %v6038, %v6230
        %v6232 = vpop.f32.mrf.mxu0
        %v6233 = vadd.f32 %v6040, %v6232
        %v6234 = vpop.f32.mrf.mxu0
        %v6235 = vadd.f32 %v6042, %v6234
        %6236 = vmatprep.mubr.bf16.mxu0 %v1568
        %6237 = vmatmul.mubr.bf16.gmra.mxu0 %v1567
        %v6238 = vpop.f32.mrf.mxu0
        %v6239 = vadd.f32 %v6046, %v6238
        %v6240 = vpop.f32.mrf.mxu0
        %v6241 = vadd.f32 %v6048, %v6240
        %v6242 = vpop.f32.mrf.mxu0
        %v6243 = vadd.f32 %v6050, %v6242
        %v6244 = vpop.f32.mrf.mxu0
        %v6245 = vadd.f32 %v6052, %v6244
        %6246 = vmatprep.mubr.bf16.mxu0 %v1595
        %6247 = vmatmul.mubr.bf16.gmra.mxu0 %v1594
        %v6248 = vpop.f32.mrf.mxu0
        %v6249 = vadd.f32 %v6056, %v6248
        %v6250 = vpop.f32.mrf.mxu0
        %v6251 = vadd.f32 %v6058, %v6250
        %v6252 = vpop.f32.mrf.mxu0
        %v6253 = vadd.f32 %v6060, %v6252
        %v6254 = vpop.f32.mrf.mxu0
        %v6255 = vadd.f32 %v6062, %v6254
        %6256 = vmatprep.mubr.bf16.mxu0 %v1622
        %6257 = vmatmul.mubr.bf16.gmra.mxu0 %v1621
        %v6258 = vpop.f32.mrf.mxu0
        %v6259 = vadd.f32 %v6066, %v6258
        %v6260 = vpop.f32.mrf.mxu0
        %v6261 = vadd.f32 %v6068, %v6260
        %v6262 = vpop.f32.mrf.mxu0
        %v6263 = vadd.f32 %v6070, %v6262
        %v6264 = vpop.f32.mrf.mxu0
        %v6265 = vadd.f32 %v6072, %v6264
        %6266 = vmatprep.mubr.bf16.mxu0 %v1649
        %6267 = vmatmul.mubr.bf16.gmra.mxu0 %v1648
        %v6268 = vpop.f32.mrf.mxu0
        %v6269 = vadd.f32 %v6076, %v6268
        %v6270 = vpop.f32.mrf.mxu0
        %v6271 = vadd.f32 %v6078, %v6270
        %v6272 = vpop.f32.mrf.mxu0
        %v6273 = vadd.f32 %v6080, %v6272
        %v6274 = vpop.f32.mrf.mxu0
        %v6275 = vadd.f32 %v6082, %v6274
        %6276 = vmatprep.mubr.bf16.mxu0 %v1676
        %6277 = vmatmul.mubr.bf16.gmra.mxu0 %v1675
        %v6278 = vpop.f32.mrf.mxu0
        %v6279 = vadd.f32 %v6086, %v6278
        %v6280 = vpop.f32.mrf.mxu0
        %v6281 = vadd.f32 %v6088, %v6280
        %v6282 = vpop.f32.mrf.mxu0
        %v6283 = vadd.f32 %v6090, %v6282
        %v6284 = vpop.f32.mrf.mxu0
        %v6285 = vadd.f32 %v6092, %v6284
        %6286 = vmatprep.mubr.bf16.mxu0 %v1703
        %6287 = vmatmul.mubr.bf16.gmra.mxu0 %v1702
        %v6288 = vpop.f32.mrf.mxu0
        %v6289 = vadd.f32 %v6096, %v6288
        %v6290 = vpop.f32.mrf.mxu0
        %v6291 = vadd.f32 %v6098, %v6290
        %v6292 = vpop.f32.mrf.mxu0
        %v6293 = vadd.f32 %v6100, %v6292
        %v6294 = vpop.f32.mrf.mxu0
        %v6295 = vadd.f32 %v6102, %v6294
        %6296 = vdwg.mxu0
        %6297 = vmatprep.subr.bf16.mxu0 %v3838
        %6298 = vmatpush1.bf16.msra.mxu0 %v3837
        %6299 = vmatprep.subr.bf16.mxu0 %v3836
        %6300 = vmatpush1.bf16.msra.mxu0 %v3835
        %6301 = vmatprep.subr.bf16.mxu0 %v3834
        %6302 = vmatpush1.bf16.msra.mxu0 %v3833
        %6303 = vmatprep.subr.bf16.mxu0 %v3832
        %6304 = vmatpush1.bf16.msra.mxu0 %v3831
        %6305 = vmatprep.subr.bf16.mxu0 %v3830
        %6306 = vmatpush1.bf16.msra.mxu0 %v3829
        %6307 = vmatprep.subr.bf16.mxu0 %v3828
        %6308 = vmatpush1.bf16.msra.mxu0 %v3827
        %6309 = vmatprep.subr.bf16.mxu0 %v3826
        %6310 = vmatpush1.bf16.msra.mxu0 %v3825
        %6311 = vmatprep.subr.bf16.mxu0 %v3824
        %6312 = vmatpush1.bf16.msra.mxu0 %v3823
        %6313 = vmatprep.subr.bf16.mxu0 %v3854
        %6314 = vmatpush2.bf16.msra.mxu0 %v3853
        %6315 = vmatprep.subr.bf16.mxu0 %v3852
        %6316 = vmatpush2.bf16.msra.mxu0 %v3851
        %6317 = vmatprep.subr.bf16.mxu0 %v3850
        %6318 = vmatpush2.bf16.msra.mxu0 %v3849
        %6319 = vmatprep.subr.bf16.mxu0 %v3848
        %6320 = vmatpush2.bf16.msra.mxu0 %v3847
        %6321 = vmatprep.subr.bf16.mxu0 %v3846
        %6322 = vmatpush2.bf16.msra.mxu0 %v3845
        %6323 = vmatprep.subr.bf16.mxu0 %v3844
        %6324 = vmatpush2.bf16.msra.mxu0 %v3843
        %6325 = vmatprep.subr.bf16.mxu0 %v3842
        %6326 = vmatpush2.bf16.msra.mxu0 %v3841
        %6327 = vmatprep.subr.bf16.mxu0 %v3840
        %6328 = vmatpush2.bf16.msra.mxu0 %v3839
        %6329 = vmatprep.mubr.bf16.mxu0 %v1300
        %6330 = vmatmul.mubr.bf16.gmra.mxu0 %v1299
        %v6331 = vpop.f32.mrf.mxu0
        %v6332 = vadd.f32 %v6139, %v6331
        %v6333 = vpop.f32.mrf.mxu0
        %v6334 = vadd.f32 %v6141, %v6333
        %v6335 = vpop.f32.mrf.mxu0
        %v6336 = vadd.f32 %v6143, %v6335
        %v6337 = vpop.f32.mrf.mxu0
        %v6338 = vadd.f32 %v6145, %v6337
        %6339 = vmatprep.mubr.bf16.mxu0 %v1327
        %6340 = vmatmul.mubr.bf16.gmra.mxu0 %v1326
        %v6341 = vpop.f32.mrf.mxu0
        %v6342 = vadd.f32 %v6149, %v6341
        %v6343 = vpop.f32.mrf.mxu0
        %v6344 = vadd.f32 %v6151, %v6343
        %v6345 = vpop.f32.mrf.mxu0
        %v6346 = vadd.f32 %v6153, %v6345
        %v6347 = vpop.f32.mrf.mxu0
        %v6348 = vadd.f32 %v6155, %v6347
        %6349 = vmatprep.mubr.bf16.mxu0 %v1354
        %6350 = vmatmul.mubr.bf16.gmra.mxu0 %v1353
        %v6351 = vpop.f32.mrf.mxu0
        %v6352 = vadd.f32 %v6159, %v6351
        %v6353 = vpop.f32.mrf.mxu0
        %v6354 = vadd.f32 %v6161, %v6353
        %v6355 = vpop.f32.mrf.mxu0
        %v6356 = vadd.f32 %v6163, %v6355
        %v6357 = vpop.f32.mrf.mxu0
        %v6358 = vadd.f32 %v6165, %v6357
        %6359 = vmatprep.mubr.bf16.mxu0 %v1381
        %6360 = vmatmul.mubr.bf16.gmra.mxu0 %v1380
        %v6361 = vpop.f32.mrf.mxu0
        %v6362 = vadd.f32 %v6169, %v6361
        %v6363 = vpop.f32.mrf.mxu0
        %v6364 = vadd.f32 %v6171, %v6363
        %v6365 = vpop.f32.mrf.mxu0
        %v6366 = vadd.f32 %v6173, %v6365
        %v6367 = vpop.f32.mrf.mxu0
        %v6368 = vadd.f32 %v6175, %v6367
        %6369 = vmatprep.mubr.bf16.mxu0 %v1408
        %6370 = vmatmul.mubr.bf16.gmra.mxu0 %v1407
        %v6371 = vpop.f32.mrf.mxu0
        %v6372 = vadd.f32 %v6179, %v6371
        %v6373 = vpop.f32.mrf.mxu0
        %v6374 = vadd.f32 %v6181, %v6373
        %v6375 = vpop.f32.mrf.mxu0
        %v6376 = vadd.f32 %v6183, %v6375
        %v6377 = vpop.f32.mrf.mxu0
        %v6378 = vadd.f32 %v6185, %v6377
        %6379 = vmatprep.mubr.bf16.mxu0 %v1435
        %6380 = vmatmul.mubr.bf16.gmra.mxu0 %v1434
        %v6381 = vpop.f32.mrf.mxu0
        %v6382 = vadd.f32 %v6189, %v6381
        %v6383 = vpop.f32.mrf.mxu0
        %v6384 = vadd.f32 %v6191, %v6383
        %v6385 = vpop.f32.mrf.mxu0
        %v6386 = vadd.f32 %v6193, %v6385
        %v6387 = vpop.f32.mrf.mxu0
        %v6388 = vadd.f32 %v6195, %v6387
        %6389 = vmatprep.mubr.bf16.mxu0 %v1462
        %6390 = vmatmul.mubr.bf16.gmra.mxu0 %v1461
        %v6391 = vpop.f32.mrf.mxu0
        %v6392 = vadd.f32 %v6199, %v6391
        %v6393 = vpop.f32.mrf.mxu0
        %v6394 = vadd.f32 %v6201, %v6393
        %v6395 = vpop.f32.mrf.mxu0
        %v6396 = vadd.f32 %v6203, %v6395
        %v6397 = vpop.f32.mrf.mxu0
        %v6398 = vadd.f32 %v6205, %v6397
        %6399 = vmatprep.mubr.bf16.mxu0 %v1489
        %6400 = vmatmul.mubr.bf16.gmra.mxu0 %v1488
        %v6401 = vpop.f32.mrf.mxu0
        %v6402 = vadd.f32 %v6209, %v6401
        %v6403 = vpop.f32.mrf.mxu0
        %v6404 = vadd.f32 %v6211, %v6403
        %v6405 = vpop.f32.mrf.mxu0
        %v6406 = vadd.f32 %v6213, %v6405
        %v6407 = vpop.f32.mrf.mxu0
        %v6408 = vadd.f32 %v6215, %v6407
        %6409 = vmatprep.mubr.bf16.mxu0 %v1516
        %6410 = vmatmul.mubr.bf16.gmra.mxu0 %v1515
        %v6411 = vpop.f32.mrf.mxu0
        %v6412 = vadd.f32 %v6219, %v6411
        %v6413 = vpop.f32.mrf.mxu0
        %v6414 = vadd.f32 %v6221, %v6413
        %v6415 = vpop.f32.mrf.mxu0
        %v6416 = vadd.f32 %v6223, %v6415
        %v6417 = vpop.f32.mrf.mxu0
        %v6418 = vadd.f32 %v6225, %v6417
        %6419 = vmatprep.mubr.bf16.mxu0 %v1543
        %6420 = vmatmul.mubr.bf16.gmra.mxu0 %v1542
        %v6421 = vpop.f32.mrf.mxu0
        %v6422 = vadd.f32 %v6229, %v6421
        %v6423 = vpop.f32.mrf.mxu0
        %v6424 = vadd.f32 %v6231, %v6423
        %v6425 = vpop.f32.mrf.mxu0
        %v6426 = vadd.f32 %v6233, %v6425
        %v6427 = vpop.f32.mrf.mxu0
        %v6428 = vadd.f32 %v6235, %v6427
        %6429 = vmatprep.mubr.bf16.mxu0 %v1570
        %6430 = vmatmul.mubr.bf16.gmra.mxu0 %v1569
        %v6431 = vpop.f32.mrf.mxu0
        %v6432 = vadd.f32 %v6239, %v6431
        %v6433 = vpop.f32.mrf.mxu0
        %v6434 = vadd.f32 %v6241, %v6433
        %v6435 = vpop.f32.mrf.mxu0
        %v6436 = vadd.f32 %v6243, %v6435
        %v6437 = vpop.f32.mrf.mxu0
        %v6438 = vadd.f32 %v6245, %v6437
        %6439 = vmatprep.mubr.bf16.mxu0 %v1597
        %6440 = vmatmul.mubr.bf16.gmra.mxu0 %v1596
        %v6441 = vpop.f32.mrf.mxu0
        %v6442 = vadd.f32 %v6249, %v6441
        %v6443 = vpop.f32.mrf.mxu0
        %v6444 = vadd.f32 %v6251, %v6443
        %v6445 = vpop.f32.mrf.mxu0
        %v6446 = vadd.f32 %v6253, %v6445
        %v6447 = vpop.f32.mrf.mxu0
        %v6448 = vadd.f32 %v6255, %v6447
        %6449 = vmatprep.mubr.bf16.mxu0 %v1624
        %6450 = vmatmul.mubr.bf16.gmra.mxu0 %v1623
        %v6451 = vpop.f32.mrf.mxu0
        %v6452 = vadd.f32 %v6259, %v6451
        %v6453 = vpop.f32.mrf.mxu0
        %v6454 = vadd.f32 %v6261, %v6453
        %v6455 = vpop.f32.mrf.mxu0
        %v6456 = vadd.f32 %v6263, %v6455
        %v6457 = vpop.f32.mrf.mxu0
        %v6458 = vadd.f32 %v6265, %v6457
        %6459 = vmatprep.mubr.bf16.mxu0 %v1651
        %6460 = vmatmul.mubr.bf16.gmra.mxu0 %v1650
        %v6461 = vpop.f32.mrf.mxu0
        %v6462 = vadd.f32 %v6269, %v6461
        %v6463 = vpop.f32.mrf.mxu0
        %v6464 = vadd.f32 %v6271, %v6463
        %v6465 = vpop.f32.mrf.mxu0
        %v6466 = vadd.f32 %v6273, %v6465
        %v6467 = vpop.f32.mrf.mxu0
        %v6468 = vadd.f32 %v6275, %v6467
        %6469 = vmatprep.mubr.bf16.mxu0 %v1678
        %6470 = vmatmul.mubr.bf16.gmra.mxu0 %v1677
        %v6471 = vpop.f32.mrf.mxu0
        %v6472 = vadd.f32 %v6279, %v6471
        %v6473 = vpop.f32.mrf.mxu0
        %v6474 = vadd.f32 %v6281, %v6473
        %v6475 = vpop.f32.mrf.mxu0
        %v6476 = vadd.f32 %v6283, %v6475
        %v6477 = vpop.f32.mrf.mxu0
        %v6478 = vadd.f32 %v6285, %v6477
        %6479 = vmatprep.mubr.bf16.mxu0 %v1705
        %6480 = vmatmul.mubr.bf16.gmra.mxu0 %v1704
        %v6481 = vpop.f32.mrf.mxu0
        %v6482 = vadd.f32 %v6289, %v6481
        %v6483 = vpop.f32.mrf.mxu0
        %v6484 = vadd.f32 %v6291, %v6483
        %v6485 = vpop.f32.mrf.mxu0
        %v6486 = vadd.f32 %v6293, %v6485
        %v6487 = vpop.f32.mrf.mxu0
        %v6488 = vadd.f32 %v6295, %v6487
        %6489 = vdwg.mxu0
        %6490 = vmatprep.subr.bf16.mxu0 %v3870
        %6491 = vmatpush1.bf16.msra.mxu0 %v3869
        %6492 = vmatprep.subr.bf16.mxu0 %v3868
        %6493 = vmatpush1.bf16.msra.mxu0 %v3867
        %6494 = vmatprep.subr.bf16.mxu0 %v3866
        %6495 = vmatpush1.bf16.msra.mxu0 %v3865
        %6496 = vmatprep.subr.bf16.mxu0 %v3864
        %6497 = vmatpush1.bf16.msra.mxu0 %v3863
        %6498 = vmatprep.subr.bf16.mxu0 %v3862
        %6499 = vmatpush1.bf16.msra.mxu0 %v3861
        %6500 = vmatprep.subr.bf16.mxu0 %v3860
        %6501 = vmatpush1.bf16.msra.mxu0 %v3859
        %6502 = vmatprep.subr.bf16.mxu0 %v3858
        %6503 = vmatpush1.bf16.msra.mxu0 %v3857
        %6504 = vmatprep.subr.bf16.mxu0 %v3856
        %6505 = vmatpush1.bf16.msra.mxu0 %v3855
        %6506 = vmatprep.subr.bf16.mxu0 %v3886
        %6507 = vmatpush2.bf16.msra.mxu0 %v3885
        %6508 = vmatprep.subr.bf16.mxu0 %v3884
        %6509 = vmatpush2.bf16.msra.mxu0 %v3883
        %6510 = vmatprep.subr.bf16.mxu0 %v3882
        %6511 = vmatpush2.bf16.msra.mxu0 %v3881
        %6512 = vmatprep.subr.bf16.mxu0 %v3880
        %6513 = vmatpush2.bf16.msra.mxu0 %v3879
        %6514 = vmatprep.subr.bf16.mxu0 %v3878
        %6515 = vmatpush2.bf16.msra.mxu0 %v3877
        %6516 = vmatprep.subr.bf16.mxu0 %v3876
        %6517 = vmatpush2.bf16.msra.mxu0 %v3875
        %6518 = vmatprep.subr.bf16.mxu0 %v3874
        %6519 = vmatpush2.bf16.msra.mxu0 %v3873
        %6520 = vmatprep.subr.bf16.mxu0 %v3872
        %6521 = vmatpush2.bf16.msra.mxu0 %v3871
        %6522 = vmatprep.mubr.bf16.mxu0 %v1302
        %6523 = vmatmul.mubr.bf16.gmra.mxu0 %v1301
        %v6524 = vpop.f32.mrf.mxu0
        %v6525 = vadd.f32 %v6332, %v6524
        %v6526 = vpop.f32.mrf.mxu0
        %v6527 = vadd.f32 %v6334, %v6526
        %v6528 = vpop.f32.mrf.mxu0
        %v6529 = vadd.f32 %v6336, %v6528
        %v6530 = vpop.f32.mrf.mxu0
        %v6531 = vadd.f32 %v6338, %v6530
        %6532 = vmatprep.mubr.bf16.mxu0 %v1329
        %6533 = vmatmul.mubr.bf16.gmra.mxu0 %v1328
        %v6534 = vpop.f32.mrf.mxu0
        %v6535 = vadd.f32 %v6342, %v6534
        %v6536 = vpop.f32.mrf.mxu0
        %v6537 = vadd.f32 %v6344, %v6536
        %v6538 = vpop.f32.mrf.mxu0
        %v6539 = vadd.f32 %v6346, %v6538
        %v6540 = vpop.f32.mrf.mxu0
        %v6541 = vadd.f32 %v6348, %v6540
        %6542 = vmatprep.mubr.bf16.mxu0 %v1356
        %6543 = vmatmul.mubr.bf16.gmra.mxu0 %v1355
        %v6544 = vpop.f32.mrf.mxu0
        %v6545 = vadd.f32 %v6352, %v6544
        %v6546 = vpop.f32.mrf.mxu0
        %v6547 = vadd.f32 %v6354, %v6546
        %v6548 = vpop.f32.mrf.mxu0
        %v6549 = vadd.f32 %v6356, %v6548
        %v6550 = vpop.f32.mrf.mxu0
        %v6551 = vadd.f32 %v6358, %v6550
        %6552 = vmatprep.mubr.bf16.mxu0 %v1383
        %6553 = vmatmul.mubr.bf16.gmra.mxu0 %v1382
        %v6554 = vpop.f32.mrf.mxu0
        %v6555 = vadd.f32 %v6362, %v6554
        %v6556 = vpop.f32.mrf.mxu0
        %v6557 = vadd.f32 %v6364, %v6556
        %v6558 = vpop.f32.mrf.mxu0
        %v6559 = vadd.f32 %v6366, %v6558
        %v6560 = vpop.f32.mrf.mxu0
        %v6561 = vadd.f32 %v6368, %v6560
        %6562 = vmatprep.mubr.bf16.mxu0 %v1410
        %6563 = vmatmul.mubr.bf16.gmra.mxu0 %v1409
        %v6564 = vpop.f32.mrf.mxu0
        %v6565 = vadd.f32 %v6372, %v6564
        %v6566 = vpop.f32.mrf.mxu0
        %v6567 = vadd.f32 %v6374, %v6566
        %v6568 = vpop.f32.mrf.mxu0
        %v6569 = vadd.f32 %v6376, %v6568
        %v6570 = vpop.f32.mrf.mxu0
        %v6571 = vadd.f32 %v6378, %v6570
        %6572 = vmatprep.mubr.bf16.mxu0 %v1437
        %6573 = vmatmul.mubr.bf16.gmra.mxu0 %v1436
        %v6574 = vpop.f32.mrf.mxu0
        %v6575 = vadd.f32 %v6382, %v6574
        %v6576 = vpop.f32.mrf.mxu0
        %v6577 = vadd.f32 %v6384, %v6576
        %v6578 = vpop.f32.mrf.mxu0
        %v6579 = vadd.f32 %v6386, %v6578
        %v6580 = vpop.f32.mrf.mxu0
        %v6581 = vadd.f32 %v6388, %v6580
        %6582 = vmatprep.mubr.bf16.mxu0 %v1464
        %6583 = vmatmul.mubr.bf16.gmra.mxu0 %v1463
        %v6584 = vpop.f32.mrf.mxu0
        %v6585 = vadd.f32 %v6392, %v6584
        %v6586 = vpop.f32.mrf.mxu0
        %v6587 = vadd.f32 %v6394, %v6586
        %v6588 = vpop.f32.mrf.mxu0
        %v6589 = vadd.f32 %v6396, %v6588
        %v6590 = vpop.f32.mrf.mxu0
        %v6591 = vadd.f32 %v6398, %v6590
        %6592 = vmatprep.mubr.bf16.mxu0 %v1491
        %6593 = vmatmul.mubr.bf16.gmra.mxu0 %v1490
        %v6594 = vpop.f32.mrf.mxu0
        %v6595 = vadd.f32 %v6402, %v6594
        %v6596 = vpop.f32.mrf.mxu0
        %v6597 = vadd.f32 %v6404, %v6596
        %v6598 = vpop.f32.mrf.mxu0
        %v6599 = vadd.f32 %v6406, %v6598
        %v6600 = vpop.f32.mrf.mxu0
        %v6601 = vadd.f32 %v6408, %v6600
        %6602 = vmatprep.mubr.bf16.mxu0 %v1518
        %6603 = vmatmul.mubr.bf16.gmra.mxu0 %v1517
        %v6604 = vpop.f32.mrf.mxu0
        %v6605 = vadd.f32 %v6412, %v6604
        %v6606 = vpop.f32.mrf.mxu0
        %v6607 = vadd.f32 %v6414, %v6606
        %v6608 = vpop.f32.mrf.mxu0
        %v6609 = vadd.f32 %v6416, %v6608
        %v6610 = vpop.f32.mrf.mxu0
        %v6611 = vadd.f32 %v6418, %v6610
        %6612 = vmatprep.mubr.bf16.mxu0 %v1545
        %6613 = vmatmul.mubr.bf16.gmra.mxu0 %v1544
        %v6614 = vpop.f32.mrf.mxu0
        %v6615 = vadd.f32 %v6422, %v6614
        %v6616 = vpop.f32.mrf.mxu0
        %v6617 = vadd.f32 %v6424, %v6616
        %v6618 = vpop.f32.mrf.mxu0
        %v6619 = vadd.f32 %v6426, %v6618
        %v6620 = vpop.f32.mrf.mxu0
        %v6621 = vadd.f32 %v6428, %v6620
        %6622 = vmatprep.mubr.bf16.mxu0 %v1572
        %6623 = vmatmul.mubr.bf16.gmra.mxu0 %v1571
        %v6624 = vpop.f32.mrf.mxu0
        %v6625 = vadd.f32 %v6432, %v6624
        %v6626 = vpop.f32.mrf.mxu0
        %v6627 = vadd.f32 %v6434, %v6626
        %v6628 = vpop.f32.mrf.mxu0
        %v6629 = vadd.f32 %v6436, %v6628
        %v6630 = vpop.f32.mrf.mxu0
        %v6631 = vadd.f32 %v6438, %v6630
        %6632 = vmatprep.mubr.bf16.mxu0 %v1599
        %6633 = vmatmul.mubr.bf16.gmra.mxu0 %v1598
        %v6634 = vpop.f32.mrf.mxu0
        %v6635 = vadd.f32 %v6442, %v6634
        %v6636 = vpop.f32.mrf.mxu0
        %v6637 = vadd.f32 %v6444, %v6636
        %v6638 = vpop.f32.mrf.mxu0
        %v6639 = vadd.f32 %v6446, %v6638
        %v6640 = vpop.f32.mrf.mxu0
        %v6641 = vadd.f32 %v6448, %v6640
        %6642 = vmatprep.mubr.bf16.mxu0 %v1626
        %6643 = vmatmul.mubr.bf16.gmra.mxu0 %v1625
        %v6644 = vpop.f32.mrf.mxu0
        %v6645 = vadd.f32 %v6452, %v6644
        %v6646 = vpop.f32.mrf.mxu0
        %v6647 = vadd.f32 %v6454, %v6646
        %v6648 = vpop.f32.mrf.mxu0
        %v6649 = vadd.f32 %v6456, %v6648
        %v6650 = vpop.f32.mrf.mxu0
        %v6651 = vadd.f32 %v6458, %v6650
        %6652 = vmatprep.mubr.bf16.mxu0 %v1653
        %6653 = vmatmul.mubr.bf16.gmra.mxu0 %v1652
        %v6654 = vpop.f32.mrf.mxu0
        %v6655 = vadd.f32 %v6462, %v6654
        %v6656 = vpop.f32.mrf.mxu0
        %v6657 = vadd.f32 %v6464, %v6656
        %v6658 = vpop.f32.mrf.mxu0
        %v6659 = vadd.f32 %v6466, %v6658
        %v6660 = vpop.f32.mrf.mxu0
        %v6661 = vadd.f32 %v6468, %v6660
        %6662 = vmatprep.mubr.bf16.mxu0 %v1680
        %6663 = vmatmul.mubr.bf16.gmra.mxu0 %v1679
        %v6664 = vpop.f32.mrf.mxu0
        %v6665 = vadd.f32 %v6472, %v6664
        %v6666 = vpop.f32.mrf.mxu0
        %v6667 = vadd.f32 %v6474, %v6666
        %v6668 = vpop.f32.mrf.mxu0
        %v6669 = vadd.f32 %v6476, %v6668
        %v6670 = vpop.f32.mrf.mxu0
        %v6671 = vadd.f32 %v6478, %v6670
        %6672 = vmatprep.mubr.bf16.mxu0 %v1707
        %6673 = vmatmul.mubr.bf16.gmra.mxu0 %v1706
        %v6674 = vpop.f32.mrf.mxu0
        %v6675 = vadd.f32 %v6482, %v6674
        %v6676 = vpop.f32.mrf.mxu0
        %v6677 = vadd.f32 %v6484, %v6676
        %v6678 = vpop.f32.mrf.mxu0
        %v6679 = vadd.f32 %v6486, %v6678
        %v6680 = vpop.f32.mrf.mxu0
        %v6681 = vadd.f32 %v6488, %v6680
        %6682 = vdwg.mxu0
        %6683 = vmatprep.subr.bf16.mxu0 %v3902
        %6684 = vmatpush1.bf16.msra.mxu0 %v3901
        %6685 = vmatprep.subr.bf16.mxu0 %v3900
        %6686 = vmatpush1.bf16.msra.mxu0 %v3899
        %6687 = vmatprep.subr.bf16.mxu0 %v3898
        %6688 = vmatpush1.bf16.msra.mxu0 %v3897
        %6689 = vmatprep.subr.bf16.mxu0 %v3896
        %6690 = vmatpush1.bf16.msra.mxu0 %v3895
        %6691 = vmatprep.subr.bf16.mxu0 %v3894
        %6692 = vmatpush1.bf16.msra.mxu0 %v3893
        %6693 = vmatprep.subr.bf16.mxu0 %v3892
        %6694 = vmatpush1.bf16.msra.mxu0 %v3891
        %6695 = vmatprep.subr.bf16.mxu0 %v3890
        %6696 = vmatpush1.bf16.msra.mxu0 %v3889
        %6697 = vmatprep.subr.bf16.mxu0 %v3888
        %6698 = vmatpush1.bf16.msra.mxu0 %v3887
        %6699 = vmatprep.subr.bf16.mxu0 %v3918
        %6700 = vmatpush2.bf16.msra.mxu0 %v3917
        %6701 = vmatprep.subr.bf16.mxu0 %v3916
        %6702 = vmatpush2.bf16.msra.mxu0 %v3915
        %6703 = vmatprep.subr.bf16.mxu0 %v3914
        %6704 = vmatpush2.bf16.msra.mxu0 %v3913
        %6705 = vmatprep.subr.bf16.mxu0 %v3912
        %6706 = vmatpush2.bf16.msra.mxu0 %v3911
        %6707 = vmatprep.subr.bf16.mxu0 %v3910
        %6708 = vmatpush2.bf16.msra.mxu0 %v3909
        %6709 = vmatprep.subr.bf16.mxu0 %v3908
        %6710 = vmatpush2.bf16.msra.mxu0 %v3907
        %6711 = vmatprep.subr.bf16.mxu0 %v3906
        %6712 = vmatpush2.bf16.msra.mxu0 %v3905
        %6713 = vmatprep.subr.bf16.mxu0 %v3904
        %6714 = vmatpush2.bf16.msra.mxu0 %v3903
        %6715 = vmatprep.mubr.bf16.mxu0 %v1304
        %6716 = vmatmul.mubr.bf16.gmra.mxu0 %v1303
        %v6717 = vpop.f32.mrf.mxu0
        %v6718 = vadd.f32 %v6525, %v6717
        %v6719 = vpop.f32.mrf.mxu0
        %v6720 = vadd.f32 %v6527, %v6719
        %v6721 = vpop.f32.mrf.mxu0
        %v6722 = vadd.f32 %v6529, %v6721
        %v6723 = vpop.f32.mrf.mxu0
        %v6724 = vadd.f32 %v6531, %v6723
        %6725 = vmatprep.mubr.bf16.mxu0 %v1331
        %6726 = vmatmul.mubr.bf16.gmra.mxu0 %v1330
        %v6727 = vpop.f32.mrf.mxu0
        %v6728 = vadd.f32 %v6535, %v6727
        %v6729 = vpop.f32.mrf.mxu0
        %v6730 = vadd.f32 %v6537, %v6729
        %v6731 = vpop.f32.mrf.mxu0
        %v6732 = vadd.f32 %v6539, %v6731
        %v6733 = vpop.f32.mrf.mxu0
        %v6734 = vadd.f32 %v6541, %v6733
        %6735 = vmatprep.mubr.bf16.mxu0 %v1358
        %6736 = vmatmul.mubr.bf16.gmra.mxu0 %v1357
        %v6737 = vpop.f32.mrf.mxu0
        %v6738 = vadd.f32 %v6545, %v6737
        %v6739 = vpop.f32.mrf.mxu0
        %v6740 = vadd.f32 %v6547, %v6739
        %v6741 = vpop.f32.mrf.mxu0
        %v6742 = vadd.f32 %v6549, %v6741
        %v6743 = vpop.f32.mrf.mxu0
        %v6744 = vadd.f32 %v6551, %v6743
        %6745 = vmatprep.mubr.bf16.mxu0 %v1385
        %6746 = vmatmul.mubr.bf16.gmra.mxu0 %v1384
        %v6747 = vpop.f32.mrf.mxu0
        %v6748 = vadd.f32 %v6555, %v6747
        %v6749 = vpop.f32.mrf.mxu0
        %v6750 = vadd.f32 %v6557, %v6749
        %v6751 = vpop.f32.mrf.mxu0
        %v6752 = vadd.f32 %v6559, %v6751
        %v6753 = vpop.f32.mrf.mxu0
        %v6754 = vadd.f32 %v6561, %v6753
        %6755 = vmatprep.mubr.bf16.mxu0 %v1412
        %6756 = vmatmul.mubr.bf16.gmra.mxu0 %v1411
        %v6757 = vpop.f32.mrf.mxu0
        %v6758 = vadd.f32 %v6565, %v6757
        %v6759 = vpop.f32.mrf.mxu0
        %v6760 = vadd.f32 %v6567, %v6759
        %v6761 = vpop.f32.mrf.mxu0
        %v6762 = vadd.f32 %v6569, %v6761
        %v6763 = vpop.f32.mrf.mxu0
        %v6764 = vadd.f32 %v6571, %v6763
        %6765 = vmatprep.mubr.bf16.mxu0 %v1439
        %6766 = vmatmul.mubr.bf16.gmra.mxu0 %v1438
        %v6767 = vpop.f32.mrf.mxu0
        %v6768 = vadd.f32 %v6575, %v6767
        %v6769 = vpop.f32.mrf.mxu0
        %v6770 = vadd.f32 %v6577, %v6769
        %v6771 = vpop.f32.mrf.mxu0
        %v6772 = vadd.f32 %v6579, %v6771
        %v6773 = vpop.f32.mrf.mxu0
        %v6774 = vadd.f32 %v6581, %v6773
        %6775 = vmatprep.mubr.bf16.mxu0 %v1466
        %6776 = vmatmul.mubr.bf16.gmra.mxu0 %v1465
        %v6777 = vpop.f32.mrf.mxu0
        %v6778 = vadd.f32 %v6585, %v6777
        %v6779 = vpop.f32.mrf.mxu0
        %v6780 = vadd.f32 %v6587, %v6779
        %v6781 = vpop.f32.mrf.mxu0
        %v6782 = vadd.f32 %v6589, %v6781
        %v6783 = vpop.f32.mrf.mxu0
        %v6784 = vadd.f32 %v6591, %v6783
        %6785 = vmatprep.mubr.bf16.mxu0 %v1493
        %6786 = vmatmul.mubr.bf16.gmra.mxu0 %v1492
        %v6787 = vpop.f32.mrf.mxu0
        %v6788 = vadd.f32 %v6595, %v6787
        %v6789 = vpop.f32.mrf.mxu0
        %v6790 = vadd.f32 %v6597, %v6789
        %v6791 = vpop.f32.mrf.mxu0
        %v6792 = vadd.f32 %v6599, %v6791
        %v6793 = vpop.f32.mrf.mxu0
        %v6794 = vadd.f32 %v6601, %v6793
        %6795 = vmatprep.mubr.bf16.mxu0 %v1520
        %6796 = vmatmul.mubr.bf16.gmra.mxu0 %v1519
        %v6797 = vpop.f32.mrf.mxu0
        %v6798 = vadd.f32 %v6605, %v6797
        %v6799 = vpop.f32.mrf.mxu0
        %v6800 = vadd.f32 %v6607, %v6799
        %v6801 = vpop.f32.mrf.mxu0
        %v6802 = vadd.f32 %v6609, %v6801
        %v6803 = vpop.f32.mrf.mxu0
        %v6804 = vadd.f32 %v6611, %v6803
        %6805 = vmatprep.mubr.bf16.mxu0 %v1547
        %6806 = vmatmul.mubr.bf16.gmra.mxu0 %v1546
        %v6807 = vpop.f32.mrf.mxu0
        %v6808 = vadd.f32 %v6615, %v6807
        %v6809 = vpop.f32.mrf.mxu0
        %v6810 = vadd.f32 %v6617, %v6809
        %v6811 = vpop.f32.mrf.mxu0
        %v6812 = vadd.f32 %v6619, %v6811
        %v6813 = vpop.f32.mrf.mxu0
        %v6814 = vadd.f32 %v6621, %v6813
        %6815 = vmatprep.mubr.bf16.mxu0 %v1574
        %6816 = vmatmul.mubr.bf16.gmra.mxu0 %v1573
        %v6817 = vpop.f32.mrf.mxu0
        %v6818 = vadd.f32 %v6625, %v6817
        %v6819 = vpop.f32.mrf.mxu0
        %v6820 = vadd.f32 %v6627, %v6819
        %v6821 = vpop.f32.mrf.mxu0
        %v6822 = vadd.f32 %v6629, %v6821
        %v6823 = vpop.f32.mrf.mxu0
        %v6824 = vadd.f32 %v6631, %v6823
        %6825 = vmatprep.mubr.bf16.mxu0 %v1601
        %6826 = vmatmul.mubr.bf16.gmra.mxu0 %v1600
        %v6827 = vpop.f32.mrf.mxu0
        %v6828 = vadd.f32 %v6635, %v6827
        %v6829 = vpop.f32.mrf.mxu0
        %v6830 = vadd.f32 %v6637, %v6829
        %v6831 = vpop.f32.mrf.mxu0
        %v6832 = vadd.f32 %v6639, %v6831
        %v6833 = vpop.f32.mrf.mxu0
        %v6834 = vadd.f32 %v6641, %v6833
        %6835 = vmatprep.mubr.bf16.mxu0 %v1628
        %6836 = vmatmul.mubr.bf16.gmra.mxu0 %v1627
        %v6837 = vpop.f32.mrf.mxu0
        %v6838 = vadd.f32 %v6645, %v6837
        %v6839 = vpop.f32.mrf.mxu0
        %v6840 = vadd.f32 %v6647, %v6839
        %v6841 = vpop.f32.mrf.mxu0
        %v6842 = vadd.f32 %v6649, %v6841
        %v6843 = vpop.f32.mrf.mxu0
        %v6844 = vadd.f32 %v6651, %v6843
        %6845 = vmatprep.mubr.bf16.mxu0 %v1655
        %6846 = vmatmul.mubr.bf16.gmra.mxu0 %v1654
        %v6847 = vpop.f32.mrf.mxu0
        %v6848 = vadd.f32 %v6655, %v6847
        %v6849 = vpop.f32.mrf.mxu0
        %v6850 = vadd.f32 %v6657, %v6849
        %v6851 = vpop.f32.mrf.mxu0
        %v6852 = vadd.f32 %v6659, %v6851
        %v6853 = vpop.f32.mrf.mxu0
        %v6854 = vadd.f32 %v6661, %v6853
        %6855 = vmatprep.mubr.bf16.mxu0 %v1682
        %6856 = vmatmul.mubr.bf16.gmra.mxu0 %v1681
        %v6857 = vpop.f32.mrf.mxu0
        %v6858 = vadd.f32 %v6665, %v6857
        %v6859 = vpop.f32.mrf.mxu0
        %v6860 = vadd.f32 %v6667, %v6859
        %v6861 = vpop.f32.mrf.mxu0
        %v6862 = vadd.f32 %v6669, %v6861
        %v6863 = vpop.f32.mrf.mxu0
        %v6864 = vadd.f32 %v6671, %v6863
        %6865 = vmatprep.mubr.bf16.mxu0 %v1709
        %6866 = vmatmul.mubr.bf16.gmra.mxu0 %v1708
        %v6867 = vpop.f32.mrf.mxu0
        %v6868 = vadd.f32 %v6675, %v6867
        %v6869 = vpop.f32.mrf.mxu0
        %v6870 = vadd.f32 %v6677, %v6869
        %v6871 = vpop.f32.mrf.mxu0
        %v6872 = vadd.f32 %v6679, %v6871
        %v6873 = vpop.f32.mrf.mxu0
        %v6874 = vadd.f32 %v6681, %v6873
        %6875 = vdwg.mxu0
        %6876 = vmatprep.subr.bf16.mxu0 %v3934
        %6877 = vmatpush1.bf16.msra.mxu0 %v3933
        %6878 = vmatprep.subr.bf16.mxu0 %v3932
        %6879 = vmatpush1.bf16.msra.mxu0 %v3931
        %6880 = vmatprep.subr.bf16.mxu0 %v3930
        %6881 = vmatpush1.bf16.msra.mxu0 %v3929
        %6882 = vmatprep.subr.bf16.mxu0 %v3928
        %6883 = vmatpush1.bf16.msra.mxu0 %v3927
        %6884 = vmatprep.subr.bf16.mxu0 %v3926
        %6885 = vmatpush1.bf16.msra.mxu0 %v3925
        %6886 = vmatprep.subr.bf16.mxu0 %v3924
        %6887 = vmatpush1.bf16.msra.mxu0 %v3923
        %6888 = vmatprep.subr.bf16.mxu0 %v3922
        %6889 = vmatpush1.bf16.msra.mxu0 %v3921
        %6890 = vmatprep.subr.bf16.mxu0 %v3920
        %6891 = vmatpush1.bf16.msra.mxu0 %v3919
        %6892 = vmatprep.subr.bf16.mxu0 0
        %6893 = vmatpush2.bf16.msra.mxu0 0
        %6894 = vmatprep.subr.bf16.mxu0 0
        %6895 = vmatpush2.bf16.msra.mxu0 0
        %6896 = vmatprep.subr.bf16.mxu0 0
        %6897 = vmatpush2.bf16.msra.mxu0 0
        %6898 = vmatprep.subr.bf16.mxu0 0
        %6899 = vmatpush2.bf16.msra.mxu0 0
        %6900 = vmatprep.subr.bf16.mxu0 0
        %6901 = vmatpush2.bf16.msra.mxu0 0
        %6902 = vmatprep.subr.bf16.mxu0 0
        %6903 = vmatpush2.bf16.msra.mxu0 0
        %6904 = vmatprep.subr.bf16.mxu0 0
        %6905 = vmatpush2.bf16.msra.mxu0 0
        %6906 = vmatprep.subr.bf16.mxu0 0
        %6907 = vmatpush2.bf16.msra.mxu0 0
        %6908 = vmatprep.mubr.bf16.mxu0 0
        %6909 = vmatmul.mubr.bf16.gmra.mxu0 %v1305
        %v6910 = vpop.f32.mrf.mxu0
        %v6911 = vadd.f32 %v6718, %v6910
        %v6912 = vpop.f32.mrf.mxu0
        %v6913 = vadd.f32 %v6720, %v6912
        %v6914 = vpop.f32.mrf.mxu0
        %v6915 = vadd.f32 %v6722, %v6914
        %v6916 = vpop.f32.mrf.mxu0
        %v6917 = vadd.f32 %v6724, %v6916
        %6918 = vmatprep.mubr.bf16.mxu0 0
        %6919 = vmatmul.mubr.bf16.gmra.mxu0 %v1332
        %v6920 = vpop.f32.mrf.mxu0
        %v6921 = vadd.f32 %v6728, %v6920
        %v6922 = vpop.f32.mrf.mxu0
        %v6923 = vadd.f32 %v6730, %v6922
        %v6924 = vpop.f32.mrf.mxu0
        %v6925 = vadd.f32 %v6732, %v6924
        %v6926 = vpop.f32.mrf.mxu0
        %v6927 = vadd.f32 %v6734, %v6926
        %6928 = vmatprep.mubr.bf16.mxu0 0
        %6929 = vmatmul.mubr.bf16.gmra.mxu0 %v1359
        %v6930 = vpop.f32.mrf.mxu0
        %v6931 = vadd.f32 %v6738, %v6930
        %v6932 = vpop.f32.mrf.mxu0
        %v6933 = vadd.f32 %v6740, %v6932
        %v6934 = vpop.f32.mrf.mxu0
        %v6935 = vadd.f32 %v6742, %v6934
        %v6936 = vpop.f32.mrf.mxu0
        %v6937 = vadd.f32 %v6744, %v6936
        %6938 = vmatprep.mubr.bf16.mxu0 0
        %6939 = vmatmul.mubr.bf16.gmra.mxu0 %v1386
        %v6940 = vpop.f32.mrf.mxu0
        %v6941 = vadd.f32 %v6748, %v6940
        %v6942 = vpop.f32.mrf.mxu0
        %v6943 = vadd.f32 %v6750, %v6942
        %v6944 = vpop.f32.mrf.mxu0
        %v6945 = vadd.f32 %v6752, %v6944
        %v6946 = vpop.f32.mrf.mxu0
        %v6947 = vadd.f32 %v6754, %v6946
        %6948 = vmatprep.mubr.bf16.mxu0 0
        %6949 = vmatmul.mubr.bf16.gmra.mxu0 %v1413
        %v6950 = vpop.f32.mrf.mxu0
        %v6951 = vadd.f32 %v6758, %v6950
        %v6952 = vpop.f32.mrf.mxu0
        %v6953 = vadd.f32 %v6760, %v6952
        %v6954 = vpop.f32.mrf.mxu0
        %v6955 = vadd.f32 %v6762, %v6954
        %v6956 = vpop.f32.mrf.mxu0
        %v6957 = vadd.f32 %v6764, %v6956
        %6958 = vmatprep.mubr.bf16.mxu0 0
        %6959 = vmatmul.mubr.bf16.gmra.mxu0 %v1440
        %v6960 = vpop.f32.mrf.mxu0
        %v6961 = vadd.f32 %v6768, %v6960
        %v6962 = vpop.f32.mrf.mxu0
        %v6963 = vadd.f32 %v6770, %v6962
        %v6964 = vpop.f32.mrf.mxu0
        %v6965 = vadd.f32 %v6772, %v6964
        %v6966 = vpop.f32.mrf.mxu0
        %v6967 = vadd.f32 %v6774, %v6966
        %6968 = vmatprep.mubr.bf16.mxu0 0
        %6969 = vmatmul.mubr.bf16.gmra.mxu0 %v1467
        %v6970 = vpop.f32.mrf.mxu0
        %v6971 = vadd.f32 %v6778, %v6970
        %v6972 = vpop.f32.mrf.mxu0
        %v6973 = vadd.f32 %v6780, %v6972
        %v6974 = vpop.f32.mrf.mxu0
        %v6975 = vadd.f32 %v6782, %v6974
        %v6976 = vpop.f32.mrf.mxu0
        %v6977 = vadd.f32 %v6784, %v6976
        %6978 = vmatprep.mubr.bf16.mxu0 0
        %6979 = vmatmul.mubr.bf16.gmra.mxu0 %v1494
        %v6980 = vpop.f32.mrf.mxu0
        %v6981 = vadd.f32 %v6788, %v6980
        %v6982 = vpop.f32.mrf.mxu0
        %v6983 = vadd.f32 %v6790, %v6982
        %v6984 = vpop.f32.mrf.mxu0
        %v6985 = vadd.f32 %v6792, %v6984
        %v6986 = vpop.f32.mrf.mxu0
        %v6987 = vadd.f32 %v6794, %v6986
        %6988 = vmatprep.mubr.bf16.mxu0 0
        %6989 = vmatmul.mubr.bf16.gmra.mxu0 %v1521
        %v6990 = vpop.f32.mrf.mxu0
        %v6991 = vadd.f32 %v6798, %v6990
        %v6992 = vpop.f32.mrf.mxu0
        %v6993 = vadd.f32 %v6800, %v6992
        %v6994 = vpop.f32.mrf.mxu0
        %v6995 = vadd.f32 %v6802, %v6994
        %v6996 = vpop.f32.mrf.mxu0
        %v6997 = vadd.f32 %v6804, %v6996
        %6998 = vmatprep.mubr.bf16.mxu0 0
        %6999 = vmatmul.mubr.bf16.gmra.mxu0 %v1548
        %v7000 = vpop.f32.mrf.mxu0
        %v7001 = vadd.f32 %v6808, %v7000
        %v7002 = vpop.f32.mrf.mxu0
        %v7003 = vadd.f32 %v6810, %v7002
        %v7004 = vpop.f32.mrf.mxu0
        %v7005 = vadd.f32 %v6812, %v7004
        %v7006 = vpop.f32.mrf.mxu0
        %v7007 = vadd.f32 %v6814, %v7006
        %7008 = vmatprep.mubr.bf16.mxu0 0
        %7009 = vmatmul.mubr.bf16.gmra.mxu0 %v1575
        %v7010 = vpop.f32.mrf.mxu0
        %v7011 = vadd.f32 %v6818, %v7010
        %v7012 = vpop.f32.mrf.mxu0
        %v7013 = vadd.f32 %v6820, %v7012
        %v7014 = vpop.f32.mrf.mxu0
        %v7015 = vadd.f32 %v6822, %v7014
        %v7016 = vpop.f32.mrf.mxu0
        %v7017 = vadd.f32 %v6824, %v7016
        %7018 = vmatprep.mubr.bf16.mxu0 0
        %7019 = vmatmul.mubr.bf16.gmra.mxu0 %v1602
        %v7020 = vpop.f32.mrf.mxu0
        %v7021 = vadd.f32 %v6828, %v7020
        %v7022 = vpop.f32.mrf.mxu0
        %v7023 = vadd.f32 %v6830, %v7022
        %v7024 = vpop.f32.mrf.mxu0
        %v7025 = vadd.f32 %v6832, %v7024
        %v7026 = vpop.f32.mrf.mxu0
        %v7027 = vadd.f32 %v6834, %v7026
        %7028 = vmatprep.mubr.bf16.mxu0 0
        %7029 = vmatmul.mubr.bf16.gmra.mxu0 %v1629
        %v7030 = vpop.f32.mrf.mxu0
        %v7031 = vadd.f32 %v6838, %v7030
        %v7032 = vpop.f32.mrf.mxu0
        %v7033 = vadd.f32 %v6840, %v7032
        %v7034 = vpop.f32.mrf.mxu0
        %v7035 = vadd.f32 %v6842, %v7034
        %v7036 = vpop.f32.mrf.mxu0
        %v7037 = vadd.f32 %v6844, %v7036
        %7038 = vmatprep.mubr.bf16.mxu0 0
        %7039 = vmatmul.mubr.bf16.gmra.mxu0 %v1656
        %v7040 = vpop.f32.mrf.mxu0
        %v7041 = vadd.f32 %v6848, %v7040
        %v7042 = vpop.f32.mrf.mxu0
        %v7043 = vadd.f32 %v6850, %v7042
        %v7044 = vpop.f32.mrf.mxu0
        %v7045 = vadd.f32 %v6852, %v7044
        %v7046 = vpop.f32.mrf.mxu0
        %v7047 = vadd.f32 %v6854, %v7046
        %7048 = vmatprep.mubr.bf16.mxu0 0
        %7049 = vmatmul.mubr.bf16.gmra.mxu0 %v1683
        %v7050 = vpop.f32.mrf.mxu0
        %v7051 = vadd.f32 %v6858, %v7050
        %v7052 = vpop.f32.mrf.mxu0
        %v7053 = vadd.f32 %v6860, %v7052
        %v7054 = vpop.f32.mrf.mxu0
        %v7055 = vadd.f32 %v6862, %v7054
        %v7056 = vpop.f32.mrf.mxu0
        %v7057 = vadd.f32 %v6864, %v7056
        %7058 = vmatprep.mubr.bf16.mxu0 0
        %7059 = vmatmul.mubr.bf16.gmra.mxu0 %v1710
        %v7060 = vpop.f32.mrf.mxu0
        %v7061 = vadd.f32 %v6868, %v7060
        %v7062 = vpop.f32.mrf.mxu0
        %v7063 = vadd.f32 %v6870, %v7062
        %v7064 = vpop.f32.mrf.mxu0
        %v7065 = vadd.f32 %v6872, %v7064
        %v7066 = vpop.f32.mrf.mxu0
        %v7067 = vadd.f32 %v6874, %v7066
        %7068 = vdwg.mxu0
        %v7069 = vadd.f32 %v1711, %v6911
        %v7070 = vadd.f32 %v1712, %v6913
        %v7071 = vadd.f32 %v1713, %v6915
        %v7072 = vadd.f32 %v1714, %v6917
        %v7073 = vadd.f32 %v1715, %v6921
        %v7074 = vadd.f32 %v1716, %v6923
        %v7075 = vadd.f32 %v1717, %v6925
        %v7076 = vadd.f32 %v1718, %v6927
        %v7077 = vadd.f32 %v1719, %v6931
        %v7078 = vadd.f32 %v1720, %v6933
        %v7079 = vadd.f32 %v1721, %v6935
        %v7080 = vadd.f32 %v1722, %v6937
        %v7081 = vadd.f32 %v1723, %v6941
        %v7082 = vadd.f32 %v1724, %v6943
        %v7083 = vadd.f32 %v1725, %v6945
        %v7084 = vadd.f32 %v1726, %v6947
        %v7085 = vadd.f32 %v1727, %v6951
        %v7086 = vadd.f32 %v1728, %v6953
        %v7087 = vadd.f32 %v1729, %v6955
        %v7088 = vadd.f32 %v1730, %v6957
        %v7089 = vadd.f32 %v1731, %v6961
        %v7090 = vadd.f32 %v1732, %v6963
        %v7091 = vadd.f32 %v1733, %v6965
        %v7092 = vadd.f32 %v1734, %v6967
        %v7093 = vadd.f32 %v1735, %v6971
        %v7094 = vadd.f32 %v1736, %v6973
        %v7095 = vadd.f32 %v1737, %v6975
        %v7096 = vadd.f32 %v1738, %v6977
        %v7097 = vadd.f32 %v1739, %v6981
        %v7098 = vadd.f32 %v1740, %v6983
        %v7099 = vadd.f32 %v1741, %v6985
        %v7100 = vadd.f32 %v1742, %v6987
        %v7101 = vadd.f32 %v1743, %v6991
        %v7102 = vadd.f32 %v1744, %v6993
        %v7103 = vadd.f32 %v1745, %v6995
        %v7104 = vadd.f32 %v1746, %v6997
        %v7105 = vadd.f32 %v1747, %v7001
        %v7106 = vadd.f32 %v1748, %v7003
        %v7107 = vadd.f32 %v1749, %v7005
        %v7108 = vadd.f32 %v1750, %v7007
        %v7109 = vadd.f32 %v1751, %v7011
        %v7110 = vadd.f32 %v1752, %v7013
        %v7111 = vadd.f32 %v1753, %v7015
        %v7112 = vadd.f32 %v1754, %v7017
        %v7113 = vadd.f32 %v1755, %v7021
        %v7114 = vadd.f32 %v1756, %v7023
        %v7115 = vadd.f32 %v1757, %v7025
        %v7116 = vadd.f32 %v1758, %v7027
        %v7117 = vadd.f32 %v1759, %v7031
        %v7118 = vadd.f32 %v1760, %v7033
        %v7119 = vadd.f32 %v1761, %v7035
        %v7120 = vadd.f32 %v1762, %v7037
        %v7121 = vadd.f32 %v1763, %v7041
        %v7122 = vadd.f32 %v1764, %v7043
        %v7123 = vadd.f32 %v1765, %v7045
        %v7124 = vadd.f32 %v1766, %v7047
        %v7125 = vadd.f32 %v1767, %v7051
        %v7126 = vadd.f32 %v1768, %v7053
        %v7127 = vadd.f32 %v1769, %v7055
        %v7128 = vadd.f32 %v1770, %v7057
        %v7129 = vadd.f32 %v1771, %v7061
        %v7130 = vadd.f32 %v1772, %v7063
        %v7131 = vadd.f32 %v1773, %v7065
        %v7132 = vadd.f32 %v1774, %v7067
        %7133 = vst [vmem:[#allocation2] sm:$0xff] %v7069
        %7134 = vst [vmem:[#allocation2 + $0x8] sm:$0xff] %v7070
        %7135 = vst [vmem:[#allocation2 + $0x10] sm:$0xff] %v7071
        %7136 = vst [vmem:[#allocation2 + $0x18] sm:$0xff] %v7072
        %7137 = vst [vmem:[#allocation2 + $0x20] sm:$0xff] %v7073
        %7138 = vst [vmem:[#allocation2 + $0x28] sm:$0xff] %v7074
        %7139 = vst [vmem:[#allocation2 + $0x30] sm:$0xff] %v7075
        %7140 = vst [vmem:[#allocation2 + $0x38] sm:$0xff] %v7076
        %7141 = vst [vmem:[#allocation2 + $0x40] sm:$0xff] %v7077
        %7142 = vst [vmem:[#allocation2 + $0x48] sm:$0xff] %v7078
        %7143 = vst [vmem:[#allocation2 + $0x50] sm:$0xff] %v7079
        %7144 = vst [vmem:[#allocation2 + $0x58] sm:$0xff] %v7080
        %7145 = vst [vmem:[#allocation2 + $0x60] sm:$0xff] %v7081
        %7146 = vst [vmem:[#allocation2 + $0x68] sm:$0xff] %v7082
        %7147 = vst [vmem:[#allocation2 + $0x70] sm:$0xff] %v7083
        %7148 = vst [vmem:[#allocation2 + $0x78] sm:$0xff] %v7084
        %7149 = vst [vmem:[#allocation2 + $0x80] sm:$0xff] %v7085
        %7150 = vst [vmem:[#allocation2 + $0x88] sm:$0xff] %v7086
        %7151 = vst [vmem:[#allocation2 + $0x90] sm:$0xff] %v7087
        %7152 = vst [vmem:[#allocation2 + $0x98] sm:$0xff] %v7088
        %7153 = vst [vmem:[#allocation2 + $0xa0] sm:$0xff] %v7089
        %7154 = vst [vmem:[#allocation2 + $0xa8] sm:$0xff] %v7090
        %7155 = vst [vmem:[#allocation2 + $0xb0] sm:$0xff] %v7091
        %7156 = vst [vmem:[#allocation2 + $0xb8] sm:$0xff] %v7092
        %7157 = vst [vmem:[#allocation2 + $0xc0] sm:$0xff] %v7093
        %7158 = vst [vmem:[#allocation2 + $0xc8] sm:$0xff] %v7094
        %7159 = vst [vmem:[#allocation2 + $0xd0] sm:$0xff] %v7095
        %7160 = vst [vmem:[#allocation2 + $0xd8] sm:$0xff] %v7096
        %7161 = vst [vmem:[#allocation2 + $0xe0] sm:$0xff] %v7097
        %7162 = vst [vmem:[#allocation2 + $0xe8] sm:$0xff] %v7098
        %7163 = vst [vmem:[#allocation2 + $0xf0] sm:$0xff] %v7099
        %7164 = vst [vmem:[#allocation2 + $0xf8] sm:$0xff] %v7100
        %7165 = vst [vmem:[#allocation2 + $0x100] sm:$0xff] %v7101
        %7166 = vst [vmem:[#allocation2 + $0x108] sm:$0xff] %v7102
        %7167 = vst [vmem:[#allocation2 + $0x110] sm:$0xff] %v7103
        %7168 = vst [vmem:[#allocation2 + $0x118] sm:$0xff] %v7104
        %7169 = vst [vmem:[#allocation2 + $0x120] sm:$0xff] %v7105
        %7170 = vst [vmem:[#allocation2 + $0x128] sm:$0xff] %v7106
        %7171 = vst [vmem:[#allocation2 + $0x130] sm:$0xff] %v7107
        %7172 = vst [vmem:[#allocation2 + $0x138] sm:$0xff] %v7108
        %7173 = vst [vmem:[#allocation2 + $0x140] sm:$0xff] %v7109
        %7174 = vst [vmem:[#allocation2 + $0x148] sm:$0xff] %v7110
        %7175 = vst [vmem:[#allocation2 + $0x150] sm:$0xff] %v7111
        %7176 = vst [vmem:[#allocation2 + $0x158] sm:$0xff] %v7112
        %7177 = vst [vmem:[#allocation2 + $0x160] sm:$0xff] %v7113
        %7178 = vst [vmem:[#allocation2 + $0x168] sm:$0xff] %v7114
        %7179 = vst [vmem:[#allocation2 + $0x170] sm:$0xff] %v7115
        %7180 = vst [vmem:[#allocation2 + $0x178] sm:$0xff] %v7116
        %7181 = vst [vmem:[#allocation2 + $0x180] sm:$0xff] %v7117
        %7182 = vst [vmem:[#allocation2 + $0x188] sm:$0xff] %v7118
        %7183 = vst [vmem:[#allocation2 + $0x190] sm:$0xff] %v7119
        %7184 = vst [vmem:[#allocation2 + $0x198] sm:$0xff] %v7120
        %7185 = vst [vmem:[#allocation2 + $0x1a0] sm:$0xff] %v7121
        %7186 = vst [vmem:[#allocation2 + $0x1a8] sm:$0xff] %v7122
        %7187 = vst [vmem:[#allocation2 + $0x1b0] sm:$0xff] %v7123
        %7188 = vst [vmem:[#allocation2 + $0x1b8] sm:$0xff] %v7124
        %7189 = vst [vmem:[#allocation2 + $0x1c0] sm:$0xff] %v7125
        %7190 = vst [vmem:[#allocation2 + $0x1c8] sm:$0xff] %v7126
        %7191 = vst [vmem:[#allocation2 + $0x1d0] sm:$0xff] %v7127
        %7192 = vst [vmem:[#allocation2 + $0x1d8] sm:$0xff] %v7128
        %7193 = vst [vmem:[#allocation2 + $0x1e0] sm:$0xff] %v7129
        %7194 = vst [vmem:[#allocation2 + $0x1e8] sm:$0xff] %v7130
        %7195 = vst [vmem:[#allocation2 + $0x1f0] sm:$0xff] %v7131
        %7196 = vst [vmem:[#allocation2 + $0x1f8] sm:$0xff] %v7132
        %p7197 = scmp.eq.s32.totalorder %s28, 2
        // Predicated region
        $region61: #{simplenet_forward.1} parent=39 // pred_check
          %p7198 = pneg %p7197
        $region62: #{simplenet_forward.1} parent=39 // pred_check_branch
          %7200 = sbr.rel (%p7198) target = $region64
        $region63: #{simplenet_forward.1} parent=39 // pred_region
          %v7201 = vld [vmem:[#allocation2] sm:$0xff]
          %v7202 = vld [vmem:[#allocation2 + $0x8] sm:$0xff]
          %v7203 = vld [vmem:[#allocation2 + $0x10] sm:$0xff]
          %v7204 = vld [vmem:[#allocation2 + $0x18] sm:$0xff]
          %v7205 = vld [vmem:[#allocation2 + $0x20] sm:$0xff]
          %v7206 = vld [vmem:[#allocation2 + $0x28] sm:$0xff]
          %v7207 = vld [vmem:[#allocation2 + $0x30] sm:$0xff]
          %v7208 = vld [vmem:[#allocation2 + $0x38] sm:$0xff]
          %v7209 = vld [vmem:[#allocation2 + $0x40] sm:$0xff]
          %v7210 = vld [vmem:[#allocation2 + $0x48] sm:$0xff]
          %v7211 = vld [vmem:[#allocation2 + $0x50] sm:$0xff]
          %v7212 = vld [vmem:[#allocation2 + $0x58] sm:$0xff]
          %v7213 = vld [vmem:[#allocation2 + $0x60] sm:$0xff]
          %v7214 = vld [vmem:[#allocation2 + $0x68] sm:$0xff]
          %v7215 = vld [vmem:[#allocation2 + $0x70] sm:$0xff]
          %v7216 = vld [vmem:[#allocation2 + $0x78] sm:$0xff]
          %v7217 = vld [vmem:[#allocation2 + $0x80] sm:$0xff]
          %v7218 = vld [vmem:[#allocation2 + $0x88] sm:$0xff]
          %v7219 = vld [vmem:[#allocation2 + $0x90] sm:$0xff]
          %v7220 = vld [vmem:[#allocation2 + $0x98] sm:$0xff]
          %v7221 = vld [vmem:[#allocation2 + $0xa0] sm:$0xff]
          %v7222 = vld [vmem:[#allocation2 + $0xa8] sm:$0xff]
          %v7223 = vld [vmem:[#allocation2 + $0xb0] sm:$0xff]
          %v7224 = vld [vmem:[#allocation2 + $0xb8] sm:$0xff]
          %v7225 = vld [vmem:[#allocation2 + $0xc0] sm:$0xff]
          %v7226 = vld [vmem:[#allocation2 + $0xc8] sm:$0xff]
          %v7227 = vld [vmem:[#allocation2 + $0xd0] sm:$0xff]
          %v7228 = vld [vmem:[#allocation2 + $0xd8] sm:$0xff]
          %v7229 = vld [vmem:[#allocation2 + $0xe0] sm:$0xff]
          %v7230 = vld [vmem:[#allocation2 + $0xe8] sm:$0xff]
          %v7231 = vld [vmem:[#allocation2 + $0xf0] sm:$0xff]
          %v7232 = vld [vmem:[#allocation2 + $0xf8] sm:$0xff]
          %v7233 = vld [vmem:[#allocation2 + $0x100] sm:$0xff]
          %v7234 = vld [vmem:[#allocation2 + $0x108] sm:$0xff]
          %v7235 = vld [vmem:[#allocation2 + $0x110] sm:$0xff]
          %v7236 = vld [vmem:[#allocation2 + $0x118] sm:$0xff]
          %v7237 = vld [vmem:[#allocation2 + $0x120] sm:$0xff]
          %v7238 = vld [vmem:[#allocation2 + $0x128] sm:$0xff]
          %v7239 = vld [vmem:[#allocation2 + $0x130] sm:$0xff]
          %v7240 = vld [vmem:[#allocation2 + $0x138] sm:$0xff]
          %v7241 = vld [vmem:[#allocation2 + $0x140] sm:$0xff]
          %v7242 = vld [vmem:[#allocation2 + $0x148] sm:$0xff]
          %v7243 = vld [vmem:[#allocation2 + $0x150] sm:$0xff]
          %v7244 = vld [vmem:[#allocation2 + $0x158] sm:$0xff]
          %v7245 = vld [vmem:[#allocation2 + $0x160] sm:$0xff]
          %v7246 = vld [vmem:[#allocation2 + $0x168] sm:$0xff]
          %v7247 = vld [vmem:[#allocation2 + $0x170] sm:$0xff]
          %v7248 = vld [vmem:[#allocation2 + $0x178] sm:$0xff]
          %v7249 = vld [vmem:[#allocation2 + $0x180] sm:$0xff]
          %v7250 = vld [vmem:[#allocation2 + $0x188] sm:$0xff]
          %v7251 = vld [vmem:[#allocation2 + $0x190] sm:$0xff]
          %v7252 = vld [vmem:[#allocation2 + $0x198] sm:$0xff]
          %v7253 = vld [vmem:[#allocation2 + $0x1a0] sm:$0xff]
          %v7254 = vld [vmem:[#allocation2 + $0x1a8] sm:$0xff]
          %v7255 = vld [vmem:[#allocation2 + $0x1b0] sm:$0xff]
          %v7256 = vld [vmem:[#allocation2 + $0x1b8] sm:$0xff]
          %v7257 = vld [vmem:[#allocation2 + $0x1c0] sm:$0xff]
          %v7258 = vld [vmem:[#allocation2 + $0x1c8] sm:$0xff]
          %v7259 = vld [vmem:[#allocation2 + $0x1d0] sm:$0xff]
          %v7260 = vld [vmem:[#allocation2 + $0x1d8] sm:$0xff]
          %v7261 = vld [vmem:[#allocation2 + $0x1e0] sm:$0xff]
          %v7262 = vld [vmem:[#allocation2 + $0x1e8] sm:$0xff]
          %v7263 = vld [vmem:[#allocation2 + $0x1f0] sm:$0xff]
          %v7264 = vld [vmem:[#allocation2 + $0x1f8] sm:$0xff]
          %v7265 = vsub.f32 0.0, %v7201
          %v7266 = vsub.f32 0.0, %v7202
          %v7267 = vsub.f32 0.0, %v7203
          %v7268 = vsub.f32 0.0, %v7204
          %v7269 = vsub.f32 0.0, %v7205
          %v7270 = vsub.f32 0.0, %v7206
          %v7271 = vsub.f32 0.0, %v7207
          %v7272 = vsub.f32 0.0, %v7208
          %v7273 = vsub.f32 0.0, %v7209
          %v7274 = vsub.f32 0.0, %v7210
          %v7275 = vsub.f32 0.0, %v7211
          %v7276 = vsub.f32 0.0, %v7212
          %v7277 = vsub.f32 0.0, %v7213
          %v7278 = vsub.f32 0.0, %v7214
          %v7279 = vsub.f32 0.0, %v7215
          %v7280 = vsub.f32 0.0, %v7216
          %v7281 = vsub.f32 0.0, %v7217
          %v7282 = vsub.f32 0.0, %v7218
          %v7283 = vsub.f32 0.0, %v7219
          %v7284 = vsub.f32 0.0, %v7220
          %v7285 = vsub.f32 0.0, %v7221
          %v7286 = vsub.f32 0.0, %v7222
          %v7287 = vsub.f32 0.0, %v7223
          %v7288 = vsub.f32 0.0, %v7224
          %v7289 = vsub.f32 0.0, %v7225
          %v7290 = vsub.f32 0.0, %v7226
          %v7291 = vsub.f32 0.0, %v7227
          %v7292 = vsub.f32 0.0, %v7228
          %v7293 = vsub.f32 0.0, %v7229
          %v7294 = vsub.f32 0.0, %v7230
          %v7295 = vsub.f32 0.0, %v7231
          %v7296 = vsub.f32 0.0, %v7232
          %v7297 = vsub.f32 0.0, %v7233
          %v7298 = vsub.f32 0.0, %v7234
          %v7299 = vsub.f32 0.0, %v7235
          %v7300 = vsub.f32 0.0, %v7236
          %v7301 = vsub.f32 0.0, %v7237
          %v7302 = vsub.f32 0.0, %v7238
          %v7303 = vsub.f32 0.0, %v7239
          %v7304 = vsub.f32 0.0, %v7240
          %v7305 = vsub.f32 0.0, %v7241
          %v7306 = vsub.f32 0.0, %v7242
          %v7307 = vsub.f32 0.0, %v7243
          %v7308 = vsub.f32 0.0, %v7244
          %v7309 = vsub.f32 0.0, %v7245
          %v7310 = vsub.f32 0.0, %v7246
          %v7311 = vsub.f32 0.0, %v7247
          %v7312 = vsub.f32 0.0, %v7248
          %v7313 = vsub.f32 0.0, %v7249
          %v7314 = vsub.f32 0.0, %v7250
          %v7315 = vsub.f32 0.0, %v7251
          %v7316 = vsub.f32 0.0, %v7252
          %v7317 = vsub.f32 0.0, %v7253
          %v7318 = vsub.f32 0.0, %v7254
          %v7319 = vsub.f32 0.0, %v7255
          %v7320 = vsub.f32 0.0, %v7256
          %v7321 = vsub.f32 0.0, %v7257
          %v7322 = vsub.f32 0.0, %v7258
          %v7323 = vsub.f32 0.0, %v7259
          %v7324 = vsub.f32 0.0, %v7260
          %v7325 = vsub.f32 0.0, %v7261
          %v7326 = vsub.f32 0.0, %v7262
          %v7327 = vsub.f32 0.0, %v7263
          %v7328 = vsub.f32 0.0, %v7264
          %v7329 = vmul.f32 %v7265, 1.442695
          %v7330 = vpow.pop %v7329
          %v7331 = vmul.f32 %v7266, 1.442695
          %v7332 = vpow.pop %v7331
          %v7333 = vmul.f32 %v7267, 1.442695
          %v7334 = vpow.pop %v7333
          %v7335 = vmul.f32 %v7268, 1.442695
          %v7336 = vpow.pop %v7335
          %v7337 = vmul.f32 %v7269, 1.442695
          %v7338 = vpow.pop %v7337
          %v7339 = vmul.f32 %v7270, 1.442695
          %v7340 = vpow.pop %v7339
          %v7341 = vmul.f32 %v7271, 1.442695
          %v7342 = vpow.pop %v7341
          %v7343 = vmul.f32 %v7272, 1.442695
          %v7344 = vpow.pop %v7343
          %v7345 = vmul.f32 %v7273, 1.442695
          %v7346 = vpow.pop %v7345
          %v7347 = vmul.f32 %v7274, 1.442695
          %v7348 = vpow.pop %v7347
          %v7349 = vmul.f32 %v7275, 1.442695
          %v7350 = vpow.pop %v7349
          %v7351 = vmul.f32 %v7276, 1.442695
          %v7352 = vpow.pop %v7351
          %v7353 = vmul.f32 %v7277, 1.442695
          %v7354 = vpow.pop %v7353
          %v7355 = vmul.f32 %v7278, 1.442695
          %v7356 = vpow.pop %v7355
          %v7357 = vmul.f32 %v7279, 1.442695
          %v7358 = vpow.pop %v7357
          %v7359 = vmul.f32 %v7280, 1.442695
          %v7360 = vpow.pop %v7359
          %v7361 = vmul.f32 %v7281, 1.442695
          %v7362 = vpow.pop %v7361
          %v7363 = vmul.f32 %v7282, 1.442695
          %v7364 = vpow.pop %v7363
          %v7365 = vmul.f32 %v7283, 1.442695
          %v7366 = vpow.pop %v7365
          %v7367 = vmul.f32 %v7284, 1.442695
          %v7368 = vpow.pop %v7367
          %v7369 = vmul.f32 %v7285, 1.442695
          %v7370 = vpow.pop %v7369
          %v7371 = vmul.f32 %v7286, 1.442695
          %v7372 = vpow.pop %v7371
          %v7373 = vmul.f32 %v7287, 1.442695
          %v7374 = vpow.pop %v7373
          %v7375 = vmul.f32 %v7288, 1.442695
          %v7376 = vpow.pop %v7375
          %v7377 = vmul.f32 %v7289, 1.442695
          %v7378 = vpow.pop %v7377
          %v7379 = vmul.f32 %v7290, 1.442695
          %v7380 = vpow.pop %v7379
          %v7381 = vmul.f32 %v7291, 1.442695
          %v7382 = vpow.pop %v7381
          %v7383 = vmul.f32 %v7292, 1.442695
          %v7384 = vpow.pop %v7383
          %v7385 = vmul.f32 %v7293, 1.442695
          %v7386 = vpow.pop %v7385
          %v7387 = vmul.f32 %v7294, 1.442695
          %v7388 = vpow.pop %v7387
          %v7389 = vmul.f32 %v7295, 1.442695
          %v7390 = vpow.pop %v7389
          %v7391 = vmul.f32 %v7296, 1.442695
          %v7392 = vpow.pop %v7391
          %v7393 = vmul.f32 %v7297, 1.442695
          %v7394 = vpow.pop %v7393
          %v7395 = vmul.f32 %v7298, 1.442695
          %v7396 = vpow.pop %v7395
          %v7397 = vmul.f32 %v7299, 1.442695
          %v7398 = vpow.pop %v7397
          %v7399 = vmul.f32 %v7300, 1.442695
          %v7400 = vpow.pop %v7399
          %v7401 = vmul.f32 %v7301, 1.442695
          %v7402 = vpow.pop %v7401
          %v7403 = vmul.f32 %v7302, 1.442695
          %v7404 = vpow.pop %v7403
          %v7405 = vmul.f32 %v7303, 1.442695
          %v7406 = vpow.pop %v7405
          %v7407 = vmul.f32 %v7304, 1.442695
          %v7408 = vpow.pop %v7407
          %v7409 = vmul.f32 %v7305, 1.442695
          %v7410 = vpow.pop %v7409
          %v7411 = vmul.f32 %v7306, 1.442695
          %v7412 = vpow.pop %v7411
          %v7413 = vmul.f32 %v7307, 1.442695
          %v7414 = vpow.pop %v7413
          %v7415 = vmul.f32 %v7308, 1.442695
          %v7416 = vpow.pop %v7415
          %v7417 = vmul.f32 %v7309, 1.442695
          %v7418 = vpow.pop %v7417
          %v7419 = vmul.f32 %v7310, 1.442695
          %v7420 = vpow.pop %v7419
          %v7421 = vmul.f32 %v7311, 1.442695
          %v7422 = vpow.pop %v7421
          %v7423 = vmul.f32 %v7312, 1.442695
          %v7424 = vpow.pop %v7423
          %v7425 = vmul.f32 %v7313, 1.442695
          %v7426 = vpow.pop %v7425
          %v7427 = vmul.f32 %v7314, 1.442695
          %v7428 = vpow.pop %v7427
          %v7429 = vmul.f32 %v7315, 1.442695
          %v7430 = vpow.pop %v7429
          %v7431 = vmul.f32 %v7316, 1.442695
          %v7432 = vpow.pop %v7431
          %v7433 = vmul.f32 %v7317, 1.442695
          %v7434 = vpow.pop %v7433
          %v7435 = vmul.f32 %v7318, 1.442695
          %v7436 = vpow.pop %v7435
          %v7437 = vmul.f32 %v7319, 1.442695
          %v7438 = vpow.pop %v7437
          %v7439 = vmul.f32 %v7320, 1.442695
          %v7440 = vpow.pop %v7439
          %v7441 = vmul.f32 %v7321, 1.442695
          %v7442 = vpow.pop %v7441
          %v7443 = vmul.f32 %v7322, 1.442695
          %v7444 = vpow.pop %v7443
          %v7445 = vmul.f32 %v7323, 1.442695
          %v7446 = vpow.pop %v7445
          %v7447 = vmul.f32 %v7324, 1.442695
          %v7448 = vpow.pop %v7447
          %v7449 = vmul.f32 %v7325, 1.442695
          %v7450 = vpow.pop %v7449
          %v7451 = vmul.f32 %v7326, 1.442695
          %v7452 = vpow.pop %v7451
          %v7453 = vmul.f32 %v7327, 1.442695
          %v7454 = vpow.pop %v7453
          %v7455 = vmul.f32 %v7328, 1.442695
          %v7456 = vpow.pop %v7455
          %v7457 = vadd.f32 %v7330, 1.0
          %v7458 = vadd.f32 %v7332, 1.0
          %v7459 = vadd.f32 %v7334, 1.0
          %v7460 = vadd.f32 %v7336, 1.0
          %v7461 = vadd.f32 %v7338, 1.0
          %v7462 = vadd.f32 %v7340, 1.0
          %v7463 = vadd.f32 %v7342, 1.0
          %v7464 = vadd.f32 %v7344, 1.0
          %v7465 = vadd.f32 %v7346, 1.0
          %v7466 = vadd.f32 %v7348, 1.0
          %v7467 = vadd.f32 %v7350, 1.0
          %v7468 = vadd.f32 %v7352, 1.0
          %v7469 = vadd.f32 %v7354, 1.0
          %v7470 = vadd.f32 %v7356, 1.0
          %v7471 = vadd.f32 %v7358, 1.0
          %v7472 = vadd.f32 %v7360, 1.0
          %v7473 = vadd.f32 %v7362, 1.0
          %v7474 = vadd.f32 %v7364, 1.0
          %v7475 = vadd.f32 %v7366, 1.0
          %v7476 = vadd.f32 %v7368, 1.0
          %v7477 = vadd.f32 %v7370, 1.0
          %v7478 = vadd.f32 %v7372, 1.0
          %v7479 = vadd.f32 %v7374, 1.0
          %v7480 = vadd.f32 %v7376, 1.0
          %v7481 = vadd.f32 %v7378, 1.0
          %v7482 = vadd.f32 %v7380, 1.0
          %v7483 = vadd.f32 %v7382, 1.0
          %v7484 = vadd.f32 %v7384, 1.0
          %v7485 = vadd.f32 %v7386, 1.0
          %v7486 = vadd.f32 %v7388, 1.0
          %v7487 = vadd.f32 %v7390, 1.0
          %v7488 = vadd.f32 %v7392, 1.0
          %v7489 = vadd.f32 %v7394, 1.0
          %v7490 = vadd.f32 %v7396, 1.0
          %v7491 = vadd.f32 %v7398, 1.0
          %v7492 = vadd.f32 %v7400, 1.0
          %v7493 = vadd.f32 %v7402, 1.0
          %v7494 = vadd.f32 %v7404, 1.0
          %v7495 = vadd.f32 %v7406, 1.0
          %v7496 = vadd.f32 %v7408, 1.0
          %v7497 = vadd.f32 %v7410, 1.0
          %v7498 = vadd.f32 %v7412, 1.0
          %v7499 = vadd.f32 %v7414, 1.0
          %v7500 = vadd.f32 %v7416, 1.0
          %v7501 = vadd.f32 %v7418, 1.0
          %v7502 = vadd.f32 %v7420, 1.0
          %v7503 = vadd.f32 %v7422, 1.0
          %v7504 = vadd.f32 %v7424, 1.0
          %v7505 = vadd.f32 %v7426, 1.0
          %v7506 = vadd.f32 %v7428, 1.0
          %v7507 = vadd.f32 %v7430, 1.0
          %v7508 = vadd.f32 %v7432, 1.0
          %v7509 = vadd.f32 %v7434, 1.0
          %v7510 = vadd.f32 %v7436, 1.0
          %v7511 = vadd.f32 %v7438, 1.0
          %v7512 = vadd.f32 %v7440, 1.0
          %v7513 = vadd.f32 %v7442, 1.0
          %v7514 = vadd.f32 %v7444, 1.0
          %v7515 = vadd.f32 %v7446, 1.0
          %v7516 = vadd.f32 %v7448, 1.0
          %v7517 = vadd.f32 %v7450, 1.0
          %v7518 = vadd.f32 %v7452, 1.0
          %v7519 = vadd.f32 %v7454, 1.0
          %v7520 = vadd.f32 %v7456, 1.0
          %v7521 = vrcp.pop %v7457
          %v7522 = vmul.f32 1.0, %v7521
          %v7523 = vrcp.pop %v7458
          %v7524 = vmul.f32 1.0, %v7523
          %v7525 = vrcp.pop %v7459
          %v7526 = vmul.f32 1.0, %v7525
          %v7527 = vrcp.pop %v7460
          %v7528 = vmul.f32 1.0, %v7527
          %v7529 = vrcp.pop %v7461
          %v7530 = vmul.f32 1.0, %v7529
          %v7531 = vrcp.pop %v7462
          %v7532 = vmul.f32 1.0, %v7531
          %v7533 = vrcp.pop %v7463
          %v7534 = vmul.f32 1.0, %v7533
          %v7535 = vrcp.pop %v7464
          %v7536 = vmul.f32 1.0, %v7535
          %v7537 = vrcp.pop %v7465
          %v7538 = vmul.f32 1.0, %v7537
          %v7539 = vrcp.pop %v7466
          %v7540 = vmul.f32 1.0, %v7539
          %v7541 = vrcp.pop %v7467
          %v7542 = vmul.f32 1.0, %v7541
          %v7543 = vrcp.pop %v7468
          %v7544 = vmul.f32 1.0, %v7543
          %v7545 = vrcp.pop %v7469
          %v7546 = vmul.f32 1.0, %v7545
          %v7547 = vrcp.pop %v7470
          %v7548 = vmul.f32 1.0, %v7547
          %v7549 = vrcp.pop %v7471
          %v7550 = vmul.f32 1.0, %v7549
          %v7551 = vrcp.pop %v7472
          %v7552 = vmul.f32 1.0, %v7551
          %v7553 = vrcp.pop %v7473
          %v7554 = vmul.f32 1.0, %v7553
          %v7555 = vrcp.pop %v7474
          %v7556 = vmul.f32 1.0, %v7555
          %v7557 = vrcp.pop %v7475
          %v7558 = vmul.f32 1.0, %v7557
          %v7559 = vrcp.pop %v7476
          %v7560 = vmul.f32 1.0, %v7559
          %v7561 = vrcp.pop %v7477
          %v7562 = vmul.f32 1.0, %v7561
          %v7563 = vrcp.pop %v7478
          %v7564 = vmul.f32 1.0, %v7563
          %v7565 = vrcp.pop %v7479
          %v7566 = vmul.f32 1.0, %v7565
          %v7567 = vrcp.pop %v7480
          %v7568 = vmul.f32 1.0, %v7567
          %v7569 = vrcp.pop %v7481
          %v7570 = vmul.f32 1.0, %v7569
          %v7571 = vrcp.pop %v7482
          %v7572 = vmul.f32 1.0, %v7571
          %v7573 = vrcp.pop %v7483
          %v7574 = vmul.f32 1.0, %v7573
          %v7575 = vrcp.pop %v7484
          %v7576 = vmul.f32 1.0, %v7575
          %v7577 = vrcp.pop %v7485
          %v7578 = vmul.f32 1.0, %v7577
          %v7579 = vrcp.pop %v7486
          %v7580 = vmul.f32 1.0, %v7579
          %v7581 = vrcp.pop %v7487
          %v7582 = vmul.f32 1.0, %v7581
          %v7583 = vrcp.pop %v7488
          %v7584 = vmul.f32 1.0, %v7583
          %v7585 = vrcp.pop %v7489
          %v7586 = vmul.f32 1.0, %v7585
          %v7587 = vrcp.pop %v7490
          %v7588 = vmul.f32 1.0, %v7587
          %v7589 = vrcp.pop %v7491
          %v7590 = vmul.f32 1.0, %v7589
          %v7591 = vrcp.pop %v7492
          %v7592 = vmul.f32 1.0, %v7591
          %v7593 = vrcp.pop %v7493
          %v7594 = vmul.f32 1.0, %v7593
          %v7595 = vrcp.pop %v7494
          %v7596 = vmul.f32 1.0, %v7595
          %v7597 = vrcp.pop %v7495
          %v7598 = vmul.f32 1.0, %v7597
          %v7599 = vrcp.pop %v7496
          %v7600 = vmul.f32 1.0, %v7599
          %v7601 = vrcp.pop %v7497
          %v7602 = vmul.f32 1.0, %v7601
          %v7603 = vrcp.pop %v7498
          %v7604 = vmul.f32 1.0, %v7603
          %v7605 = vrcp.pop %v7499
          %v7606 = vmul.f32 1.0, %v7605
          %v7607 = vrcp.pop %v7500
          %v7608 = vmul.f32 1.0, %v7607
          %v7609 = vrcp.pop %v7501
          %v7610 = vmul.f32 1.0, %v7609
          %v7611 = vrcp.pop %v7502
          %v7612 = vmul.f32 1.0, %v7611
          %v7613 = vrcp.pop %v7503
          %v7614 = vmul.f32 1.0, %v7613
          %v7615 = vrcp.pop %v7504
          %v7616 = vmul.f32 1.0, %v7615
          %v7617 = vrcp.pop %v7505
          %v7618 = vmul.f32 1.0, %v7617
          %v7619 = vrcp.pop %v7506
          %v7620 = vmul.f32 1.0, %v7619
          %v7621 = vrcp.pop %v7507
          %v7622 = vmul.f32 1.0, %v7621
          %v7623 = vrcp.pop %v7508
          %v7624 = vmul.f32 1.0, %v7623
          %v7625 = vrcp.pop %v7509
          %v7626 = vmul.f32 1.0, %v7625
          %v7627 = vrcp.pop %v7510
          %v7628 = vmul.f32 1.0, %v7627
          %v7629 = vrcp.pop %v7511
          %v7630 = vmul.f32 1.0, %v7629
          %v7631 = vrcp.pop %v7512
          %v7632 = vmul.f32 1.0, %v7631
          %v7633 = vrcp.pop %v7513
          %v7634 = vmul.f32 1.0, %v7633
          %v7635 = vrcp.pop %v7514
          %v7636 = vmul.f32 1.0, %v7635
          %v7637 = vrcp.pop %v7515
          %v7638 = vmul.f32 1.0, %v7637
          %v7639 = vrcp.pop %v7516
          %v7640 = vmul.f32 1.0, %v7639
          %v7641 = vrcp.pop %v7517
          %v7642 = vmul.f32 1.0, %v7641
          %v7643 = vrcp.pop %v7518
          %v7644 = vmul.f32 1.0, %v7643
          %v7645 = vrcp.pop %v7519
          %v7646 = vmul.f32 1.0, %v7645
          %v7647 = vrcp.pop %v7520
          %v7648 = vmul.f32 1.0, %v7647
          %v7649 = vld [vmem:[%s3] sm:$0xff]
          %v7650 = vld [vmem:[%s3 + $0x8] sm:$0xff]
          %v7651 = vld [vmem:[%s3 + $0x10] sm:$0xff]
          %v7652 = vld [vmem:[%s3 + $0x18] sm:$0xff]
          %v7653 = vld [vmem:[%s3 + $0x20] sm:$0xff]
          %v7654 = vld [vmem:[%s3 + $0x28] sm:$0xff]
          %v7655 = vld [vmem:[%s3 + $0x30] sm:$0xff]
          %v7656 = vld [vmem:[%s3 + $0x38] sm:$0xff]
          %v7657 = vld [vmem:[%s3 + $0x40] sm:$0xff]
          %v7658 = vld [vmem:[%s3 + $0x48] sm:$0xff]
          %v7659 = vld [vmem:[%s3 + $0x50] sm:$0xff]
          %v7660 = vld [vmem:[%s3 + $0x58] sm:$0xff]
          %v7661 = vld [vmem:[%s3 + $0x60] sm:$0xff]
          %v7662 = vld [vmem:[%s3 + $0x68] sm:$0xff]
          %v7663 = vld [vmem:[%s3 + $0x70] sm:$0xff]
          %v7664 = vld [vmem:[%s3 + $0x78] sm:$0xff]
          %v7665 = vld [vmem:[%s3 + $0x80] sm:$0xff]
          %v7666 = vld [vmem:[%s3 + $0x88] sm:$0xff]
          %v7667 = vld [vmem:[%s3 + $0x90] sm:$0xff]
          %v7668 = vld [vmem:[%s3 + $0x98] sm:$0xff]
          %v7669 = vld [vmem:[%s3 + $0xa0] sm:$0xff]
          %v7670 = vld [vmem:[%s3 + $0xa8] sm:$0xff]
          %v7671 = vld [vmem:[%s3 + $0xb0] sm:$0xff]
          %v7672 = vld [vmem:[%s3 + $0xb8] sm:$0xff]
          %v7673 = vld [vmem:[%s3 + $0xc0] sm:$0xff]
          %v7674 = vld [vmem:[%s3 + $0xc8] sm:$0xff]
          %v7675 = vld [vmem:[%s3 + $0xd0] sm:$0xff]
          %v7676 = vld [vmem:[%s3 + $0xd8] sm:$0xff]
          %v7677 = vld [vmem:[%s3 + $0xe0] sm:$0xff]
          %v7678 = vld [vmem:[%s3 + $0xe8] sm:$0xff]
          %v7679 = vld [vmem:[%s3 + $0xf0] sm:$0xff]
          %v7680 = vld [vmem:[%s3 + $0xf8] sm:$0xff]
          %v7681 = vld [vmem:[#allocation8] sm:$0x1]
          %v7683 = vlaneseq
          %v7684 = vshrl.u32 %v7683, 7
          %v7685 = vsub.s32 0, %v7684
          %v7686 = vrot.slane %v7681, %v7685
          %7688 = vmatprep.subr.mxu0 0.0
          %7689 = vmatpush1.msra.mxu0 %v7664
          %7690 = vmatprep.subr.mxu0 0.0
          %7691 = vmatpush1.msra.mxu0 %v7663
          %7692 = vmatprep.subr.mxu0 0.0
          %7693 = vmatpush1.msra.mxu0 %v7662
          %7694 = vmatprep.subr.mxu0 0.0
          %7695 = vmatpush1.msra.mxu0 %v7661
          %7696 = vmatprep.subr.mxu0 0.0
          %7697 = vmatpush1.msra.mxu0 %v7660
          %7698 = vmatprep.subr.mxu0 0.0
          %7699 = vmatpush1.msra.mxu0 %v7659
          %7700 = vmatprep.subr.mxu0 0.0
          %7701 = vmatpush1.msra.mxu0 %v7658
          %7702 = vmatprep.subr.mxu0 0.0
          %7703 = vmatpush1.msra.mxu0 %v7657
          %7704 = vmatprep.subr.mxu0 0.0
          %7705 = vmatpush1.msra.mxu0 %v7656
          %7706 = vmatprep.subr.mxu0 0.0
          %7707 = vmatpush1.msra.mxu0 %v7655
          %7708 = vmatprep.subr.mxu0 0.0
          %7709 = vmatpush1.msra.mxu0 %v7654
          %7710 = vmatprep.subr.mxu0 0.0
          %7711 = vmatpush1.msra.mxu0 %v7653
          %7712 = vmatprep.subr.mxu0 0.0
          %7713 = vmatpush1.msra.mxu0 %v7652
          %7714 = vmatprep.subr.mxu0 0.0
          %7715 = vmatpush1.msra.mxu0 %v7651
          %7716 = vmatprep.subr.mxu0 0.0
          %7717 = vmatpush1.msra.mxu0 %v7650
          %7718 = vmatprep.subr.mxu0 0.0
          %7719 = vmatpush1.msra.mxu0 %v7649
          %7720 = vmatprep.subr.mxu0 0.0
          %7721 = vmatpush2.msra.mxu0 %v7680
          %7722 = vmatprep.subr.mxu0 0.0
          %7723 = vmatpush2.msra.mxu0 %v7679
          %7724 = vmatprep.subr.mxu0 0.0
          %7725 = vmatpush2.msra.mxu0 %v7678
          %7726 = vmatprep.subr.mxu0 0.0
          %7727 = vmatpush2.msra.mxu0 %v7677
          %7728 = vmatprep.subr.mxu0 0.0
          %7729 = vmatpush2.msra.mxu0 %v7676
          %7730 = vmatprep.subr.mxu0 0.0
          %7731 = vmatpush2.msra.mxu0 %v7675
          %7732 = vmatprep.subr.mxu0 0.0
          %7733 = vmatpush2.msra.mxu0 %v7674
          %7734 = vmatprep.subr.mxu0 0.0
          %7735 = vmatpush2.msra.mxu0 %v7673
          %7736 = vmatprep.subr.mxu0 0.0
          %7737 = vmatpush2.msra.mxu0 %v7672
          %7738 = vmatprep.subr.mxu0 0.0
          %7739 = vmatpush2.msra.mxu0 %v7671
          %7740 = vmatprep.subr.mxu0 0.0
          %7741 = vmatpush2.msra.mxu0 %v7670
          %7742 = vmatprep.subr.mxu0 0.0
          %7743 = vmatpush2.msra.mxu0 %v7669
          %7744 = vmatprep.subr.mxu0 0.0
          %7745 = vmatpush2.msra.mxu0 %v7668
          %7746 = vmatprep.subr.mxu0 0.0
          %7747 = vmatpush2.msra.mxu0 %v7667
          %7748 = vmatprep.subr.mxu0 0.0
          %7749 = vmatpush2.msra.mxu0 %v7666
          %7750 = vmatprep.subr.mxu0 0.0
          %7751 = vmatpush2.msra.mxu0 %v7665
          %7752 = vmatprep.mubr.f32.mxu0 %v7524
          %7753 = vmatmul.mubr.f32.gmra.mxu0 %v7522
          %v7754 = vpop.f32.mrf.mxu0
          %v7755 = vadd.f32 %v7686, %v7754
          %v7756 = vpop.f32.mrf.mxu0
          %7757 = vmatprep.mubr.f32.mxu0 %v7528
          %7758 = vmatmul.mubr.f32.gmra.mxu0 %v7526
          %v7759 = vpop.f32.mrf.mxu0
          %v7760 = vadd.f32 %v7686, %v7759
          %v7761 = vpop.f32.mrf.mxu0
          %7762 = vmatprep.mubr.f32.mxu0 %v7532
          %7763 = vmatmul.mubr.f32.gmra.mxu0 %v7530
          %v7764 = vpop.f32.mrf.mxu0
          %v7765 = vadd.f32 %v7686, %v7764
          %v7766 = vpop.f32.mrf.mxu0
          %7767 = vmatprep.mubr.f32.mxu0 %v7536
          %7768 = vmatmul.mubr.f32.gmra.mxu0 %v7534
          %v7769 = vpop.f32.mrf.mxu0
          %v7770 = vadd.f32 %v7686, %v7769
          %v7771 = vpop.f32.mrf.mxu0
          %7772 = vmatprep.mubr.f32.mxu0 %v7540
          %7773 = vmatmul.mubr.f32.gmra.mxu0 %v7538
          %v7774 = vpop.f32.mrf.mxu0
          %v7775 = vadd.f32 %v7686, %v7774
          %v7776 = vpop.f32.mrf.mxu0
          %7777 = vmatprep.mubr.f32.mxu0 %v7544
          %7778 = vmatmul.mubr.f32.gmra.mxu0 %v7542
          %v7779 = vpop.f32.mrf.mxu0
          %v7780 = vadd.f32 %v7686, %v7779
          %v7781 = vpop.f32.mrf.mxu0
          %7782 = vmatprep.mubr.f32.mxu0 %v7548
          %7783 = vmatmul.mubr.f32.gmra.mxu0 %v7546
          %v7784 = vpop.f32.mrf.mxu0
          %v7785 = vadd.f32 %v7686, %v7784
          %v7786 = vpop.f32.mrf.mxu0
          %7787 = vmatprep.mubr.f32.mxu0 %v7552
          %7788 = vmatmul.mubr.f32.gmra.mxu0 %v7550
          %v7789 = vpop.f32.mrf.mxu0
          %v7790 = vadd.f32 %v7686, %v7789
          %v7791 = vpop.f32.mrf.mxu0
          %7792 = vmatprep.mubr.f32.mxu0 %v7556
          %7793 = vmatmul.mubr.f32.gmra.mxu0 %v7554
          %v7794 = vpop.f32.mrf.mxu0
          %v7795 = vadd.f32 %v7686, %v7794
          %v7796 = vpop.f32.mrf.mxu0
          %7797 = vmatprep.mubr.f32.mxu0 %v7560
          %7798 = vmatmul.mubr.f32.gmra.mxu0 %v7558
          %v7799 = vpop.f32.mrf.mxu0
          %v7800 = vadd.f32 %v7686, %v7799
          %v7801 = vpop.f32.mrf.mxu0
          %7802 = vmatprep.mubr.f32.mxu0 %v7564
          %7803 = vmatmul.mubr.f32.gmra.mxu0 %v7562
          %v7804 = vpop.f32.mrf.mxu0
          %v7805 = vadd.f32 %v7686, %v7804
          %v7806 = vpop.f32.mrf.mxu0
          %7807 = vmatprep.mubr.f32.mxu0 %v7568
          %7808 = vmatmul.mubr.f32.gmra.mxu0 %v7566
          %v7809 = vpop.f32.mrf.mxu0
          %v7810 = vadd.f32 %v7686, %v7809
          %v7811 = vpop.f32.mrf.mxu0
          %7812 = vmatprep.mubr.f32.mxu0 %v7572
          %7813 = vmatmul.mubr.f32.gmra.mxu0 %v7570
          %v7814 = vpop.f32.mrf.mxu0
          %v7815 = vadd.f32 %v7686, %v7814
          %v7816 = vpop.f32.mrf.mxu0
          %7817 = vmatprep.mubr.f32.mxu0 %v7576
          %7818 = vmatmul.mubr.f32.gmra.mxu0 %v7574
          %v7819 = vpop.f32.mrf.mxu0
          %v7820 = vadd.f32 %v7686, %v7819
          %v7821 = vpop.f32.mrf.mxu0
          %7822 = vmatprep.mubr.f32.mxu0 %v7580
          %7823 = vmatmul.mubr.f32.gmra.mxu0 %v7578
          %v7824 = vpop.f32.mrf.mxu0
          %v7825 = vadd.f32 %v7686, %v7824
          %v7826 = vpop.f32.mrf.mxu0
          %7827 = vmatprep.mubr.f32.mxu0 %v7584
          %7828 = vmatmul.mubr.f32.gmra.mxu0 %v7582
          %v7829 = vpop.f32.mrf.mxu0
          %v7830 = vadd.f32 %v7686, %v7829
          %v7831 = vpop.f32.mrf.mxu0
          %7832 = vmatprep.mubr.f32.mxu0 %v7588
          %7833 = vmatmul.mubr.f32.gmra.mxu0 %v7586
          %v7834 = vpop.f32.mrf.mxu0
          %v7835 = vadd.f32 %v7686, %v7834
          %v7836 = vpop.f32.mrf.mxu0
          %7837 = vmatprep.mubr.f32.mxu0 %v7592
          %7838 = vmatmul.mubr.f32.gmra.mxu0 %v7590
          %v7839 = vpop.f32.mrf.mxu0
          %v7840 = vadd.f32 %v7686, %v7839
          %v7841 = vpop.f32.mrf.mxu0
          %7842 = vmatprep.mubr.f32.mxu0 %v7596
          %7843 = vmatmul.mubr.f32.gmra.mxu0 %v7594
          %v7844 = vpop.f32.mrf.mxu0
          %v7845 = vadd.f32 %v7686, %v7844
          %v7846 = vpop.f32.mrf.mxu0
          %7847 = vmatprep.mubr.f32.mxu0 %v7600
          %7848 = vmatmul.mubr.f32.gmra.mxu0 %v7598
          %v7849 = vpop.f32.mrf.mxu0
          %v7850 = vadd.f32 %v7686, %v7849
          %v7851 = vpop.f32.mrf.mxu0
          %7852 = vmatprep.mubr.f32.mxu0 %v7604
          %7853 = vmatmul.mubr.f32.gmra.mxu0 %v7602
          %v7854 = vpop.f32.mrf.mxu0
          %v7855 = vadd.f32 %v7686, %v7854
          %v7856 = vpop.f32.mrf.mxu0
          %7857 = vmatprep.mubr.f32.mxu0 %v7608
          %7858 = vmatmul.mubr.f32.gmra.mxu0 %v7606
          %v7859 = vpop.f32.mrf.mxu0
          %v7860 = vadd.f32 %v7686, %v7859
          %v7861 = vpop.f32.mrf.mxu0
          %7862 = vmatprep.mubr.f32.mxu0 %v7612
          %7863 = vmatmul.mubr.f32.gmra.mxu0 %v7610
          %v7864 = vpop.f32.mrf.mxu0
          %v7865 = vadd.f32 %v7686, %v7864
          %v7866 = vpop.f32.mrf.mxu0
          %7867 = vmatprep.mubr.f32.mxu0 %v7616
          %7868 = vmatmul.mubr.f32.gmra.mxu0 %v7614
          %v7869 = vpop.f32.mrf.mxu0
          %v7870 = vadd.f32 %v7686, %v7869
          %v7871 = vpop.f32.mrf.mxu0
          %7872 = vmatprep.mubr.f32.mxu0 %v7620
          %7873 = vmatmul.mubr.f32.gmra.mxu0 %v7618
          %v7874 = vpop.f32.mrf.mxu0
          %v7875 = vadd.f32 %v7686, %v7874
          %v7876 = vpop.f32.mrf.mxu0
          %7877 = vmatprep.mubr.f32.mxu0 %v7624
          %7878 = vmatmul.mubr.f32.gmra.mxu0 %v7622
          %v7879 = vpop.f32.mrf.mxu0
          %v7880 = vadd.f32 %v7686, %v7879
          %v7881 = vpop.f32.mrf.mxu0
          %7882 = vmatprep.mubr.f32.mxu0 %v7628
          %7883 = vmatmul.mubr.f32.gmra.mxu0 %v7626
          %v7884 = vpop.f32.mrf.mxu0
          %v7885 = vadd.f32 %v7686, %v7884
          %v7886 = vpop.f32.mrf.mxu0
          %7887 = vmatprep.mubr.f32.mxu0 %v7632
          %7888 = vmatmul.mubr.f32.gmra.mxu0 %v7630
          %v7889 = vpop.f32.mrf.mxu0
          %v7890 = vadd.f32 %v7686, %v7889
          %v7891 = vpop.f32.mrf.mxu0
          %7892 = vmatprep.mubr.f32.mxu0 %v7636
          %7893 = vmatmul.mubr.f32.gmra.mxu0 %v7634
          %v7894 = vpop.f32.mrf.mxu0
          %v7895 = vadd.f32 %v7686, %v7894
          %v7896 = vpop.f32.mrf.mxu0
          %7897 = vmatprep.mubr.f32.mxu0 %v7640
          %7898 = vmatmul.mubr.f32.gmra.mxu0 %v7638
          %v7899 = vpop.f32.mrf.mxu0
          %v7900 = vadd.f32 %v7686, %v7899
          %v7901 = vpop.f32.mrf.mxu0
          %7902 = vmatprep.mubr.f32.mxu0 %v7644
          %7903 = vmatmul.mubr.f32.gmra.mxu0 %v7642
          %v7904 = vpop.f32.mrf.mxu0
          %v7905 = vadd.f32 %v7686, %v7904
          %v7906 = vpop.f32.mrf.mxu0
          %7907 = vmatprep.mubr.f32.mxu0 %v7648
          %7908 = vmatmul.mubr.f32.gmra.mxu0 %v7646
          %v7909 = vpop.f32.mrf.mxu0
          %v7910 = vadd.f32 %v7686, %v7909
          %v7911 = vpop.f32.mrf.mxu0
          %7912 = vdwg.mxu0
          %vm7913 = vcmask 31744
          %v7914 = vsel %vm7913, %v7755, -inf
          %7915 = vmax.xlane.f32.xlu0 %v7914
          %v7916 = vpop.xlane.xlu0 %7915
          %v7917 = vsel %vm7913, %v7760, -inf
          %7918 = vmax.xlane.f32.xlu0 %v7917
          %v7919 = vpop.xlane.xlu0 %7918
          %v7920 = vsel %vm7913, %v7765, -inf
          %7921 = vmax.xlane.f32.xlu0 %v7920
          %v7922 = vpop.xlane.xlu0 %7921
          %v7923 = vsel %vm7913, %v7770, -inf
          %7924 = vmax.xlane.f32.xlu0 %v7923
          %v7925 = vpop.xlane.xlu0 %7924
          %v7926 = vsel %vm7913, %v7775, -inf
          %7927 = vmax.xlane.f32.xlu0 %v7926
          %v7928 = vpop.xlane.xlu0 %7927
          %v7929 = vsel %vm7913, %v7780, -inf
          %7930 = vmax.xlane.f32.xlu0 %v7929
          %v7931 = vpop.xlane.xlu0 %7930
          %v7932 = vsel %vm7913, %v7785, -inf
          %7933 = vmax.xlane.f32.xlu0 %v7932
          %v7934 = vpop.xlane.xlu0 %7933
          %v7935 = vsel %vm7913, %v7790, -inf
          %7936 = vmax.xlane.f32.xlu0 %v7935
          %v7937 = vpop.xlane.xlu0 %7936
          %v7938 = vsel %vm7913, %v7795, -inf
          %7939 = vmax.xlane.f32.xlu0 %v7938
          %v7940 = vpop.xlane.xlu0 %7939
          %v7941 = vsel %vm7913, %v7800, -inf
          %7942 = vmax.xlane.f32.xlu0 %v7941
          %v7943 = vpop.xlane.xlu0 %7942
          %v7944 = vsel %vm7913, %v7805, -inf
          %7945 = vmax.xlane.f32.xlu0 %v7944
          %v7946 = vpop.xlane.xlu0 %7945
          %v7947 = vsel %vm7913, %v7810, -inf
          %7948 = vmax.xlane.f32.xlu0 %v7947
          %v7949 = vpop.xlane.xlu0 %7948
          %v7950 = vsel %vm7913, %v7815, -inf
          %7951 = vmax.xlane.f32.xlu0 %v7950
          %v7952 = vpop.xlane.xlu0 %7951
          %v7953 = vsel %vm7913, %v7820, -inf
          %7954 = vmax.xlane.f32.xlu0 %v7953
          %v7955 = vpop.xlane.xlu0 %7954
          %v7956 = vsel %vm7913, %v7825, -inf
          %7957 = vmax.xlane.f32.xlu0 %v7956
          %v7958 = vpop.xlane.xlu0 %7957
          %v7959 = vsel %vm7913, %v7830, -inf
          %7960 = vmax.xlane.f32.xlu0 %v7959
          %v7961 = vpop.xlane.xlu0 %7960
          %v7962 = vsel %vm7913, %v7835, -inf
          %7963 = vmax.xlane.f32.xlu0 %v7962
          %v7964 = vpop.xlane.xlu0 %7963
          %v7965 = vsel %vm7913, %v7840, -inf
          %7966 = vmax.xlane.f32.xlu0 %v7965
          %v7967 = vpop.xlane.xlu0 %7966
          %v7968 = vsel %vm7913, %v7845, -inf
          %7969 = vmax.xlane.f32.xlu0 %v7968
          %v7970 = vpop.xlane.xlu0 %7969
          %v7971 = vsel %vm7913, %v7850, -inf
          %7972 = vmax.xlane.f32.xlu0 %v7971
          %v7973 = vpop.xlane.xlu0 %7972
          %v7974 = vsel %vm7913, %v7855, -inf
          %7975 = vmax.xlane.f32.xlu0 %v7974
          %v7976 = vpop.xlane.xlu0 %7975
          %v7977 = vsel %vm7913, %v7860, -inf
          %7978 = vmax.xlane.f32.xlu0 %v7977
          %v7979 = vpop.xlane.xlu0 %7978
          %v7980 = vsel %vm7913, %v7865, -inf
          %7981 = vmax.xlane.f32.xlu0 %v7980
          %v7982 = vpop.xlane.xlu0 %7981
          %v7983 = vsel %vm7913, %v7870, -inf
          %7984 = vmax.xlane.f32.xlu0 %v7983
          %v7985 = vpop.xlane.xlu0 %7984
          %v7986 = vsel %vm7913, %v7875, -inf
          %7987 = vmax.xlane.f32.xlu0 %v7986
          %v7988 = vpop.xlane.xlu0 %7987
          %v7989 = vsel %vm7913, %v7880, -inf
          %7990 = vmax.xlane.f32.xlu0 %v7989
          %v7991 = vpop.xlane.xlu0 %7990
          %v7992 = vsel %vm7913, %v7885, -inf
          %7993 = vmax.xlane.f32.xlu0 %v7992
          %v7994 = vpop.xlane.xlu0 %7993
          %v7995 = vsel %vm7913, %v7890, -inf
          %7996 = vmax.xlane.f32.xlu0 %v7995
          %v7997 = vpop.xlane.xlu0 %7996
          %v7998 = vsel %vm7913, %v7895, -inf
          %7999 = vmax.xlane.f32.xlu0 %v7998
          %v8000 = vpop.xlane.xlu0 %7999
          %v8001 = vsel %vm7913, %v7900, -inf
          %8002 = vmax.xlane.f32.xlu0 %v8001
          %v8003 = vpop.xlane.xlu0 %8002
          %v8004 = vsel %vm7913, %v7905, -inf
          %8005 = vmax.xlane.f32.xlu0 %v8004
          %v8006 = vpop.xlane.xlu0 %8005
          %v8007 = vsel %vm7913, %v7910, -inf
          %8008 = vmax.xlane.f32.xlu0 %v8007
          %v8009 = vpop.xlane.xlu0 %8008
          %v8010 = vsub.f32 %v7755, %v7916
          %v8011 = vsub.f32 %v7760, %v7919
          %v8012 = vsub.f32 %v7765, %v7922
          %v8013 = vsub.f32 %v7770, %v7925
          %v8014 = vsub.f32 %v7775, %v7928
          %v8015 = vsub.f32 %v7780, %v7931
          %v8016 = vsub.f32 %v7785, %v7934
          %v8017 = vsub.f32 %v7790, %v7937
          %v8018 = vsub.f32 %v7795, %v7940
          %v8019 = vsub.f32 %v7800, %v7943
          %v8020 = vsub.f32 %v7805, %v7946
          %v8021 = vsub.f32 %v7810, %v7949
          %v8022 = vsub.f32 %v7815, %v7952
          %v8023 = vsub.f32 %v7820, %v7955
          %v8024 = vsub.f32 %v7825, %v7958
          %v8025 = vsub.f32 %v7830, %v7961
          %v8026 = vsub.f32 %v7835, %v7964
          %v8027 = vsub.f32 %v7840, %v7967
          %v8028 = vsub.f32 %v7845, %v7970
          %v8029 = vsub.f32 %v7850, %v7973
          %v8030 = vsub.f32 %v7855, %v7976
          %v8031 = vsub.f32 %v7860, %v7979
          %v8032 = vsub.f32 %v7865, %v7982
          %v8033 = vsub.f32 %v7870, %v7985
          %v8034 = vsub.f32 %v7875, %v7988
          %v8035 = vsub.f32 %v7880, %v7991
          %v8036 = vsub.f32 %v7885, %v7994
          %v8037 = vsub.f32 %v7890, %v7997
          %v8038 = vsub.f32 %v7895, %v8000
          %v8039 = vsub.f32 %v7900, %v8003
          %v8040 = vsub.f32 %v7905, %v8006
          %v8041 = vsub.f32 %v7910, %v8009
          %v8042 = vmul.f32 %v8010, 1.442695
          %v8043 = vpow.pop %v8042
          %v8044 = vmul.f32 %v8011, 1.442695
          %v8045 = vpow.pop %v8044
          %v8046 = vmul.f32 %v8012, 1.442695
          %v8047 = vpow.pop %v8046
          %v8048 = vmul.f32 %v8013, 1.442695
          %v8049 = vpow.pop %v8048
          %v8050 = vmul.f32 %v8014, 1.442695
          %v8051 = vpow.pop %v8050
          %v8052 = vmul.f32 %v8015, 1.442695
          %v8053 = vpow.pop %v8052
          %v8054 = vmul.f32 %v8016, 1.442695
          %v8055 = vpow.pop %v8054
          %v8056 = vmul.f32 %v8017, 1.442695
          %v8057 = vpow.pop %v8056
          %v8058 = vmul.f32 %v8018, 1.442695
          %v8059 = vpow.pop %v8058
          %v8060 = vmul.f32 %v8019, 1.442695
          %v8061 = vpow.pop %v8060
          %v8062 = vmul.f32 %v8020, 1.442695
          %v8063 = vpow.pop %v8062
          %v8064 = vmul.f32 %v8021, 1.442695
          %v8065 = vpow.pop %v8064
          %v8066 = vmul.f32 %v8022, 1.442695
          %v8067 = vpow.pop %v8066
          %v8068 = vmul.f32 %v8023, 1.442695
          %v8069 = vpow.pop %v8068
          %v8070 = vmul.f32 %v8024, 1.442695
          %v8071 = vpow.pop %v8070
          %v8072 = vmul.f32 %v8025, 1.442695
          %v8073 = vpow.pop %v8072
          %v8074 = vmul.f32 %v8026, 1.442695
          %v8075 = vpow.pop %v8074
          %v8076 = vmul.f32 %v8027, 1.442695
          %v8077 = vpow.pop %v8076
          %v8078 = vmul.f32 %v8028, 1.442695
          %v8079 = vpow.pop %v8078
          %v8080 = vmul.f32 %v8029, 1.442695
          %v8081 = vpow.pop %v8080
          %v8082 = vmul.f32 %v8030, 1.442695
          %v8083 = vpow.pop %v8082
          %v8084 = vmul.f32 %v8031, 1.442695
          %v8085 = vpow.pop %v8084
          %v8086 = vmul.f32 %v8032, 1.442695
          %v8087 = vpow.pop %v8086
          %v8088 = vmul.f32 %v8033, 1.442695
          %v8089 = vpow.pop %v8088
          %v8090 = vmul.f32 %v8034, 1.442695
          %v8091 = vpow.pop %v8090
          %v8092 = vmul.f32 %v8035, 1.442695
          %v8093 = vpow.pop %v8092
          %v8094 = vmul.f32 %v8036, 1.442695
          %v8095 = vpow.pop %v8094
          %v8096 = vmul.f32 %v8037, 1.442695
          %v8097 = vpow.pop %v8096
          %v8098 = vmul.f32 %v8038, 1.442695
          %v8099 = vpow.pop %v8098
          %v8100 = vmul.f32 %v8039, 1.442695
          %v8101 = vpow.pop %v8100
          %v8102 = vmul.f32 %v8040, 1.442695
          %v8103 = vpow.pop %v8102
          %v8104 = vmul.f32 %v8041, 1.442695
          %v8105 = vpow.pop %v8104
          %v8106 = vsel %vm7913, %v8043, 0.0
          %8107 = vadd.xlane.f32.xlu0 %v8106
          %v8108 = vpop.xlane.xlu0 %8107
          %v8109 = vsel %vm7913, %v8045, 0.0
          %8110 = vadd.xlane.f32.xlu0 %v8109
          %v8111 = vpop.xlane.xlu0 %8110
          %v8112 = vsel %vm7913, %v8047, 0.0
          %8113 = vadd.xlane.f32.xlu0 %v8112
          %v8114 = vpop.xlane.xlu0 %8113
          %v8115 = vsel %vm7913, %v8049, 0.0
          %8116 = vadd.xlane.f32.xlu0 %v8115
          %v8117 = vpop.xlane.xlu0 %8116
          %v8118 = vsel %vm7913, %v8051, 0.0
          %8119 = vadd.xlane.f32.xlu0 %v8118
          %v8120 = vpop.xlane.xlu0 %8119
          %v8121 = vsel %vm7913, %v8053, 0.0
          %8122 = vadd.xlane.f32.xlu0 %v8121
          %v8123 = vpop.xlane.xlu0 %8122
          %v8124 = vsel %vm7913, %v8055, 0.0
          %8125 = vadd.xlane.f32.xlu0 %v8124
          %v8126 = vpop.xlane.xlu0 %8125
          %v8127 = vsel %vm7913, %v8057, 0.0
          %8128 = vadd.xlane.f32.xlu0 %v8127
          %v8129 = vpop.xlane.xlu0 %8128
          %v8130 = vsel %vm7913, %v8059, 0.0
          %8131 = vadd.xlane.f32.xlu0 %v8130
          %v8132 = vpop.xlane.xlu0 %8131
          %v8133 = vsel %vm7913, %v8061, 0.0
          %8134 = vadd.xlane.f32.xlu0 %v8133
          %v8135 = vpop.xlane.xlu0 %8134
          %v8136 = vsel %vm7913, %v8063, 0.0
          %8137 = vadd.xlane.f32.xlu0 %v8136
          %v8138 = vpop.xlane.xlu0 %8137
          %v8139 = vsel %vm7913, %v8065, 0.0
          %8140 = vadd.xlane.f32.xlu0 %v8139
          %v8141 = vpop.xlane.xlu0 %8140
          %v8142 = vsel %vm7913, %v8067, 0.0
          %8143 = vadd.xlane.f32.xlu0 %v8142
          %v8144 = vpop.xlane.xlu0 %8143
          %v8145 = vsel %vm7913, %v8069, 0.0
          %8146 = vadd.xlane.f32.xlu0 %v8145
          %v8147 = vpop.xlane.xlu0 %8146
          %v8148 = vsel %vm7913, %v8071, 0.0
          %8149 = vadd.xlane.f32.xlu0 %v8148
          %v8150 = vpop.xlane.xlu0 %8149
          %v8151 = vsel %vm7913, %v8073, 0.0
          %8152 = vadd.xlane.f32.xlu0 %v8151
          %v8153 = vpop.xlane.xlu0 %8152
          %v8154 = vsel %vm7913, %v8075, 0.0
          %8155 = vadd.xlane.f32.xlu0 %v8154
          %v8156 = vpop.xlane.xlu0 %8155
          %v8157 = vsel %vm7913, %v8077, 0.0
          %8158 = vadd.xlane.f32.xlu0 %v8157
          %v8159 = vpop.xlane.xlu0 %8158
          %v8160 = vsel %vm7913, %v8079, 0.0
          %8161 = vadd.xlane.f32.xlu0 %v8160
          %v8162 = vpop.xlane.xlu0 %8161
          %v8163 = vsel %vm7913, %v8081, 0.0
          %8164 = vadd.xlane.f32.xlu0 %v8163
          %v8165 = vpop.xlane.xlu0 %8164
          %v8166 = vsel %vm7913, %v8083, 0.0
          %8167 = vadd.xlane.f32.xlu0 %v8166
          %v8168 = vpop.xlane.xlu0 %8167
          %v8169 = vsel %vm7913, %v8085, 0.0
          %8170 = vadd.xlane.f32.xlu0 %v8169
          %v8171 = vpop.xlane.xlu0 %8170
          %v8172 = vsel %vm7913, %v8087, 0.0
          %8173 = vadd.xlane.f32.xlu0 %v8172
          %v8174 = vpop.xlane.xlu0 %8173
          %v8175 = vsel %vm7913, %v8089, 0.0
          %8176 = vadd.xlane.f32.xlu0 %v8175
          %v8177 = vpop.xlane.xlu0 %8176
          %v8178 = vsel %vm7913, %v8091, 0.0
          %8179 = vadd.xlane.f32.xlu0 %v8178
          %v8180 = vpop.xlane.xlu0 %8179
          %v8181 = vsel %vm7913, %v8093, 0.0
          %8182 = vadd.xlane.f32.xlu0 %v8181
          %v8183 = vpop.xlane.xlu0 %8182
          %v8184 = vsel %vm7913, %v8095, 0.0
          %8185 = vadd.xlane.f32.xlu0 %v8184
          %v8186 = vpop.xlane.xlu0 %8185
          %v8187 = vsel %vm7913, %v8097, 0.0
          %8188 = vadd.xlane.f32.xlu0 %v8187
          %v8189 = vpop.xlane.xlu0 %8188
          %v8190 = vsel %vm7913, %v8099, 0.0
          %8191 = vadd.xlane.f32.xlu0 %v8190
          %v8192 = vpop.xlane.xlu0 %8191
          %v8193 = vsel %vm7913, %v8101, 0.0
          %8194 = vadd.xlane.f32.xlu0 %v8193
          %v8195 = vpop.xlane.xlu0 %8194
          %v8196 = vsel %vm7913, %v8103, 0.0
          %8197 = vadd.xlane.f32.xlu0 %v8196
          %v8198 = vpop.xlane.xlu0 %8197
          %v8199 = vsel %vm7913, %v8105, 0.0
          %8200 = vadd.xlane.f32.xlu0 %v8199
          %v8201 = vpop.xlane.xlu0 %8200
          %v8202 = vlog2.pop %v8108
          %v8203 = vmul.f32 %v8202, 0.6931472
          %v8204 = vlog2.pop %v8111
          %v8205 = vmul.f32 %v8204, 0.6931472
          %v8206 = vlog2.pop %v8114
          %v8207 = vmul.f32 %v8206, 0.6931472
          %v8208 = vlog2.pop %v8117
          %v8209 = vmul.f32 %v8208, 0.6931472
          %v8210 = vlog2.pop %v8120
          %v8211 = vmul.f32 %v8210, 0.6931472
          %v8212 = vlog2.pop %v8123
          %v8213 = vmul.f32 %v8212, 0.6931472
          %v8214 = vlog2.pop %v8126
          %v8215 = vmul.f32 %v8214, 0.6931472
          %v8216 = vlog2.pop %v8129
          %v8217 = vmul.f32 %v8216, 0.6931472
          %v8218 = vlog2.pop %v8132
          %v8219 = vmul.f32 %v8218, 0.6931472
          %v8220 = vlog2.pop %v8135
          %v8221 = vmul.f32 %v8220, 0.6931472
          %v8222 = vlog2.pop %v8138
          %v8223 = vmul.f32 %v8222, 0.6931472
          %v8224 = vlog2.pop %v8141
          %v8225 = vmul.f32 %v8224, 0.6931472
          %v8226 = vlog2.pop %v8144
          %v8227 = vmul.f32 %v8226, 0.6931472
          %v8228 = vlog2.pop %v8147
          %v8229 = vmul.f32 %v8228, 0.6931472
          %v8230 = vlog2.pop %v8150
          %v8231 = vmul.f32 %v8230, 0.6931472
          %v8232 = vlog2.pop %v8153
          %v8233 = vmul.f32 %v8232, 0.6931472
          %v8234 = vlog2.pop %v8156
          %v8235 = vmul.f32 %v8234, 0.6931472
          %v8236 = vlog2.pop %v8159
          %v8237 = vmul.f32 %v8236, 0.6931472
          %v8238 = vlog2.pop %v8162
          %v8239 = vmul.f32 %v8238, 0.6931472
          %v8240 = vlog2.pop %v8165
          %v8241 = vmul.f32 %v8240, 0.6931472
          %v8242 = vlog2.pop %v8168
          %v8243 = vmul.f32 %v8242, 0.6931472
          %v8244 = vlog2.pop %v8171
          %v8245 = vmul.f32 %v8244, 0.6931472
          %v8246 = vlog2.pop %v8174
          %v8247 = vmul.f32 %v8246, 0.6931472
          %v8248 = vlog2.pop %v8177
          %v8249 = vmul.f32 %v8248, 0.6931472
          %v8250 = vlog2.pop %v8180
          %v8251 = vmul.f32 %v8250, 0.6931472
          %v8252 = vlog2.pop %v8183
          %v8253 = vmul.f32 %v8252, 0.6931472
          %v8254 = vlog2.pop %v8186
          %v8255 = vmul.f32 %v8254, 0.6931472
          %v8256 = vlog2.pop %v8189
          %v8257 = vmul.f32 %v8256, 0.6931472
          %v8258 = vlog2.pop %v8192
          %v8259 = vmul.f32 %v8258, 0.6931472
          %v8260 = vlog2.pop %v8195
          %v8261 = vmul.f32 %v8260, 0.6931472
          %v8262 = vlog2.pop %v8198
          %v8263 = vmul.f32 %v8262, 0.6931472
          %v8264 = vlog2.pop %v8201
          %v8265 = vmul.f32 %v8264, 0.6931472
          %v8266 = vsub.f32 %v8010, %v8203
          %v8267 = vsub.f32 %v8011, %v8205
          %v8268 = vsub.f32 %v8012, %v8207
          %v8269 = vsub.f32 %v8013, %v8209
          %v8270 = vsub.f32 %v8014, %v8211
          %v8271 = vsub.f32 %v8015, %v8213
          %v8272 = vsub.f32 %v8016, %v8215
          %v8273 = vsub.f32 %v8017, %v8217
          %v8274 = vsub.f32 %v8018, %v8219
          %v8275 = vsub.f32 %v8019, %v8221
          %v8276 = vsub.f32 %v8020, %v8223
          %v8277 = vsub.f32 %v8021, %v8225
          %v8278 = vsub.f32 %v8022, %v8227
          %v8279 = vsub.f32 %v8023, %v8229
          %v8280 = vsub.f32 %v8024, %v8231
          %v8281 = vsub.f32 %v8025, %v8233
          %v8282 = vsub.f32 %v8026, %v8235
          %v8283 = vsub.f32 %v8027, %v8237
          %v8284 = vsub.f32 %v8028, %v8239
          %v8285 = vsub.f32 %v8029, %v8241
          %v8286 = vsub.f32 %v8030, %v8243
          %v8287 = vsub.f32 %v8031, %v8245
          %v8288 = vsub.f32 %v8032, %v8247
          %v8289 = vsub.f32 %v8033, %v8249
          %v8290 = vsub.f32 %v8034, %v8251
          %v8291 = vsub.f32 %v8035, %v8253
          %v8292 = vsub.f32 %v8036, %v8255
          %v8293 = vsub.f32 %v8037, %v8257
          %v8294 = vsub.f32 %v8038, %v8259
          %v8295 = vsub.f32 %v8039, %v8261
          %v8296 = vsub.f32 %v8040, %v8263
          %v8297 = vsub.f32 %v8041, %v8265
          %8298 = vst.msk [vmem:[%s330] sm:$0xff] %vm7913, %v8266
          %8299 = vst.msk [vmem:[%s330 + $0x8] sm:$0xff] %vm7913, %v8267
          %8300 = vst.msk [vmem:[%s330 + $0x10] sm:$0xff] %vm7913, %v8268
          %8301 = vst.msk [vmem:[%s330 + $0x18] sm:$0xff] %vm7913, %v8269
          %8302 = vst.msk [vmem:[%s330 + $0x20] sm:$0xff] %vm7913, %v8270
          %8303 = vst.msk [vmem:[%s330 + $0x28] sm:$0xff] %vm7913, %v8271
          %8304 = vst.msk [vmem:[%s330 + $0x30] sm:$0xff] %vm7913, %v8272
          %8305 = vst.msk [vmem:[%s330 + $0x38] sm:$0xff] %vm7913, %v8273
          %8306 = vst.msk [vmem:[%s330 + $0x40] sm:$0xff] %vm7913, %v8274
          %8307 = vst.msk [vmem:[%s330 + $0x48] sm:$0xff] %vm7913, %v8275
          %8308 = vst.msk [vmem:[%s330 + $0x50] sm:$0xff] %vm7913, %v8276
          %8309 = vst.msk [vmem:[%s330 + $0x58] sm:$0xff] %vm7913, %v8277
          %8310 = vst.msk [vmem:[%s330 + $0x60] sm:$0xff] %vm7913, %v8278
          %8311 = vst.msk [vmem:[%s330 + $0x68] sm:$0xff] %vm7913, %v8279
          %8312 = vst.msk [vmem:[%s330 + $0x70] sm:$0xff] %vm7913, %v8280
          %8313 = vst.msk [vmem:[%s330 + $0x78] sm:$0xff] %vm7913, %v8281
          %8314 = vst.msk [vmem:[%s330 + $0x80] sm:$0xff] %vm7913, %v8282
          %8315 = vst.msk [vmem:[%s330 + $0x88] sm:$0xff] %vm7913, %v8283
          %8316 = vst.msk [vmem:[%s330 + $0x90] sm:$0xff] %vm7913, %v8284
          %8317 = vst.msk [vmem:[%s330 + $0x98] sm:$0xff] %vm7913, %v8285
          %8318 = vst.msk [vmem:[%s330 + $0xa0] sm:$0xff] %vm7913, %v8286
          %8319 = vst.msk [vmem:[%s330 + $0xa8] sm:$0xff] %vm7913, %v8287
          %8320 = vst.msk [vmem:[%s330 + $0xb0] sm:$0xff] %vm7913, %v8288
          %8321 = vst.msk [vmem:[%s330 + $0xb8] sm:$0xff] %vm7913, %v8289
          %8322 = vst.msk [vmem:[%s330 + $0xc0] sm:$0xff] %vm7913, %v8290
          %8323 = vst.msk [vmem:[%s330 + $0xc8] sm:$0xff] %vm7913, %v8291
          %8324 = vst.msk [vmem:[%s330 + $0xd0] sm:$0xff] %vm7913, %v8292
          %8325 = vst.msk [vmem:[%s330 + $0xd8] sm:$0xff] %vm7913, %v8293
          %8326 = vst.msk [vmem:[%s330 + $0xe0] sm:$0xff] %vm7913, %v8294
          %8327 = vst.msk [vmem:[%s330 + $0xe8] sm:$0xff] %vm7913, %v8295
          %8328 = vst.msk [vmem:[%s330 + $0xf0] sm:$0xff] %vm7913, %v8296
          %8329 = vst.msk [vmem:[%s330 + $0xf8] sm:$0xff] %vm7913, %v8297
        $region64: #{simplenet_forward.1} parent=39 // pred_fallthru
          _
        %s8330 = smul.u32 32, %s27
        %p8331 = scmp.lt.s32.totalorder %s8330, 31
        %s8332 = scalar_select %p8331, %s8330, 31
        %s8333 = smul.addr %s8332, 8
        %s8334 = scalar_lea.vmem %s5, %s8333
        // Predicated region
        $region65: #{simplenet_forward.1} parent=39 // pred_check
          %p8335 = pneg %p170
        $region66: #{simplenet_forward.1} parent=39 // pred_check_branch
          %8337 = sbr.rel (%p8335) target = $region68
        $region67: #{simplenet_forward.1} parent=39 // pred_region
          %s8338 = smul.u32 32, %s27
        $region68: #{simplenet_forward.1} parent=39 // pred_fallthru
          _
        // Predicated region
        $region69: #{simplenet_forward.1} parent=39 // pred_check
          %p8339 = pneg %p170
        $region70: #{simplenet_forward.1} parent=39 // pred_check_branch
          %8341 = sbr.rel (%p8339) target = $region72
        $region71: #{simplenet_forward.1} parent=39 // pred_region
          %s8342 = smul.u32 32, %s27
          %p8343 = scmp.lt.s32.totalorder %s8342, 31
          %s8344 = scalar_select %p8343, %s8342, 31
          %s8345 = smul.addr %s8344, 8
          %s8346 = scalar_lea.vmem %s5, %s8345
        $region72: #{simplenet_forward.1} parent=39 // pred_fallthru
          _
      $region40: #{simplenet_forward.1} parent=5 // pred_fallthru
        _
      %p8347 = scmp.le.s32.totalorder 2, %s18
      // Predicated region
      $region73: #{simplenet_forward.1} parent=5 // pred_check
        %p8348 = pneg %p8347
      $region74: #{simplenet_forward.1} parent=5 // pred_check_branch
        %8350 = sbr.rel (%p8348) target = $region76
      $region75: #{simplenet_forward.1} parent=5 // pred_region
        %s8351 = ssub.s32 %s18, 2
      $region76: #{simplenet_forward.1} parent=5 // pred_fallthru
        _
    $region6: #{simplenet_forward.1} parent=1 // loop_footer
      %s22 = sadd.s32 1, %s18
    $region7: #{simplenet_forward.1} parent=1 // loop_footer_branch
      %17 = sbr.rel target = $region3
    $region8: #{simplenet_forward.1} parent=1 // loop_exit
      _
    %8352 = vsyncpa [#allocation4], 1
    %s8353 = scalar_lea.sflag [#allocation4], 1
    %8354 = vsyncpa %s8353, 1
    %8355 = vsyncpa [#allocation6], 1
    %s8356 = scalar_lea.sflag [#allocation6], 1
    %8357 = vsyncpa %s8356, 1
    %8358 = vsyncpa [#allocation9], 1

</llo_original>
